<compile_context>
chip_gen: v7x
topology: tpu7x:2x2x1
jax: 0.10.0
libtpu: 0.0.40
codegen_flags: <defaults>
</compile_context>

<pallas_src>
import functools

import jax
import jax.numpy as jnp
from jax.experimental import pallas as pl
from jax.experimental.pallas import tpu as pltpu

SENT_HIDDEN = 256      # sent_hidden_size from the module
SENT_LAYERS = 2        # sent_num_layers from the module
DROPOUT_P = 0.15       # TODO(synk): training-mode dropout (p=0.15) not applied; eval forward only.


# ----------------------------------------------------------------------------
# Pallas kernel: one bidirectional LSTM layer (both directions, whole sequence).
#   gates_ref : (T, 2B, 4H) precomputed x @ W_ih^T + b; rows [0:B] = fwd (natural
#               time order), rows [B:2B] = bwd (already time-reversed).
#   whh_*_ref : (H, 4H)     recurrent weights, gate order [i, f, o, g].
#   mask_ref  : (T, B, 1)   sequence mask (only present when apply_mask=True).
#   out_ref   : (T, B, 2H)  fwd hidden in [:, :, :H], bwd hidden in [:, :, H:].
# ----------------------------------------------------------------------------
def _bilstm_layer_kernel(*refs, apply_mask):
    if apply_mask:
        gates_ref, whh_f_ref, whh_b_ref, mask_ref, out_ref = refs
    else:
        gates_ref, whh_f_ref, whh_b_ref, out_ref = refs
        mask_ref = None

    T, twoB, fourH = gates_ref.shape
    B = twoB // 2
    H = fourH // 4

    def step(s, carry):
        h, c = carry                                               # (2B, H) each
        gh_f = jnp.dot(h[:B], whh_f_ref[...], preferred_element_type=jnp.float32)
        gh_b = jnp.dot(h[B:], whh_b_ref[...], preferred_element_type=jnp.float32)
        gates = gates_ref[s] + jnp.concatenate([gh_f, gh_b], axis=0)   # (2B, 4H)

        sig = jax.nn.sigmoid(gates[:, :3 * H])                     # i, f, o in one shot
        g_g = jnp.tanh(gates[:, 3 * H:])
        i_g = sig[:, 0 * H:1 * H]
        f_g = sig[:, 1 * H:2 * H]
        o_g = sig[:, 2 * H:3 * H]

        c_new = f_g * c + i_g * g_g
        h_new = o_g * jnp.tanh(c_new)

        out_ref[pl.ds(s, 1), :, 0:H] = h_new[:B][None]             # fwd hidden @ time s
        out_ref[pl.ds(T - 1 - s, 1), :, H:2 * H] = h_new[B:][None]  # bwd hidden @ time T-1-s
        return h_new, c_new

    init = (jnp.zeros((twoB, H), jnp.float32),
            jnp.zeros((twoB, H), jnp.float32))
    jax.lax.fori_loop(0, T, step, init, unroll=(T <= 32))

    if apply_mask:
        # (T, B, 1) mask lane-broadcasts against (T, B, 2H); applied once to the slab.
        out_ref[...] = out_ref[...] * mask_ref[...]


def bilstm_layer(gates_x, whh_f_t, whh_b_t, mask3=None):
    """gates_x: (T, 2B, 4H); whh_*_t: (H, 4H); mask3: optional (T, B, 1)."""
    T, twoB, fourH = gates_x.shape
    B = twoB // 2
    H = fourH // 4

    operands = [gates_x, whh_f_t, whh_b_t]
    in_specs = [
        pl.BlockSpec((T, twoB, fourH), lambda i: (0, 0, 0)),
        pl.BlockSpec((H, fourH), lambda i: (0, 0)),
        pl.BlockSpec((H, fourH), lambda i: (0, 0)),
    ]
    apply_mask = mask3 is not None
    if apply_mask:
        operands.append(mask3)
        in_specs.append(pl.BlockSpec((T, B, 1), lambda i: (0, 0, 0)))

    # TODO(synk): for very long sequences, chunk T so gates + output stay within the
    # per-generation VMEM budget (64 MiB on v7x) instead of keeping the full slab resident.
    return pl.pallas_call(
        functools.partial(_bilstm_layer_kernel, apply_mask=apply_mask),
        out_shape=jax.ShapeDtypeStruct((T, B, 2 * H), jnp.float32),
        grid=(1,),
        in_specs=in_specs,
        out_specs=pl.BlockSpec((T, B, 2 * H), lambda i: (0, 0, 0)),
        compiler_params=pltpu.CompilerParams(
            dimension_semantics=("arbitrary",)),
    )(*operands)


# ----------------------------------------------------------------------------
# Hoisted input projection: one big matmul per layer for both directions.
# ----------------------------------------------------------------------------
def _project_inputs(x_tm, wih_cat_t, b_cat):
    """x_tm: (T, B, Din); wih_cat_t: (Din, 8H) = [fwd | bwd]; b_cat: (8H,).
    Returns (T, 2B, 4H): rows [0:B] fwd gates (natural time order),
    rows [B:2B] bwd gates already reversed in time."""
    T, B, Din = x_tm.shape
    eightH = wih_cat_t.shape[1]
    fourH = eightH // 2
    g = jnp.dot(x_tm.reshape(T * B, Din), wih_cat_t,
                precision=jax.lax.Precision.HIGHEST) + b_cat
    g = g.reshape(T, B, eightH)
    g_f = g[:, :, :fourH]
    g_b = g[:, :, fourH:][::-1]          # time-reverse the backward direction
    return jnp.concatenate([g_f, g_b], axis=1)


# ----------------------------------------------------------------------------
# Parameter init (PyTorch nn.LSTM shapes, gate order [i, f, g, o]) + kernel prep.
# ----------------------------------------------------------------------------
def init_lstm_params(key, input_size, hidden_size, num_layers):
    bound = 1.0 / float(hidden_size) ** 0.5
    params = []
    for layer in range(num_layers):
        in_size = input_size if layer == 0 else 2 * hidden_size
        layer_p = {}
        for direction in ("fwd", "bwd"):
            key, k1, k2, k3, k4 = jax.random.split(key, 5)
            w_ih = jax.random.uniform(k1, (4 * hidden_size, in_size), jnp.float32, -bound, bound)
            w_hh = jax.random.uniform(k2, (4 * hidden_size, hidden_size), jnp.float32, -bound, bound)
            b_ih = jax.random.uniform(k3, (4 * hidden_size,), jnp.float32, -bound, bound)
            b_hh = jax.random.uniform(k4, (4 * hidden_size,), jnp.float32, -bound, bound)
            layer_p[direction] = dict(w_ih=w_ih, w_hh=w_hh, b=b_ih + b_hh)
        params.append(layer_p)
    return params


def _reorder_gates(w, hidden_size):
    """Permute PyTorch gate blocks [i, f, g, o] -> [i, f, o, g] along axis 0."""
    H = hidden_size
    return jnp.concatenate([w[:H], w[H:2 * H], w[3 * H:], w[2 * H:3 * H]], axis=0)


def prepare_kernel_params(params, hidden_size):
    kparams = []
    for lp in params:
        wih_f = _reorder_gates(lp["fwd"]["w_ih"], hidden_size)   # (4H, Din)
        wih_b = _reorder_gates(lp["bwd"]["w_ih"], hidden_size)
        whh_f = _reorder_gates(lp["fwd"]["w_hh"], hidden_size)   # (4H, H)
        whh_b = _reorder_gates(lp["bwd"]["w_hh"], hidden_size)
        b_f = _reorder_gates(lp["fwd"]["b"], hidden_size)        # (4H,)
        b_b = _reorder_gates(lp["bwd"]["b"], hidden_size)
        kparams.append(dict(
            wih_cat_t=jnp.concatenate([wih_f.T, wih_b.T], axis=1),   # (Din, 8H)
            b_cat=jnp.concatenate([b_f, b_b], axis=0),               # (8H,)
            whh_f_t=whh_f.T,                                         # (H, 4H)
            whh_b_t=whh_b.T))                                        # (H, 4H)
    return kparams


# ----------------------------------------------------------------------------
# SentEncoder forward (eval mode)
# ----------------------------------------------------------------------------
def sent_encoder_forward(kparams, sent_reps, sent_masks):
    """sent_reps: (B, T, D) f32, sent_masks: (B, T) f32 -> (B, T, 2H) f32."""
    x_tm = jnp.transpose(sent_reps.astype(jnp.float32), (1, 0, 2))          # time-major once
    mask3 = jnp.transpose(sent_masks.astype(jnp.float32), (1, 0))[:, :, None]  # (T, B, 1)
    n_layers = len(kparams)
    for li, lp in enumerate(kparams):
        gates_x = _project_inputs(x_tm, lp["wih_cat_t"], lp["b_cat"])
        is_last = (li == n_layers - 1)
        x_tm = bilstm_layer(gates_x, lp["whh_f_t"], lp["whh_b_t"],
                            mask3=mask3 if is_last else None)
    return jnp.transpose(x_tm, (1, 0, 2))                                    # back to batch-first


# ----------------------------------------------------------------------------
# Pure-JAX reference (lax.scan, PyTorch gate order) for a sanity check
# ----------------------------------------------------------------------------
def _ref_lstm_cell(carry, x_t, w_ih, w_hh, b):
    h, c = carry
    gates = (jnp.dot(x_t, w_ih.T, precision=jax.lax.Precision.HIGHEST)
             + jnp.dot(h, w_hh.T, precision=jax.lax.Precision.HIGHEST) + b)
    i, f, g, o = jnp.split(gates, 4, axis=-1)
    i, f, g, o = jax.nn.sigmoid(i), jax.nn.sigmoid(f), jnp.tanh(g), jax.nn.sigmoid(o)
    c = f * c + i * g
    h = o * jnp.tanh(c)
    return (h, c), h


def sent_encoder_reference(params, sent_reps, sent_masks, hidden_size):
    x = sent_reps.astype(jnp.float32)
    for layer_p in params:
        B = x.shape[0]
        h0 = jnp.zeros((B, hidden_size), jnp.float32)
        outs = []
        for direction, rev in (("fwd", False), ("bwd", True)):
            p = layer_p[direction]
            xs = jnp.transpose(x, (1, 0, 2))
            if rev:
                xs = xs[::-1]
            _, hs = jax.lax.scan(
                lambda c, xt: _ref_lstm_cell(c, xt, p["w_ih"], p["w_hh"], p["b"]),
                (h0, h0), xs)
            if rev:
                hs = hs[::-1]
            outs.append(jnp.transpose(hs, (1, 0, 2)))
        x = jnp.concatenate(outs, axis=-1)
    return x * sent_masks[..., None]


if __name__ == "__main__":
    key = jax.random.PRNGKey(0)
    B, T, D = 2, 8, 32          # small batch / seq / sent_rep_size
    H = SENT_HIDDEN             # 256 (module constant)

    k_params, k_x = jax.random.split(key)
    params = init_lstm_params(k_params, D, H, SENT_LAYERS)
    kparams = prepare_kernel_params(params, H)

    sent_reps = jax.random.normal(k_x, (B, T, D), jnp.float32)
    # mask: first row full, second row padded after position 5
    sent_masks = (jnp.arange(T)[None, :] < jnp.array([[T], [5]])).astype(jnp.float32)

    out = sent_encoder_forward(kparams, sent_reps, sent_masks)
    out = jax.block_until_ready(out)

    assert out.shape == (B, T, 2 * H), out.shape
    assert bool(jnp.all(jnp.isfinite(out)))

    ref = jax.block_until_ready(sent_encoder_reference(params, sent_reps, sent_masks, H))
    max_err = float(jnp.max(jnp.abs(out - ref)))
    assert max_err < 1e-2, f"max abs error vs reference = {max_err}"

    print("KERNEL_OK")
</pallas_src>

<mosaic_0001>
module attributes {stable_mosaic.version = 11 : i64} {
  func.func @_bilstm_layer_kernel(%arg0: i32, %arg1: memref<8x4x1024xf32, #tpu.memory_space<vmem>>, %arg2: memref<256x1024xf32, #tpu.memory_space<vmem>>, %arg3: memref<256x1024xf32, #tpu.memory_space<vmem>>, %arg4: memref<8x2x512xf32, #tpu.memory_space<vmem>>) attributes {dimension_semantics = [#tpu.dimension_semantics<arbitrary>], iteration_bounds = array<i64: 1>, scalar_prefetch = 0 : i64, scratch_operands = 0 : i64, tpu.core_type = #tpu.core_type<tc>, window_params = [{pipeline_mode = #tpu.pipeline_mode<synchronous>, transform_indices = @transform_0, window_bounds = array<i64: 8, 4, 1024>}, {pipeline_mode = #tpu.pipeline_mode<synchronous>, transform_indices = @transform_1, window_bounds = array<i64: 256, 1024>}, {pipeline_mode = #tpu.pipeline_mode<synchronous>, transform_indices = @transform_2, window_bounds = array<i64: 256, 1024>}, {pipeline_mode = #tpu.pipeline_mode<synchronous>, transform_indices = @transform_3, window_bounds = array<i64: 8, 2, 512>}]} {
    %cst = arith.constant 0.000000e+00 : f32
    %0 = vector.broadcast %cst : f32 to vector<4x256xf32>
    %cst_0 = arith.constant 0.000000e+00 : f32
    %1 = vector.broadcast %cst_0 : f32 to vector<4x256xf32>
    %c0_i32 = arith.constant 0 : i32
    %2 = vector.extract_strided_slice %0 {offsets = [0, 0], sizes = [2, 256], strides = [1, 1]} : vector<4x256xf32> to vector<2x256xf32>
    %c0 = arith.constant 0 : index
    %c0_1 = arith.constant 0 : index
    %3 = vector.load %arg2[%c0, %c0_1] : memref<256x1024xf32, #tpu.memory_space<vmem>>, vector<256x1024xf32>
    %cst_2 = arith.constant dense<0.000000e+00> : vector<2x1024xf32>
    %4 = tpu.matmul %2, %3, %cst_2 {dimension_numbers = #tpu.dot_dimension_numbers<[1], [0], [0], [1], [0, 0, 1, 1], [], []>} : vector<2x256xf32>, vector<256x1024xf32>, vector<2x1024xf32> -> vector<2x1024xf32>
    %5 = vector.extract_strided_slice %0 {offsets = [2, 0], sizes = [2, 256], strides = [1, 1]} : vector<4x256xf32> to vector<2x256xf32>
    %c0_3 = arith.constant 0 : index
    %c0_4 = arith.constant 0 : index
    %6 = vector.load %arg3[%c0_3, %c0_4] : memref<256x1024xf32, #tpu.memory_space<vmem>>, vector<256x1024xf32>
    %cst_5 = arith.constant dense<0.000000e+00> : vector<2x1024xf32>
    %7 = tpu.matmul %5, %6, %cst_5 {dimension_numbers = #tpu.dot_dimension_numbers<[1], [0], [0], [1], [0, 0, 1, 1], [], []>} : vector<2x256xf32>, vector<256x1024xf32>, vector<2x1024xf32> -> vector<2x1024xf32>
    %8 = arith.index_cast %c0_i32 : i32 to index
    %c0_6 = arith.constant 0 : index
    %c0_7 = arith.constant 0 : index
    %9 = vector.load %arg1[%8, %c0_6, %c0_7] : memref<8x4x1024xf32, #tpu.memory_space<vmem>>, vector<1x4x1024xf32>
    %10 = vector.shape_cast %9 : vector<1x4x1024xf32> to vector<4x1024xf32>
    %11 = tpu.concatenate %4, %7 in 0 : vector<2x1024xf32>, vector<2x1024xf32> -> vector<4x1024xf32>
    %12 = arith.addf %10, %11 : vector<4x1024xf32>
    %13 = vector.extract_strided_slice %12 {offsets = [0, 0], sizes = [4, 768], strides = [1, 1]} : vector<4x1024xf32> to vector<4x768xf32>
    %14 = arith.negf %13 : vector<4x768xf32>
    %15 = math.exp %14 : vector<4x768xf32>
    %cst_8 = arith.constant 1.000000e+00 : f32
    %16 = vector.broadcast %cst_8 : f32 to vector<4x768xf32>
    %17 = arith.addf %16, %15 : vector<4x768xf32>
    %18 = arith.divf %16, %17 : vector<4x768xf32>
    %19 = vector.extract_strided_slice %12 {offsets = [0, 768], sizes = [4, 256], strides = [1, 1]} : vector<4x1024xf32> to vector<4x256xf32>
    %20 = math.tanh %19 : vector<4x256xf32>
    %21 = vector.extract_strided_slice %18 {offsets = [0, 0], sizes = [4, 256], strides = [1, 1]} : vector<4x768xf32> to vector<4x256xf32>
    %22 = vector.extract_strided_slice %18 {offsets = [0, 256], sizes = [4, 256], strides = [1, 1]} : vector<4x768xf32> to vector<4x256xf32>
    %23 = vector.extract_strided_slice %18 {offsets = [0, 512], sizes = [4, 256], strides = [1, 1]} : vector<4x768xf32> to vector<4x256xf32>
    %24 = arith.mulf %22, %1 : vector<4x256xf32>
    %25 = arith.mulf %21, %20 : vector<4x256xf32>
    %26 = arith.addf %24, %25 : vector<4x256xf32>
    %27 = math.tanh %26 : vector<4x256xf32>
    %28 = arith.mulf %23, %27 : vector<4x256xf32>
    %29 = vector.extract_strided_slice %28 {offsets = [0, 0], sizes = [2, 256], strides = [1, 1]} : vector<4x256xf32> to vector<2x256xf32>
    %30 = vector.shape_cast %29 : vector<2x256xf32> to vector<1x2x256xf32>
    %31 = arith.index_cast %c0_i32 : i32 to index
    %c0_9 = arith.constant 0 : index
    %c0_10 = arith.constant 0 : index
    %32 = vector.load %arg4[%31, %c0_9, %c0_10] : memref<8x2x512xf32, #tpu.memory_space<vmem>>, vector<1x2x256xf32>
    tpu.vector_store %arg4[%31, %c0_9, %c0_10], %30 {strides = array<i32>} : memref<8x2x512xf32, #tpu.memory_space<vmem>>, vector<1x2x256xf32>,
    %33 = vector.extract_strided_slice %28 {offsets = [2, 0], sizes = [2, 256], strides = [1, 1]} : vector<4x256xf32> to vector<2x256xf32>
    %34 = vector.shape_cast %33 : vector<2x256xf32> to vector<1x2x256xf32>
    %c7_i32 = arith.constant 7 : i32
    %35 = arith.subi %c7_i32, %c0_i32 : i32
    %36 = arith.index_cast %35 : i32 to index
    %c0_11 = arith.constant 0 : index
    %c256 = arith.constant 256 : index
    %37 = vector.load %arg4[%36, %c0_11, %c256] : memref<8x2x512xf32, #tpu.memory_space<vmem>>, vector<1x2x256xf32>
    tpu.vector_store %arg4[%36, %c0_11, %c256], %34 {strides = array<i32>} : memref<8x2x512xf32, #tpu.memory_space<vmem>>, vector<1x2x256xf32>,
    %c1_i32 = arith.constant 1 : i32
    %38 = vector.extract_strided_slice %28 {offsets = [0, 0], sizes = [2, 256], strides = [1, 1]} : vector<4x256xf32> to vector<2x256xf32>
    %c0_12 = arith.constant 0 : index
    %c0_13 = arith.constant 0 : index
    %39 = vector.load %arg2[%c0_12, %c0_13] : memref<256x1024xf32, #tpu.memory_space<vmem>>, vector<256x1024xf32>
    %cst_14 = arith.constant dense<0.000000e+00> : vector<2x1024xf32>
    %40 = tpu.matmul %38, %39, %cst_14 {dimension_numbers = #tpu.dot_dimension_numbers<[1], [0], [0], [1], [0, 0, 1, 1], [], []>} : vector<2x256xf32>, vector<256x1024xf32>, vector<2x1024xf32> -> vector<2x1024xf32>
    %41 = vector.extract_strided_slice %28 {offsets = [2, 0], sizes = [2, 256], strides = [1, 1]} : vector<4x256xf32> to vector<2x256xf32>
    %c0_15 = arith.constant 0 : index
    %c0_16 = arith.constant 0 : index
    %42 = vector.load %arg3[%c0_15, %c0_16] : memref<256x1024xf32, #tpu.memory_space<vmem>>, vector<256x1024xf32>
    %cst_17 = arith.constant dense<0.000000e+00> : vector<2x1024xf32>
    %43 = tpu.matmul %41, %42, %cst_17 {dimension_numbers = #tpu.dot_dimension_numbers<[1], [0], [0], [1], [0, 0, 1, 1], [], []>} : vector<2x256xf32>, vector<256x1024xf32>, vector<2x1024xf32> -> vector<2x1024xf32>
    %44 = arith.index_cast %c1_i32 : i32 to index
    %c0_18 = arith.constant 0 : index
    %c0_19 = arith.constant 0 : index
    %45 = vector.load %arg1[%44, %c0_18, %c0_19] : memref<8x4x1024xf32, #tpu.memory_space<vmem>>, vector<1x4x1024xf32>
    %46 = vector.shape_cast %45 : vector<1x4x1024xf32> to vector<4x1024xf32>
    %47 = tpu.concatenate %40, %43 in 0 : vector<2x1024xf32>, vector<2x1024xf32> -> vector<4x1024xf32>
    %48 = arith.addf %46, %47 : vector<4x1024xf32>
    %49 = vector.extract_strided_slice %48 {offsets = [0, 0], sizes = [4, 768], strides = [1, 1]} : vector<4x1024xf32> to vector<4x768xf32>
    %50 = arith.negf %49 : vector<4x768xf32>
    %51 = math.exp %50 : vector<4x768xf32>
    %cst_20 = arith.constant 1.000000e+00 : f32
    %52 = vector.broadcast %cst_20 : f32 to vector<4x768xf32>
    %53 = arith.addf %52, %51 : vector<4x768xf32>
    %54 = arith.divf %52, %53 : vector<4x768xf32>
    %55 = vector.extract_strided_slice %48 {offsets = [0, 768], sizes = [4, 256], strides = [1, 1]} : vector<4x1024xf32> to vector<4x256xf32>
    %56 = math.tanh %55 : vector<4x256xf32>
    %57 = vector.extract_strided_slice %54 {offsets = [0, 0], sizes = [4, 256], strides = [1, 1]} : vector<4x768xf32> to vector<4x256xf32>
    %58 = vector.extract_strided_slice %54 {offsets = [0, 256], sizes = [4, 256], strides = [1, 1]} : vector<4x768xf32> to vector<4x256xf32>
    %59 = vector.extract_strided_slice %54 {offsets = [0, 512], sizes = [4, 256], strides = [1, 1]} : vector<4x768xf32> to vector<4x256xf32>
    %60 = arith.mulf %58, %26 : vector<4x256xf32>
    %61 = arith.mulf %57, %56 : vector<4x256xf32>
    %62 = arith.addf %60, %61 : vector<4x256xf32>
    %63 = math.tanh %62 : vector<4x256xf32>
    %64 = arith.mulf %59, %63 : vector<4x256xf32>
    %65 = vector.extract_strided_slice %64 {offsets = [0, 0], sizes = [2, 256], strides = [1, 1]} : vector<4x256xf32> to vector<2x256xf32>
    %66 = vector.shape_cast %65 : vector<2x256xf32> to vector<1x2x256xf32>
    %67 = arith.index_cast %c1_i32 : i32 to index
    %c0_21 = arith.constant 0 : index
    %c0_22 = arith.constant 0 : index
    %68 = vector.load %arg4[%67, %c0_21, %c0_22] : memref<8x2x512xf32, #tpu.memory_space<vmem>>, vector<1x2x256xf32>
    tpu.vector_store %arg4[%67, %c0_21, %c0_22], %66 {strides = array<i32>} : memref<8x2x512xf32, #tpu.memory_space<vmem>>, vector<1x2x256xf32>,
    %69 = vector.extract_strided_slice %64 {offsets = [2, 0], sizes = [2, 256], strides = [1, 1]} : vector<4x256xf32> to vector<2x256xf32>
    %70 = vector.shape_cast %69 : vector<2x256xf32> to vector<1x2x256xf32>
    %c7_i32_23 = arith.constant 7 : i32
    %71 = arith.subi %c7_i32_23, %c1_i32 : i32
    %72 = arith.index_cast %71 : i32 to index
    %c0_24 = arith.constant 0 : index
    %c256_25 = arith.constant 256 : index
    %73 = vector.load %arg4[%72, %c0_24, %c256_25] : memref<8x2x512xf32, #tpu.memory_space<vmem>>, vector<1x2x256xf32>
    tpu.vector_store %arg4[%72, %c0_24, %c256_25], %70 {strides = array<i32>} : memref<8x2x512xf32, #tpu.memory_space<vmem>>, vector<1x2x256xf32>,
    %c2_i32 = arith.constant 2 : i32
    %74 = vector.extract_strided_slice %64 {offsets = [0, 0], sizes = [2, 256], strides = [1, 1]} : vector<4x256xf32> to vector<2x256xf32>
    %c0_26 = arith.constant 0 : index
    %c0_27 = arith.constant 0 : index
    %75 = vector.load %arg2[%c0_26, %c0_27] : memref<256x1024xf32, #tpu.memory_space<vmem>>, vector<256x1024xf32>
    %cst_28 = arith.constant dense<0.000000e+00> : vector<2x1024xf32>
    %76 = tpu.matmul %74, %75, %cst_28 {dimension_numbers = #tpu.dot_dimension_numbers<[1], [0], [0], [1], [0, 0, 1, 1], [], []>} : vector<2x256xf32>, vector<256x1024xf32>, vector<2x1024xf32> -> vector<2x1024xf32>
    %77 = vector.extract_strided_slice %64 {offsets = [2, 0], sizes = [2, 256], strides = [1, 1]} : vector<4x256xf32> to vector<2x256xf32>
    %c0_29 = arith.constant 0 : index
    %c0_30 = arith.constant 0 : index
    %78 = vector.load %arg3[%c0_29, %c0_30] : memref<256x1024xf32, #tpu.memory_space<vmem>>, vector<256x1024xf32>
    %cst_31 = arith.constant dense<0.000000e+00> : vector<2x1024xf32>
    %79 = tpu.matmul %77, %78, %cst_31 {dimension_numbers = #tpu.dot_dimension_numbers<[1], [0], [0], [1], [0, 0, 1, 1], [], []>} : vector<2x256xf32>, vector<256x1024xf32>, vector<2x1024xf32> -> vector<2x1024xf32>
    %80 = arith.index_cast %c2_i32 : i32 to index
    %c0_32 = arith.constant 0 : index
    %c0_33 = arith.constant 0 : index
    %81 = vector.load %arg1[%80, %c0_32, %c0_33] : memref<8x4x1024xf32, #tpu.memory_space<vmem>>, vector<1x4x1024xf32>
    %82 = vector.shape_cast %81 : vector<1x4x1024xf32> to vector<4x1024xf32>
    %83 = tpu.concatenate %76, %79 in 0 : vector<2x1024xf32>, vector<2x1024xf32> -> vector<4x1024xf32>
    %84 = arith.addf %82, %83 : vector<4x1024xf32>
    %85 = vector.extract_strided_slice %84 {offsets = [0, 0], sizes = [4, 768], strides = [1, 1]} : vector<4x1024xf32> to vector<4x768xf32>
    %86 = arith.negf %85 : vector<4x768xf32>
    %87 = math.exp %86 : vector<4x768xf32>
    %cst_34 = arith.constant 1.000000e+00 : f32
    %88 = vector.broadcast %cst_34 : f32 to vector<4x768xf32>
    %89 = arith.addf %88, %87 : vector<4x768xf32>
    %90 = arith.divf %88, %89 : vector<4x768xf32>
    %91 = vector.extract_strided_slice %84 {offsets = [0, 768], sizes = [4, 256], strides = [1, 1]} : vector<4x1024xf32> to vector<4x256xf32>
    %92 = math.tanh %91 : vector<4x256xf32>
    %93 = vector.extract_strided_slice %90 {offsets = [0, 0], sizes = [4, 256], strides = [1, 1]} : vector<4x768xf32> to vector<4x256xf32>
    %94 = vector.extract_strided_slice %90 {offsets = [0, 256], sizes = [4, 256], strides = [1, 1]} : vector<4x768xf32> to vector<4x256xf32>
    %95 = vector.extract_strided_slice %90 {offsets = [0, 512], sizes = [4, 256], strides = [1, 1]} : vector<4x768xf32> to vector<4x256xf32>
    %96 = arith.mulf %94, %62 : vector<4x256xf32>
    %97 = arith.mulf %93, %92 : vector<4x256xf32>
    %98 = arith.addf %96, %97 : vector<4x256xf32>
    %99 = math.tanh %98 : vector<4x256xf32>
    %100 = arith.mulf %95, %99 : vector<4x256xf32>
    %101 = vector.extract_strided_slice %100 {offsets = [0, 0], sizes = [2, 256], strides = [1, 1]} : vector<4x256xf32> to vector<2x256xf32>
    %102 = vector.shape_cast %101 : vector<2x256xf32> to vector<1x2x256xf32>
    %103 = arith.index_cast %c2_i32 : i32 to index
    %c0_35 = arith.constant 0 : index
    %c0_36 = arith.constant 0 : index
    %104 = vector.load %arg4[%103, %c0_35, %c0_36] : memref<8x2x512xf32, #tpu.memory_space<vmem>>, vector<1x2x256xf32>
    tpu.vector_store %arg4[%103, %c0_35, %c0_36], %102 {strides = array<i32>} : memref<8x2x512xf32, #tpu.memory_space<vmem>>, vector<1x2x256xf32>,
    %105 = vector.extract_strided_slice %100 {offsets = [2, 0], sizes = [2, 256], strides = [1, 1]} : vector<4x256xf32> to vector<2x256xf32>
    %106 = vector.shape_cast %105 : vector<2x256xf32> to vector<1x2x256xf32>
    %c7_i32_37 = arith.constant 7 : i32
    %107 = arith.subi %c7_i32_37, %c2_i32 : i32
    %108 = arith.index_cast %107 : i32 to index
    %c0_38 = arith.constant 0 : index
    %c256_39 = arith.constant 256 : index
    %109 = vector.load %arg4[%108, %c0_38, %c256_39] : memref<8x2x512xf32, #tpu.memory_space<vmem>>, vector<1x2x256xf32>
    tpu.vector_store %arg4[%108, %c0_38, %c256_39], %106 {strides = array<i32>} : memref<8x2x512xf32, #tpu.memory_space<vmem>>, vector<1x2x256xf32>,
    %c3_i32 = arith.constant 3 : i32
    %110 = vector.extract_strided_slice %100 {offsets = [0, 0], sizes = [2, 256], strides = [1, 1]} : vector<4x256xf32> to vector<2x256xf32>
    %c0_40 = arith.constant 0 : index
    %c0_41 = arith.constant 0 : index
    %111 = vector.load %arg2[%c0_40, %c0_41] : memref<256x1024xf32, #tpu.memory_space<vmem>>, vector<256x1024xf32>
    %cst_42 = arith.constant dense<0.000000e+00> : vector<2x1024xf32>
    %112 = tpu.matmul %110, %111, %cst_42 {dimension_numbers = #tpu.dot_dimension_numbers<[1], [0], [0], [1], [0, 0, 1, 1], [], []>} : vector<2x256xf32>, vector<256x1024xf32>, vector<2x1024xf32> -> vector<2x1024xf32>
    %113 = vector.extract_strided_slice %100 {offsets = [2, 0], sizes = [2, 256], strides = [1, 1]} : vector<4x256xf32> to vector<2x256xf32>
    %c0_43 = arith.constant 0 : index
    %c0_44 = arith.constant 0 : index
    %114 = vector.load %arg3[%c0_43, %c0_44] : memref<256x1024xf32, #tpu.memory_space<vmem>>, vector<256x1024xf32>
    %cst_45 = arith.constant dense<0.000000e+00> : vector<2x1024xf32>
    %115 = tpu.matmul %113, %114, %cst_45 {dimension_numbers = #tpu.dot_dimension_numbers<[1], [0], [0], [1], [0, 0, 1, 1], [], []>} : vector<2x256xf32>, vector<256x1024xf32>, vector<2x1024xf32> -> vector<2x1024xf32>
    %116 = arith.index_cast %c3_i32 : i32 to index
    %c0_46 = arith.constant 0 : index
    %c0_47 = arith.constant 0 : index
    %117 = vector.load %arg1[%116, %c0_46, %c0_47] : memref<8x4x1024xf32, #tpu.memory_space<vmem>>, vector<1x4x1024xf32>
    %118 = vector.shape_cast %117 : vector<1x4x1024xf32> to vector<4x1024xf32>
    %119 = tpu.concatenate %112, %115 in 0 : vector<2x1024xf32>, vector<2x1024xf32> -> vector<4x1024xf32>
    %120 = arith.addf %118, %119 : vector<4x1024xf32>
    %121 = vector.extract_strided_slice %120 {offsets = [0, 0], sizes = [4, 768], strides = [1, 1]} : vector<4x1024xf32> to vector<4x768xf32>
    %122 = arith.negf %121 : vector<4x768xf32>
    %123 = math.exp %122 : vector<4x768xf32>
    %cst_48 = arith.constant 1.000000e+00 : f32
    %124 = vector.broadcast %cst_48 : f32 to vector<4x768xf32>
    %125 = arith.addf %124, %123 : vector<4x768xf32>
    %126 = arith.divf %124, %125 : vector<4x768xf32>
    %127 = vector.extract_strided_slice %120 {offsets = [0, 768], sizes = [4, 256], strides = [1, 1]} : vector<4x1024xf32> to vector<4x256xf32>
    %128 = math.tanh %127 : vector<4x256xf32>
    %129 = vector.extract_strided_slice %126 {offsets = [0, 0], sizes = [4, 256], strides = [1, 1]} : vector<4x768xf32> to vector<4x256xf32>
    %130 = vector.extract_strided_slice %126 {offsets = [0, 256], sizes = [4, 256], strides = [1, 1]} : vector<4x768xf32> to vector<4x256xf32>
    %131 = vector.extract_strided_slice %126 {offsets = [0, 512], sizes = [4, 256], strides = [1, 1]} : vector<4x768xf32> to vector<4x256xf32>
    %132 = arith.mulf %130, %98 : vector<4x256xf32>
    %133 = arith.mulf %129, %128 : vector<4x256xf32>
    %134 = arith.addf %132, %133 : vector<4x256xf32>
    %135 = math.tanh %134 : vector<4x256xf32>
    %136 = arith.mulf %131, %135 : vector<4x256xf32>
    %137 = vector.extract_strided_slice %136 {offsets = [0, 0], sizes = [2, 256], strides = [1, 1]} : vector<4x256xf32> to vector<2x256xf32>
    %138 = vector.shape_cast %137 : vector<2x256xf32> to vector<1x2x256xf32>
    %139 = arith.index_cast %c3_i32 : i32 to index
    %c0_49 = arith.constant 0 : index
    %c0_50 = arith.constant 0 : index
    %140 = vector.load %arg4[%139, %c0_49, %c0_50] : memref<8x2x512xf32, #tpu.memory_space<vmem>>, vector<1x2x256xf32>
    tpu.vector_store %arg4[%139, %c0_49, %c0_50], %138 {strides = array<i32>} : memref<8x2x512xf32, #tpu.memory_space<vmem>>, vector<1x2x256xf32>,
    %141 = vector.extract_strided_slice %136 {offsets = [2, 0], sizes = [2, 256], strides = [1, 1]} : vector<4x256xf32> to vector<2x256xf32>
    %142 = vector.shape_cast %141 : vector<2x256xf32> to vector<1x2x256xf32>
    %c7_i32_51 = arith.constant 7 : i32
    %143 = arith.subi %c7_i32_51, %c3_i32 : i32
    %144 = arith.index_cast %143 : i32 to index
    %c0_52 = arith.constant 0 : index
    %c256_53 = arith.constant 256 : index
    %145 = vector.load %arg4[%144, %c0_52, %c256_53] : memref<8x2x512xf32, #tpu.memory_space<vmem>>, vector<1x2x256xf32>
    tpu.vector_store %arg4[%144, %c0_52, %c256_53], %142 {strides = array<i32>} : memref<8x2x512xf32, #tpu.memory_space<vmem>>, vector<1x2x256xf32>,
    %c4_i32 = arith.constant 4 : i32
    %146 = vector.extract_strided_slice %136 {offsets = [0, 0], sizes = [2, 256], strides = [1, 1]} : vector<4x256xf32> to vector<2x256xf32>
    %c0_54 = arith.constant 0 : index
    %c0_55 = arith.constant 0 : index
    %147 = vector.load %arg2[%c0_54, %c0_55] : memref<256x1024xf32, #tpu.memory_space<vmem>>, vector<256x1024xf32>
    %cst_56 = arith.constant dense<0.000000e+00> : vector<2x1024xf32>
    %148 = tpu.matmul %146, %147, %cst_56 {dimension_numbers = #tpu.dot_dimension_numbers<[1], [0], [0], [1], [0, 0, 1, 1], [], []>} : vector<2x256xf32>, vector<256x1024xf32>, vector<2x1024xf32> -> vector<2x1024xf32>
    %149 = vector.extract_strided_slice %136 {offsets = [2, 0], sizes = [2, 256], strides = [1, 1]} : vector<4x256xf32> to vector<2x256xf32>
    %c0_57 = arith.constant 0 : index
    %c0_58 = arith.constant 0 : index
    %150 = vector.load %arg3[%c0_57, %c0_58] : memref<256x1024xf32, #tpu.memory_space<vmem>>, vector<256x1024xf32>
    %cst_59 = arith.constant dense<0.000000e+00> : vector<2x1024xf32>
    %151 = tpu.matmul %149, %150, %cst_59 {dimension_numbers = #tpu.dot_dimension_numbers<[1], [0], [0], [1], [0, 0, 1, 1], [], []>} : vector<2x256xf32>, vector<256x1024xf32>, vector<2x1024xf32> -> vector<2x1024xf32>
    %152 = arith.index_cast %c4_i32 : i32 to index
    %c0_60 = arith.constant 0 : index
    %c0_61 = arith.constant 0 : index
    %153 = vector.load %arg1[%152, %c0_60, %c0_61] : memref<8x4x1024xf32, #tpu.memory_space<vmem>>, vector<1x4x1024xf32>
    %154 = vector.shape_cast %153 : vector<1x4x1024xf32> to vector<4x1024xf32>
    %155 = tpu.concatenate %148, %151 in 0 : vector<2x1024xf32>, vector<2x1024xf32> -> vector<4x1024xf32>
    %156 = arith.addf %154, %155 : vector<4x1024xf32>
    %157 = vector.extract_strided_slice %156 {offsets = [0, 0], sizes = [4, 768], strides = [1, 1]} : vector<4x1024xf32> to vector<4x768xf32>
    %158 = arith.negf %157 : vector<4x768xf32>
    %159 = math.exp %158 : vector<4x768xf32>
    %cst_62 = arith.constant 1.000000e+00 : f32
    %160 = vector.broadcast %cst_62 : f32 to vector<4x768xf32>
    %161 = arith.addf %160, %159 : vector<4x768xf32>
    %162 = arith.divf %160, %161 : vector<4x768xf32>
    %163 = vector.extract_strided_slice %156 {offsets = [0, 768], sizes = [4, 256], strides = [1, 1]} : vector<4x1024xf32> to vector<4x256xf32>
    %164 = math.tanh %163 : vector<4x256xf32>
    %165 = vector.extract_strided_slice %162 {offsets = [0, 0], sizes = [4, 256], strides = [1, 1]} : vector<4x768xf32> to vector<4x256xf32>
    %166 = vector.extract_strided_slice %162 {offsets = [0, 256], sizes = [4, 256], strides = [1, 1]} : vector<4x768xf32> to vector<4x256xf32>
    %167 = vector.extract_strided_slice %162 {offsets = [0, 512], sizes = [4, 256], strides = [1, 1]} : vector<4x768xf32> to vector<4x256xf32>
    %168 = arith.mulf %166, %134 : vector<4x256xf32>
    %169 = arith.mulf %165, %164 : vector<4x256xf32>
    %170 = arith.addf %168, %169 : vector<4x256xf32>
    %171 = math.tanh %170 : vector<4x256xf32>
    %172 = arith.mulf %167, %171 : vector<4x256xf32>
    %173 = vector.extract_strided_slice %172 {offsets = [0, 0], sizes = [2, 256], strides = [1, 1]} : vector<4x256xf32> to vector<2x256xf32>
    %174 = vector.shape_cast %173 : vector<2x256xf32> to vector<1x2x256xf32>
    %175 = arith.index_cast %c4_i32 : i32 to index
    %c0_63 = arith.constant 0 : index
    %c0_64 = arith.constant 0 : index
    %176 = vector.load %arg4[%175, %c0_63, %c0_64] : memref<8x2x512xf32, #tpu.memory_space<vmem>>, vector<1x2x256xf32>
    tpu.vector_store %arg4[%175, %c0_63, %c0_64], %174 {strides = array<i32>} : memref<8x2x512xf32, #tpu.memory_space<vmem>>, vector<1x2x256xf32>,
    %177 = vector.extract_strided_slice %172 {offsets = [2, 0], sizes = [2, 256], strides = [1, 1]} : vector<4x256xf32> to vector<2x256xf32>
    %178 = vector.shape_cast %177 : vector<2x256xf32> to vector<1x2x256xf32>
    %c7_i32_65 = arith.constant 7 : i32
    %179 = arith.subi %c7_i32_65, %c4_i32 : i32
    %180 = arith.index_cast %179 : i32 to index
    %c0_66 = arith.constant 0 : index
    %c256_67 = arith.constant 256 : index
    %181 = vector.load %arg4[%180, %c0_66, %c256_67] : memref<8x2x512xf32, #tpu.memory_space<vmem>>, vector<1x2x256xf32>
    tpu.vector_store %arg4[%180, %c0_66, %c256_67], %178 {strides = array<i32>} : memref<8x2x512xf32, #tpu.memory_space<vmem>>, vector<1x2x256xf32>,
    %c5_i32 = arith.constant 5 : i32
    %182 = vector.extract_strided_slice %172 {offsets = [0, 0], sizes = [2, 256], strides = [1, 1]} : vector<4x256xf32> to vector<2x256xf32>
    %c0_68 = arith.constant 0 : index
    %c0_69 = arith.constant 0 : index
    %183 = vector.load %arg2[%c0_68, %c0_69] : memref<256x1024xf32, #tpu.memory_space<vmem>>, vector<256x1024xf32>
    %cst_70 = arith.constant dense<0.000000e+00> : vector<2x1024xf32>
    %184 = tpu.matmul %182, %183, %cst_70 {dimension_numbers = #tpu.dot_dimension_numbers<[1], [0], [0], [1], [0, 0, 1, 1], [], []>} : vector<2x256xf32>, vector<256x1024xf32>, vector<2x1024xf32> -> vector<2x1024xf32>
    %185 = vector.extract_strided_slice %172 {offsets = [2, 0], sizes = [2, 256], strides = [1, 1]} : vector<4x256xf32> to vector<2x256xf32>
    %c0_71 = arith.constant 0 : index
    %c0_72 = arith.constant 0 : index
    %186 = vector.load %arg3[%c0_71, %c0_72] : memref<256x1024xf32, #tpu.memory_space<vmem>>, vector<256x1024xf32>
    %cst_73 = arith.constant dense<0.000000e+00> : vector<2x1024xf32>
    %187 = tpu.matmul %185, %186, %cst_73 {dimension_numbers = #tpu.dot_dimension_numbers<[1], [0], [0], [1], [0, 0, 1, 1], [], []>} : vector<2x256xf32>, vector<256x1024xf32>, vector<2x1024xf32> -> vector<2x1024xf32>
    %188 = arith.index_cast %c5_i32 : i32 to index
    %c0_74 = arith.constant 0 : index
    %c0_75 = arith.constant 0 : index
    %189 = vector.load %arg1[%188, %c0_74, %c0_75] : memref<8x4x1024xf32, #tpu.memory_space<vmem>>, vector<1x4x1024xf32>
    %190 = vector.shape_cast %189 : vector<1x4x1024xf32> to vector<4x1024xf32>
    %191 = tpu.concatenate %184, %187 in 0 : vector<2x1024xf32>, vector<2x1024xf32> -> vector<4x1024xf32>
    %192 = arith.addf %190, %191 : vector<4x1024xf32>
    %193 = vector.extract_strided_slice %192 {offsets = [0, 0], sizes = [4, 768], strides = [1, 1]} : vector<4x1024xf32> to vector<4x768xf32>
    %194 = arith.negf %193 : vector<4x768xf32>
    %195 = math.exp %194 : vector<4x768xf32>
    %cst_76 = arith.constant 1.000000e+00 : f32
    %196 = vector.broadcast %cst_76 : f32 to vector<4x768xf32>
    %197 = arith.addf %196, %195 : vector<4x768xf32>
    %198 = arith.divf %196, %197 : vector<4x768xf32>
    %199 = vector.extract_strided_slice %192 {offsets = [0, 768], sizes = [4, 256], strides = [1, 1]} : vector<4x1024xf32> to vector<4x256xf32>
    %200 = math.tanh %199 : vector<4x256xf32>
    %201 = vector.extract_strided_slice %198 {offsets = [0, 0], sizes = [4, 256], strides = [1, 1]} : vector<4x768xf32> to vector<4x256xf32>
    %202 = vector.extract_strided_slice %198 {offsets = [0, 256], sizes = [4, 256], strides = [1, 1]} : vector<4x768xf32> to vector<4x256xf32>
    %203 = vector.extract_strided_slice %198 {offsets = [0, 512], sizes = [4, 256], strides = [1, 1]} : vector<4x768xf32> to vector<4x256xf32>
    %204 = arith.mulf %202, %170 : vector<4x256xf32>
    %205 = arith.mulf %201, %200 : vector<4x256xf32>
    %206 = arith.addf %204, %205 : vector<4x256xf32>
    %207 = math.tanh %206 : vector<4x256xf32>
    %208 = arith.mulf %203, %207 : vector<4x256xf32>
    %209 = vector.extract_strided_slice %208 {offsets = [0, 0], sizes = [2, 256], strides = [1, 1]} : vector<4x256xf32> to vector<2x256xf32>
    %210 = vector.shape_cast %209 : vector<2x256xf32> to vector<1x2x256xf32>
    %211 = arith.index_cast %c5_i32 : i32 to index
    %c0_77 = arith.constant 0 : index
    %c0_78 = arith.constant 0 : index
    %212 = vector.load %arg4[%211, %c0_77, %c0_78] : memref<8x2x512xf32, #tpu.memory_space<vmem>>, vector<1x2x256xf32>
    tpu.vector_store %arg4[%211, %c0_77, %c0_78], %210 {strides = array<i32>} : memref<8x2x512xf32, #tpu.memory_space<vmem>>, vector<1x2x256xf32>,
    %213 = vector.extract_strided_slice %208 {offsets = [2, 0], sizes = [2, 256], strides = [1, 1]} : vector<4x256xf32> to vector<2x256xf32>
    %214 = vector.shape_cast %213 : vector<2x256xf32> to vector<1x2x256xf32>
    %c7_i32_79 = arith.constant 7 : i32
    %215 = arith.subi %c7_i32_79, %c5_i32 : i32
    %216 = arith.index_cast %215 : i32 to index
    %c0_80 = arith.constant 0 : index
    %c256_81 = arith.constant 256 : index
    %217 = vector.load %arg4[%216, %c0_80, %c256_81] : memref<8x2x512xf32, #tpu.memory_space<vmem>>, vector<1x2x256xf32>
    tpu.vector_store %arg4[%216, %c0_80, %c256_81], %214 {strides = array<i32>} : memref<8x2x512xf32, #tpu.memory_space<vmem>>, vector<1x2x256xf32>,
    %c6_i32 = arith.constant 6 : i32
    %218 = vector.extract_strided_slice %208 {offsets = [0, 0], sizes = [2, 256], strides = [1, 1]} : vector<4x256xf32> to vector<2x256xf32>
    %c0_82 = arith.constant 0 : index
    %c0_83 = arith.constant 0 : index
    %219 = vector.load %arg2[%c0_82, %c0_83] : memref<256x1024xf32, #tpu.memory_space<vmem>>, vector<256x1024xf32>
    %cst_84 = arith.constant dense<0.000000e+00> : vector<2x1024xf32>
    %220 = tpu.matmul %218, %219, %cst_84 {dimension_numbers = #tpu.dot_dimension_numbers<[1], [0], [0], [1], [0, 0, 1, 1], [], []>} : vector<2x256xf32>, vector<256x1024xf32>, vector<2x1024xf32> -> vector<2x1024xf32>
    %221 = vector.extract_strided_slice %208 {offsets = [2, 0], sizes = [2, 256], strides = [1, 1]} : vector<4x256xf32> to vector<2x256xf32>
    %c0_85 = arith.constant 0 : index
    %c0_86 = arith.constant 0 : index
    %222 = vector.load %arg3[%c0_85, %c0_86] : memref<256x1024xf32, #tpu.memory_space<vmem>>, vector<256x1024xf32>
    %cst_87 = arith.constant dense<0.000000e+00> : vector<2x1024xf32>
    %223 = tpu.matmul %221, %222, %cst_87 {dimension_numbers = #tpu.dot_dimension_numbers<[1], [0], [0], [1], [0, 0, 1, 1], [], []>} : vector<2x256xf32>, vector<256x1024xf32>, vector<2x1024xf32> -> vector<2x1024xf32>
    %224 = arith.index_cast %c6_i32 : i32 to index
    %c0_88 = arith.constant 0 : index
    %c0_89 = arith.constant 0 : index
    %225 = vector.load %arg1[%224, %c0_88, %c0_89] : memref<8x4x1024xf32, #tpu.memory_space<vmem>>, vector<1x4x1024xf32>
    %226 = vector.shape_cast %225 : vector<1x4x1024xf32> to vector<4x1024xf32>
    %227 = tpu.concatenate %220, %223 in 0 : vector<2x1024xf32>, vector<2x1024xf32> -> vector<4x1024xf32>
    %228 = arith.addf %226, %227 : vector<4x1024xf32>
    %229 = vector.extract_strided_slice %228 {offsets = [0, 0], sizes = [4, 768], strides = [1, 1]} : vector<4x1024xf32> to vector<4x768xf32>
    %230 = arith.negf %229 : vector<4x768xf32>
    %231 = math.exp %230 : vector<4x768xf32>
    %cst_90 = arith.constant 1.000000e+00 : f32
    %232 = vector.broadcast %cst_90 : f32 to vector<4x768xf32>
    %233 = arith.addf %232, %231 : vector<4x768xf32>
    %234 = arith.divf %232, %233 : vector<4x768xf32>
    %235 = vector.extract_strided_slice %228 {offsets = [0, 768], sizes = [4, 256], strides = [1, 1]} : vector<4x1024xf32> to vector<4x256xf32>
    %236 = math.tanh %235 : vector<4x256xf32>
    %237 = vector.extract_strided_slice %234 {offsets = [0, 0], sizes = [4, 256], strides = [1, 1]} : vector<4x768xf32> to vector<4x256xf32>
    %238 = vector.extract_strided_slice %234 {offsets = [0, 256], sizes = [4, 256], strides = [1, 1]} : vector<4x768xf32> to vector<4x256xf32>
    %239 = vector.extract_strided_slice %234 {offsets = [0, 512], sizes = [4, 256], strides = [1, 1]} : vector<4x768xf32> to vector<4x256xf32>
    %240 = arith.mulf %238, %206 : vector<4x256xf32>
    %241 = arith.mulf %237, %236 : vector<4x256xf32>
    %242 = arith.addf %240, %241 : vector<4x256xf32>
    %243 = math.tanh %242 : vector<4x256xf32>
    %244 = arith.mulf %239, %243 : vector<4x256xf32>
    %245 = vector.extract_strided_slice %244 {offsets = [0, 0], sizes = [2, 256], strides = [1, 1]} : vector<4x256xf32> to vector<2x256xf32>
    %246 = vector.shape_cast %245 : vector<2x256xf32> to vector<1x2x256xf32>
    %247 = arith.index_cast %c6_i32 : i32 to index
    %c0_91 = arith.constant 0 : index
    %c0_92 = arith.constant 0 : index
    %248 = vector.load %arg4[%247, %c0_91, %c0_92] : memref<8x2x512xf32, #tpu.memory_space<vmem>>, vector<1x2x256xf32>
    tpu.vector_store %arg4[%247, %c0_91, %c0_92], %246 {strides = array<i32>} : memref<8x2x512xf32, #tpu.memory_space<vmem>>, vector<1x2x256xf32>,
    %249 = vector.extract_strided_slice %244 {offsets = [2, 0], sizes = [2, 256], strides = [1, 1]} : vector<4x256xf32> to vector<2x256xf32>
    %250 = vector.shape_cast %249 : vector<2x256xf32> to vector<1x2x256xf32>
    %c7_i32_93 = arith.constant 7 : i32
    %251 = arith.subi %c7_i32_93, %c6_i32 : i32
    %252 = arith.index_cast %251 : i32 to index
    %c0_94 = arith.constant 0 : index
    %c256_95 = arith.constant 256 : index
    %253 = vector.load %arg4[%252, %c0_94, %c256_95] : memref<8x2x512xf32, #tpu.memory_space<vmem>>, vector<1x2x256xf32>
    tpu.vector_store %arg4[%252, %c0_94, %c256_95], %250 {strides = array<i32>} : memref<8x2x512xf32, #tpu.memory_space<vmem>>, vector<1x2x256xf32>,
    %c7_i32_96 = arith.constant 7 : i32
    %254 = vector.extract_strided_slice %244 {offsets = [0, 0], sizes = [2, 256], strides = [1, 1]} : vector<4x256xf32> to vector<2x256xf32>
    %c0_97 = arith.constant 0 : index
    %c0_98 = arith.constant 0 : index
    %255 = vector.load %arg2[%c0_97, %c0_98] : memref<256x1024xf32, #tpu.memory_space<vmem>>, vector<256x1024xf32>
    %cst_99 = arith.constant dense<0.000000e+00> : vector<2x1024xf32>
    %256 = tpu.matmul %254, %255, %cst_99 {dimension_numbers = #tpu.dot_dimension_numbers<[1], [0], [0], [1], [0, 0, 1, 1], [], []>} : vector<2x256xf32>, vector<256x1024xf32>, vector<2x1024xf32> -> vector<2x1024xf32>
    %257 = vector.extract_strided_slice %244 {offsets = [2, 0], sizes = [2, 256], strides = [1, 1]} : vector<4x256xf32> to vector<2x256xf32>
    %c0_100 = arith.constant 0 : index
    %c0_101 = arith.constant 0 : index
    %258 = vector.load %arg3[%c0_100, %c0_101] : memref<256x1024xf32, #tpu.memory_space<vmem>>, vector<256x1024xf32>
    %cst_102 = arith.constant dense<0.000000e+00> : vector<2x1024xf32>
    %259 = tpu.matmul %257, %258, %cst_102 {dimension_numbers = #tpu.dot_dimension_numbers<[1], [0], [0], [1], [0, 0, 1, 1], [], []>} : vector<2x256xf32>, vector<256x1024xf32>, vector<2x1024xf32> -> vector<2x1024xf32>
    %260 = arith.index_cast %c7_i32_96 : i32 to index
    %c0_103 = arith.constant 0 : index
    %c0_104 = arith.constant 0 : index
    %261 = vector.load %arg1[%260, %c0_103, %c0_104] : memref<8x4x1024xf32, #tpu.memory_space<vmem>>, vector<1x4x1024xf32>
    %262 = vector.shape_cast %261 : vector<1x4x1024xf32> to vector<4x1024xf32>
    %263 = tpu.concatenate %256, %259 in 0 : vector<2x1024xf32>, vector<2x1024xf32> -> vector<4x1024xf32>
    %264 = arith.addf %262, %263 : vector<4x1024xf32>
    %265 = vector.extract_strided_slice %264 {offsets = [0, 0], sizes = [4, 768], strides = [1, 1]} : vector<4x1024xf32> to vector<4x768xf32>
    %266 = arith.negf %265 : vector<4x768xf32>
    %267 = math.exp %266 : vector<4x768xf32>
    %cst_105 = arith.constant 1.000000e+00 : f32
    %268 = vector.broadcast %cst_105 : f32 to vector<4x768xf32>
    %269 = arith.addf %268, %267 : vector<4x768xf32>
    %270 = arith.divf %268, %269 : vector<4x768xf32>
    %271 = vector.extract_strided_slice %264 {offsets = [0, 768], sizes = [4, 256], strides = [1, 1]} : vector<4x1024xf32> to vector<4x256xf32>
    %272 = math.tanh %271 : vector<4x256xf32>
    %273 = vector.extract_strided_slice %270 {offsets = [0, 0], sizes = [4, 256], strides = [1, 1]} : vector<4x768xf32> to vector<4x256xf32>
    %274 = vector.extract_strided_slice %270 {offsets = [0, 256], sizes = [4, 256], strides = [1, 1]} : vector<4x768xf32> to vector<4x256xf32>
    %275 = vector.extract_strided_slice %270 {offsets = [0, 512], sizes = [4, 256], strides = [1, 1]} : vector<4x768xf32> to vector<4x256xf32>
    %276 = arith.mulf %274, %242 : vector<4x256xf32>
    %277 = arith.mulf %273, %272 : vector<4x256xf32>
    %278 = arith.addf %276, %277 : vector<4x256xf32>
    %279 = math.tanh %278 : vector<4x256xf32>
    %280 = arith.mulf %275, %279 : vector<4x256xf32>
    %281 = vector.extract_strided_slice %280 {offsets = [0, 0], sizes = [2, 256], strides = [1, 1]} : vector<4x256xf32> to vector<2x256xf32>
    %282 = vector.shape_cast %281 : vector<2x256xf32> to vector<1x2x256xf32>
    %283 = arith.index_cast %c7_i32_96 : i32 to index
    %c0_106 = arith.constant 0 : index
    %c0_107 = arith.constant 0 : index
    %284 = vector.load %arg4[%283, %c0_106, %c0_107] : memref<8x2x512xf32, #tpu.memory_space<vmem>>, vector<1x2x256xf32>
    tpu.vector_store %arg4[%283, %c0_106, %c0_107], %282 {strides = array<i32>} : memref<8x2x512xf32, #tpu.memory_space<vmem>>, vector<1x2x256xf32>,
    %285 = vector.extract_strided_slice %280 {offsets = [2, 0], sizes = [2, 256], strides = [1, 1]} : vector<4x256xf32> to vector<2x256xf32>
    %286 = vector.shape_cast %285 : vector<2x256xf32> to vector<1x2x256xf32>
    %c7_i32_108 = arith.constant 7 : i32
    %287 = arith.subi %c7_i32_108, %c7_i32_96 : i32
    %288 = arith.index_cast %287 : i32 to index
    %c0_109 = arith.constant 0 : index
    %c256_110 = arith.constant 256 : index
    %289 = vector.load %arg4[%288, %c0_109, %c256_110] : memref<8x2x512xf32, #tpu.memory_space<vmem>>, vector<1x2x256xf32>
    tpu.vector_store %arg4[%288, %c0_109, %c256_110], %286 {strides = array<i32>} : memref<8x2x512xf32, #tpu.memory_space<vmem>>, vector<1x2x256xf32>,
    %c8_i32 = arith.constant 8 : i32
    return
  }
  func.func @transform_0(%arg0: i32) -> (i32, i32, i32) {
    %c0_i32 = arith.constant 0 : i32
    %c0_i32_0 = arith.constant 0 : i32
    %c0_i32_1 = arith.constant 0 : i32
    %c0_i32_2 = arith.constant 0 : i32
    return %c0_i32, %c0_i32_0, %c0_i32_1 : i32, i32, i32
  }
  func.func @transform_1(%arg0: i32) -> (i32, i32) {
    %c0_i32 = arith.constant 0 : i32
    %c0_i32_0 = arith.constant 0 : i32
    %c0_i32_1 = arith.constant 0 : i32
    return %c0_i32, %c0_i32_0 : i32, i32
  }
  func.func @transform_2(%arg0: i32) -> (i32, i32) {
    %c0_i32 = arith.constant 0 : i32
    %c0_i32_0 = arith.constant 0 : i32
    %c0_i32_1 = arith.constant 0 : i32
    return %c0_i32, %c0_i32_0 : i32, i32
  }
  func.func @transform_3(%arg0: i32) -> (i32, i32, i32) {
    %c0_i32 = arith.constant 0 : i32
    %c0_i32_0 = arith.constant 0 : i32
    %c0_i32_1 = arith.constant 0 : i32
    %c0_i32_2 = arith.constant 0 : i32
    return %c0_i32, %c0_i32_0, %c0_i32_1 : i32, i32, i32
  }
}

</mosaic_0001>

<llo_original>
// kernel: tpu_custom_call.1
$region0: #{tpu_custom_call.1}
  #allocation0 [shape = 'u32[]', space=smem, size = 0x4, offset = 0x4, fixed_abs, tag = 'smem constant byte address 0x4 - core index']
  #allocation1 [shape = 'u32[144,128]{1,0:T(1,128)}', space=vmem, size = 0x12000, scoped, tag = 'internal scratch']
  %s0 = inlined_call_operand.hbm [shape: f32[8,4,1024], index: 0, kind: input, shape index: {}]
  %s1 = inlined_call_operand.hbm [shape: f32[256,1024], index: 1, kind: input, shape index: {}]
  %s2 = inlined_call_operand.hbm [shape: f32[256,1024], index: 2, kind: input, shape index: {}]
  %s3 = inlined_call_operand.hbm [shape: f32[8,2,512], index: 3, kind: output, shape index: {}]
  %s4 = sld [smem:[#allocation0]]
  $region34: #{tpu_custom_call.1} parent=0
    _
  %s6 = ssub.s32 1, %s4
  %s7 = scalar_select 0, %s6, %s4
  $region1: #{tpu_custom_call.1} parent=0
    #allocation2 [shape = 'u8[131072]{0}', space=vmem, size = 0x20000, scoped, tag = 'input window, operand 0, single buffered']
    #allocation3 [shape = 's32[1]{0}', space=sflag, size = 0x4, scoped, tag = 'scoped memory for tpu_custom_call.1']
    #allocation4 [shape = 's32[1]{0}', space=sflag, size = 0x4, scoped, tag = 'scoped memory for tpu_custom_call.1']
    #allocation5 [shape = 'u8[1048576]{0}', space=vmem, size = 0x100000, scoped, tag = 'input window, operand 1, single buffered']
    #allocation6 [shape = 's32[1]{0}', space=sflag, size = 0x4, scoped, tag = 'scoped memory for tpu_custom_call.1']
    #allocation7 [shape = 'u8[1048576]{0}', space=vmem, size = 0x100000, scoped, tag = 'input window, operand 2, single buffered']
    #allocation8 [shape = 'u8[32768]{0}', space=vmem, size = 0x8000, scoped, tag = 'output window, operand 0, single buffered']
    %8 = vsyncpa [#allocation3], 0
    %9 = vsyncpa [#allocation6], 0
    %10 = vsyncpa [#allocation4], 0
    // Predicated region
    $region2: #{tpu_custom_call.1} parent=1 // pred_check
      _
    $region3: #{tpu_custom_call.1} parent=1 // pred_check_branch
      %12 = sbr.rel (0) target = $region5
    $region4: #{tpu_custom_call.1} parent=1 // pred_region
      %s14 = ssub.s32 4096, 4096
      %15 = vsyncadd [#allocation3], %s14
      %s16 = sshll.u32 [#allocation2], 4
      %s17 = int_to_ptr.vmem [resolvable:$true] %s16
      %22 = dma.hbm_to_vmem [thread:$0]  %s0, 4096, %s17, [#allocation3], 512, 512, 32
    $region5: #{tpu_custom_call.1} parent=1 // pred_fallthru
      _
    // Predicated region
    $region6: #{tpu_custom_call.1} parent=1 // pred_check
      _
    $region7: #{tpu_custom_call.1} parent=1 // pred_check_branch
      %24 = sbr.rel (0) target = $region9
    $region8: #{tpu_custom_call.1} parent=1 // pred_region
      %s26 = ssub.s32 32768, 32768
      %27 = vsyncadd [#allocation6], %s26
      %s28 = sshll.u32 [#allocation5], 4
      %s29 = int_to_ptr.vmem [resolvable:$true] %s28
      %34 = dma.hbm_to_vmem [thread:$0]  %s1, 32768, %s29, [#allocation6], 1024, 1024, 64
    $region9: #{tpu_custom_call.1} parent=1 // pred_fallthru
      _
    // Predicated region
    $region10: #{tpu_custom_call.1} parent=1 // pred_check
      _
    $region11: #{tpu_custom_call.1} parent=1 // pred_check_branch
      %36 = sbr.rel (0) target = $region13
    $region12: #{tpu_custom_call.1} parent=1 // pred_region
      %s38 = ssub.s32 32768, 32768
      %39 = vsyncadd [#allocation6], %s38
      %s40 = sshll.u32 [#allocation7], 4
      %s41 = int_to_ptr.vmem [resolvable:$true] %s40
      %46 = dma.hbm_to_vmem [thread:$0]  %s2, 32768, %s41, [#allocation6], 1024, 1024, 64
    $region13: #{tpu_custom_call.1} parent=1 // pred_fallthru
      _
    // Predicated region
    $region14: #{tpu_custom_call.1} parent=1 // pred_check
      _
    $region15: #{tpu_custom_call.1} parent=1 // pred_check_branch
      %48 = sbr.rel (0) target = $region17
    $region16: #{tpu_custom_call.1} parent=1 // pred_region
      %49 = dma.done [#allocation3], 4096
    $region17: #{tpu_custom_call.1} parent=1 // pred_fallthru
      _
    // Predicated region
    $region18: #{tpu_custom_call.1} parent=1 // pred_check
      _
    $region19: #{tpu_custom_call.1} parent=1 // pred_check_branch
      %51 = sbr.rel (0) target = $region21
    $region20: #{tpu_custom_call.1} parent=1 // pred_region
      %52 = dma.done [#allocation6], 32768
    $region21: #{tpu_custom_call.1} parent=1 // pred_fallthru
      _
    // Predicated region
    $region22: #{tpu_custom_call.1} parent=1 // pred_check
      _
    $region23: #{tpu_custom_call.1} parent=1 // pred_check_branch
      %54 = sbr.rel (0) target = $region25
    $region24: #{tpu_custom_call.1} parent=1 // pred_region
      %55 = dma.done [#allocation6], 32768
    $region25: #{tpu_custom_call.1} parent=1 // pred_fallthru
      _
    %v56 = vld [vmem:[#allocation5] sm:$0xff]
    %v57 = vld [vmem:[#allocation5 + $0x8] sm:$0xff]
    %v58 = vld [vmem:[#allocation5 + $0x10] sm:$0xff]
    %v59 = vld [vmem:[#allocation5 + $0x18] sm:$0xff]
    %v60 = vld [vmem:[#allocation5 + $0x20] sm:$0xff]
    %v61 = vld [vmem:[#allocation5 + $0x28] sm:$0xff]
    %v62 = vld [vmem:[#allocation5 + $0x30] sm:$0xff]
    %v63 = vld [vmem:[#allocation5 + $0x38] sm:$0xff]
    %v64 = vld [vmem:[#allocation5 + $0x40] sm:$0xff]
    %v65 = vld [vmem:[#allocation5 + $0x48] sm:$0xff]
    %v66 = vld [vmem:[#allocation5 + $0x50] sm:$0xff]
    %v67 = vld [vmem:[#allocation5 + $0x58] sm:$0xff]
    %v68 = vld [vmem:[#allocation5 + $0x60] sm:$0xff]
    %v69 = vld [vmem:[#allocation5 + $0x68] sm:$0xff]
    %v70 = vld [vmem:[#allocation5 + $0x70] sm:$0xff]
    %v71 = vld [vmem:[#allocation5 + $0x78] sm:$0xff]
    %v72 = vld [vmem:[#allocation5 + $0x80] sm:$0xff]
    %v73 = vld [vmem:[#allocation5 + $0x88] sm:$0xff]
    %v74 = vld [vmem:[#allocation5 + $0x90] sm:$0xff]
    %v75 = vld [vmem:[#allocation5 + $0x98] sm:$0xff]
    %v76 = vld [vmem:[#allocation5 + $0xa0] sm:$0xff]
    %v77 = vld [vmem:[#allocation5 + $0xa8] sm:$0xff]
    %v78 = vld [vmem:[#allocation5 + $0xb0] sm:$0xff]
    %v79 = vld [vmem:[#allocation5 + $0xb8] sm:$0xff]
    %v80 = vld [vmem:[#allocation5 + $0xc0] sm:$0xff]
    %v81 = vld [vmem:[#allocation5 + $0xc8] sm:$0xff]
    %v82 = vld [vmem:[#allocation5 + $0xd0] sm:$0xff]
    %v83 = vld [vmem:[#allocation5 + $0xd8] sm:$0xff]
    %v84 = vld [vmem:[#allocation5 + $0xe0] sm:$0xff]
    %v85 = vld [vmem:[#allocation5 + $0xe8] sm:$0xff]
    %v86 = vld [vmem:[#allocation5 + $0xf0] sm:$0xff]
    %v87 = vld [vmem:[#allocation5 + $0xf8] sm:$0xff]
    %v88 = vld [vmem:[#allocation5 + $0x100] sm:$0xff]
    %v89 = vld [vmem:[#allocation5 + $0x108] sm:$0xff]
    %v90 = vld [vmem:[#allocation5 + $0x110] sm:$0xff]
    %v91 = vld [vmem:[#allocation5 + $0x118] sm:$0xff]
    %v92 = vld [vmem:[#allocation5 + $0x120] sm:$0xff]
    %v93 = vld [vmem:[#allocation5 + $0x128] sm:$0xff]
    %v94 = vld [vmem:[#allocation5 + $0x130] sm:$0xff]
    %v95 = vld [vmem:[#allocation5 + $0x138] sm:$0xff]
    %v96 = vld [vmem:[#allocation5 + $0x140] sm:$0xff]
    %v97 = vld [vmem:[#allocation5 + $0x148] sm:$0xff]
    %v98 = vld [vmem:[#allocation5 + $0x150] sm:$0xff]
    %v99 = vld [vmem:[#allocation5 + $0x158] sm:$0xff]
    %v100 = vld [vmem:[#allocation5 + $0x160] sm:$0xff]
    %v101 = vld [vmem:[#allocation5 + $0x168] sm:$0xff]
    %v102 = vld [vmem:[#allocation5 + $0x170] sm:$0xff]
    %v103 = vld [vmem:[#allocation5 + $0x178] sm:$0xff]
    %v104 = vld [vmem:[#allocation5 + $0x180] sm:$0xff]
    %v105 = vld [vmem:[#allocation5 + $0x188] sm:$0xff]
    %v106 = vld [vmem:[#allocation5 + $0x190] sm:$0xff]
    %v107 = vld [vmem:[#allocation5 + $0x198] sm:$0xff]
    %v108 = vld [vmem:[#allocation5 + $0x1a0] sm:$0xff]
    %v109 = vld [vmem:[#allocation5 + $0x1a8] sm:$0xff]
    %v110 = vld [vmem:[#allocation5 + $0x1b0] sm:$0xff]
    %v111 = vld [vmem:[#allocation5 + $0x1b8] sm:$0xff]
    %v112 = vld [vmem:[#allocation5 + $0x1c0] sm:$0xff]
    %v113 = vld [vmem:[#allocation5 + $0x1c8] sm:$0xff]
    %v114 = vld [vmem:[#allocation5 + $0x1d0] sm:$0xff]
    %v115 = vld [vmem:[#allocation5 + $0x1d8] sm:$0xff]
    %v116 = vld [vmem:[#allocation5 + $0x1e0] sm:$0xff]
    %v117 = vld [vmem:[#allocation5 + $0x1e8] sm:$0xff]
    %v118 = vld [vmem:[#allocation5 + $0x1f0] sm:$0xff]
    %v119 = vld [vmem:[#allocation5 + $0x1f8] sm:$0xff]
    %v120 = vld [vmem:[#allocation5 + $0x200] sm:$0xff]
    %v121 = vld [vmem:[#allocation5 + $0x208] sm:$0xff]
    %v122 = vld [vmem:[#allocation5 + $0x210] sm:$0xff]
    %v123 = vld [vmem:[#allocation5 + $0x218] sm:$0xff]
    %v124 = vld [vmem:[#allocation5 + $0x220] sm:$0xff]
    %v125 = vld [vmem:[#allocation5 + $0x228] sm:$0xff]
    %v126 = vld [vmem:[#allocation5 + $0x230] sm:$0xff]
    %v127 = vld [vmem:[#allocation5 + $0x238] sm:$0xff]
    %v128 = vld [vmem:[#allocation5 + $0x240] sm:$0xff]
    %v129 = vld [vmem:[#allocation5 + $0x248] sm:$0xff]
    %v130 = vld [vmem:[#allocation5 + $0x250] sm:$0xff]
    %v131 = vld [vmem:[#allocation5 + $0x258] sm:$0xff]
    %v132 = vld [vmem:[#allocation5 + $0x260] sm:$0xff]
    %v133 = vld [vmem:[#allocation5 + $0x268] sm:$0xff]
    %v134 = vld [vmem:[#allocation5 + $0x270] sm:$0xff]
    %v135 = vld [vmem:[#allocation5 + $0x278] sm:$0xff]
    %v136 = vld [vmem:[#allocation5 + $0x280] sm:$0xff]
    %v137 = vld [vmem:[#allocation5 + $0x288] sm:$0xff]
    %v138 = vld [vmem:[#allocation5 + $0x290] sm:$0xff]
    %v139 = vld [vmem:[#allocation5 + $0x298] sm:$0xff]
    %v140 = vld [vmem:[#allocation5 + $0x2a0] sm:$0xff]
    %v141 = vld [vmem:[#allocation5 + $0x2a8] sm:$0xff]
    %v142 = vld [vmem:[#allocation5 + $0x2b0] sm:$0xff]
    %v143 = vld [vmem:[#allocation5 + $0x2b8] sm:$0xff]
    %v144 = vld [vmem:[#allocation5 + $0x2c0] sm:$0xff]
    %v145 = vld [vmem:[#allocation5 + $0x2c8] sm:$0xff]
    %v146 = vld [vmem:[#allocation5 + $0x2d0] sm:$0xff]
    %v147 = vld [vmem:[#allocation5 + $0x2d8] sm:$0xff]
    %v148 = vld [vmem:[#allocation5 + $0x2e0] sm:$0xff]
    %v149 = vld [vmem:[#allocation5 + $0x2e8] sm:$0xff]
    %v150 = vld [vmem:[#allocation5 + $0x2f0] sm:$0xff]
    %v151 = vld [vmem:[#allocation5 + $0x2f8] sm:$0xff]
    %v152 = vld [vmem:[#allocation5 + $0x300] sm:$0xff]
    %v153 = vld [vmem:[#allocation5 + $0x308] sm:$0xff]
    %v154 = vld [vmem:[#allocation5 + $0x310] sm:$0xff]
    %v155 = vld [vmem:[#allocation5 + $0x318] sm:$0xff]
    %v156 = vld [vmem:[#allocation5 + $0x320] sm:$0xff]
    %v157 = vld [vmem:[#allocation5 + $0x328] sm:$0xff]
    %v158 = vld [vmem:[#allocation5 + $0x330] sm:$0xff]
    %v159 = vld [vmem:[#allocation5 + $0x338] sm:$0xff]
    %v160 = vld [vmem:[#allocation5 + $0x340] sm:$0xff]
    %v161 = vld [vmem:[#allocation5 + $0x348] sm:$0xff]
    %v162 = vld [vmem:[#allocation5 + $0x350] sm:$0xff]
    %v163 = vld [vmem:[#allocation5 + $0x358] sm:$0xff]
    %v164 = vld [vmem:[#allocation5 + $0x360] sm:$0xff]
    %v165 = vld [vmem:[#allocation5 + $0x368] sm:$0xff]
    %v166 = vld [vmem:[#allocation5 + $0x370] sm:$0xff]
    %v167 = vld [vmem:[#allocation5 + $0x378] sm:$0xff]
    %v168 = vld [vmem:[#allocation5 + $0x380] sm:$0xff]
    %v169 = vld [vmem:[#allocation5 + $0x388] sm:$0xff]
    %v170 = vld [vmem:[#allocation5 + $0x390] sm:$0xff]
    %v171 = vld [vmem:[#allocation5 + $0x398] sm:$0xff]
    %v172 = vld [vmem:[#allocation5 + $0x3a0] sm:$0xff]
    %v173 = vld [vmem:[#allocation5 + $0x3a8] sm:$0xff]
    %v174 = vld [vmem:[#allocation5 + $0x3b0] sm:$0xff]
    %v175 = vld [vmem:[#allocation5 + $0x3b8] sm:$0xff]
    %v176 = vld [vmem:[#allocation5 + $0x3c0] sm:$0xff]
    %v177 = vld [vmem:[#allocation5 + $0x3c8] sm:$0xff]
    %v178 = vld [vmem:[#allocation5 + $0x3d0] sm:$0xff]
    %v179 = vld [vmem:[#allocation5 + $0x3d8] sm:$0xff]
    %v180 = vld [vmem:[#allocation5 + $0x3e0] sm:$0xff]
    %v181 = vld [vmem:[#allocation5 + $0x3e8] sm:$0xff]
    %v182 = vld [vmem:[#allocation5 + $0x3f0] sm:$0xff]
    %v183 = vld [vmem:[#allocation5 + $0x3f8] sm:$0xff]
    %v184 = vld [vmem:[#allocation5 + $0x400] sm:$0xff]
    %v185 = vld [vmem:[#allocation5 + $0x408] sm:$0xff]
    %v186 = vld [vmem:[#allocation5 + $0x410] sm:$0xff]
    %v187 = vld [vmem:[#allocation5 + $0x418] sm:$0xff]
    %v188 = vld [vmem:[#allocation5 + $0x420] sm:$0xff]
    %v189 = vld [vmem:[#allocation5 + $0x428] sm:$0xff]
    %v190 = vld [vmem:[#allocation5 + $0x430] sm:$0xff]
    %v191 = vld [vmem:[#allocation5 + $0x438] sm:$0xff]
    %v192 = vld [vmem:[#allocation5 + $0x440] sm:$0xff]
    %v193 = vld [vmem:[#allocation5 + $0x448] sm:$0xff]
    %v194 = vld [vmem:[#allocation5 + $0x450] sm:$0xff]
    %v195 = vld [vmem:[#allocation5 + $0x458] sm:$0xff]
    %v196 = vld [vmem:[#allocation5 + $0x460] sm:$0xff]
    %v197 = vld [vmem:[#allocation5 + $0x468] sm:$0xff]
    %v198 = vld [vmem:[#allocation5 + $0x470] sm:$0xff]
    %v199 = vld [vmem:[#allocation5 + $0x478] sm:$0xff]
    %v200 = vld [vmem:[#allocation5 + $0x480] sm:$0xff]
    %v201 = vld [vmem:[#allocation5 + $0x488] sm:$0xff]
    %v202 = vld [vmem:[#allocation5 + $0x490] sm:$0xff]
    %v203 = vld [vmem:[#allocation5 + $0x498] sm:$0xff]
    %v204 = vld [vmem:[#allocation5 + $0x4a0] sm:$0xff]
    %v205 = vld [vmem:[#allocation5 + $0x4a8] sm:$0xff]
    %v206 = vld [vmem:[#allocation5 + $0x4b0] sm:$0xff]
    %v207 = vld [vmem:[#allocation5 + $0x4b8] sm:$0xff]
    %v208 = vld [vmem:[#allocation5 + $0x4c0] sm:$0xff]
    %v209 = vld [vmem:[#allocation5 + $0x4c8] sm:$0xff]
    %v210 = vld [vmem:[#allocation5 + $0x4d0] sm:$0xff]
    %v211 = vld [vmem:[#allocation5 + $0x4d8] sm:$0xff]
    %v212 = vld [vmem:[#allocation5 + $0x4e0] sm:$0xff]
    %v213 = vld [vmem:[#allocation5 + $0x4e8] sm:$0xff]
    %v214 = vld [vmem:[#allocation5 + $0x4f0] sm:$0xff]
    %v215 = vld [vmem:[#allocation5 + $0x4f8] sm:$0xff]
    %v216 = vld [vmem:[#allocation5 + $0x500] sm:$0xff]
    %v217 = vld [vmem:[#allocation5 + $0x508] sm:$0xff]
    %v218 = vld [vmem:[#allocation5 + $0x510] sm:$0xff]
    %v219 = vld [vmem:[#allocation5 + $0x518] sm:$0xff]
    %v220 = vld [vmem:[#allocation5 + $0x520] sm:$0xff]
    %v221 = vld [vmem:[#allocation5 + $0x528] sm:$0xff]
    %v222 = vld [vmem:[#allocation5 + $0x530] sm:$0xff]
    %v223 = vld [vmem:[#allocation5 + $0x538] sm:$0xff]
    %v224 = vld [vmem:[#allocation5 + $0x540] sm:$0xff]
    %v225 = vld [vmem:[#allocation5 + $0x548] sm:$0xff]
    %v226 = vld [vmem:[#allocation5 + $0x550] sm:$0xff]
    %v227 = vld [vmem:[#allocation5 + $0x558] sm:$0xff]
    %v228 = vld [vmem:[#allocation5 + $0x560] sm:$0xff]
    %v229 = vld [vmem:[#allocation5 + $0x568] sm:$0xff]
    %v230 = vld [vmem:[#allocation5 + $0x570] sm:$0xff]
    %v231 = vld [vmem:[#allocation5 + $0x578] sm:$0xff]
    %v232 = vld [vmem:[#allocation5 + $0x580] sm:$0xff]
    %v233 = vld [vmem:[#allocation5 + $0x588] sm:$0xff]
    %v234 = vld [vmem:[#allocation5 + $0x590] sm:$0xff]
    %v235 = vld [vmem:[#allocation5 + $0x598] sm:$0xff]
    %v236 = vld [vmem:[#allocation5 + $0x5a0] sm:$0xff]
    %v237 = vld [vmem:[#allocation5 + $0x5a8] sm:$0xff]
    %v238 = vld [vmem:[#allocation5 + $0x5b0] sm:$0xff]
    %v239 = vld [vmem:[#allocation5 + $0x5b8] sm:$0xff]
    %v240 = vld [vmem:[#allocation5 + $0x5c0] sm:$0xff]
    %v241 = vld [vmem:[#allocation5 + $0x5c8] sm:$0xff]
    %v242 = vld [vmem:[#allocation5 + $0x5d0] sm:$0xff]
    %v243 = vld [vmem:[#allocation5 + $0x5d8] sm:$0xff]
    %v244 = vld [vmem:[#allocation5 + $0x5e0] sm:$0xff]
    %v245 = vld [vmem:[#allocation5 + $0x5e8] sm:$0xff]
    %v246 = vld [vmem:[#allocation5 + $0x5f0] sm:$0xff]
    %v247 = vld [vmem:[#allocation5 + $0x5f8] sm:$0xff]
    %v248 = vld [vmem:[#allocation5 + $0x600] sm:$0xff]
    %v249 = vld [vmem:[#allocation5 + $0x608] sm:$0xff]
    %v250 = vld [vmem:[#allocation5 + $0x610] sm:$0xff]
    %v251 = vld [vmem:[#allocation5 + $0x618] sm:$0xff]
    %v252 = vld [vmem:[#allocation5 + $0x620] sm:$0xff]
    %v253 = vld [vmem:[#allocation5 + $0x628] sm:$0xff]
    %v254 = vld [vmem:[#allocation5 + $0x630] sm:$0xff]
    %v255 = vld [vmem:[#allocation5 + $0x638] sm:$0xff]
    %v256 = vld [vmem:[#allocation5 + $0x640] sm:$0xff]
    %v257 = vld [vmem:[#allocation5 + $0x648] sm:$0xff]
    %v258 = vld [vmem:[#allocation5 + $0x650] sm:$0xff]
    %v259 = vld [vmem:[#allocation5 + $0x658] sm:$0xff]
    %v260 = vld [vmem:[#allocation5 + $0x660] sm:$0xff]
    %v261 = vld [vmem:[#allocation5 + $0x668] sm:$0xff]
    %v262 = vld [vmem:[#allocation5 + $0x670] sm:$0xff]
    %v263 = vld [vmem:[#allocation5 + $0x678] sm:$0xff]
    %v264 = vld [vmem:[#allocation5 + $0x680] sm:$0xff]
    %v265 = vld [vmem:[#allocation5 + $0x688] sm:$0xff]
    %v266 = vld [vmem:[#allocation5 + $0x690] sm:$0xff]
    %v267 = vld [vmem:[#allocation5 + $0x698] sm:$0xff]
    %v268 = vld [vmem:[#allocation5 + $0x6a0] sm:$0xff]
    %v269 = vld [vmem:[#allocation5 + $0x6a8] sm:$0xff]
    %v270 = vld [vmem:[#allocation5 + $0x6b0] sm:$0xff]
    %v271 = vld [vmem:[#allocation5 + $0x6b8] sm:$0xff]
    %v272 = vld [vmem:[#allocation5 + $0x6c0] sm:$0xff]
    %v273 = vld [vmem:[#allocation5 + $0x6c8] sm:$0xff]
    %v274 = vld [vmem:[#allocation5 + $0x6d0] sm:$0xff]
    %v275 = vld [vmem:[#allocation5 + $0x6d8] sm:$0xff]
    %v276 = vld [vmem:[#allocation5 + $0x6e0] sm:$0xff]
    %v277 = vld [vmem:[#allocation5 + $0x6e8] sm:$0xff]
    %v278 = vld [vmem:[#allocation5 + $0x6f0] sm:$0xff]
    %v279 = vld [vmem:[#allocation5 + $0x6f8] sm:$0xff]
    %v280 = vld [vmem:[#allocation5 + $0x700] sm:$0xff]
    %v281 = vld [vmem:[#allocation5 + $0x708] sm:$0xff]
    %v282 = vld [vmem:[#allocation5 + $0x710] sm:$0xff]
    %v283 = vld [vmem:[#allocation5 + $0x718] sm:$0xff]
    %v284 = vld [vmem:[#allocation5 + $0x720] sm:$0xff]
    %v285 = vld [vmem:[#allocation5 + $0x728] sm:$0xff]
    %v286 = vld [vmem:[#allocation5 + $0x730] sm:$0xff]
    %v287 = vld [vmem:[#allocation5 + $0x738] sm:$0xff]
    %v288 = vld [vmem:[#allocation5 + $0x740] sm:$0xff]
    %v289 = vld [vmem:[#allocation5 + $0x748] sm:$0xff]
    %v290 = vld [vmem:[#allocation5 + $0x750] sm:$0xff]
    %v291 = vld [vmem:[#allocation5 + $0x758] sm:$0xff]
    %v292 = vld [vmem:[#allocation5 + $0x760] sm:$0xff]
    %v293 = vld [vmem:[#allocation5 + $0x768] sm:$0xff]
    %v294 = vld [vmem:[#allocation5 + $0x770] sm:$0xff]
    %v295 = vld [vmem:[#allocation5 + $0x778] sm:$0xff]
    %v296 = vld [vmem:[#allocation5 + $0x780] sm:$0xff]
    %v297 = vld [vmem:[#allocation5 + $0x788] sm:$0xff]
    %v298 = vld [vmem:[#allocation5 + $0x790] sm:$0xff]
    %v299 = vld [vmem:[#allocation5 + $0x798] sm:$0xff]
    %v300 = vld [vmem:[#allocation5 + $0x7a0] sm:$0xff]
    %v301 = vld [vmem:[#allocation5 + $0x7a8] sm:$0xff]
    %v302 = vld [vmem:[#allocation5 + $0x7b0] sm:$0xff]
    %v303 = vld [vmem:[#allocation5 + $0x7b8] sm:$0xff]
    %v304 = vld [vmem:[#allocation5 + $0x7c0] sm:$0xff]
    %v305 = vld [vmem:[#allocation5 + $0x7c8] sm:$0xff]
    %v306 = vld [vmem:[#allocation5 + $0x7d0] sm:$0xff]
    %v307 = vld [vmem:[#allocation5 + $0x7d8] sm:$0xff]
    %v308 = vld [vmem:[#allocation5 + $0x7e0] sm:$0xff]
    %v309 = vld [vmem:[#allocation5 + $0x7e8] sm:$0xff]
    %v310 = vld [vmem:[#allocation5 + $0x7f0] sm:$0xff]
    %v311 = vld [vmem:[#allocation5 + $0x7f8] sm:$0xff]
    %312 = vmatprep.subr.mxu0 %v57
    %313 = vmatpush1.msra.mxu0 %v56
    %314 = vmatprep.subr.mxu0 %v65
    %315 = vmatpush1.msra.mxu0 %v64
    %316 = vmatprep.subr.mxu0 %v73
    %317 = vmatpush1.msra.mxu0 %v72
    %318 = vmatprep.subr.mxu0 %v81
    %319 = vmatpush1.msra.mxu0 %v80
    %320 = vmatprep.subr.mxu0 %v89
    %321 = vmatpush1.msra.mxu0 %v88
    %322 = vmatprep.subr.mxu0 %v97
    %323 = vmatpush1.msra.mxu0 %v96
    %324 = vmatprep.subr.mxu0 %v105
    %325 = vmatpush1.msra.mxu0 %v104
    %326 = vmatprep.subr.mxu0 %v113
    %327 = vmatpush1.msra.mxu0 %v112
    %328 = vmatprep.subr.mxu0 %v121
    %329 = vmatpush1.msra.mxu0 %v120
    %330 = vmatprep.subr.mxu0 %v129
    %331 = vmatpush1.msra.mxu0 %v128
    %332 = vmatprep.subr.mxu0 %v137
    %333 = vmatpush1.msra.mxu0 %v136
    %334 = vmatprep.subr.mxu0 %v145
    %335 = vmatpush1.msra.mxu0 %v144
    %336 = vmatprep.subr.mxu0 %v153
    %337 = vmatpush1.msra.mxu0 %v152
    %338 = vmatprep.subr.mxu0 %v161
    %339 = vmatpush1.msra.mxu0 %v160
    %340 = vmatprep.subr.mxu0 %v169
    %341 = vmatpush1.msra.mxu0 %v168
    %342 = vmatprep.subr.mxu0 %v177
    %343 = vmatpush1.msra.mxu0 %v176
    %344 = vmatprep.subr.mxu0 %v185
    %345 = vmatpush1.msra.mxu0 %v184
    %346 = vmatprep.subr.mxu0 %v193
    %347 = vmatpush1.msra.mxu0 %v192
    %348 = vmatprep.subr.mxu0 %v201
    %349 = vmatpush1.msra.mxu0 %v200
    %350 = vmatprep.subr.mxu0 %v209
    %351 = vmatpush1.msra.mxu0 %v208
    %352 = vmatprep.subr.mxu0 %v217
    %353 = vmatpush1.msra.mxu0 %v216
    %354 = vmatprep.subr.mxu0 %v225
    %355 = vmatpush1.msra.mxu0 %v224
    %356 = vmatprep.subr.mxu0 %v233
    %357 = vmatpush1.msra.mxu0 %v232
    %358 = vmatprep.subr.mxu0 %v241
    %359 = vmatpush1.msra.mxu0 %v240
    %360 = vmatprep.subr.mxu0 %v249
    %361 = vmatpush1.msra.mxu0 %v248
    %362 = vmatprep.subr.mxu0 %v257
    %363 = vmatpush1.msra.mxu0 %v256
    %364 = vmatprep.subr.mxu0 %v265
    %365 = vmatpush1.msra.mxu0 %v264
    %366 = vmatprep.subr.mxu0 %v273
    %367 = vmatpush1.msra.mxu0 %v272
    %368 = vmatprep.subr.mxu0 %v281
    %369 = vmatpush1.msra.mxu0 %v280
    %370 = vmatprep.subr.mxu0 %v289
    %371 = vmatpush1.msra.mxu0 %v288
    %372 = vmatprep.subr.mxu0 %v297
    %373 = vmatpush1.msra.mxu0 %v296
    %374 = vmatprep.subr.mxu0 %v305
    %375 = vmatpush1.msra.mxu0 %v304
    %376 = vmatprep.mubr.f32.mxu0 0.0
    %377 = vmatmul.mubr.f32.gmra.mrb[0].mxu0 0.0
    %v378 = vpop.f32.mrb[0].mxu0
    %v379 = vadd.f32 0.0, %v378
    %v380 = vpop.f32.mrb[0].mxu0
    %v381 = vadd.f32 0.0, %v380
    %382 = vdwg.mxu0
    %383 = vmatprep.subr.mxu0 %v59
    %384 = vmatpush1.msra.mxu0 %v58
    %385 = vmatprep.subr.mxu0 %v67
    %386 = vmatpush1.msra.mxu0 %v66
    %387 = vmatprep.subr.mxu0 %v75
    %388 = vmatpush1.msra.mxu0 %v74
    %389 = vmatprep.subr.mxu0 %v83
    %390 = vmatpush1.msra.mxu0 %v82
    %391 = vmatprep.subr.mxu0 %v91
    %392 = vmatpush1.msra.mxu0 %v90
    %393 = vmatprep.subr.mxu0 %v99
    %394 = vmatpush1.msra.mxu0 %v98
    %395 = vmatprep.subr.mxu0 %v107
    %396 = vmatpush1.msra.mxu0 %v106
    %397 = vmatprep.subr.mxu0 %v115
    %398 = vmatpush1.msra.mxu0 %v114
    %399 = vmatprep.subr.mxu0 %v123
    %400 = vmatpush1.msra.mxu0 %v122
    %401 = vmatprep.subr.mxu0 %v131
    %402 = vmatpush1.msra.mxu0 %v130
    %403 = vmatprep.subr.mxu0 %v139
    %404 = vmatpush1.msra.mxu0 %v138
    %405 = vmatprep.subr.mxu0 %v147
    %406 = vmatpush1.msra.mxu0 %v146
    %407 = vmatprep.subr.mxu0 %v155
    %408 = vmatpush1.msra.mxu0 %v154
    %409 = vmatprep.subr.mxu0 %v163
    %410 = vmatpush1.msra.mxu0 %v162
    %411 = vmatprep.subr.mxu0 %v171
    %412 = vmatpush1.msra.mxu0 %v170
    %413 = vmatprep.subr.mxu0 %v179
    %414 = vmatpush1.msra.mxu0 %v178
    %415 = vmatprep.subr.mxu0 %v187
    %416 = vmatpush1.msra.mxu0 %v186
    %417 = vmatprep.subr.mxu0 %v195
    %418 = vmatpush1.msra.mxu0 %v194
    %419 = vmatprep.subr.mxu0 %v203
    %420 = vmatpush1.msra.mxu0 %v202
    %421 = vmatprep.subr.mxu0 %v211
    %422 = vmatpush1.msra.mxu0 %v210
    %423 = vmatprep.subr.mxu0 %v219
    %424 = vmatpush1.msra.mxu0 %v218
    %425 = vmatprep.subr.mxu0 %v227
    %426 = vmatpush1.msra.mxu0 %v226
    %427 = vmatprep.subr.mxu0 %v235
    %428 = vmatpush1.msra.mxu0 %v234
    %429 = vmatprep.subr.mxu0 %v243
    %430 = vmatpush1.msra.mxu0 %v242
    %431 = vmatprep.subr.mxu0 %v251
    %432 = vmatpush1.msra.mxu0 %v250
    %433 = vmatprep.subr.mxu0 %v259
    %434 = vmatpush1.msra.mxu0 %v258
    %435 = vmatprep.subr.mxu0 %v267
    %436 = vmatpush1.msra.mxu0 %v266
    %437 = vmatprep.subr.mxu0 %v275
    %438 = vmatpush1.msra.mxu0 %v274
    %439 = vmatprep.subr.mxu0 %v283
    %440 = vmatpush1.msra.mxu0 %v282
    %441 = vmatprep.subr.mxu0 %v291
    %442 = vmatpush1.msra.mxu0 %v290
    %443 = vmatprep.subr.mxu0 %v299
    %444 = vmatpush1.msra.mxu0 %v298
    %445 = vmatprep.subr.mxu0 %v307
    %446 = vmatpush1.msra.mxu0 %v306
    %447 = vmatprep.mubr.f32.mxu0 0.0
    %448 = vmatmul.mubr.f32.gmra.mrb[0].mxu0 0.0
    %v449 = vpop.f32.mrb[0].mxu0
    %v450 = vadd.f32 0.0, %v449
    %v451 = vpop.f32.mrb[0].mxu0
    %v452 = vadd.f32 0.0, %v451
    %453 = vdwg.mxu0
    %454 = vmatprep.subr.mxu0 %v61
    %455 = vmatpush1.msra.mxu0 %v60
    %456 = vmatprep.subr.mxu0 %v69
    %457 = vmatpush1.msra.mxu0 %v68
    %458 = vmatprep.subr.mxu0 %v77
    %459 = vmatpush1.msra.mxu0 %v76
    %460 = vmatprep.subr.mxu0 %v85
    %461 = vmatpush1.msra.mxu0 %v84
    %462 = vmatprep.subr.mxu0 %v93
    %463 = vmatpush1.msra.mxu0 %v92
    %464 = vmatprep.subr.mxu0 %v101
    %465 = vmatpush1.msra.mxu0 %v100
    %466 = vmatprep.subr.mxu0 %v109
    %467 = vmatpush1.msra.mxu0 %v108
    %468 = vmatprep.subr.mxu0 %v117
    %469 = vmatpush1.msra.mxu0 %v116
    %470 = vmatprep.subr.mxu0 %v125
    %471 = vmatpush1.msra.mxu0 %v124
    %472 = vmatprep.subr.mxu0 %v133
    %473 = vmatpush1.msra.mxu0 %v132
    %474 = vmatprep.subr.mxu0 %v141
    %475 = vmatpush1.msra.mxu0 %v140
    %476 = vmatprep.subr.mxu0 %v149
    %477 = vmatpush1.msra.mxu0 %v148
    %478 = vmatprep.subr.mxu0 %v157
    %479 = vmatpush1.msra.mxu0 %v156
    %480 = vmatprep.subr.mxu0 %v165
    %481 = vmatpush1.msra.mxu0 %v164
    %482 = vmatprep.subr.mxu0 %v173
    %483 = vmatpush1.msra.mxu0 %v172
    %484 = vmatprep.subr.mxu0 %v181
    %485 = vmatpush1.msra.mxu0 %v180
    %486 = vmatprep.subr.mxu0 %v189
    %487 = vmatpush1.msra.mxu0 %v188
    %488 = vmatprep.subr.mxu0 %v197
    %489 = vmatpush1.msra.mxu0 %v196
    %490 = vmatprep.subr.mxu0 %v205
    %491 = vmatpush1.msra.mxu0 %v204
    %492 = vmatprep.subr.mxu0 %v213
    %493 = vmatpush1.msra.mxu0 %v212
    %494 = vmatprep.subr.mxu0 %v221
    %495 = vmatpush1.msra.mxu0 %v220
    %496 = vmatprep.subr.mxu0 %v229
    %497 = vmatpush1.msra.mxu0 %v228
    %498 = vmatprep.subr.mxu0 %v237
    %499 = vmatpush1.msra.mxu0 %v236
    %500 = vmatprep.subr.mxu0 %v245
    %501 = vmatpush1.msra.mxu0 %v244
    %502 = vmatprep.subr.mxu0 %v253
    %503 = vmatpush1.msra.mxu0 %v252
    %504 = vmatprep.subr.mxu0 %v261
    %505 = vmatpush1.msra.mxu0 %v260
    %506 = vmatprep.subr.mxu0 %v269
    %507 = vmatpush1.msra.mxu0 %v268
    %508 = vmatprep.subr.mxu0 %v277
    %509 = vmatpush1.msra.mxu0 %v276
    %510 = vmatprep.subr.mxu0 %v285
    %511 = vmatpush1.msra.mxu0 %v284
    %512 = vmatprep.subr.mxu0 %v293
    %513 = vmatpush1.msra.mxu0 %v292
    %514 = vmatprep.subr.mxu0 %v301
    %515 = vmatpush1.msra.mxu0 %v300
    %516 = vmatprep.subr.mxu0 %v309
    %517 = vmatpush1.msra.mxu0 %v308
    %518 = vmatprep.mubr.f32.mxu0 0.0
    %519 = vmatmul.mubr.f32.gmra.mrb[0].mxu0 0.0
    %v520 = vpop.f32.mrb[0].mxu0
    %v521 = vadd.f32 0.0, %v520
    %v522 = vpop.f32.mrb[0].mxu0
    %v523 = vadd.f32 0.0, %v522
    %524 = vdwg.mxu0
    %525 = vmatprep.subr.mxu0 %v63
    %526 = vmatpush1.msra.mxu0 %v62
    %527 = vmatprep.subr.mxu0 %v71
    %528 = vmatpush1.msra.mxu0 %v70
    %529 = vmatprep.subr.mxu0 %v79
    %530 = vmatpush1.msra.mxu0 %v78
    %531 = vmatprep.subr.mxu0 %v87
    %532 = vmatpush1.msra.mxu0 %v86
    %533 = vmatprep.subr.mxu0 %v95
    %534 = vmatpush1.msra.mxu0 %v94
    %535 = vmatprep.subr.mxu0 %v103
    %536 = vmatpush1.msra.mxu0 %v102
    %537 = vmatprep.subr.mxu0 %v111
    %538 = vmatpush1.msra.mxu0 %v110
    %539 = vmatprep.subr.mxu0 %v119
    %540 = vmatpush1.msra.mxu0 %v118
    %541 = vmatprep.subr.mxu0 %v127
    %542 = vmatpush1.msra.mxu0 %v126
    %543 = vmatprep.subr.mxu0 %v135
    %544 = vmatpush1.msra.mxu0 %v134
    %545 = vmatprep.subr.mxu0 %v143
    %546 = vmatpush1.msra.mxu0 %v142
    %547 = vmatprep.subr.mxu0 %v151
    %548 = vmatpush1.msra.mxu0 %v150
    %549 = vmatprep.subr.mxu0 %v159
    %550 = vmatpush1.msra.mxu0 %v158
    %551 = vmatprep.subr.mxu0 %v167
    %552 = vmatpush1.msra.mxu0 %v166
    %553 = vmatprep.subr.mxu0 %v175
    %554 = vmatpush1.msra.mxu0 %v174
    %555 = vmatprep.subr.mxu0 %v183
    %556 = vmatpush1.msra.mxu0 %v182
    %557 = vmatprep.subr.mxu0 %v191
    %558 = vmatpush1.msra.mxu0 %v190
    %559 = vmatprep.subr.mxu0 %v199
    %560 = vmatpush1.msra.mxu0 %v198
    %561 = vmatprep.subr.mxu0 %v207
    %562 = vmatpush1.msra.mxu0 %v206
    %563 = vmatprep.subr.mxu0 %v215
    %564 = vmatpush1.msra.mxu0 %v214
    %565 = vmatprep.subr.mxu0 %v223
    %566 = vmatpush1.msra.mxu0 %v222
    %567 = vmatprep.subr.mxu0 %v231
    %568 = vmatpush1.msra.mxu0 %v230
    %569 = vmatprep.subr.mxu0 %v239
    %570 = vmatpush1.msra.mxu0 %v238
    %571 = vmatprep.subr.mxu0 %v247
    %572 = vmatpush1.msra.mxu0 %v246
    %573 = vmatprep.subr.mxu0 %v255
    %574 = vmatpush1.msra.mxu0 %v254
    %575 = vmatprep.subr.mxu0 %v263
    %576 = vmatpush1.msra.mxu0 %v262
    %577 = vmatprep.subr.mxu0 %v271
    %578 = vmatpush1.msra.mxu0 %v270
    %579 = vmatprep.subr.mxu0 %v279
    %580 = vmatpush1.msra.mxu0 %v278
    %581 = vmatprep.subr.mxu0 %v287
    %582 = vmatpush1.msra.mxu0 %v286
    %583 = vmatprep.subr.mxu0 %v295
    %584 = vmatpush1.msra.mxu0 %v294
    %585 = vmatprep.subr.mxu0 %v303
    %586 = vmatpush1.msra.mxu0 %v302
    %587 = vmatprep.subr.mxu0 %v311
    %588 = vmatpush1.msra.mxu0 %v310
    %589 = vmatprep.mubr.f32.mxu0 0.0
    %590 = vmatmul.mubr.f32.gmra.mrb[0].mxu0 0.0
    %v591 = vpop.f32.mrb[0].mxu0
    %v592 = vadd.f32 0.0, %v591
    %v593 = vpop.f32.mrb[0].mxu0
    %v594 = vadd.f32 0.0, %v593
    %595 = vdwg.mxu0
    %v596 = vld [vmem:[#allocation7] sm:$0xff]
    %v597 = vld [vmem:[#allocation7 + $0x8] sm:$0xff]
    %v598 = vld [vmem:[#allocation7 + $0x10] sm:$0xff]
    %v599 = vld [vmem:[#allocation7 + $0x18] sm:$0xff]
    %v600 = vld [vmem:[#allocation7 + $0x20] sm:$0xff]
    %v601 = vld [vmem:[#allocation7 + $0x28] sm:$0xff]
    %v602 = vld [vmem:[#allocation7 + $0x30] sm:$0xff]
    %v603 = vld [vmem:[#allocation7 + $0x38] sm:$0xff]
    %v604 = vld [vmem:[#allocation7 + $0x40] sm:$0xff]
    %v605 = vld [vmem:[#allocation7 + $0x48] sm:$0xff]
    %v606 = vld [vmem:[#allocation7 + $0x50] sm:$0xff]
    %v607 = vld [vmem:[#allocation7 + $0x58] sm:$0xff]
    %v608 = vld [vmem:[#allocation7 + $0x60] sm:$0xff]
    %v609 = vld [vmem:[#allocation7 + $0x68] sm:$0xff]
    %v610 = vld [vmem:[#allocation7 + $0x70] sm:$0xff]
    %v611 = vld [vmem:[#allocation7 + $0x78] sm:$0xff]
    %v612 = vld [vmem:[#allocation7 + $0x80] sm:$0xff]
    %v613 = vld [vmem:[#allocation7 + $0x88] sm:$0xff]
    %v614 = vld [vmem:[#allocation7 + $0x90] sm:$0xff]
    %v615 = vld [vmem:[#allocation7 + $0x98] sm:$0xff]
    %v616 = vld [vmem:[#allocation7 + $0xa0] sm:$0xff]
    %v617 = vld [vmem:[#allocation7 + $0xa8] sm:$0xff]
    %v618 = vld [vmem:[#allocation7 + $0xb0] sm:$0xff]
    %v619 = vld [vmem:[#allocation7 + $0xb8] sm:$0xff]
    %v620 = vld [vmem:[#allocation7 + $0xc0] sm:$0xff]
    %v621 = vld [vmem:[#allocation7 + $0xc8] sm:$0xff]
    %v622 = vld [vmem:[#allocation7 + $0xd0] sm:$0xff]
    %v623 = vld [vmem:[#allocation7 + $0xd8] sm:$0xff]
    %v624 = vld [vmem:[#allocation7 + $0xe0] sm:$0xff]
    %v625 = vld [vmem:[#allocation7 + $0xe8] sm:$0xff]
    %v626 = vld [vmem:[#allocation7 + $0xf0] sm:$0xff]
    %v627 = vld [vmem:[#allocation7 + $0xf8] sm:$0xff]
    %v628 = vld [vmem:[#allocation7 + $0x100] sm:$0xff]
    %v629 = vld [vmem:[#allocation7 + $0x108] sm:$0xff]
    %v630 = vld [vmem:[#allocation7 + $0x110] sm:$0xff]
    %v631 = vld [vmem:[#allocation7 + $0x118] sm:$0xff]
    %v632 = vld [vmem:[#allocation7 + $0x120] sm:$0xff]
    %v633 = vld [vmem:[#allocation7 + $0x128] sm:$0xff]
    %v634 = vld [vmem:[#allocation7 + $0x130] sm:$0xff]
    %v635 = vld [vmem:[#allocation7 + $0x138] sm:$0xff]
    %v636 = vld [vmem:[#allocation7 + $0x140] sm:$0xff]
    %v637 = vld [vmem:[#allocation7 + $0x148] sm:$0xff]
    %v638 = vld [vmem:[#allocation7 + $0x150] sm:$0xff]
    %v639 = vld [vmem:[#allocation7 + $0x158] sm:$0xff]
    %v640 = vld [vmem:[#allocation7 + $0x160] sm:$0xff]
    %v641 = vld [vmem:[#allocation7 + $0x168] sm:$0xff]
    %v642 = vld [vmem:[#allocation7 + $0x170] sm:$0xff]
    %v643 = vld [vmem:[#allocation7 + $0x178] sm:$0xff]
    %v644 = vld [vmem:[#allocation7 + $0x180] sm:$0xff]
    %v645 = vld [vmem:[#allocation7 + $0x188] sm:$0xff]
    %v646 = vld [vmem:[#allocation7 + $0x190] sm:$0xff]
    %v647 = vld [vmem:[#allocation7 + $0x198] sm:$0xff]
    %v648 = vld [vmem:[#allocation7 + $0x1a0] sm:$0xff]
    %v649 = vld [vmem:[#allocation7 + $0x1a8] sm:$0xff]
    %v650 = vld [vmem:[#allocation7 + $0x1b0] sm:$0xff]
    %v651 = vld [vmem:[#allocation7 + $0x1b8] sm:$0xff]
    %v652 = vld [vmem:[#allocation7 + $0x1c0] sm:$0xff]
    %v653 = vld [vmem:[#allocation7 + $0x1c8] sm:$0xff]
    %v654 = vld [vmem:[#allocation7 + $0x1d0] sm:$0xff]
    %v655 = vld [vmem:[#allocation7 + $0x1d8] sm:$0xff]
    %v656 = vld [vmem:[#allocation7 + $0x1e0] sm:$0xff]
    %v657 = vld [vmem:[#allocation7 + $0x1e8] sm:$0xff]
    %v658 = vld [vmem:[#allocation7 + $0x1f0] sm:$0xff]
    %v659 = vld [vmem:[#allocation7 + $0x1f8] sm:$0xff]
    %v660 = vld [vmem:[#allocation7 + $0x200] sm:$0xff]
    %v661 = vld [vmem:[#allocation7 + $0x208] sm:$0xff]
    %v662 = vld [vmem:[#allocation7 + $0x210] sm:$0xff]
    %v663 = vld [vmem:[#allocation7 + $0x218] sm:$0xff]
    %v664 = vld [vmem:[#allocation7 + $0x220] sm:$0xff]
    %v665 = vld [vmem:[#allocation7 + $0x228] sm:$0xff]
    %v666 = vld [vmem:[#allocation7 + $0x230] sm:$0xff]
    %v667 = vld [vmem:[#allocation7 + $0x238] sm:$0xff]
    %v668 = vld [vmem:[#allocation7 + $0x240] sm:$0xff]
    %v669 = vld [vmem:[#allocation7 + $0x248] sm:$0xff]
    %v670 = vld [vmem:[#allocation7 + $0x250] sm:$0xff]
    %v671 = vld [vmem:[#allocation7 + $0x258] sm:$0xff]
    %v672 = vld [vmem:[#allocation7 + $0x260] sm:$0xff]
    %v673 = vld [vmem:[#allocation7 + $0x268] sm:$0xff]
    %v674 = vld [vmem:[#allocation7 + $0x270] sm:$0xff]
    %v675 = vld [vmem:[#allocation7 + $0x278] sm:$0xff]
    %v676 = vld [vmem:[#allocation7 + $0x280] sm:$0xff]
    %v677 = vld [vmem:[#allocation7 + $0x288] sm:$0xff]
    %v678 = vld [vmem:[#allocation7 + $0x290] sm:$0xff]
    %v679 = vld [vmem:[#allocation7 + $0x298] sm:$0xff]
    %v680 = vld [vmem:[#allocation7 + $0x2a0] sm:$0xff]
    %v681 = vld [vmem:[#allocation7 + $0x2a8] sm:$0xff]
    %v682 = vld [vmem:[#allocation7 + $0x2b0] sm:$0xff]
    %v683 = vld [vmem:[#allocation7 + $0x2b8] sm:$0xff]
    %v684 = vld [vmem:[#allocation7 + $0x2c0] sm:$0xff]
    %v685 = vld [vmem:[#allocation7 + $0x2c8] sm:$0xff]
    %v686 = vld [vmem:[#allocation7 + $0x2d0] sm:$0xff]
    %v687 = vld [vmem:[#allocation7 + $0x2d8] sm:$0xff]
    %v688 = vld [vmem:[#allocation7 + $0x2e0] sm:$0xff]
    %v689 = vld [vmem:[#allocation7 + $0x2e8] sm:$0xff]
    %v690 = vld [vmem:[#allocation7 + $0x2f0] sm:$0xff]
    %v691 = vld [vmem:[#allocation7 + $0x2f8] sm:$0xff]
    %v692 = vld [vmem:[#allocation7 + $0x300] sm:$0xff]
    %v693 = vld [vmem:[#allocation7 + $0x308] sm:$0xff]
    %v694 = vld [vmem:[#allocation7 + $0x310] sm:$0xff]
    %v695 = vld [vmem:[#allocation7 + $0x318] sm:$0xff]
    %v696 = vld [vmem:[#allocation7 + $0x320] sm:$0xff]
    %v697 = vld [vmem:[#allocation7 + $0x328] sm:$0xff]
    %v698 = vld [vmem:[#allocation7 + $0x330] sm:$0xff]
    %v699 = vld [vmem:[#allocation7 + $0x338] sm:$0xff]
    %v700 = vld [vmem:[#allocation7 + $0x340] sm:$0xff]
    %v701 = vld [vmem:[#allocation7 + $0x348] sm:$0xff]
    %v702 = vld [vmem:[#allocation7 + $0x350] sm:$0xff]
    %v703 = vld [vmem:[#allocation7 + $0x358] sm:$0xff]
    %v704 = vld [vmem:[#allocation7 + $0x360] sm:$0xff]
    %v705 = vld [vmem:[#allocation7 + $0x368] sm:$0xff]
    %v706 = vld [vmem:[#allocation7 + $0x370] sm:$0xff]
    %v707 = vld [vmem:[#allocation7 + $0x378] sm:$0xff]
    %v708 = vld [vmem:[#allocation7 + $0x380] sm:$0xff]
    %v709 = vld [vmem:[#allocation7 + $0x388] sm:$0xff]
    %v710 = vld [vmem:[#allocation7 + $0x390] sm:$0xff]
    %v711 = vld [vmem:[#allocation7 + $0x398] sm:$0xff]
    %v712 = vld [vmem:[#allocation7 + $0x3a0] sm:$0xff]
    %v713 = vld [vmem:[#allocation7 + $0x3a8] sm:$0xff]
    %v714 = vld [vmem:[#allocation7 + $0x3b0] sm:$0xff]
    %v715 = vld [vmem:[#allocation7 + $0x3b8] sm:$0xff]
    %v716 = vld [vmem:[#allocation7 + $0x3c0] sm:$0xff]
    %v717 = vld [vmem:[#allocation7 + $0x3c8] sm:$0xff]
    %v718 = vld [vmem:[#allocation7 + $0x3d0] sm:$0xff]
    %v719 = vld [vmem:[#allocation7 + $0x3d8] sm:$0xff]
    %v720 = vld [vmem:[#allocation7 + $0x3e0] sm:$0xff]
    %v721 = vld [vmem:[#allocation7 + $0x3e8] sm:$0xff]
    %v722 = vld [vmem:[#allocation7 + $0x3f0] sm:$0xff]
    %v723 = vld [vmem:[#allocation7 + $0x3f8] sm:$0xff]
    %v724 = vld [vmem:[#allocation7 + $0x400] sm:$0xff]
    %v725 = vld [vmem:[#allocation7 + $0x408] sm:$0xff]
    %v726 = vld [vmem:[#allocation7 + $0x410] sm:$0xff]
    %v727 = vld [vmem:[#allocation7 + $0x418] sm:$0xff]
    %v728 = vld [vmem:[#allocation7 + $0x420] sm:$0xff]
    %v729 = vld [vmem:[#allocation7 + $0x428] sm:$0xff]
    %v730 = vld [vmem:[#allocation7 + $0x430] sm:$0xff]
    %v731 = vld [vmem:[#allocation7 + $0x438] sm:$0xff]
    %v732 = vld [vmem:[#allocation7 + $0x440] sm:$0xff]
    %v733 = vld [vmem:[#allocation7 + $0x448] sm:$0xff]
    %v734 = vld [vmem:[#allocation7 + $0x450] sm:$0xff]
    %v735 = vld [vmem:[#allocation7 + $0x458] sm:$0xff]
    %v736 = vld [vmem:[#allocation7 + $0x460] sm:$0xff]
    %v737 = vld [vmem:[#allocation7 + $0x468] sm:$0xff]
    %v738 = vld [vmem:[#allocation7 + $0x470] sm:$0xff]
    %v739 = vld [vmem:[#allocation7 + $0x478] sm:$0xff]
    %v740 = vld [vmem:[#allocation7 + $0x480] sm:$0xff]
    %v741 = vld [vmem:[#allocation7 + $0x488] sm:$0xff]
    %v742 = vld [vmem:[#allocation7 + $0x490] sm:$0xff]
    %v743 = vld [vmem:[#allocation7 + $0x498] sm:$0xff]
    %v744 = vld [vmem:[#allocation7 + $0x4a0] sm:$0xff]
    %v745 = vld [vmem:[#allocation7 + $0x4a8] sm:$0xff]
    %v746 = vld [vmem:[#allocation7 + $0x4b0] sm:$0xff]
    %v747 = vld [vmem:[#allocation7 + $0x4b8] sm:$0xff]
    %v748 = vld [vmem:[#allocation7 + $0x4c0] sm:$0xff]
    %v749 = vld [vmem:[#allocation7 + $0x4c8] sm:$0xff]
    %v750 = vld [vmem:[#allocation7 + $0x4d0] sm:$0xff]
    %v751 = vld [vmem:[#allocation7 + $0x4d8] sm:$0xff]
    %v752 = vld [vmem:[#allocation7 + $0x4e0] sm:$0xff]
    %v753 = vld [vmem:[#allocation7 + $0x4e8] sm:$0xff]
    %v754 = vld [vmem:[#allocation7 + $0x4f0] sm:$0xff]
    %v755 = vld [vmem:[#allocation7 + $0x4f8] sm:$0xff]
    %v756 = vld [vmem:[#allocation7 + $0x500] sm:$0xff]
    %v757 = vld [vmem:[#allocation7 + $0x508] sm:$0xff]
    %v758 = vld [vmem:[#allocation7 + $0x510] sm:$0xff]
    %v759 = vld [vmem:[#allocation7 + $0x518] sm:$0xff]
    %v760 = vld [vmem:[#allocation7 + $0x520] sm:$0xff]
    %v761 = vld [vmem:[#allocation7 + $0x528] sm:$0xff]
    %v762 = vld [vmem:[#allocation7 + $0x530] sm:$0xff]
    %v763 = vld [vmem:[#allocation7 + $0x538] sm:$0xff]
    %v764 = vld [vmem:[#allocation7 + $0x540] sm:$0xff]
    %v765 = vld [vmem:[#allocation7 + $0x548] sm:$0xff]
    %v766 = vld [vmem:[#allocation7 + $0x550] sm:$0xff]
    %v767 = vld [vmem:[#allocation7 + $0x558] sm:$0xff]
    %v768 = vld [vmem:[#allocation7 + $0x560] sm:$0xff]
    %v769 = vld [vmem:[#allocation7 + $0x568] sm:$0xff]
    %v770 = vld [vmem:[#allocation7 + $0x570] sm:$0xff]
    %v771 = vld [vmem:[#allocation7 + $0x578] sm:$0xff]
    %v772 = vld [vmem:[#allocation7 + $0x580] sm:$0xff]
    %v773 = vld [vmem:[#allocation7 + $0x588] sm:$0xff]
    %v774 = vld [vmem:[#allocation7 + $0x590] sm:$0xff]
    %v775 = vld [vmem:[#allocation7 + $0x598] sm:$0xff]
    %v776 = vld [vmem:[#allocation7 + $0x5a0] sm:$0xff]
    %v777 = vld [vmem:[#allocation7 + $0x5a8] sm:$0xff]
    %v778 = vld [vmem:[#allocation7 + $0x5b0] sm:$0xff]
    %v779 = vld [vmem:[#allocation7 + $0x5b8] sm:$0xff]
    %v780 = vld [vmem:[#allocation7 + $0x5c0] sm:$0xff]
    %v781 = vld [vmem:[#allocation7 + $0x5c8] sm:$0xff]
    %v782 = vld [vmem:[#allocation7 + $0x5d0] sm:$0xff]
    %v783 = vld [vmem:[#allocation7 + $0x5d8] sm:$0xff]
    %v784 = vld [vmem:[#allocation7 + $0x5e0] sm:$0xff]
    %v785 = vld [vmem:[#allocation7 + $0x5e8] sm:$0xff]
    %v786 = vld [vmem:[#allocation7 + $0x5f0] sm:$0xff]
    %v787 = vld [vmem:[#allocation7 + $0x5f8] sm:$0xff]
    %v788 = vld [vmem:[#allocation7 + $0x600] sm:$0xff]
    %v789 = vld [vmem:[#allocation7 + $0x608] sm:$0xff]
    %v790 = vld [vmem:[#allocation7 + $0x610] sm:$0xff]
    %v791 = vld [vmem:[#allocation7 + $0x618] sm:$0xff]
    %v792 = vld [vmem:[#allocation7 + $0x620] sm:$0xff]
    %v793 = vld [vmem:[#allocation7 + $0x628] sm:$0xff]
    %v794 = vld [vmem:[#allocation7 + $0x630] sm:$0xff]
    %v795 = vld [vmem:[#allocation7 + $0x638] sm:$0xff]
    %v796 = vld [vmem:[#allocation7 + $0x640] sm:$0xff]
    %v797 = vld [vmem:[#allocation7 + $0x648] sm:$0xff]
    %v798 = vld [vmem:[#allocation7 + $0x650] sm:$0xff]
    %v799 = vld [vmem:[#allocation7 + $0x658] sm:$0xff]
    %v800 = vld [vmem:[#allocation7 + $0x660] sm:$0xff]
    %v801 = vld [vmem:[#allocation7 + $0x668] sm:$0xff]
    %v802 = vld [vmem:[#allocation7 + $0x670] sm:$0xff]
    %v803 = vld [vmem:[#allocation7 + $0x678] sm:$0xff]
    %v804 = vld [vmem:[#allocation7 + $0x680] sm:$0xff]
    %v805 = vld [vmem:[#allocation7 + $0x688] sm:$0xff]
    %v806 = vld [vmem:[#allocation7 + $0x690] sm:$0xff]
    %v807 = vld [vmem:[#allocation7 + $0x698] sm:$0xff]
    %v808 = vld [vmem:[#allocation7 + $0x6a0] sm:$0xff]
    %v809 = vld [vmem:[#allocation7 + $0x6a8] sm:$0xff]
    %v810 = vld [vmem:[#allocation7 + $0x6b0] sm:$0xff]
    %v811 = vld [vmem:[#allocation7 + $0x6b8] sm:$0xff]
    %v812 = vld [vmem:[#allocation7 + $0x6c0] sm:$0xff]
    %v813 = vld [vmem:[#allocation7 + $0x6c8] sm:$0xff]
    %v814 = vld [vmem:[#allocation7 + $0x6d0] sm:$0xff]
    %v815 = vld [vmem:[#allocation7 + $0x6d8] sm:$0xff]
    %v816 = vld [vmem:[#allocation7 + $0x6e0] sm:$0xff]
    %v817 = vld [vmem:[#allocation7 + $0x6e8] sm:$0xff]
    %v818 = vld [vmem:[#allocation7 + $0x6f0] sm:$0xff]
    %v819 = vld [vmem:[#allocation7 + $0x6f8] sm:$0xff]
    %v820 = vld [vmem:[#allocation7 + $0x700] sm:$0xff]
    %v821 = vld [vmem:[#allocation7 + $0x708] sm:$0xff]
    %v822 = vld [vmem:[#allocation7 + $0x710] sm:$0xff]
    %v823 = vld [vmem:[#allocation7 + $0x718] sm:$0xff]
    %v824 = vld [vmem:[#allocation7 + $0x720] sm:$0xff]
    %v825 = vld [vmem:[#allocation7 + $0x728] sm:$0xff]
    %v826 = vld [vmem:[#allocation7 + $0x730] sm:$0xff]
    %v827 = vld [vmem:[#allocation7 + $0x738] sm:$0xff]
    %v828 = vld [vmem:[#allocation7 + $0x740] sm:$0xff]
    %v829 = vld [vmem:[#allocation7 + $0x748] sm:$0xff]
    %v830 = vld [vmem:[#allocation7 + $0x750] sm:$0xff]
    %v831 = vld [vmem:[#allocation7 + $0x758] sm:$0xff]
    %v832 = vld [vmem:[#allocation7 + $0x760] sm:$0xff]
    %v833 = vld [vmem:[#allocation7 + $0x768] sm:$0xff]
    %v834 = vld [vmem:[#allocation7 + $0x770] sm:$0xff]
    %v835 = vld [vmem:[#allocation7 + $0x778] sm:$0xff]
    %v836 = vld [vmem:[#allocation7 + $0x780] sm:$0xff]
    %v837 = vld [vmem:[#allocation7 + $0x788] sm:$0xff]
    %v838 = vld [vmem:[#allocation7 + $0x790] sm:$0xff]
    %v839 = vld [vmem:[#allocation7 + $0x798] sm:$0xff]
    %v840 = vld [vmem:[#allocation7 + $0x7a0] sm:$0xff]
    %v841 = vld [vmem:[#allocation7 + $0x7a8] sm:$0xff]
    %v842 = vld [vmem:[#allocation7 + $0x7b0] sm:$0xff]
    %v843 = vld [vmem:[#allocation7 + $0x7b8] sm:$0xff]
    %v844 = vld [vmem:[#allocation7 + $0x7c0] sm:$0xff]
    %v845 = vld [vmem:[#allocation7 + $0x7c8] sm:$0xff]
    %v846 = vld [vmem:[#allocation7 + $0x7d0] sm:$0xff]
    %v847 = vld [vmem:[#allocation7 + $0x7d8] sm:$0xff]
    %v848 = vld [vmem:[#allocation7 + $0x7e0] sm:$0xff]
    %v849 = vld [vmem:[#allocation7 + $0x7e8] sm:$0xff]
    %v850 = vld [vmem:[#allocation7 + $0x7f0] sm:$0xff]
    %v851 = vld [vmem:[#allocation7 + $0x7f8] sm:$0xff]
    %852 = vmatprep.subr.mxu0 %v597
    %853 = vmatpush1.msra.mxu0 %v596
    %854 = vmatprep.subr.mxu0 %v605
    %855 = vmatpush1.msra.mxu0 %v604
    %856 = vmatprep.subr.mxu0 %v613
    %857 = vmatpush1.msra.mxu0 %v612
    %858 = vmatprep.subr.mxu0 %v621
    %859 = vmatpush1.msra.mxu0 %v620
    %860 = vmatprep.subr.mxu0 %v629
    %861 = vmatpush1.msra.mxu0 %v628
    %862 = vmatprep.subr.mxu0 %v637
    %863 = vmatpush1.msra.mxu0 %v636
    %864 = vmatprep.subr.mxu0 %v645
    %865 = vmatpush1.msra.mxu0 %v644
    %866 = vmatprep.subr.mxu0 %v653
    %867 = vmatpush1.msra.mxu0 %v652
    %868 = vmatprep.subr.mxu0 %v661
    %869 = vmatpush1.msra.mxu0 %v660
    %870 = vmatprep.subr.mxu0 %v669
    %871 = vmatpush1.msra.mxu0 %v668
    %872 = vmatprep.subr.mxu0 %v677
    %873 = vmatpush1.msra.mxu0 %v676
    %874 = vmatprep.subr.mxu0 %v685
    %875 = vmatpush1.msra.mxu0 %v684
    %876 = vmatprep.subr.mxu0 %v693
    %877 = vmatpush1.msra.mxu0 %v692
    %878 = vmatprep.subr.mxu0 %v701
    %879 = vmatpush1.msra.mxu0 %v700
    %880 = vmatprep.subr.mxu0 %v709
    %881 = vmatpush1.msra.mxu0 %v708
    %882 = vmatprep.subr.mxu0 %v717
    %883 = vmatpush1.msra.mxu0 %v716
    %884 = vmatprep.subr.mxu0 %v725
    %885 = vmatpush1.msra.mxu0 %v724
    %886 = vmatprep.subr.mxu0 %v733
    %887 = vmatpush1.msra.mxu0 %v732
    %888 = vmatprep.subr.mxu0 %v741
    %889 = vmatpush1.msra.mxu0 %v740
    %890 = vmatprep.subr.mxu0 %v749
    %891 = vmatpush1.msra.mxu0 %v748
    %892 = vmatprep.subr.mxu0 %v757
    %893 = vmatpush1.msra.mxu0 %v756
    %894 = vmatprep.subr.mxu0 %v765
    %895 = vmatpush1.msra.mxu0 %v764
    %896 = vmatprep.subr.mxu0 %v773
    %897 = vmatpush1.msra.mxu0 %v772
    %898 = vmatprep.subr.mxu0 %v781
    %899 = vmatpush1.msra.mxu0 %v780
    %900 = vmatprep.subr.mxu0 %v789
    %901 = vmatpush1.msra.mxu0 %v788
    %902 = vmatprep.subr.mxu0 %v797
    %903 = vmatpush1.msra.mxu0 %v796
    %904 = vmatprep.subr.mxu0 %v805
    %905 = vmatpush1.msra.mxu0 %v804
    %906 = vmatprep.subr.mxu0 %v813
    %907 = vmatpush1.msra.mxu0 %v812
    %908 = vmatprep.subr.mxu0 %v821
    %909 = vmatpush1.msra.mxu0 %v820
    %910 = vmatprep.subr.mxu0 %v829
    %911 = vmatpush1.msra.mxu0 %v828
    %912 = vmatprep.subr.mxu0 %v837
    %913 = vmatpush1.msra.mxu0 %v836
    %914 = vmatprep.subr.mxu0 %v845
    %915 = vmatpush1.msra.mxu0 %v844
    %916 = vmatprep.mubr.f32.mxu0 0.0
    %917 = vmatmul.mubr.f32.gmra.mrb[0].mxu0 0.0
    %v918 = vpop.f32.mrb[0].mxu0
    %v919 = vadd.f32 0.0, %v918
    %v920 = vpop.f32.mrb[0].mxu0
    %v921 = vadd.f32 0.0, %v920
    %922 = vdwg.mxu0
    %923 = vmatprep.subr.mxu0 %v599
    %924 = vmatpush1.msra.mxu0 %v598
    %925 = vmatprep.subr.mxu0 %v607
    %926 = vmatpush1.msra.mxu0 %v606
    %927 = vmatprep.subr.mxu0 %v615
    %928 = vmatpush1.msra.mxu0 %v614
    %929 = vmatprep.subr.mxu0 %v623
    %930 = vmatpush1.msra.mxu0 %v622
    %931 = vmatprep.subr.mxu0 %v631
    %932 = vmatpush1.msra.mxu0 %v630
    %933 = vmatprep.subr.mxu0 %v639
    %934 = vmatpush1.msra.mxu0 %v638
    %935 = vmatprep.subr.mxu0 %v647
    %936 = vmatpush1.msra.mxu0 %v646
    %937 = vmatprep.subr.mxu0 %v655
    %938 = vmatpush1.msra.mxu0 %v654
    %939 = vmatprep.subr.mxu0 %v663
    %940 = vmatpush1.msra.mxu0 %v662
    %941 = vmatprep.subr.mxu0 %v671
    %942 = vmatpush1.msra.mxu0 %v670
    %943 = vmatprep.subr.mxu0 %v679
    %944 = vmatpush1.msra.mxu0 %v678
    %945 = vmatprep.subr.mxu0 %v687
    %946 = vmatpush1.msra.mxu0 %v686
    %947 = vmatprep.subr.mxu0 %v695
    %948 = vmatpush1.msra.mxu0 %v694
    %949 = vmatprep.subr.mxu0 %v703
    %950 = vmatpush1.msra.mxu0 %v702
    %951 = vmatprep.subr.mxu0 %v711
    %952 = vmatpush1.msra.mxu0 %v710
    %953 = vmatprep.subr.mxu0 %v719
    %954 = vmatpush1.msra.mxu0 %v718
    %955 = vmatprep.subr.mxu0 %v727
    %956 = vmatpush1.msra.mxu0 %v726
    %957 = vmatprep.subr.mxu0 %v735
    %958 = vmatpush1.msra.mxu0 %v734
    %959 = vmatprep.subr.mxu0 %v743
    %960 = vmatpush1.msra.mxu0 %v742
    %961 = vmatprep.subr.mxu0 %v751
    %962 = vmatpush1.msra.mxu0 %v750
    %963 = vmatprep.subr.mxu0 %v759
    %964 = vmatpush1.msra.mxu0 %v758
    %965 = vmatprep.subr.mxu0 %v767
    %966 = vmatpush1.msra.mxu0 %v766
    %967 = vmatprep.subr.mxu0 %v775
    %968 = vmatpush1.msra.mxu0 %v774
    %969 = vmatprep.subr.mxu0 %v783
    %970 = vmatpush1.msra.mxu0 %v782
    %971 = vmatprep.subr.mxu0 %v791
    %972 = vmatpush1.msra.mxu0 %v790
    %973 = vmatprep.subr.mxu0 %v799
    %974 = vmatpush1.msra.mxu0 %v798
    %975 = vmatprep.subr.mxu0 %v807
    %976 = vmatpush1.msra.mxu0 %v806
    %977 = vmatprep.subr.mxu0 %v815
    %978 = vmatpush1.msra.mxu0 %v814
    %979 = vmatprep.subr.mxu0 %v823
    %980 = vmatpush1.msra.mxu0 %v822
    %981 = vmatprep.subr.mxu0 %v831
    %982 = vmatpush1.msra.mxu0 %v830
    %983 = vmatprep.subr.mxu0 %v839
    %984 = vmatpush1.msra.mxu0 %v838
    %985 = vmatprep.subr.mxu0 %v847
    %986 = vmatpush1.msra.mxu0 %v846
    %987 = vmatprep.mubr.f32.mxu0 0.0
    %988 = vmatmul.mubr.f32.gmra.mrb[0].mxu0 0.0
    %v989 = vpop.f32.mrb[0].mxu0
    %v990 = vadd.f32 0.0, %v989
    %v991 = vpop.f32.mrb[0].mxu0
    %v992 = vadd.f32 0.0, %v991
    %993 = vdwg.mxu0
    %994 = vmatprep.subr.mxu0 %v601
    %995 = vmatpush1.msra.mxu0 %v600
    %996 = vmatprep.subr.mxu0 %v609
    %997 = vmatpush1.msra.mxu0 %v608
    %998 = vmatprep.subr.mxu0 %v617
    %999 = vmatpush1.msra.mxu0 %v616
    %1000 = vmatprep.subr.mxu0 %v625
    %1001 = vmatpush1.msra.mxu0 %v624
    %1002 = vmatprep.subr.mxu0 %v633
    %1003 = vmatpush1.msra.mxu0 %v632
    %1004 = vmatprep.subr.mxu0 %v641
    %1005 = vmatpush1.msra.mxu0 %v640
    %1006 = vmatprep.subr.mxu0 %v649
    %1007 = vmatpush1.msra.mxu0 %v648
    %1008 = vmatprep.subr.mxu0 %v657
    %1009 = vmatpush1.msra.mxu0 %v656
    %1010 = vmatprep.subr.mxu0 %v665
    %1011 = vmatpush1.msra.mxu0 %v664
    %1012 = vmatprep.subr.mxu0 %v673
    %1013 = vmatpush1.msra.mxu0 %v672
    %1014 = vmatprep.subr.mxu0 %v681
    %1015 = vmatpush1.msra.mxu0 %v680
    %1016 = vmatprep.subr.mxu0 %v689
    %1017 = vmatpush1.msra.mxu0 %v688
    %1018 = vmatprep.subr.mxu0 %v697
    %1019 = vmatpush1.msra.mxu0 %v696
    %1020 = vmatprep.subr.mxu0 %v705
    %1021 = vmatpush1.msra.mxu0 %v704
    %1022 = vmatprep.subr.mxu0 %v713
    %1023 = vmatpush1.msra.mxu0 %v712
    %1024 = vmatprep.subr.mxu0 %v721
    %1025 = vmatpush1.msra.mxu0 %v720
    %1026 = vmatprep.subr.mxu0 %v729
    %1027 = vmatpush1.msra.mxu0 %v728
    %1028 = vmatprep.subr.mxu0 %v737
    %1029 = vmatpush1.msra.mxu0 %v736
    %1030 = vmatprep.subr.mxu0 %v745
    %1031 = vmatpush1.msra.mxu0 %v744
    %1032 = vmatprep.subr.mxu0 %v753
    %1033 = vmatpush1.msra.mxu0 %v752
    %1034 = vmatprep.subr.mxu0 %v761
    %1035 = vmatpush1.msra.mxu0 %v760
    %1036 = vmatprep.subr.mxu0 %v769
    %1037 = vmatpush1.msra.mxu0 %v768
    %1038 = vmatprep.subr.mxu0 %v777
    %1039 = vmatpush1.msra.mxu0 %v776
    %1040 = vmatprep.subr.mxu0 %v785
    %1041 = vmatpush1.msra.mxu0 %v784
    %1042 = vmatprep.subr.mxu0 %v793
    %1043 = vmatpush1.msra.mxu0 %v792
    %1044 = vmatprep.subr.mxu0 %v801
    %1045 = vmatpush1.msra.mxu0 %v800
    %1046 = vmatprep.subr.mxu0 %v809
    %1047 = vmatpush1.msra.mxu0 %v808
    %1048 = vmatprep.subr.mxu0 %v817
    %1049 = vmatpush1.msra.mxu0 %v816
    %1050 = vmatprep.subr.mxu0 %v825
    %1051 = vmatpush1.msra.mxu0 %v824
    %1052 = vmatprep.subr.mxu0 %v833
    %1053 = vmatpush1.msra.mxu0 %v832
    %1054 = vmatprep.subr.mxu0 %v841
    %1055 = vmatpush1.msra.mxu0 %v840
    %1056 = vmatprep.subr.mxu0 %v849
    %1057 = vmatpush1.msra.mxu0 %v848
    %1058 = vmatprep.mubr.f32.mxu0 0.0
    %1059 = vmatmul.mubr.f32.gmra.mrb[0].mxu0 0.0
    %v1060 = vpop.f32.mrb[0].mxu0
    %v1061 = vadd.f32 0.0, %v1060
    %v1062 = vpop.f32.mrb[0].mxu0
    %v1063 = vadd.f32 0.0, %v1062
    %1064 = vdwg.mxu0
    %1065 = vmatprep.subr.mxu0 %v603
    %1066 = vmatpush1.msra.mxu0 %v602
    %1067 = vmatprep.subr.mxu0 %v611
    %1068 = vmatpush1.msra.mxu0 %v610
    %1069 = vmatprep.subr.mxu0 %v619
    %1070 = vmatpush1.msra.mxu0 %v618
    %1071 = vmatprep.subr.mxu0 %v627
    %1072 = vmatpush1.msra.mxu0 %v626
    %1073 = vmatprep.subr.mxu0 %v635
    %1074 = vmatpush1.msra.mxu0 %v634
    %1075 = vmatprep.subr.mxu0 %v643
    %1076 = vmatpush1.msra.mxu0 %v642
    %1077 = vmatprep.subr.mxu0 %v651
    %1078 = vmatpush1.msra.mxu0 %v650
    %1079 = vmatprep.subr.mxu0 %v659
    %1080 = vmatpush1.msra.mxu0 %v658
    %1081 = vmatprep.subr.mxu0 %v667
    %1082 = vmatpush1.msra.mxu0 %v666
    %1083 = vmatprep.subr.mxu0 %v675
    %1084 = vmatpush1.msra.mxu0 %v674
    %1085 = vmatprep.subr.mxu0 %v683
    %1086 = vmatpush1.msra.mxu0 %v682
    %1087 = vmatprep.subr.mxu0 %v691
    %1088 = vmatpush1.msra.mxu0 %v690
    %1089 = vmatprep.subr.mxu0 %v699
    %1090 = vmatpush1.msra.mxu0 %v698
    %1091 = vmatprep.subr.mxu0 %v707
    %1092 = vmatpush1.msra.mxu0 %v706
    %1093 = vmatprep.subr.mxu0 %v715
    %1094 = vmatpush1.msra.mxu0 %v714
    %1095 = vmatprep.subr.mxu0 %v723
    %1096 = vmatpush1.msra.mxu0 %v722
    %1097 = vmatprep.subr.mxu0 %v731
    %1098 = vmatpush1.msra.mxu0 %v730
    %1099 = vmatprep.subr.mxu0 %v739
    %1100 = vmatpush1.msra.mxu0 %v738
    %1101 = vmatprep.subr.mxu0 %v747
    %1102 = vmatpush1.msra.mxu0 %v746
    %1103 = vmatprep.subr.mxu0 %v755
    %1104 = vmatpush1.msra.mxu0 %v754
    %1105 = vmatprep.subr.mxu0 %v763
    %1106 = vmatpush1.msra.mxu0 %v762
    %1107 = vmatprep.subr.mxu0 %v771
    %1108 = vmatpush1.msra.mxu0 %v770
    %1109 = vmatprep.subr.mxu0 %v779
    %1110 = vmatpush1.msra.mxu0 %v778
    %1111 = vmatprep.subr.mxu0 %v787
    %1112 = vmatpush1.msra.mxu0 %v786
    %1113 = vmatprep.subr.mxu0 %v795
    %1114 = vmatpush1.msra.mxu0 %v794
    %1115 = vmatprep.subr.mxu0 %v803
    %1116 = vmatpush1.msra.mxu0 %v802
    %1117 = vmatprep.subr.mxu0 %v811
    %1118 = vmatpush1.msra.mxu0 %v810
    %1119 = vmatprep.subr.mxu0 %v819
    %1120 = vmatpush1.msra.mxu0 %v818
    %1121 = vmatprep.subr.mxu0 %v827
    %1122 = vmatpush1.msra.mxu0 %v826
    %1123 = vmatprep.subr.mxu0 %v835
    %1124 = vmatpush1.msra.mxu0 %v834
    %1125 = vmatprep.subr.mxu0 %v843
    %1126 = vmatpush1.msra.mxu0 %v842
    %1127 = vmatprep.subr.mxu0 %v851
    %1128 = vmatpush1.msra.mxu0 %v850
    %1129 = vmatprep.mubr.f32.mxu0 0.0
    %1130 = vmatmul.mubr.f32.gmra.mrb[0].mxu0 0.0
    %v1131 = vpop.f32.mrb[0].mxu0
    %v1132 = vadd.f32 0.0, %v1131
    %v1133 = vpop.f32.mrb[0].mxu0
    %v1134 = vadd.f32 0.0, %v1133
    %1135 = vdwg.mxu0
    %v1136 = vld [vmem:[#allocation2] sm:$0xff]
    %v1137 = vld [vmem:[#allocation2 + $0x8] sm:$0xff]
    %v1138 = vld [vmem:[#allocation2 + $0x10] sm:$0xff]
    %v1139 = vld [vmem:[#allocation2 + $0x18] sm:$0xff]
    %v1148 = vrot.slane %v919, 6
    %v1149 = vrot.slane %v921, 6
    %v1150 = vrot.slane %v990, 6
    %v1151 = vrot.slane %v992, 6
    %v1152 = vrot.slane %v1061, 6
    %v1153 = vrot.slane %v1063, 6
    %v1154 = vrot.slane %v1132, 6
    %v1155 = vrot.slane %v1134, 6
    %vm1164 = vcmask 1041408
    %v1165 = vsel %vm1164, %v379, %v1148
    %v1166 = vsel %vm1164, %v381, %v1149
    %v1167 = vsel %vm1164, %v450, %v1150
    %v1168 = vsel %vm1164, %v452, %v1151
    %v1169 = vsel %vm1164, %v521, %v1152
    %v1170 = vsel %vm1164, %v523, %v1153
    %v1171 = vsel %vm1164, %v592, %v1154
    %v1172 = vsel %vm1164, %v594, %v1155
    %v1181 = vcombine.low %v1165, %v1166
    %v1182 = vcombine.low %v1167, %v1168
    %v1183 = vcombine.low %v1169, %v1170
    %v1184 = vcombine.low %v1171, %v1172
    %v1189 = vadd.f32 %v1136, %v1181
    %v1190 = vadd.f32 %v1137, %v1182
    %v1191 = vadd.f32 %v1138, %v1183
    %v1192 = vadd.f32 %v1139, %v1184
    %v1193 = vxor.u32 %v1189, 2147483648
    %v1194 = vxor.u32 %v1190, 2147483648
    %v1195 = vxor.u32 %v1191, 2147483648
    %v1196 = vmul.f32 %v1193, 1.442695
    %v1197 = vpow.pop %v1196
    %v1198 = vmul.f32 %v1194, 1.442695
    %v1199 = vpow.pop %v1198
    %v1200 = vmul.f32 %v1195, 1.442695
    %v1201 = vpow.pop %v1200
    %v1202 = vadd.f32 %v1197, 1.0
    %v1203 = vadd.f32 %v1199, 1.0
    %v1204 = vadd.f32 %v1201, 1.0
    %v1205 = vrcp.pop %v1202
    %v1206 = vmul.f32 1.0, %v1205
    %v1207 = vrcp.pop %v1203
    %v1208 = vmul.f32 1.0, %v1207
    %v1209 = vrcp.pop %v1204
    %v1210 = vmul.f32 1.0, %v1209
    %v1211 = vtanh.pop %v1192
    %v1212 = vmul.f32 %v1208, 0.0
    %v1213 = vmul.f32 %v1206, %v1211
    %v1214 = vadd.f32 %v1212, %v1213
    %v1215 = vtanh.pop %v1214
    %v1216 = vmul.f32 %v1210, %v1215
    %v1219 = vunpack.c.l.s4 1983009808
    %v1220 = vunpack.c.0.s8 %v1219
    %v1221 = vlaneseq
    %v1222 = vshrl.u32 %v1221, 7
    %v1223 = vsub.s32 %v1220, %v1222
    %v1224 = vrot.slane %v1216, %v1223
    %1226 = vst [vmem:[#allocation8] sm:$0xf] %v1224
    %v1227 = vcombine.high %v1224, %v1224
    %s1229 = scalar_lea.vmem [#allocation8], 56
    %1230 = vst [vmem:[%s1229 + $0x4] sm:$0xf] %v1227
    %v1231 = vld [vmem:[#allocation5] sm:$0xff]
    %v1232 = vld [vmem:[#allocation5 + $0x8] sm:$0xff]
    %v1233 = vld [vmem:[#allocation5 + $0x10] sm:$0xff]
    %v1234 = vld [vmem:[#allocation5 + $0x18] sm:$0xff]
    %v1235 = vld [vmem:[#allocation5 + $0x20] sm:$0xff]
    %v1236 = vld [vmem:[#allocation5 + $0x28] sm:$0xff]
    %v1237 = vld [vmem:[#allocation5 + $0x30] sm:$0xff]
    %v1238 = vld [vmem:[#allocation5 + $0x38] sm:$0xff]
    %v1239 = vld [vmem:[#allocation5 + $0x40] sm:$0xff]
    %v1240 = vld [vmem:[#allocation5 + $0x48] sm:$0xff]
    %v1241 = vld [vmem:[#allocation5 + $0x50] sm:$0xff]
    %v1242 = vld [vmem:[#allocation5 + $0x58] sm:$0xff]
    %v1243 = vld [vmem:[#allocation5 + $0x60] sm:$0xff]
    %v1244 = vld [vmem:[#allocation5 + $0x68] sm:$0xff]
    %v1245 = vld [vmem:[#allocation5 + $0x70] sm:$0xff]
    %v1246 = vld [vmem:[#allocation5 + $0x78] sm:$0xff]
    %v1247 = vld [vmem:[#allocation5 + $0x80] sm:$0xff]
    %v1248 = vld [vmem:[#allocation5 + $0x88] sm:$0xff]
    %v1249 = vld [vmem:[#allocation5 + $0x90] sm:$0xff]
    %v1250 = vld [vmem:[#allocation5 + $0x98] sm:$0xff]
    %v1251 = vld [vmem:[#allocation5 + $0xa0] sm:$0xff]
    %v1252 = vld [vmem:[#allocation5 + $0xa8] sm:$0xff]
    %v1253 = vld [vmem:[#allocation5 + $0xb0] sm:$0xff]
    %v1254 = vld [vmem:[#allocation5 + $0xb8] sm:$0xff]
    %v1255 = vld [vmem:[#allocation5 + $0xc0] sm:$0xff]
    %v1256 = vld [vmem:[#allocation5 + $0xc8] sm:$0xff]
    %v1257 = vld [vmem:[#allocation5 + $0xd0] sm:$0xff]
    %v1258 = vld [vmem:[#allocation5 + $0xd8] sm:$0xff]
    %v1259 = vld [vmem:[#allocation5 + $0xe0] sm:$0xff]
    %v1260 = vld [vmem:[#allocation5 + $0xe8] sm:$0xff]
    %v1261 = vld [vmem:[#allocation5 + $0xf0] sm:$0xff]
    %v1262 = vld [vmem:[#allocation5 + $0xf8] sm:$0xff]
    %v1263 = vld [vmem:[#allocation5 + $0x100] sm:$0xff]
    %v1264 = vld [vmem:[#allocation5 + $0x108] sm:$0xff]
    %v1265 = vld [vmem:[#allocation5 + $0x110] sm:$0xff]
    %v1266 = vld [vmem:[#allocation5 + $0x118] sm:$0xff]
    %v1267 = vld [vmem:[#allocation5 + $0x120] sm:$0xff]
    %v1268 = vld [vmem:[#allocation5 + $0x128] sm:$0xff]
    %v1269 = vld [vmem:[#allocation5 + $0x130] sm:$0xff]
    %v1270 = vld [vmem:[#allocation5 + $0x138] sm:$0xff]
    %v1271 = vld [vmem:[#allocation5 + $0x140] sm:$0xff]
    %v1272 = vld [vmem:[#allocation5 + $0x148] sm:$0xff]
    %v1273 = vld [vmem:[#allocation5 + $0x150] sm:$0xff]
    %v1274 = vld [vmem:[#allocation5 + $0x158] sm:$0xff]
    %v1275 = vld [vmem:[#allocation5 + $0x160] sm:$0xff]
    %v1276 = vld [vmem:[#allocation5 + $0x168] sm:$0xff]
    %v1277 = vld [vmem:[#allocation5 + $0x170] sm:$0xff]
    %v1278 = vld [vmem:[#allocation5 + $0x178] sm:$0xff]
    %v1279 = vld [vmem:[#allocation5 + $0x180] sm:$0xff]
    %v1280 = vld [vmem:[#allocation5 + $0x188] sm:$0xff]
    %v1281 = vld [vmem:[#allocation5 + $0x190] sm:$0xff]
    %v1282 = vld [vmem:[#allocation5 + $0x198] sm:$0xff]
    %v1283 = vld [vmem:[#allocation5 + $0x1a0] sm:$0xff]
    %v1284 = vld [vmem:[#allocation5 + $0x1a8] sm:$0xff]
    %v1285 = vld [vmem:[#allocation5 + $0x1b0] sm:$0xff]
    %v1286 = vld [vmem:[#allocation5 + $0x1b8] sm:$0xff]
    %v1287 = vld [vmem:[#allocation5 + $0x1c0] sm:$0xff]
    %v1288 = vld [vmem:[#allocation5 + $0x1c8] sm:$0xff]
    %v1289 = vld [vmem:[#allocation5 + $0x1d0] sm:$0xff]
    %v1290 = vld [vmem:[#allocation5 + $0x1d8] sm:$0xff]
    %v1291 = vld [vmem:[#allocation5 + $0x1e0] sm:$0xff]
    %v1292 = vld [vmem:[#allocation5 + $0x1e8] sm:$0xff]
    %v1293 = vld [vmem:[#allocation5 + $0x1f0] sm:$0xff]
    %v1294 = vld [vmem:[#allocation5 + $0x1f8] sm:$0xff]
    %v1295 = vld [vmem:[#allocation5 + $0x200] sm:$0xff]
    %v1296 = vld [vmem:[#allocation5 + $0x208] sm:$0xff]
    %v1297 = vld [vmem:[#allocation5 + $0x210] sm:$0xff]
    %v1298 = vld [vmem:[#allocation5 + $0x218] sm:$0xff]
    %v1299 = vld [vmem:[#allocation5 + $0x220] sm:$0xff]
    %v1300 = vld [vmem:[#allocation5 + $0x228] sm:$0xff]
    %v1301 = vld [vmem:[#allocation5 + $0x230] sm:$0xff]
    %v1302 = vld [vmem:[#allocation5 + $0x238] sm:$0xff]
    %v1303 = vld [vmem:[#allocation5 + $0x240] sm:$0xff]
    %v1304 = vld [vmem:[#allocation5 + $0x248] sm:$0xff]
    %v1305 = vld [vmem:[#allocation5 + $0x250] sm:$0xff]
    %v1306 = vld [vmem:[#allocation5 + $0x258] sm:$0xff]
    %v1307 = vld [vmem:[#allocation5 + $0x260] sm:$0xff]
    %v1308 = vld [vmem:[#allocation5 + $0x268] sm:$0xff]
    %v1309 = vld [vmem:[#allocation5 + $0x270] sm:$0xff]
    %v1310 = vld [vmem:[#allocation5 + $0x278] sm:$0xff]
    %v1311 = vld [vmem:[#allocation5 + $0x280] sm:$0xff]
    %v1312 = vld [vmem:[#allocation5 + $0x288] sm:$0xff]
    %v1313 = vld [vmem:[#allocation5 + $0x290] sm:$0xff]
    %v1314 = vld [vmem:[#allocation5 + $0x298] sm:$0xff]
    %v1315 = vld [vmem:[#allocation5 + $0x2a0] sm:$0xff]
    %v1316 = vld [vmem:[#allocation5 + $0x2a8] sm:$0xff]
    %v1317 = vld [vmem:[#allocation5 + $0x2b0] sm:$0xff]
    %v1318 = vld [vmem:[#allocation5 + $0x2b8] sm:$0xff]
    %v1319 = vld [vmem:[#allocation5 + $0x2c0] sm:$0xff]
    %v1320 = vld [vmem:[#allocation5 + $0x2c8] sm:$0xff]
    %v1321 = vld [vmem:[#allocation5 + $0x2d0] sm:$0xff]
    %v1322 = vld [vmem:[#allocation5 + $0x2d8] sm:$0xff]
    %v1323 = vld [vmem:[#allocation5 + $0x2e0] sm:$0xff]
    %v1324 = vld [vmem:[#allocation5 + $0x2e8] sm:$0xff]
    %v1325 = vld [vmem:[#allocation5 + $0x2f0] sm:$0xff]
    %v1326 = vld [vmem:[#allocation5 + $0x2f8] sm:$0xff]
    %v1327 = vld [vmem:[#allocation5 + $0x300] sm:$0xff]
    %v1328 = vld [vmem:[#allocation5 + $0x308] sm:$0xff]
    %v1329 = vld [vmem:[#allocation5 + $0x310] sm:$0xff]
    %v1330 = vld [vmem:[#allocation5 + $0x318] sm:$0xff]
    %v1331 = vld [vmem:[#allocation5 + $0x320] sm:$0xff]
    %v1332 = vld [vmem:[#allocation5 + $0x328] sm:$0xff]
    %v1333 = vld [vmem:[#allocation5 + $0x330] sm:$0xff]
    %v1334 = vld [vmem:[#allocation5 + $0x338] sm:$0xff]
    %v1335 = vld [vmem:[#allocation5 + $0x340] sm:$0xff]
    %v1336 = vld [vmem:[#allocation5 + $0x348] sm:$0xff]
    %v1337 = vld [vmem:[#allocation5 + $0x350] sm:$0xff]
    %v1338 = vld [vmem:[#allocation5 + $0x358] sm:$0xff]
    %v1339 = vld [vmem:[#allocation5 + $0x360] sm:$0xff]
    %v1340 = vld [vmem:[#allocation5 + $0x368] sm:$0xff]
    %v1341 = vld [vmem:[#allocation5 + $0x370] sm:$0xff]
    %v1342 = vld [vmem:[#allocation5 + $0x378] sm:$0xff]
    %v1343 = vld [vmem:[#allocation5 + $0x380] sm:$0xff]
    %v1344 = vld [vmem:[#allocation5 + $0x388] sm:$0xff]
    %v1345 = vld [vmem:[#allocation5 + $0x390] sm:$0xff]
    %v1346 = vld [vmem:[#allocation5 + $0x398] sm:$0xff]
    %v1347 = vld [vmem:[#allocation5 + $0x3a0] sm:$0xff]
    %v1348 = vld [vmem:[#allocation5 + $0x3a8] sm:$0xff]
    %v1349 = vld [vmem:[#allocation5 + $0x3b0] sm:$0xff]
    %v1350 = vld [vmem:[#allocation5 + $0x3b8] sm:$0xff]
    %v1351 = vld [vmem:[#allocation5 + $0x3c0] sm:$0xff]
    %v1352 = vld [vmem:[#allocation5 + $0x3c8] sm:$0xff]
    %v1353 = vld [vmem:[#allocation5 + $0x3d0] sm:$0xff]
    %v1354 = vld [vmem:[#allocation5 + $0x3d8] sm:$0xff]
    %v1355 = vld [vmem:[#allocation5 + $0x3e0] sm:$0xff]
    %v1356 = vld [vmem:[#allocation5 + $0x3e8] sm:$0xff]
    %v1357 = vld [vmem:[#allocation5 + $0x3f0] sm:$0xff]
    %v1358 = vld [vmem:[#allocation5 + $0x3f8] sm:$0xff]
    %v1359 = vld [vmem:[#allocation5 + $0x400] sm:$0xff]
    %v1360 = vld [vmem:[#allocation5 + $0x408] sm:$0xff]
    %v1361 = vld [vmem:[#allocation5 + $0x410] sm:$0xff]
    %v1362 = vld [vmem:[#allocation5 + $0x418] sm:$0xff]
    %v1363 = vld [vmem:[#allocation5 + $0x420] sm:$0xff]
    %v1364 = vld [vmem:[#allocation5 + $0x428] sm:$0xff]
    %v1365 = vld [vmem:[#allocation5 + $0x430] sm:$0xff]
    %v1366 = vld [vmem:[#allocation5 + $0x438] sm:$0xff]
    %v1367 = vld [vmem:[#allocation5 + $0x440] sm:$0xff]
    %v1368 = vld [vmem:[#allocation5 + $0x448] sm:$0xff]
    %v1369 = vld [vmem:[#allocation5 + $0x450] sm:$0xff]
    %v1370 = vld [vmem:[#allocation5 + $0x458] sm:$0xff]
    %v1371 = vld [vmem:[#allocation5 + $0x460] sm:$0xff]
    %v1372 = vld [vmem:[#allocation5 + $0x468] sm:$0xff]
    %v1373 = vld [vmem:[#allocation5 + $0x470] sm:$0xff]
    %v1374 = vld [vmem:[#allocation5 + $0x478] sm:$0xff]
    %v1375 = vld [vmem:[#allocation5 + $0x480] sm:$0xff]
    %v1376 = vld [vmem:[#allocation5 + $0x488] sm:$0xff]
    %v1377 = vld [vmem:[#allocation5 + $0x490] sm:$0xff]
    %v1378 = vld [vmem:[#allocation5 + $0x498] sm:$0xff]
    %v1379 = vld [vmem:[#allocation5 + $0x4a0] sm:$0xff]
    %v1380 = vld [vmem:[#allocation5 + $0x4a8] sm:$0xff]
    %v1381 = vld [vmem:[#allocation5 + $0x4b0] sm:$0xff]
    %v1382 = vld [vmem:[#allocation5 + $0x4b8] sm:$0xff]
    %v1383 = vld [vmem:[#allocation5 + $0x4c0] sm:$0xff]
    %v1384 = vld [vmem:[#allocation5 + $0x4c8] sm:$0xff]
    %v1385 = vld [vmem:[#allocation5 + $0x4d0] sm:$0xff]
    %v1386 = vld [vmem:[#allocation5 + $0x4d8] sm:$0xff]
    %v1387 = vld [vmem:[#allocation5 + $0x4e0] sm:$0xff]
    %v1388 = vld [vmem:[#allocation5 + $0x4e8] sm:$0xff]
    %v1389 = vld [vmem:[#allocation5 + $0x4f0] sm:$0xff]
    %v1390 = vld [vmem:[#allocation5 + $0x4f8] sm:$0xff]
    %v1391 = vld [vmem:[#allocation5 + $0x500] sm:$0xff]
    %v1392 = vld [vmem:[#allocation5 + $0x508] sm:$0xff]
    %v1393 = vld [vmem:[#allocation5 + $0x510] sm:$0xff]
    %v1394 = vld [vmem:[#allocation5 + $0x518] sm:$0xff]
    %v1395 = vld [vmem:[#allocation5 + $0x520] sm:$0xff]
    %v1396 = vld [vmem:[#allocation5 + $0x528] sm:$0xff]
    %v1397 = vld [vmem:[#allocation5 + $0x530] sm:$0xff]
    %v1398 = vld [vmem:[#allocation5 + $0x538] sm:$0xff]
    %v1399 = vld [vmem:[#allocation5 + $0x540] sm:$0xff]
    %v1400 = vld [vmem:[#allocation5 + $0x548] sm:$0xff]
    %v1401 = vld [vmem:[#allocation5 + $0x550] sm:$0xff]
    %v1402 = vld [vmem:[#allocation5 + $0x558] sm:$0xff]
    %v1403 = vld [vmem:[#allocation5 + $0x560] sm:$0xff]
    %v1404 = vld [vmem:[#allocation5 + $0x568] sm:$0xff]
    %v1405 = vld [vmem:[#allocation5 + $0x570] sm:$0xff]
    %v1406 = vld [vmem:[#allocation5 + $0x578] sm:$0xff]
    %v1407 = vld [vmem:[#allocation5 + $0x580] sm:$0xff]
    %v1408 = vld [vmem:[#allocation5 + $0x588] sm:$0xff]
    %v1409 = vld [vmem:[#allocation5 + $0x590] sm:$0xff]
    %v1410 = vld [vmem:[#allocation5 + $0x598] sm:$0xff]
    %v1411 = vld [vmem:[#allocation5 + $0x5a0] sm:$0xff]
    %v1412 = vld [vmem:[#allocation5 + $0x5a8] sm:$0xff]
    %v1413 = vld [vmem:[#allocation5 + $0x5b0] sm:$0xff]
    %v1414 = vld [vmem:[#allocation5 + $0x5b8] sm:$0xff]
    %v1415 = vld [vmem:[#allocation5 + $0x5c0] sm:$0xff]
    %v1416 = vld [vmem:[#allocation5 + $0x5c8] sm:$0xff]
    %v1417 = vld [vmem:[#allocation5 + $0x5d0] sm:$0xff]
    %v1418 = vld [vmem:[#allocation5 + $0x5d8] sm:$0xff]
    %v1419 = vld [vmem:[#allocation5 + $0x5e0] sm:$0xff]
    %v1420 = vld [vmem:[#allocation5 + $0x5e8] sm:$0xff]
    %v1421 = vld [vmem:[#allocation5 + $0x5f0] sm:$0xff]
    %v1422 = vld [vmem:[#allocation5 + $0x5f8] sm:$0xff]
    %v1423 = vld [vmem:[#allocation5 + $0x600] sm:$0xff]
    %v1424 = vld [vmem:[#allocation5 + $0x608] sm:$0xff]
    %v1425 = vld [vmem:[#allocation5 + $0x610] sm:$0xff]
    %v1426 = vld [vmem:[#allocation5 + $0x618] sm:$0xff]
    %v1427 = vld [vmem:[#allocation5 + $0x620] sm:$0xff]
    %v1428 = vld [vmem:[#allocation5 + $0x628] sm:$0xff]
    %v1429 = vld [vmem:[#allocation5 + $0x630] sm:$0xff]
    %v1430 = vld [vmem:[#allocation5 + $0x638] sm:$0xff]
    %v1431 = vld [vmem:[#allocation5 + $0x640] sm:$0xff]
    %v1432 = vld [vmem:[#allocation5 + $0x648] sm:$0xff]
    %v1433 = vld [vmem:[#allocation5 + $0x650] sm:$0xff]
    %v1434 = vld [vmem:[#allocation5 + $0x658] sm:$0xff]
    %v1435 = vld [vmem:[#allocation5 + $0x660] sm:$0xff]
    %v1436 = vld [vmem:[#allocation5 + $0x668] sm:$0xff]
    %v1437 = vld [vmem:[#allocation5 + $0x670] sm:$0xff]
    %v1438 = vld [vmem:[#allocation5 + $0x678] sm:$0xff]
    %v1439 = vld [vmem:[#allocation5 + $0x680] sm:$0xff]
    %v1440 = vld [vmem:[#allocation5 + $0x688] sm:$0xff]
    %v1441 = vld [vmem:[#allocation5 + $0x690] sm:$0xff]
    %v1442 = vld [vmem:[#allocation5 + $0x698] sm:$0xff]
    %v1443 = vld [vmem:[#allocation5 + $0x6a0] sm:$0xff]
    %v1444 = vld [vmem:[#allocation5 + $0x6a8] sm:$0xff]
    %v1445 = vld [vmem:[#allocation5 + $0x6b0] sm:$0xff]
    %v1446 = vld [vmem:[#allocation5 + $0x6b8] sm:$0xff]
    %v1447 = vld [vmem:[#allocation5 + $0x6c0] sm:$0xff]
    %v1448 = vld [vmem:[#allocation5 + $0x6c8] sm:$0xff]
    %v1449 = vld [vmem:[#allocation5 + $0x6d0] sm:$0xff]
    %v1450 = vld [vmem:[#allocation5 + $0x6d8] sm:$0xff]
    %v1451 = vld [vmem:[#allocation5 + $0x6e0] sm:$0xff]
    %v1452 = vld [vmem:[#allocation5 + $0x6e8] sm:$0xff]
    %v1453 = vld [vmem:[#allocation5 + $0x6f0] sm:$0xff]
    %v1454 = vld [vmem:[#allocation5 + $0x6f8] sm:$0xff]
    %v1455 = vld [vmem:[#allocation5 + $0x700] sm:$0xff]
    %v1456 = vld [vmem:[#allocation5 + $0x708] sm:$0xff]
    %v1457 = vld [vmem:[#allocation5 + $0x710] sm:$0xff]
    %v1458 = vld [vmem:[#allocation5 + $0x718] sm:$0xff]
    %v1459 = vld [vmem:[#allocation5 + $0x720] sm:$0xff]
    %v1460 = vld [vmem:[#allocation5 + $0x728] sm:$0xff]
    %v1461 = vld [vmem:[#allocation5 + $0x730] sm:$0xff]
    %v1462 = vld [vmem:[#allocation5 + $0x738] sm:$0xff]
    %v1463 = vld [vmem:[#allocation5 + $0x740] sm:$0xff]
    %v1464 = vld [vmem:[#allocation5 + $0x748] sm:$0xff]
    %v1465 = vld [vmem:[#allocation5 + $0x750] sm:$0xff]
    %v1466 = vld [vmem:[#allocation5 + $0x758] sm:$0xff]
    %v1467 = vld [vmem:[#allocation5 + $0x760] sm:$0xff]
    %v1468 = vld [vmem:[#allocation5 + $0x768] sm:$0xff]
    %v1469 = vld [vmem:[#allocation5 + $0x770] sm:$0xff]
    %v1470 = vld [vmem:[#allocation5 + $0x778] sm:$0xff]
    %v1471 = vld [vmem:[#allocation5 + $0x780] sm:$0xff]
    %v1472 = vld [vmem:[#allocation5 + $0x788] sm:$0xff]
    %v1473 = vld [vmem:[#allocation5 + $0x790] sm:$0xff]
    %v1474 = vld [vmem:[#allocation5 + $0x798] sm:$0xff]
    %v1475 = vld [vmem:[#allocation5 + $0x7a0] sm:$0xff]
    %v1476 = vld [vmem:[#allocation5 + $0x7a8] sm:$0xff]
    %v1477 = vld [vmem:[#allocation5 + $0x7b0] sm:$0xff]
    %v1478 = vld [vmem:[#allocation5 + $0x7b8] sm:$0xff]
    %v1479 = vld [vmem:[#allocation5 + $0x7c0] sm:$0xff]
    %v1480 = vld [vmem:[#allocation5 + $0x7c8] sm:$0xff]
    %v1481 = vld [vmem:[#allocation5 + $0x7d0] sm:$0xff]
    %v1482 = vld [vmem:[#allocation5 + $0x7d8] sm:$0xff]
    %v1483 = vld [vmem:[#allocation5 + $0x7e0] sm:$0xff]
    %v1484 = vld [vmem:[#allocation5 + $0x7e8] sm:$0xff]
    %v1485 = vld [vmem:[#allocation5 + $0x7f0] sm:$0xff]
    %v1486 = vld [vmem:[#allocation5 + $0x7f8] sm:$0xff]
    %v1487 = vcombine.high %v1216, %v1216
    %1489 = vmatprep.subr.mxu0 %v1232
    %1490 = vmatpush1.msra.mxu0 %v1231
    %1491 = vmatprep.subr.mxu0 %v1240
    %1492 = vmatpush1.msra.mxu0 %v1239
    %1493 = vmatprep.subr.mxu0 %v1248
    %1494 = vmatpush1.msra.mxu0 %v1247
    %1495 = vmatprep.subr.mxu0 %v1256
    %1496 = vmatpush1.msra.mxu0 %v1255
    %1497 = vmatprep.subr.mxu0 %v1264
    %1498 = vmatpush1.msra.mxu0 %v1263
    %1499 = vmatprep.subr.mxu0 %v1272
    %1500 = vmatpush1.msra.mxu0 %v1271
    %1501 = vmatprep.subr.mxu0 %v1280
    %1502 = vmatpush1.msra.mxu0 %v1279
    %1503 = vmatprep.subr.mxu0 %v1288
    %1504 = vmatpush1.msra.mxu0 %v1287
    %1505 = vmatprep.subr.mxu0 %v1296
    %1506 = vmatpush1.msra.mxu0 %v1295
    %1507 = vmatprep.subr.mxu0 %v1304
    %1508 = vmatpush1.msra.mxu0 %v1303
    %1509 = vmatprep.subr.mxu0 %v1312
    %1510 = vmatpush1.msra.mxu0 %v1311
    %1511 = vmatprep.subr.mxu0 %v1320
    %1512 = vmatpush1.msra.mxu0 %v1319
    %1513 = vmatprep.subr.mxu0 %v1328
    %1514 = vmatpush1.msra.mxu0 %v1327
    %1515 = vmatprep.subr.mxu0 %v1336
    %1516 = vmatpush1.msra.mxu0 %v1335
    %1517 = vmatprep.subr.mxu0 %v1344
    %1518 = vmatpush1.msra.mxu0 %v1343
    %1519 = vmatprep.subr.mxu0 %v1352
    %1520 = vmatpush1.msra.mxu0 %v1351
    %1521 = vmatprep.subr.mxu0 %v1360
    %1522 = vmatpush1.msra.mxu0 %v1359
    %1523 = vmatprep.subr.mxu0 %v1368
    %1524 = vmatpush1.msra.mxu0 %v1367
    %1525 = vmatprep.subr.mxu0 %v1376
    %1526 = vmatpush1.msra.mxu0 %v1375
    %1527 = vmatprep.subr.mxu0 %v1384
    %1528 = vmatpush1.msra.mxu0 %v1383
    %1529 = vmatprep.subr.mxu0 %v1392
    %1530 = vmatpush1.msra.mxu0 %v1391
    %1531 = vmatprep.subr.mxu0 %v1400
    %1532 = vmatpush1.msra.mxu0 %v1399
    %1533 = vmatprep.subr.mxu0 %v1408
    %1534 = vmatpush1.msra.mxu0 %v1407
    %1535 = vmatprep.subr.mxu0 %v1416
    %1536 = vmatpush1.msra.mxu0 %v1415
    %1537 = vmatprep.subr.mxu0 %v1424
    %1538 = vmatpush1.msra.mxu0 %v1423
    %1539 = vmatprep.subr.mxu0 %v1432
    %1540 = vmatpush1.msra.mxu0 %v1431
    %1541 = vmatprep.subr.mxu0 %v1440
    %1542 = vmatpush1.msra.mxu0 %v1439
    %1543 = vmatprep.subr.mxu0 %v1448
    %1544 = vmatpush1.msra.mxu0 %v1447
    %1545 = vmatprep.subr.mxu0 %v1456
    %1546 = vmatpush1.msra.mxu0 %v1455
    %1547 = vmatprep.subr.mxu0 %v1464
    %1548 = vmatpush1.msra.mxu0 %v1463
    %1549 = vmatprep.subr.mxu0 %v1472
    %1550 = vmatpush1.msra.mxu0 %v1471
    %1551 = vmatprep.subr.mxu0 %v1480
    %1552 = vmatpush1.msra.mxu0 %v1479
    %1553 = vmatprep.mubr.f32.mxu0 %v1487
    %1554 = vmatmul.mubr.f32.gmra.mrb[0].mxu0 %v1216
    %v1555 = vpop.f32.mrb[0].mxu0
    %v1556 = vadd.f32 0.0, %v1555
    %v1557 = vpop.f32.mrb[0].mxu0
    %v1558 = vadd.f32 0.0, %v1557
    %1559 = vdwg.mxu0
    %1560 = vmatprep.subr.mxu0 %v1234
    %1561 = vmatpush1.msra.mxu0 %v1233
    %1562 = vmatprep.subr.mxu0 %v1242
    %1563 = vmatpush1.msra.mxu0 %v1241
    %1564 = vmatprep.subr.mxu0 %v1250
    %1565 = vmatpush1.msra.mxu0 %v1249
    %1566 = vmatprep.subr.mxu0 %v1258
    %1567 = vmatpush1.msra.mxu0 %v1257
    %1568 = vmatprep.subr.mxu0 %v1266
    %1569 = vmatpush1.msra.mxu0 %v1265
    %1570 = vmatprep.subr.mxu0 %v1274
    %1571 = vmatpush1.msra.mxu0 %v1273
    %1572 = vmatprep.subr.mxu0 %v1282
    %1573 = vmatpush1.msra.mxu0 %v1281
    %1574 = vmatprep.subr.mxu0 %v1290
    %1575 = vmatpush1.msra.mxu0 %v1289
    %1576 = vmatprep.subr.mxu0 %v1298
    %1577 = vmatpush1.msra.mxu0 %v1297
    %1578 = vmatprep.subr.mxu0 %v1306
    %1579 = vmatpush1.msra.mxu0 %v1305
    %1580 = vmatprep.subr.mxu0 %v1314
    %1581 = vmatpush1.msra.mxu0 %v1313
    %1582 = vmatprep.subr.mxu0 %v1322
    %1583 = vmatpush1.msra.mxu0 %v1321
    %1584 = vmatprep.subr.mxu0 %v1330
    %1585 = vmatpush1.msra.mxu0 %v1329
    %1586 = vmatprep.subr.mxu0 %v1338
    %1587 = vmatpush1.msra.mxu0 %v1337
    %1588 = vmatprep.subr.mxu0 %v1346
    %1589 = vmatpush1.msra.mxu0 %v1345
    %1590 = vmatprep.subr.mxu0 %v1354
    %1591 = vmatpush1.msra.mxu0 %v1353
    %1592 = vmatprep.subr.mxu0 %v1362
    %1593 = vmatpush1.msra.mxu0 %v1361
    %1594 = vmatprep.subr.mxu0 %v1370
    %1595 = vmatpush1.msra.mxu0 %v1369
    %1596 = vmatprep.subr.mxu0 %v1378
    %1597 = vmatpush1.msra.mxu0 %v1377
    %1598 = vmatprep.subr.mxu0 %v1386
    %1599 = vmatpush1.msra.mxu0 %v1385
    %1600 = vmatprep.subr.mxu0 %v1394
    %1601 = vmatpush1.msra.mxu0 %v1393
    %1602 = vmatprep.subr.mxu0 %v1402
    %1603 = vmatpush1.msra.mxu0 %v1401
    %1604 = vmatprep.subr.mxu0 %v1410
    %1605 = vmatpush1.msra.mxu0 %v1409
    %1606 = vmatprep.subr.mxu0 %v1418
    %1607 = vmatpush1.msra.mxu0 %v1417
    %1608 = vmatprep.subr.mxu0 %v1426
    %1609 = vmatpush1.msra.mxu0 %v1425
    %1610 = vmatprep.subr.mxu0 %v1434
    %1611 = vmatpush1.msra.mxu0 %v1433
    %1612 = vmatprep.subr.mxu0 %v1442
    %1613 = vmatpush1.msra.mxu0 %v1441
    %1614 = vmatprep.subr.mxu0 %v1450
    %1615 = vmatpush1.msra.mxu0 %v1449
    %1616 = vmatprep.subr.mxu0 %v1458
    %1617 = vmatpush1.msra.mxu0 %v1457
    %1618 = vmatprep.subr.mxu0 %v1466
    %1619 = vmatpush1.msra.mxu0 %v1465
    %1620 = vmatprep.subr.mxu0 %v1474
    %1621 = vmatpush1.msra.mxu0 %v1473
    %1622 = vmatprep.subr.mxu0 %v1482
    %1623 = vmatpush1.msra.mxu0 %v1481
    %1624 = vmatprep.mubr.f32.mxu0 %v1487
    %1625 = vmatmul.mubr.f32.gmra.mrb[0].mxu0 %v1216
    %v1626 = vpop.f32.mrb[0].mxu0
    %v1627 = vadd.f32 0.0, %v1626
    %v1628 = vpop.f32.mrb[0].mxu0
    %v1629 = vadd.f32 0.0, %v1628
    %1630 = vdwg.mxu0
    %1631 = vmatprep.subr.mxu0 %v1236
    %1632 = vmatpush1.msra.mxu0 %v1235
    %1633 = vmatprep.subr.mxu0 %v1244
    %1634 = vmatpush1.msra.mxu0 %v1243
    %1635 = vmatprep.subr.mxu0 %v1252
    %1636 = vmatpush1.msra.mxu0 %v1251
    %1637 = vmatprep.subr.mxu0 %v1260
    %1638 = vmatpush1.msra.mxu0 %v1259
    %1639 = vmatprep.subr.mxu0 %v1268
    %1640 = vmatpush1.msra.mxu0 %v1267
    %1641 = vmatprep.subr.mxu0 %v1276
    %1642 = vmatpush1.msra.mxu0 %v1275
    %1643 = vmatprep.subr.mxu0 %v1284
    %1644 = vmatpush1.msra.mxu0 %v1283
    %1645 = vmatprep.subr.mxu0 %v1292
    %1646 = vmatpush1.msra.mxu0 %v1291
    %1647 = vmatprep.subr.mxu0 %v1300
    %1648 = vmatpush1.msra.mxu0 %v1299
    %1649 = vmatprep.subr.mxu0 %v1308
    %1650 = vmatpush1.msra.mxu0 %v1307
    %1651 = vmatprep.subr.mxu0 %v1316
    %1652 = vmatpush1.msra.mxu0 %v1315
    %1653 = vmatprep.subr.mxu0 %v1324
    %1654 = vmatpush1.msra.mxu0 %v1323
    %1655 = vmatprep.subr.mxu0 %v1332
    %1656 = vmatpush1.msra.mxu0 %v1331
    %1657 = vmatprep.subr.mxu0 %v1340
    %1658 = vmatpush1.msra.mxu0 %v1339
    %1659 = vmatprep.subr.mxu0 %v1348
    %1660 = vmatpush1.msra.mxu0 %v1347
    %1661 = vmatprep.subr.mxu0 %v1356
    %1662 = vmatpush1.msra.mxu0 %v1355
    %1663 = vmatprep.subr.mxu0 %v1364
    %1664 = vmatpush1.msra.mxu0 %v1363
    %1665 = vmatprep.subr.mxu0 %v1372
    %1666 = vmatpush1.msra.mxu0 %v1371
    %1667 = vmatprep.subr.mxu0 %v1380
    %1668 = vmatpush1.msra.mxu0 %v1379
    %1669 = vmatprep.subr.mxu0 %v1388
    %1670 = vmatpush1.msra.mxu0 %v1387
    %1671 = vmatprep.subr.mxu0 %v1396
    %1672 = vmatpush1.msra.mxu0 %v1395
    %1673 = vmatprep.subr.mxu0 %v1404
    %1674 = vmatpush1.msra.mxu0 %v1403
    %1675 = vmatprep.subr.mxu0 %v1412
    %1676 = vmatpush1.msra.mxu0 %v1411
    %1677 = vmatprep.subr.mxu0 %v1420
    %1678 = vmatpush1.msra.mxu0 %v1419
    %1679 = vmatprep.subr.mxu0 %v1428
    %1680 = vmatpush1.msra.mxu0 %v1427
    %1681 = vmatprep.subr.mxu0 %v1436
    %1682 = vmatpush1.msra.mxu0 %v1435
    %1683 = vmatprep.subr.mxu0 %v1444
    %1684 = vmatpush1.msra.mxu0 %v1443
    %1685 = vmatprep.subr.mxu0 %v1452
    %1686 = vmatpush1.msra.mxu0 %v1451
    %1687 = vmatprep.subr.mxu0 %v1460
    %1688 = vmatpush1.msra.mxu0 %v1459
    %1689 = vmatprep.subr.mxu0 %v1468
    %1690 = vmatpush1.msra.mxu0 %v1467
    %1691 = vmatprep.subr.mxu0 %v1476
    %1692 = vmatpush1.msra.mxu0 %v1475
    %1693 = vmatprep.subr.mxu0 %v1484
    %1694 = vmatpush1.msra.mxu0 %v1483
    %1695 = vmatprep.mubr.f32.mxu0 %v1487
    %1696 = vmatmul.mubr.f32.gmra.mrb[0].mxu0 %v1216
    %v1697 = vpop.f32.mrb[0].mxu0
    %v1698 = vadd.f32 0.0, %v1697
    %v1699 = vpop.f32.mrb[0].mxu0
    %v1700 = vadd.f32 0.0, %v1699
    %1701 = vdwg.mxu0
    %1702 = vmatprep.subr.mxu0 %v1238
    %1703 = vmatpush1.msra.mxu0 %v1237
    %1704 = vmatprep.subr.mxu0 %v1246
    %1705 = vmatpush1.msra.mxu0 %v1245
    %1706 = vmatprep.subr.mxu0 %v1254
    %1707 = vmatpush1.msra.mxu0 %v1253
    %1708 = vmatprep.subr.mxu0 %v1262
    %1709 = vmatpush1.msra.mxu0 %v1261
    %1710 = vmatprep.subr.mxu0 %v1270
    %1711 = vmatpush1.msra.mxu0 %v1269
    %1712 = vmatprep.subr.mxu0 %v1278
    %1713 = vmatpush1.msra.mxu0 %v1277
    %1714 = vmatprep.subr.mxu0 %v1286
    %1715 = vmatpush1.msra.mxu0 %v1285
    %1716 = vmatprep.subr.mxu0 %v1294
    %1717 = vmatpush1.msra.mxu0 %v1293
    %1718 = vmatprep.subr.mxu0 %v1302
    %1719 = vmatpush1.msra.mxu0 %v1301
    %1720 = vmatprep.subr.mxu0 %v1310
    %1721 = vmatpush1.msra.mxu0 %v1309
    %1722 = vmatprep.subr.mxu0 %v1318
    %1723 = vmatpush1.msra.mxu0 %v1317
    %1724 = vmatprep.subr.mxu0 %v1326
    %1725 = vmatpush1.msra.mxu0 %v1325
    %1726 = vmatprep.subr.mxu0 %v1334
    %1727 = vmatpush1.msra.mxu0 %v1333
    %1728 = vmatprep.subr.mxu0 %v1342
    %1729 = vmatpush1.msra.mxu0 %v1341
    %1730 = vmatprep.subr.mxu0 %v1350
    %1731 = vmatpush1.msra.mxu0 %v1349
    %1732 = vmatprep.subr.mxu0 %v1358
    %1733 = vmatpush1.msra.mxu0 %v1357
    %1734 = vmatprep.subr.mxu0 %v1366
    %1735 = vmatpush1.msra.mxu0 %v1365
    %1736 = vmatprep.subr.mxu0 %v1374
    %1737 = vmatpush1.msra.mxu0 %v1373
    %1738 = vmatprep.subr.mxu0 %v1382
    %1739 = vmatpush1.msra.mxu0 %v1381
    %1740 = vmatprep.subr.mxu0 %v1390
    %1741 = vmatpush1.msra.mxu0 %v1389
    %1742 = vmatprep.subr.mxu0 %v1398
    %1743 = vmatpush1.msra.mxu0 %v1397
    %1744 = vmatprep.subr.mxu0 %v1406
    %1745 = vmatpush1.msra.mxu0 %v1405
    %1746 = vmatprep.subr.mxu0 %v1414
    %1747 = vmatpush1.msra.mxu0 %v1413
    %1748 = vmatprep.subr.mxu0 %v1422
    %1749 = vmatpush1.msra.mxu0 %v1421
    %1750 = vmatprep.subr.mxu0 %v1430
    %1751 = vmatpush1.msra.mxu0 %v1429
    %1752 = vmatprep.subr.mxu0 %v1438
    %1753 = vmatpush1.msra.mxu0 %v1437
    %1754 = vmatprep.subr.mxu0 %v1446
    %1755 = vmatpush1.msra.mxu0 %v1445
    %1756 = vmatprep.subr.mxu0 %v1454
    %1757 = vmatpush1.msra.mxu0 %v1453
    %1758 = vmatprep.subr.mxu0 %v1462
    %1759 = vmatpush1.msra.mxu0 %v1461
    %1760 = vmatprep.subr.mxu0 %v1470
    %1761 = vmatpush1.msra.mxu0 %v1469
    %1762 = vmatprep.subr.mxu0 %v1478
    %1763 = vmatpush1.msra.mxu0 %v1477
    %1764 = vmatprep.subr.mxu0 %v1486
    %1765 = vmatpush1.msra.mxu0 %v1485
    %1766 = vmatprep.mubr.f32.mxu0 %v1487
    %1767 = vmatmul.mubr.f32.gmra.mrb[0].mxu0 %v1216
    %v1768 = vpop.f32.mrb[0].mxu0
    %v1769 = vadd.f32 0.0, %v1768
    %v1770 = vpop.f32.mrb[0].mxu0
    %v1771 = vadd.f32 0.0, %v1770
    %1772 = vdwg.mxu0
    %v1773 = vld [vmem:[#allocation7] sm:$0xff]
    %v1774 = vld [vmem:[#allocation7 + $0x8] sm:$0xff]
    %v1775 = vld [vmem:[#allocation7 + $0x10] sm:$0xff]
    %v1776 = vld [vmem:[#allocation7 + $0x18] sm:$0xff]
    %v1777 = vld [vmem:[#allocation7 + $0x20] sm:$0xff]
    %v1778 = vld [vmem:[#allocation7 + $0x28] sm:$0xff]
    %v1779 = vld [vmem:[#allocation7 + $0x30] sm:$0xff]
    %v1780 = vld [vmem:[#allocation7 + $0x38] sm:$0xff]
    %v1781 = vld [vmem:[#allocation7 + $0x40] sm:$0xff]
    %v1782 = vld [vmem:[#allocation7 + $0x48] sm:$0xff]
    %v1783 = vld [vmem:[#allocation7 + $0x50] sm:$0xff]
    %v1784 = vld [vmem:[#allocation7 + $0x58] sm:$0xff]
    %v1785 = vld [vmem:[#allocation7 + $0x60] sm:$0xff]
    %v1786 = vld [vmem:[#allocation7 + $0x68] sm:$0xff]
    %v1787 = vld [vmem:[#allocation7 + $0x70] sm:$0xff]
    %v1788 = vld [vmem:[#allocation7 + $0x78] sm:$0xff]
    %v1789 = vld [vmem:[#allocation7 + $0x80] sm:$0xff]
    %v1790 = vld [vmem:[#allocation7 + $0x88] sm:$0xff]
    %v1791 = vld [vmem:[#allocation7 + $0x90] sm:$0xff]
    %v1792 = vld [vmem:[#allocation7 + $0x98] sm:$0xff]
    %v1793 = vld [vmem:[#allocation7 + $0xa0] sm:$0xff]
    %v1794 = vld [vmem:[#allocation7 + $0xa8] sm:$0xff]
    %v1795 = vld [vmem:[#allocation7 + $0xb0] sm:$0xff]
    %v1796 = vld [vmem:[#allocation7 + $0xb8] sm:$0xff]
    %v1797 = vld [vmem:[#allocation7 + $0xc0] sm:$0xff]
    %v1798 = vld [vmem:[#allocation7 + $0xc8] sm:$0xff]
    %v1799 = vld [vmem:[#allocation7 + $0xd0] sm:$0xff]
    %v1800 = vld [vmem:[#allocation7 + $0xd8] sm:$0xff]
    %v1801 = vld [vmem:[#allocation7 + $0xe0] sm:$0xff]
    %v1802 = vld [vmem:[#allocation7 + $0xe8] sm:$0xff]
    %v1803 = vld [vmem:[#allocation7 + $0xf0] sm:$0xff]
    %v1804 = vld [vmem:[#allocation7 + $0xf8] sm:$0xff]
    %v1805 = vld [vmem:[#allocation7 + $0x100] sm:$0xff]
    %v1806 = vld [vmem:[#allocation7 + $0x108] sm:$0xff]
    %v1807 = vld [vmem:[#allocation7 + $0x110] sm:$0xff]
    %v1808 = vld [vmem:[#allocation7 + $0x118] sm:$0xff]
    %v1809 = vld [vmem:[#allocation7 + $0x120] sm:$0xff]
    %v1810 = vld [vmem:[#allocation7 + $0x128] sm:$0xff]
    %v1811 = vld [vmem:[#allocation7 + $0x130] sm:$0xff]
    %v1812 = vld [vmem:[#allocation7 + $0x138] sm:$0xff]
    %v1813 = vld [vmem:[#allocation7 + $0x140] sm:$0xff]
    %v1814 = vld [vmem:[#allocation7 + $0x148] sm:$0xff]
    %v1815 = vld [vmem:[#allocation7 + $0x150] sm:$0xff]
    %v1816 = vld [vmem:[#allocation7 + $0x158] sm:$0xff]
    %v1817 = vld [vmem:[#allocation7 + $0x160] sm:$0xff]
    %v1818 = vld [vmem:[#allocation7 + $0x168] sm:$0xff]
    %v1819 = vld [vmem:[#allocation7 + $0x170] sm:$0xff]
    %v1820 = vld [vmem:[#allocation7 + $0x178] sm:$0xff]
    %v1821 = vld [vmem:[#allocation7 + $0x180] sm:$0xff]
    %v1822 = vld [vmem:[#allocation7 + $0x188] sm:$0xff]
    %v1823 = vld [vmem:[#allocation7 + $0x190] sm:$0xff]
    %v1824 = vld [vmem:[#allocation7 + $0x198] sm:$0xff]
    %v1825 = vld [vmem:[#allocation7 + $0x1a0] sm:$0xff]
    %v1826 = vld [vmem:[#allocation7 + $0x1a8] sm:$0xff]
    %v1827 = vld [vmem:[#allocation7 + $0x1b0] sm:$0xff]
    %v1828 = vld [vmem:[#allocation7 + $0x1b8] sm:$0xff]
    %v1829 = vld [vmem:[#allocation7 + $0x1c0] sm:$0xff]
    %v1830 = vld [vmem:[#allocation7 + $0x1c8] sm:$0xff]
    %v1831 = vld [vmem:[#allocation7 + $0x1d0] sm:$0xff]
    %v1832 = vld [vmem:[#allocation7 + $0x1d8] sm:$0xff]
    %v1833 = vld [vmem:[#allocation7 + $0x1e0] sm:$0xff]
    %v1834 = vld [vmem:[#allocation7 + $0x1e8] sm:$0xff]
    %v1835 = vld [vmem:[#allocation7 + $0x1f0] sm:$0xff]
    %v1836 = vld [vmem:[#allocation7 + $0x1f8] sm:$0xff]
    %v1837 = vld [vmem:[#allocation7 + $0x200] sm:$0xff]
    %v1838 = vld [vmem:[#allocation7 + $0x208] sm:$0xff]
    %v1839 = vld [vmem:[#allocation7 + $0x210] sm:$0xff]
    %v1840 = vld [vmem:[#allocation7 + $0x218] sm:$0xff]
    %v1841 = vld [vmem:[#allocation7 + $0x220] sm:$0xff]
    %v1842 = vld [vmem:[#allocation7 + $0x228] sm:$0xff]
    %v1843 = vld [vmem:[#allocation7 + $0x230] sm:$0xff]
    %v1844 = vld [vmem:[#allocation7 + $0x238] sm:$0xff]
    %v1845 = vld [vmem:[#allocation7 + $0x240] sm:$0xff]
    %v1846 = vld [vmem:[#allocation7 + $0x248] sm:$0xff]
    %v1847 = vld [vmem:[#allocation7 + $0x250] sm:$0xff]
    %v1848 = vld [vmem:[#allocation7 + $0x258] sm:$0xff]
    %v1849 = vld [vmem:[#allocation7 + $0x260] sm:$0xff]
    %v1850 = vld [vmem:[#allocation7 + $0x268] sm:$0xff]
    %v1851 = vld [vmem:[#allocation7 + $0x270] sm:$0xff]
    %v1852 = vld [vmem:[#allocation7 + $0x278] sm:$0xff]
    %v1853 = vld [vmem:[#allocation7 + $0x280] sm:$0xff]
    %v1854 = vld [vmem:[#allocation7 + $0x288] sm:$0xff]
    %v1855 = vld [vmem:[#allocation7 + $0x290] sm:$0xff]
    %v1856 = vld [vmem:[#allocation7 + $0x298] sm:$0xff]
    %v1857 = vld [vmem:[#allocation7 + $0x2a0] sm:$0xff]
    %v1858 = vld [vmem:[#allocation7 + $0x2a8] sm:$0xff]
    %v1859 = vld [vmem:[#allocation7 + $0x2b0] sm:$0xff]
    %v1860 = vld [vmem:[#allocation7 + $0x2b8] sm:$0xff]
    %v1861 = vld [vmem:[#allocation7 + $0x2c0] sm:$0xff]
    %v1862 = vld [vmem:[#allocation7 + $0x2c8] sm:$0xff]
    %v1863 = vld [vmem:[#allocation7 + $0x2d0] sm:$0xff]
    %v1864 = vld [vmem:[#allocation7 + $0x2d8] sm:$0xff]
    %v1865 = vld [vmem:[#allocation7 + $0x2e0] sm:$0xff]
    %v1866 = vld [vmem:[#allocation7 + $0x2e8] sm:$0xff]
    %v1867 = vld [vmem:[#allocation7 + $0x2f0] sm:$0xff]
    %v1868 = vld [vmem:[#allocation7 + $0x2f8] sm:$0xff]
    %v1869 = vld [vmem:[#allocation7 + $0x300] sm:$0xff]
    %v1870 = vld [vmem:[#allocation7 + $0x308] sm:$0xff]
    %v1871 = vld [vmem:[#allocation7 + $0x310] sm:$0xff]
    %v1872 = vld [vmem:[#allocation7 + $0x318] sm:$0xff]
    %v1873 = vld [vmem:[#allocation7 + $0x320] sm:$0xff]
    %v1874 = vld [vmem:[#allocation7 + $0x328] sm:$0xff]
    %v1875 = vld [vmem:[#allocation7 + $0x330] sm:$0xff]
    %v1876 = vld [vmem:[#allocation7 + $0x338] sm:$0xff]
    %v1877 = vld [vmem:[#allocation7 + $0x340] sm:$0xff]
    %v1878 = vld [vmem:[#allocation7 + $0x348] sm:$0xff]
    %v1879 = vld [vmem:[#allocation7 + $0x350] sm:$0xff]
    %v1880 = vld [vmem:[#allocation7 + $0x358] sm:$0xff]
    %v1881 = vld [vmem:[#allocation7 + $0x360] sm:$0xff]
    %v1882 = vld [vmem:[#allocation7 + $0x368] sm:$0xff]
    %v1883 = vld [vmem:[#allocation7 + $0x370] sm:$0xff]
    %v1884 = vld [vmem:[#allocation7 + $0x378] sm:$0xff]
    %v1885 = vld [vmem:[#allocation7 + $0x380] sm:$0xff]
    %v1886 = vld [vmem:[#allocation7 + $0x388] sm:$0xff]
    %v1887 = vld [vmem:[#allocation7 + $0x390] sm:$0xff]
    %v1888 = vld [vmem:[#allocation7 + $0x398] sm:$0xff]
    %v1889 = vld [vmem:[#allocation7 + $0x3a0] sm:$0xff]
    %v1890 = vld [vmem:[#allocation7 + $0x3a8] sm:$0xff]
    %v1891 = vld [vmem:[#allocation7 + $0x3b0] sm:$0xff]
    %v1892 = vld [vmem:[#allocation7 + $0x3b8] sm:$0xff]
    %v1893 = vld [vmem:[#allocation7 + $0x3c0] sm:$0xff]
    %v1894 = vld [vmem:[#allocation7 + $0x3c8] sm:$0xff]
    %v1895 = vld [vmem:[#allocation7 + $0x3d0] sm:$0xff]
    %v1896 = vld [vmem:[#allocation7 + $0x3d8] sm:$0xff]
    %v1897 = vld [vmem:[#allocation7 + $0x3e0] sm:$0xff]
    %v1898 = vld [vmem:[#allocation7 + $0x3e8] sm:$0xff]
    %v1899 = vld [vmem:[#allocation7 + $0x3f0] sm:$0xff]
    %v1900 = vld [vmem:[#allocation7 + $0x3f8] sm:$0xff]
    %v1901 = vld [vmem:[#allocation7 + $0x400] sm:$0xff]
    %v1902 = vld [vmem:[#allocation7 + $0x408] sm:$0xff]
    %v1903 = vld [vmem:[#allocation7 + $0x410] sm:$0xff]
    %v1904 = vld [vmem:[#allocation7 + $0x418] sm:$0xff]
    %v1905 = vld [vmem:[#allocation7 + $0x420] sm:$0xff]
    %v1906 = vld [vmem:[#allocation7 + $0x428] sm:$0xff]
    %v1907 = vld [vmem:[#allocation7 + $0x430] sm:$0xff]
    %v1908 = vld [vmem:[#allocation7 + $0x438] sm:$0xff]
    %v1909 = vld [vmem:[#allocation7 + $0x440] sm:$0xff]
    %v1910 = vld [vmem:[#allocation7 + $0x448] sm:$0xff]
    %v1911 = vld [vmem:[#allocation7 + $0x450] sm:$0xff]
    %v1912 = vld [vmem:[#allocation7 + $0x458] sm:$0xff]
    %v1913 = vld [vmem:[#allocation7 + $0x460] sm:$0xff]
    %v1914 = vld [vmem:[#allocation7 + $0x468] sm:$0xff]
    %v1915 = vld [vmem:[#allocation7 + $0x470] sm:$0xff]
    %v1916 = vld [vmem:[#allocation7 + $0x478] sm:$0xff]
    %v1917 = vld [vmem:[#allocation7 + $0x480] sm:$0xff]
    %v1918 = vld [vmem:[#allocation7 + $0x488] sm:$0xff]
    %v1919 = vld [vmem:[#allocation7 + $0x490] sm:$0xff]
    %v1920 = vld [vmem:[#allocation7 + $0x498] sm:$0xff]
    %v1921 = vld [vmem:[#allocation7 + $0x4a0] sm:$0xff]
    %v1922 = vld [vmem:[#allocation7 + $0x4a8] sm:$0xff]
    %v1923 = vld [vmem:[#allocation7 + $0x4b0] sm:$0xff]
    %v1924 = vld [vmem:[#allocation7 + $0x4b8] sm:$0xff]
    %v1925 = vld [vmem:[#allocation7 + $0x4c0] sm:$0xff]
    %v1926 = vld [vmem:[#allocation7 + $0x4c8] sm:$0xff]
    %v1927 = vld [vmem:[#allocation7 + $0x4d0] sm:$0xff]
    %v1928 = vld [vmem:[#allocation7 + $0x4d8] sm:$0xff]
    %v1929 = vld [vmem:[#allocation7 + $0x4e0] sm:$0xff]
    %v1930 = vld [vmem:[#allocation7 + $0x4e8] sm:$0xff]
    %v1931 = vld [vmem:[#allocation7 + $0x4f0] sm:$0xff]
    %v1932 = vld [vmem:[#allocation7 + $0x4f8] sm:$0xff]
    %v1933 = vld [vmem:[#allocation7 + $0x500] sm:$0xff]
    %v1934 = vld [vmem:[#allocation7 + $0x508] sm:$0xff]
    %v1935 = vld [vmem:[#allocation7 + $0x510] sm:$0xff]
    %v1936 = vld [vmem:[#allocation7 + $0x518] sm:$0xff]
    %v1937 = vld [vmem:[#allocation7 + $0x520] sm:$0xff]
    %v1938 = vld [vmem:[#allocation7 + $0x528] sm:$0xff]
    %v1939 = vld [vmem:[#allocation7 + $0x530] sm:$0xff]
    %v1940 = vld [vmem:[#allocation7 + $0x538] sm:$0xff]
    %v1941 = vld [vmem:[#allocation7 + $0x540] sm:$0xff]
    %v1942 = vld [vmem:[#allocation7 + $0x548] sm:$0xff]
    %v1943 = vld [vmem:[#allocation7 + $0x550] sm:$0xff]
    %v1944 = vld [vmem:[#allocation7 + $0x558] sm:$0xff]
    %v1945 = vld [vmem:[#allocation7 + $0x560] sm:$0xff]
    %v1946 = vld [vmem:[#allocation7 + $0x568] sm:$0xff]
    %v1947 = vld [vmem:[#allocation7 + $0x570] sm:$0xff]
    %v1948 = vld [vmem:[#allocation7 + $0x578] sm:$0xff]
    %v1949 = vld [vmem:[#allocation7 + $0x580] sm:$0xff]
    %v1950 = vld [vmem:[#allocation7 + $0x588] sm:$0xff]
    %v1951 = vld [vmem:[#allocation7 + $0x590] sm:$0xff]
    %v1952 = vld [vmem:[#allocation7 + $0x598] sm:$0xff]
    %v1953 = vld [vmem:[#allocation7 + $0x5a0] sm:$0xff]
    %v1954 = vld [vmem:[#allocation7 + $0x5a8] sm:$0xff]
    %v1955 = vld [vmem:[#allocation7 + $0x5b0] sm:$0xff]
    %v1956 = vld [vmem:[#allocation7 + $0x5b8] sm:$0xff]
    %v1957 = vld [vmem:[#allocation7 + $0x5c0] sm:$0xff]
    %v1958 = vld [vmem:[#allocation7 + $0x5c8] sm:$0xff]
    %v1959 = vld [vmem:[#allocation7 + $0x5d0] sm:$0xff]
    %v1960 = vld [vmem:[#allocation7 + $0x5d8] sm:$0xff]
    %v1961 = vld [vmem:[#allocation7 + $0x5e0] sm:$0xff]
    %v1962 = vld [vmem:[#allocation7 + $0x5e8] sm:$0xff]
    %v1963 = vld [vmem:[#allocation7 + $0x5f0] sm:$0xff]
    %v1964 = vld [vmem:[#allocation7 + $0x5f8] sm:$0xff]
    %v1965 = vld [vmem:[#allocation7 + $0x600] sm:$0xff]
    %v1966 = vld [vmem:[#allocation7 + $0x608] sm:$0xff]
    %v1967 = vld [vmem:[#allocation7 + $0x610] sm:$0xff]
    %v1968 = vld [vmem:[#allocation7 + $0x618] sm:$0xff]
    %v1969 = vld [vmem:[#allocation7 + $0x620] sm:$0xff]
    %v1970 = vld [vmem:[#allocation7 + $0x628] sm:$0xff]
    %v1971 = vld [vmem:[#allocation7 + $0x630] sm:$0xff]
    %v1972 = vld [vmem:[#allocation7 + $0x638] sm:$0xff]
    %v1973 = vld [vmem:[#allocation7 + $0x640] sm:$0xff]
    %v1974 = vld [vmem:[#allocation7 + $0x648] sm:$0xff]
    %v1975 = vld [vmem:[#allocation7 + $0x650] sm:$0xff]
    %v1976 = vld [vmem:[#allocation7 + $0x658] sm:$0xff]
    %v1977 = vld [vmem:[#allocation7 + $0x660] sm:$0xff]
    %v1978 = vld [vmem:[#allocation7 + $0x668] sm:$0xff]
    %v1979 = vld [vmem:[#allocation7 + $0x670] sm:$0xff]
    %v1980 = vld [vmem:[#allocation7 + $0x678] sm:$0xff]
    %v1981 = vld [vmem:[#allocation7 + $0x680] sm:$0xff]
    %v1982 = vld [vmem:[#allocation7 + $0x688] sm:$0xff]
    %v1983 = vld [vmem:[#allocation7 + $0x690] sm:$0xff]
    %v1984 = vld [vmem:[#allocation7 + $0x698] sm:$0xff]
    %v1985 = vld [vmem:[#allocation7 + $0x6a0] sm:$0xff]
    %v1986 = vld [vmem:[#allocation7 + $0x6a8] sm:$0xff]
    %v1987 = vld [vmem:[#allocation7 + $0x6b0] sm:$0xff]
    %v1988 = vld [vmem:[#allocation7 + $0x6b8] sm:$0xff]
    %v1989 = vld [vmem:[#allocation7 + $0x6c0] sm:$0xff]
    %v1990 = vld [vmem:[#allocation7 + $0x6c8] sm:$0xff]
    %v1991 = vld [vmem:[#allocation7 + $0x6d0] sm:$0xff]
    %v1992 = vld [vmem:[#allocation7 + $0x6d8] sm:$0xff]
    %v1993 = vld [vmem:[#allocation7 + $0x6e0] sm:$0xff]
    %v1994 = vld [vmem:[#allocation7 + $0x6e8] sm:$0xff]
    %v1995 = vld [vmem:[#allocation7 + $0x6f0] sm:$0xff]
    %v1996 = vld [vmem:[#allocation7 + $0x6f8] sm:$0xff]
    %v1997 = vld [vmem:[#allocation7 + $0x700] sm:$0xff]
    %v1998 = vld [vmem:[#allocation7 + $0x708] sm:$0xff]
    %v1999 = vld [vmem:[#allocation7 + $0x710] sm:$0xff]
    %v2000 = vld [vmem:[#allocation7 + $0x718] sm:$0xff]
    %v2001 = vld [vmem:[#allocation7 + $0x720] sm:$0xff]
    %v2002 = vld [vmem:[#allocation7 + $0x728] sm:$0xff]
    %v2003 = vld [vmem:[#allocation7 + $0x730] sm:$0xff]
    %v2004 = vld [vmem:[#allocation7 + $0x738] sm:$0xff]
    %v2005 = vld [vmem:[#allocation7 + $0x740] sm:$0xff]
    %v2006 = vld [vmem:[#allocation7 + $0x748] sm:$0xff]
    %v2007 = vld [vmem:[#allocation7 + $0x750] sm:$0xff]
    %v2008 = vld [vmem:[#allocation7 + $0x758] sm:$0xff]
    %v2009 = vld [vmem:[#allocation7 + $0x760] sm:$0xff]
    %v2010 = vld [vmem:[#allocation7 + $0x768] sm:$0xff]
    %v2011 = vld [vmem:[#allocation7 + $0x770] sm:$0xff]
    %v2012 = vld [vmem:[#allocation7 + $0x778] sm:$0xff]
    %v2013 = vld [vmem:[#allocation7 + $0x780] sm:$0xff]
    %v2014 = vld [vmem:[#allocation7 + $0x788] sm:$0xff]
    %v2015 = vld [vmem:[#allocation7 + $0x790] sm:$0xff]
    %v2016 = vld [vmem:[#allocation7 + $0x798] sm:$0xff]
    %v2017 = vld [vmem:[#allocation7 + $0x7a0] sm:$0xff]
    %v2018 = vld [vmem:[#allocation7 + $0x7a8] sm:$0xff]
    %v2019 = vld [vmem:[#allocation7 + $0x7b0] sm:$0xff]
    %v2020 = vld [vmem:[#allocation7 + $0x7b8] sm:$0xff]
    %v2021 = vld [vmem:[#allocation7 + $0x7c0] sm:$0xff]
    %v2022 = vld [vmem:[#allocation7 + $0x7c8] sm:$0xff]
    %v2023 = vld [vmem:[#allocation7 + $0x7d0] sm:$0xff]
    %v2024 = vld [vmem:[#allocation7 + $0x7d8] sm:$0xff]
    %v2025 = vld [vmem:[#allocation7 + $0x7e0] sm:$0xff]
    %v2026 = vld [vmem:[#allocation7 + $0x7e8] sm:$0xff]
    %v2027 = vld [vmem:[#allocation7 + $0x7f0] sm:$0xff]
    %v2028 = vld [vmem:[#allocation7 + $0x7f8] sm:$0xff]
    %v2029 = vrot.slane %v1216, 2
    %v2030 = vrot.slane %v1487, 2
    %2033 = vmatprep.subr.mxu0 %v1774
    %2034 = vmatpush1.msra.mxu0 %v1773
    %2035 = vmatprep.subr.mxu0 %v1782
    %2036 = vmatpush1.msra.mxu0 %v1781
    %2037 = vmatprep.subr.mxu0 %v1790
    %2038 = vmatpush1.msra.mxu0 %v1789
    %2039 = vmatprep.subr.mxu0 %v1798
    %2040 = vmatpush1.msra.mxu0 %v1797
    %2041 = vmatprep.subr.mxu0 %v1806
    %2042 = vmatpush1.msra.mxu0 %v1805
    %2043 = vmatprep.subr.mxu0 %v1814
    %2044 = vmatpush1.msra.mxu0 %v1813
    %2045 = vmatprep.subr.mxu0 %v1822
    %2046 = vmatpush1.msra.mxu0 %v1821
    %2047 = vmatprep.subr.mxu0 %v1830
    %2048 = vmatpush1.msra.mxu0 %v1829
    %2049 = vmatprep.subr.mxu0 %v1838
    %2050 = vmatpush1.msra.mxu0 %v1837
    %2051 = vmatprep.subr.mxu0 %v1846
    %2052 = vmatpush1.msra.mxu0 %v1845
    %2053 = vmatprep.subr.mxu0 %v1854
    %2054 = vmatpush1.msra.mxu0 %v1853
    %2055 = vmatprep.subr.mxu0 %v1862
    %2056 = vmatpush1.msra.mxu0 %v1861
    %2057 = vmatprep.subr.mxu0 %v1870
    %2058 = vmatpush1.msra.mxu0 %v1869
    %2059 = vmatprep.subr.mxu0 %v1878
    %2060 = vmatpush1.msra.mxu0 %v1877
    %2061 = vmatprep.subr.mxu0 %v1886
    %2062 = vmatpush1.msra.mxu0 %v1885
    %2063 = vmatprep.subr.mxu0 %v1894
    %2064 = vmatpush1.msra.mxu0 %v1893
    %2065 = vmatprep.subr.mxu0 %v1902
    %2066 = vmatpush1.msra.mxu0 %v1901
    %2067 = vmatprep.subr.mxu0 %v1910
    %2068 = vmatpush1.msra.mxu0 %v1909
    %2069 = vmatprep.subr.mxu0 %v1918
    %2070 = vmatpush1.msra.mxu0 %v1917
    %2071 = vmatprep.subr.mxu0 %v1926
    %2072 = vmatpush1.msra.mxu0 %v1925
    %2073 = vmatprep.subr.mxu0 %v1934
    %2074 = vmatpush1.msra.mxu0 %v1933
    %2075 = vmatprep.subr.mxu0 %v1942
    %2076 = vmatpush1.msra.mxu0 %v1941
    %2077 = vmatprep.subr.mxu0 %v1950
    %2078 = vmatpush1.msra.mxu0 %v1949
    %2079 = vmatprep.subr.mxu0 %v1958
    %2080 = vmatpush1.msra.mxu0 %v1957
    %2081 = vmatprep.subr.mxu0 %v1966
    %2082 = vmatpush1.msra.mxu0 %v1965
    %2083 = vmatprep.subr.mxu0 %v1974
    %2084 = vmatpush1.msra.mxu0 %v1973
    %2085 = vmatprep.subr.mxu0 %v1982
    %2086 = vmatpush1.msra.mxu0 %v1981
    %2087 = vmatprep.subr.mxu0 %v1990
    %2088 = vmatpush1.msra.mxu0 %v1989
    %2089 = vmatprep.subr.mxu0 %v1998
    %2090 = vmatpush1.msra.mxu0 %v1997
    %2091 = vmatprep.subr.mxu0 %v2006
    %2092 = vmatpush1.msra.mxu0 %v2005
    %2093 = vmatprep.subr.mxu0 %v2014
    %2094 = vmatpush1.msra.mxu0 %v2013
    %2095 = vmatprep.subr.mxu0 %v2022
    %2096 = vmatpush1.msra.mxu0 %v2021
    %2097 = vmatprep.mubr.f32.mxu0 %v2030
    %2098 = vmatmul.mubr.f32.gmra.mrb[0].mxu0 %v2029
    %v2099 = vpop.f32.mrb[0].mxu0
    %v2100 = vadd.f32 0.0, %v2099
    %v2101 = vpop.f32.mrb[0].mxu0
    %v2102 = vadd.f32 0.0, %v2101
    %2103 = vdwg.mxu0
    %2104 = vmatprep.subr.mxu0 %v1776
    %2105 = vmatpush1.msra.mxu0 %v1775
    %2106 = vmatprep.subr.mxu0 %v1784
    %2107 = vmatpush1.msra.mxu0 %v1783
    %2108 = vmatprep.subr.mxu0 %v1792
    %2109 = vmatpush1.msra.mxu0 %v1791
    %2110 = vmatprep.subr.mxu0 %v1800
    %2111 = vmatpush1.msra.mxu0 %v1799
    %2112 = vmatprep.subr.mxu0 %v1808
    %2113 = vmatpush1.msra.mxu0 %v1807
    %2114 = vmatprep.subr.mxu0 %v1816
    %2115 = vmatpush1.msra.mxu0 %v1815
    %2116 = vmatprep.subr.mxu0 %v1824
    %2117 = vmatpush1.msra.mxu0 %v1823
    %2118 = vmatprep.subr.mxu0 %v1832
    %2119 = vmatpush1.msra.mxu0 %v1831
    %2120 = vmatprep.subr.mxu0 %v1840
    %2121 = vmatpush1.msra.mxu0 %v1839
    %2122 = vmatprep.subr.mxu0 %v1848
    %2123 = vmatpush1.msra.mxu0 %v1847
    %2124 = vmatprep.subr.mxu0 %v1856
    %2125 = vmatpush1.msra.mxu0 %v1855
    %2126 = vmatprep.subr.mxu0 %v1864
    %2127 = vmatpush1.msra.mxu0 %v1863
    %2128 = vmatprep.subr.mxu0 %v1872
    %2129 = vmatpush1.msra.mxu0 %v1871
    %2130 = vmatprep.subr.mxu0 %v1880
    %2131 = vmatpush1.msra.mxu0 %v1879
    %2132 = vmatprep.subr.mxu0 %v1888
    %2133 = vmatpush1.msra.mxu0 %v1887
    %2134 = vmatprep.subr.mxu0 %v1896
    %2135 = vmatpush1.msra.mxu0 %v1895
    %2136 = vmatprep.subr.mxu0 %v1904
    %2137 = vmatpush1.msra.mxu0 %v1903
    %2138 = vmatprep.subr.mxu0 %v1912
    %2139 = vmatpush1.msra.mxu0 %v1911
    %2140 = vmatprep.subr.mxu0 %v1920
    %2141 = vmatpush1.msra.mxu0 %v1919
    %2142 = vmatprep.subr.mxu0 %v1928
    %2143 = vmatpush1.msra.mxu0 %v1927
    %2144 = vmatprep.subr.mxu0 %v1936
    %2145 = vmatpush1.msra.mxu0 %v1935
    %2146 = vmatprep.subr.mxu0 %v1944
    %2147 = vmatpush1.msra.mxu0 %v1943
    %2148 = vmatprep.subr.mxu0 %v1952
    %2149 = vmatpush1.msra.mxu0 %v1951
    %2150 = vmatprep.subr.mxu0 %v1960
    %2151 = vmatpush1.msra.mxu0 %v1959
    %2152 = vmatprep.subr.mxu0 %v1968
    %2153 = vmatpush1.msra.mxu0 %v1967
    %2154 = vmatprep.subr.mxu0 %v1976
    %2155 = vmatpush1.msra.mxu0 %v1975
    %2156 = vmatprep.subr.mxu0 %v1984
    %2157 = vmatpush1.msra.mxu0 %v1983
    %2158 = vmatprep.subr.mxu0 %v1992
    %2159 = vmatpush1.msra.mxu0 %v1991
    %2160 = vmatprep.subr.mxu0 %v2000
    %2161 = vmatpush1.msra.mxu0 %v1999
    %2162 = vmatprep.subr.mxu0 %v2008
    %2163 = vmatpush1.msra.mxu0 %v2007
    %2164 = vmatprep.subr.mxu0 %v2016
    %2165 = vmatpush1.msra.mxu0 %v2015
    %2166 = vmatprep.subr.mxu0 %v2024
    %2167 = vmatpush1.msra.mxu0 %v2023
    %2168 = vmatprep.mubr.f32.mxu0 %v2030
    %2169 = vmatmul.mubr.f32.gmra.mrb[0].mxu0 %v2029
    %v2170 = vpop.f32.mrb[0].mxu0
    %v2171 = vadd.f32 0.0, %v2170
    %v2172 = vpop.f32.mrb[0].mxu0
    %v2173 = vadd.f32 0.0, %v2172
    %2174 = vdwg.mxu0
    %2175 = vmatprep.subr.mxu0 %v1778
    %2176 = vmatpush1.msra.mxu0 %v1777
    %2177 = vmatprep.subr.mxu0 %v1786
    %2178 = vmatpush1.msra.mxu0 %v1785
    %2179 = vmatprep.subr.mxu0 %v1794
    %2180 = vmatpush1.msra.mxu0 %v1793
    %2181 = vmatprep.subr.mxu0 %v1802
    %2182 = vmatpush1.msra.mxu0 %v1801
    %2183 = vmatprep.subr.mxu0 %v1810
    %2184 = vmatpush1.msra.mxu0 %v1809
    %2185 = vmatprep.subr.mxu0 %v1818
    %2186 = vmatpush1.msra.mxu0 %v1817
    %2187 = vmatprep.subr.mxu0 %v1826
    %2188 = vmatpush1.msra.mxu0 %v1825
    %2189 = vmatprep.subr.mxu0 %v1834
    %2190 = vmatpush1.msra.mxu0 %v1833
    %2191 = vmatprep.subr.mxu0 %v1842
    %2192 = vmatpush1.msra.mxu0 %v1841
    %2193 = vmatprep.subr.mxu0 %v1850
    %2194 = vmatpush1.msra.mxu0 %v1849
    %2195 = vmatprep.subr.mxu0 %v1858
    %2196 = vmatpush1.msra.mxu0 %v1857
    %2197 = vmatprep.subr.mxu0 %v1866
    %2198 = vmatpush1.msra.mxu0 %v1865
    %2199 = vmatprep.subr.mxu0 %v1874
    %2200 = vmatpush1.msra.mxu0 %v1873
    %2201 = vmatprep.subr.mxu0 %v1882
    %2202 = vmatpush1.msra.mxu0 %v1881
    %2203 = vmatprep.subr.mxu0 %v1890
    %2204 = vmatpush1.msra.mxu0 %v1889
    %2205 = vmatprep.subr.mxu0 %v1898
    %2206 = vmatpush1.msra.mxu0 %v1897
    %2207 = vmatprep.subr.mxu0 %v1906
    %2208 = vmatpush1.msra.mxu0 %v1905
    %2209 = vmatprep.subr.mxu0 %v1914
    %2210 = vmatpush1.msra.mxu0 %v1913
    %2211 = vmatprep.subr.mxu0 %v1922
    %2212 = vmatpush1.msra.mxu0 %v1921
    %2213 = vmatprep.subr.mxu0 %v1930
    %2214 = vmatpush1.msra.mxu0 %v1929
    %2215 = vmatprep.subr.mxu0 %v1938
    %2216 = vmatpush1.msra.mxu0 %v1937
    %2217 = vmatprep.subr.mxu0 %v1946
    %2218 = vmatpush1.msra.mxu0 %v1945
    %2219 = vmatprep.subr.mxu0 %v1954
    %2220 = vmatpush1.msra.mxu0 %v1953
    %2221 = vmatprep.subr.mxu0 %v1962
    %2222 = vmatpush1.msra.mxu0 %v1961
    %2223 = vmatprep.subr.mxu0 %v1970
    %2224 = vmatpush1.msra.mxu0 %v1969
    %2225 = vmatprep.subr.mxu0 %v1978
    %2226 = vmatpush1.msra.mxu0 %v1977
    %2227 = vmatprep.subr.mxu0 %v1986
    %2228 = vmatpush1.msra.mxu0 %v1985
    %2229 = vmatprep.subr.mxu0 %v1994
    %2230 = vmatpush1.msra.mxu0 %v1993
    %2231 = vmatprep.subr.mxu0 %v2002
    %2232 = vmatpush1.msra.mxu0 %v2001
    %2233 = vmatprep.subr.mxu0 %v2010
    %2234 = vmatpush1.msra.mxu0 %v2009
    %2235 = vmatprep.subr.mxu0 %v2018
    %2236 = vmatpush1.msra.mxu0 %v2017
    %2237 = vmatprep.subr.mxu0 %v2026
    %2238 = vmatpush1.msra.mxu0 %v2025
    %2239 = vmatprep.mubr.f32.mxu0 %v2030
    %2240 = vmatmul.mubr.f32.gmra.mrb[0].mxu0 %v2029
    %v2241 = vpop.f32.mrb[0].mxu0
    %v2242 = vadd.f32 0.0, %v2241
    %v2243 = vpop.f32.mrb[0].mxu0
    %v2244 = vadd.f32 0.0, %v2243
    %2245 = vdwg.mxu0
    %2246 = vmatprep.subr.mxu0 %v1780
    %2247 = vmatpush1.msra.mxu0 %v1779
    %2248 = vmatprep.subr.mxu0 %v1788
    %2249 = vmatpush1.msra.mxu0 %v1787
    %2250 = vmatprep.subr.mxu0 %v1796
    %2251 = vmatpush1.msra.mxu0 %v1795
    %2252 = vmatprep.subr.mxu0 %v1804
    %2253 = vmatpush1.msra.mxu0 %v1803
    %2254 = vmatprep.subr.mxu0 %v1812
    %2255 = vmatpush1.msra.mxu0 %v1811
    %2256 = vmatprep.subr.mxu0 %v1820
    %2257 = vmatpush1.msra.mxu0 %v1819
    %2258 = vmatprep.subr.mxu0 %v1828
    %2259 = vmatpush1.msra.mxu0 %v1827
    %2260 = vmatprep.subr.mxu0 %v1836
    %2261 = vmatpush1.msra.mxu0 %v1835
    %2262 = vmatprep.subr.mxu0 %v1844
    %2263 = vmatpush1.msra.mxu0 %v1843
    %2264 = vmatprep.subr.mxu0 %v1852
    %2265 = vmatpush1.msra.mxu0 %v1851
    %2266 = vmatprep.subr.mxu0 %v1860
    %2267 = vmatpush1.msra.mxu0 %v1859
    %2268 = vmatprep.subr.mxu0 %v1868
    %2269 = vmatpush1.msra.mxu0 %v1867
    %2270 = vmatprep.subr.mxu0 %v1876
    %2271 = vmatpush1.msra.mxu0 %v1875
    %2272 = vmatprep.subr.mxu0 %v1884
    %2273 = vmatpush1.msra.mxu0 %v1883
    %2274 = vmatprep.subr.mxu0 %v1892
    %2275 = vmatpush1.msra.mxu0 %v1891
    %2276 = vmatprep.subr.mxu0 %v1900
    %2277 = vmatpush1.msra.mxu0 %v1899
    %2278 = vmatprep.subr.mxu0 %v1908
    %2279 = vmatpush1.msra.mxu0 %v1907
    %2280 = vmatprep.subr.mxu0 %v1916
    %2281 = vmatpush1.msra.mxu0 %v1915
    %2282 = vmatprep.subr.mxu0 %v1924
    %2283 = vmatpush1.msra.mxu0 %v1923
    %2284 = vmatprep.subr.mxu0 %v1932
    %2285 = vmatpush1.msra.mxu0 %v1931
    %2286 = vmatprep.subr.mxu0 %v1940
    %2287 = vmatpush1.msra.mxu0 %v1939
    %2288 = vmatprep.subr.mxu0 %v1948
    %2289 = vmatpush1.msra.mxu0 %v1947
    %2290 = vmatprep.subr.mxu0 %v1956
    %2291 = vmatpush1.msra.mxu0 %v1955
    %2292 = vmatprep.subr.mxu0 %v1964
    %2293 = vmatpush1.msra.mxu0 %v1963
    %2294 = vmatprep.subr.mxu0 %v1972
    %2295 = vmatpush1.msra.mxu0 %v1971
    %2296 = vmatprep.subr.mxu0 %v1980
    %2297 = vmatpush1.msra.mxu0 %v1979
    %2298 = vmatprep.subr.mxu0 %v1988
    %2299 = vmatpush1.msra.mxu0 %v1987
    %2300 = vmatprep.subr.mxu0 %v1996
    %2301 = vmatpush1.msra.mxu0 %v1995
    %2302 = vmatprep.subr.mxu0 %v2004
    %2303 = vmatpush1.msra.mxu0 %v2003
    %2304 = vmatprep.subr.mxu0 %v2012
    %2305 = vmatpush1.msra.mxu0 %v2011
    %2306 = vmatprep.subr.mxu0 %v2020
    %2307 = vmatpush1.msra.mxu0 %v2019
    %2308 = vmatprep.subr.mxu0 %v2028
    %2309 = vmatpush1.msra.mxu0 %v2027
    %2310 = vmatprep.mubr.f32.mxu0 %v2030
    %2311 = vmatmul.mubr.f32.gmra.mrb[0].mxu0 %v2029
    %v2312 = vpop.f32.mrb[0].mxu0
    %v2313 = vadd.f32 0.0, %v2312
    %v2314 = vpop.f32.mrb[0].mxu0
    %v2315 = vadd.f32 0.0, %v2314
    %2316 = vdwg.mxu0
    %s2317 = scalar_lea.vmem [#allocation2], 32
    %v2318 = vld [vmem:[%s2317] sm:$0xff]
    %v2319 = vld [vmem:[%s2317 + $0x8] sm:$0xff]
    %v2320 = vld [vmem:[%s2317 + $0x10] sm:$0xff]
    %v2321 = vld [vmem:[%s2317 + $0x18] sm:$0xff]
    %v2330 = vrot.slane %v2100, 6
    %v2331 = vrot.slane %v2102, 6
    %v2332 = vrot.slane %v2171, 6
    %v2333 = vrot.slane %v2173, 6
    %v2334 = vrot.slane %v2242, 6
    %v2335 = vrot.slane %v2244, 6
    %v2336 = vrot.slane %v2313, 6
    %v2337 = vrot.slane %v2315, 6
    %v2346 = vsel %vm1164, %v1556, %v2330
    %v2347 = vsel %vm1164, %v1558, %v2331
    %v2348 = vsel %vm1164, %v1627, %v2332
    %v2349 = vsel %vm1164, %v1629, %v2333
    %v2350 = vsel %vm1164, %v1698, %v2334
    %v2351 = vsel %vm1164, %v1700, %v2335
    %v2352 = vsel %vm1164, %v1769, %v2336
    %v2353 = vsel %vm1164, %v1771, %v2337
    %v2362 = vcombine.low %v2346, %v2347
    %v2363 = vcombine.low %v2348, %v2349
    %v2364 = vcombine.low %v2350, %v2351
    %v2365 = vcombine.low %v2352, %v2353
    %v2370 = vadd.f32 %v2318, %v2362
    %v2371 = vadd.f32 %v2319, %v2363
    %v2372 = vadd.f32 %v2320, %v2364
    %v2373 = vadd.f32 %v2321, %v2365
    %v2374 = vxor.u32 %v2370, 2147483648
    %v2375 = vxor.u32 %v2371, 2147483648
    %v2376 = vxor.u32 %v2372, 2147483648
    %v2377 = vmul.f32 %v2374, 1.442695
    %v2378 = vpow.pop %v2377
    %v2379 = vmul.f32 %v2375, 1.442695
    %v2380 = vpow.pop %v2379
    %v2381 = vmul.f32 %v2376, 1.442695
    %v2382 = vpow.pop %v2381
    %v2383 = vadd.f32 %v2378, 1.0
    %v2384 = vadd.f32 %v2380, 1.0
    %v2385 = vadd.f32 %v2382, 1.0
    %v2386 = vrcp.pop %v2383
    %v2387 = vmul.f32 1.0, %v2386
    %v2388 = vrcp.pop %v2384
    %v2389 = vmul.f32 1.0, %v2388
    %v2390 = vrcp.pop %v2385
    %v2391 = vmul.f32 1.0, %v2390
    %v2392 = vtanh.pop %v2373
    %v2393 = vmul.f32 %v2389, %v1214
    %v2394 = vmul.f32 %v2387, %v2392
    %v2395 = vadd.f32 %v2393, %v2394
    %v2396 = vtanh.pop %v2395
    %v2397 = vmul.f32 %v2391, %v2396
    %v2400 = vunpack.c.l.s4 1983009808
    %v2401 = vunpack.c.0.s8 %v2400
    %v2402 = vlaneseq
    %v2403 = vshrl.u32 %v2402, 7
    %v2404 = vsub.s32 %v2401, %v2403
    %v2405 = vrot.slane %v2397, %v2404
    %s2407 = scalar_lea.vmem [#allocation8], 8
    %2408 = vst [vmem:[%s2407] sm:$0xf] %v2405
    %v2409 = vcombine.high %v2405, %v2405
    %s2411 = scalar_lea.vmem [#allocation8], 48
    %2412 = vst [vmem:[%s2411 + $0x4] sm:$0xf] %v2409
    %v2413 = vld [vmem:[#allocation5] sm:$0xff]
    %v2414 = vld [vmem:[#allocation5 + $0x8] sm:$0xff]
    %v2415 = vld [vmem:[#allocation5 + $0x10] sm:$0xff]
    %v2416 = vld [vmem:[#allocation5 + $0x18] sm:$0xff]
    %v2417 = vld [vmem:[#allocation5 + $0x20] sm:$0xff]
    %v2418 = vld [vmem:[#allocation5 + $0x28] sm:$0xff]
    %v2419 = vld [vmem:[#allocation5 + $0x30] sm:$0xff]
    %v2420 = vld [vmem:[#allocation5 + $0x38] sm:$0xff]
    %v2421 = vld [vmem:[#allocation5 + $0x40] sm:$0xff]
    %v2422 = vld [vmem:[#allocation5 + $0x48] sm:$0xff]
    %v2423 = vld [vmem:[#allocation5 + $0x50] sm:$0xff]
    %v2424 = vld [vmem:[#allocation5 + $0x58] sm:$0xff]
    %v2425 = vld [vmem:[#allocation5 + $0x60] sm:$0xff]
    %v2426 = vld [vmem:[#allocation5 + $0x68] sm:$0xff]
    %v2427 = vld [vmem:[#allocation5 + $0x70] sm:$0xff]
    %v2428 = vld [vmem:[#allocation5 + $0x78] sm:$0xff]
    %v2429 = vld [vmem:[#allocation5 + $0x80] sm:$0xff]
    %v2430 = vld [vmem:[#allocation5 + $0x88] sm:$0xff]
    %v2431 = vld [vmem:[#allocation5 + $0x90] sm:$0xff]
    %v2432 = vld [vmem:[#allocation5 + $0x98] sm:$0xff]
    %v2433 = vld [vmem:[#allocation5 + $0xa0] sm:$0xff]
    %v2434 = vld [vmem:[#allocation5 + $0xa8] sm:$0xff]
    %v2435 = vld [vmem:[#allocation5 + $0xb0] sm:$0xff]
    %v2436 = vld [vmem:[#allocation5 + $0xb8] sm:$0xff]
    %v2437 = vld [vmem:[#allocation5 + $0xc0] sm:$0xff]
    %v2438 = vld [vmem:[#allocation5 + $0xc8] sm:$0xff]
    %v2439 = vld [vmem:[#allocation5 + $0xd0] sm:$0xff]
    %v2440 = vld [vmem:[#allocation5 + $0xd8] sm:$0xff]
    %v2441 = vld [vmem:[#allocation5 + $0xe0] sm:$0xff]
    %v2442 = vld [vmem:[#allocation5 + $0xe8] sm:$0xff]
    %v2443 = vld [vmem:[#allocation5 + $0xf0] sm:$0xff]
    %v2444 = vld [vmem:[#allocation5 + $0xf8] sm:$0xff]
    %v2445 = vld [vmem:[#allocation5 + $0x100] sm:$0xff]
    %v2446 = vld [vmem:[#allocation5 + $0x108] sm:$0xff]
    %v2447 = vld [vmem:[#allocation5 + $0x110] sm:$0xff]
    %v2448 = vld [vmem:[#allocation5 + $0x118] sm:$0xff]
    %v2449 = vld [vmem:[#allocation5 + $0x120] sm:$0xff]
    %v2450 = vld [vmem:[#allocation5 + $0x128] sm:$0xff]
    %v2451 = vld [vmem:[#allocation5 + $0x130] sm:$0xff]
    %v2452 = vld [vmem:[#allocation5 + $0x138] sm:$0xff]
    %v2453 = vld [vmem:[#allocation5 + $0x140] sm:$0xff]
    %v2454 = vld [vmem:[#allocation5 + $0x148] sm:$0xff]
    %v2455 = vld [vmem:[#allocation5 + $0x150] sm:$0xff]
    %v2456 = vld [vmem:[#allocation5 + $0x158] sm:$0xff]
    %v2457 = vld [vmem:[#allocation5 + $0x160] sm:$0xff]
    %v2458 = vld [vmem:[#allocation5 + $0x168] sm:$0xff]
    %v2459 = vld [vmem:[#allocation5 + $0x170] sm:$0xff]
    %v2460 = vld [vmem:[#allocation5 + $0x178] sm:$0xff]
    %v2461 = vld [vmem:[#allocation5 + $0x180] sm:$0xff]
    %v2462 = vld [vmem:[#allocation5 + $0x188] sm:$0xff]
    %v2463 = vld [vmem:[#allocation5 + $0x190] sm:$0xff]
    %v2464 = vld [vmem:[#allocation5 + $0x198] sm:$0xff]
    %v2465 = vld [vmem:[#allocation5 + $0x1a0] sm:$0xff]
    %v2466 = vld [vmem:[#allocation5 + $0x1a8] sm:$0xff]
    %v2467 = vld [vmem:[#allocation5 + $0x1b0] sm:$0xff]
    %v2468 = vld [vmem:[#allocation5 + $0x1b8] sm:$0xff]
    %v2469 = vld [vmem:[#allocation5 + $0x1c0] sm:$0xff]
    %v2470 = vld [vmem:[#allocation5 + $0x1c8] sm:$0xff]
    %v2471 = vld [vmem:[#allocation5 + $0x1d0] sm:$0xff]
    %v2472 = vld [vmem:[#allocation5 + $0x1d8] sm:$0xff]
    %v2473 = vld [vmem:[#allocation5 + $0x1e0] sm:$0xff]
    %v2474 = vld [vmem:[#allocation5 + $0x1e8] sm:$0xff]
    %v2475 = vld [vmem:[#allocation5 + $0x1f0] sm:$0xff]
    %v2476 = vld [vmem:[#allocation5 + $0x1f8] sm:$0xff]
    %v2477 = vld [vmem:[#allocation5 + $0x200] sm:$0xff]
    %v2478 = vld [vmem:[#allocation5 + $0x208] sm:$0xff]
    %v2479 = vld [vmem:[#allocation5 + $0x210] sm:$0xff]
    %v2480 = vld [vmem:[#allocation5 + $0x218] sm:$0xff]
    %v2481 = vld [vmem:[#allocation5 + $0x220] sm:$0xff]
    %v2482 = vld [vmem:[#allocation5 + $0x228] sm:$0xff]
    %v2483 = vld [vmem:[#allocation5 + $0x230] sm:$0xff]
    %v2484 = vld [vmem:[#allocation5 + $0x238] sm:$0xff]
    %v2485 = vld [vmem:[#allocation5 + $0x240] sm:$0xff]
    %v2486 = vld [vmem:[#allocation5 + $0x248] sm:$0xff]
    %v2487 = vld [vmem:[#allocation5 + $0x250] sm:$0xff]
    %v2488 = vld [vmem:[#allocation5 + $0x258] sm:$0xff]
    %v2489 = vld [vmem:[#allocation5 + $0x260] sm:$0xff]
    %v2490 = vld [vmem:[#allocation5 + $0x268] sm:$0xff]
    %v2491 = vld [vmem:[#allocation5 + $0x270] sm:$0xff]
    %v2492 = vld [vmem:[#allocation5 + $0x278] sm:$0xff]
    %v2493 = vld [vmem:[#allocation5 + $0x280] sm:$0xff]
    %v2494 = vld [vmem:[#allocation5 + $0x288] sm:$0xff]
    %v2495 = vld [vmem:[#allocation5 + $0x290] sm:$0xff]
    %v2496 = vld [vmem:[#allocation5 + $0x298] sm:$0xff]
    %v2497 = vld [vmem:[#allocation5 + $0x2a0] sm:$0xff]
    %v2498 = vld [vmem:[#allocation5 + $0x2a8] sm:$0xff]
    %v2499 = vld [vmem:[#allocation5 + $0x2b0] sm:$0xff]
    %v2500 = vld [vmem:[#allocation5 + $0x2b8] sm:$0xff]
    %v2501 = vld [vmem:[#allocation5 + $0x2c0] sm:$0xff]
    %v2502 = vld [vmem:[#allocation5 + $0x2c8] sm:$0xff]
    %v2503 = vld [vmem:[#allocation5 + $0x2d0] sm:$0xff]
    %v2504 = vld [vmem:[#allocation5 + $0x2d8] sm:$0xff]
    %v2505 = vld [vmem:[#allocation5 + $0x2e0] sm:$0xff]
    %v2506 = vld [vmem:[#allocation5 + $0x2e8] sm:$0xff]
    %v2507 = vld [vmem:[#allocation5 + $0x2f0] sm:$0xff]
    %v2508 = vld [vmem:[#allocation5 + $0x2f8] sm:$0xff]
    %v2509 = vld [vmem:[#allocation5 + $0x300] sm:$0xff]
    %v2510 = vld [vmem:[#allocation5 + $0x308] sm:$0xff]
    %v2511 = vld [vmem:[#allocation5 + $0x310] sm:$0xff]
    %v2512 = vld [vmem:[#allocation5 + $0x318] sm:$0xff]
    %v2513 = vld [vmem:[#allocation5 + $0x320] sm:$0xff]
    %v2514 = vld [vmem:[#allocation5 + $0x328] sm:$0xff]
    %v2515 = vld [vmem:[#allocation5 + $0x330] sm:$0xff]
    %v2516 = vld [vmem:[#allocation5 + $0x338] sm:$0xff]
    %v2517 = vld [vmem:[#allocation5 + $0x340] sm:$0xff]
    %v2518 = vld [vmem:[#allocation5 + $0x348] sm:$0xff]
    %v2519 = vld [vmem:[#allocation5 + $0x350] sm:$0xff]
    %v2520 = vld [vmem:[#allocation5 + $0x358] sm:$0xff]
    %v2521 = vld [vmem:[#allocation5 + $0x360] sm:$0xff]
    %v2522 = vld [vmem:[#allocation5 + $0x368] sm:$0xff]
    %v2523 = vld [vmem:[#allocation5 + $0x370] sm:$0xff]
    %v2524 = vld [vmem:[#allocation5 + $0x378] sm:$0xff]
    %v2525 = vld [vmem:[#allocation5 + $0x380] sm:$0xff]
    %v2526 = vld [vmem:[#allocation5 + $0x388] sm:$0xff]
    %v2527 = vld [vmem:[#allocation5 + $0x390] sm:$0xff]
    %v2528 = vld [vmem:[#allocation5 + $0x398] sm:$0xff]
    %v2529 = vld [vmem:[#allocation5 + $0x3a0] sm:$0xff]
    %v2530 = vld [vmem:[#allocation5 + $0x3a8] sm:$0xff]
    %v2531 = vld [vmem:[#allocation5 + $0x3b0] sm:$0xff]
    %v2532 = vld [vmem:[#allocation5 + $0x3b8] sm:$0xff]
    %v2533 = vld [vmem:[#allocation5 + $0x3c0] sm:$0xff]
    %v2534 = vld [vmem:[#allocation5 + $0x3c8] sm:$0xff]
    %v2535 = vld [vmem:[#allocation5 + $0x3d0] sm:$0xff]
    %v2536 = vld [vmem:[#allocation5 + $0x3d8] sm:$0xff]
    %v2537 = vld [vmem:[#allocation5 + $0x3e0] sm:$0xff]
    %v2538 = vld [vmem:[#allocation5 + $0x3e8] sm:$0xff]
    %v2539 = vld [vmem:[#allocation5 + $0x3f0] sm:$0xff]
    %v2540 = vld [vmem:[#allocation5 + $0x3f8] sm:$0xff]
    %v2541 = vld [vmem:[#allocation5 + $0x400] sm:$0xff]
    %v2542 = vld [vmem:[#allocation5 + $0x408] sm:$0xff]
    %v2543 = vld [vmem:[#allocation5 + $0x410] sm:$0xff]
    %v2544 = vld [vmem:[#allocation5 + $0x418] sm:$0xff]
    %v2545 = vld [vmem:[#allocation5 + $0x420] sm:$0xff]
    %v2546 = vld [vmem:[#allocation5 + $0x428] sm:$0xff]
    %v2547 = vld [vmem:[#allocation5 + $0x430] sm:$0xff]
    %v2548 = vld [vmem:[#allocation5 + $0x438] sm:$0xff]
    %v2549 = vld [vmem:[#allocation5 + $0x440] sm:$0xff]
    %v2550 = vld [vmem:[#allocation5 + $0x448] sm:$0xff]
    %v2551 = vld [vmem:[#allocation5 + $0x450] sm:$0xff]
    %v2552 = vld [vmem:[#allocation5 + $0x458] sm:$0xff]
    %v2553 = vld [vmem:[#allocation5 + $0x460] sm:$0xff]
    %v2554 = vld [vmem:[#allocation5 + $0x468] sm:$0xff]
    %v2555 = vld [vmem:[#allocation5 + $0x470] sm:$0xff]
    %v2556 = vld [vmem:[#allocation5 + $0x478] sm:$0xff]
    %v2557 = vld [vmem:[#allocation5 + $0x480] sm:$0xff]
    %v2558 = vld [vmem:[#allocation5 + $0x488] sm:$0xff]
    %v2559 = vld [vmem:[#allocation5 + $0x490] sm:$0xff]
    %v2560 = vld [vmem:[#allocation5 + $0x498] sm:$0xff]
    %v2561 = vld [vmem:[#allocation5 + $0x4a0] sm:$0xff]
    %v2562 = vld [vmem:[#allocation5 + $0x4a8] sm:$0xff]
    %v2563 = vld [vmem:[#allocation5 + $0x4b0] sm:$0xff]
    %v2564 = vld [vmem:[#allocation5 + $0x4b8] sm:$0xff]
    %v2565 = vld [vmem:[#allocation5 + $0x4c0] sm:$0xff]
    %v2566 = vld [vmem:[#allocation5 + $0x4c8] sm:$0xff]
    %v2567 = vld [vmem:[#allocation5 + $0x4d0] sm:$0xff]
    %v2568 = vld [vmem:[#allocation5 + $0x4d8] sm:$0xff]
    %v2569 = vld [vmem:[#allocation5 + $0x4e0] sm:$0xff]
    %v2570 = vld [vmem:[#allocation5 + $0x4e8] sm:$0xff]
    %v2571 = vld [vmem:[#allocation5 + $0x4f0] sm:$0xff]
    %v2572 = vld [vmem:[#allocation5 + $0x4f8] sm:$0xff]
    %v2573 = vld [vmem:[#allocation5 + $0x500] sm:$0xff]
    %v2574 = vld [vmem:[#allocation5 + $0x508] sm:$0xff]
    %v2575 = vld [vmem:[#allocation5 + $0x510] sm:$0xff]
    %v2576 = vld [vmem:[#allocation5 + $0x518] sm:$0xff]
    %v2577 = vld [vmem:[#allocation5 + $0x520] sm:$0xff]
    %v2578 = vld [vmem:[#allocation5 + $0x528] sm:$0xff]
    %v2579 = vld [vmem:[#allocation5 + $0x530] sm:$0xff]
    %v2580 = vld [vmem:[#allocation5 + $0x538] sm:$0xff]
    %v2581 = vld [vmem:[#allocation5 + $0x540] sm:$0xff]
    %v2582 = vld [vmem:[#allocation5 + $0x548] sm:$0xff]
    %v2583 = vld [vmem:[#allocation5 + $0x550] sm:$0xff]
    %v2584 = vld [vmem:[#allocation5 + $0x558] sm:$0xff]
    %v2585 = vld [vmem:[#allocation5 + $0x560] sm:$0xff]
    %v2586 = vld [vmem:[#allocation5 + $0x568] sm:$0xff]
    %v2587 = vld [vmem:[#allocation5 + $0x570] sm:$0xff]
    %v2588 = vld [vmem:[#allocation5 + $0x578] sm:$0xff]
    %v2589 = vld [vmem:[#allocation5 + $0x580] sm:$0xff]
    %v2590 = vld [vmem:[#allocation5 + $0x588] sm:$0xff]
    %v2591 = vld [vmem:[#allocation5 + $0x590] sm:$0xff]
    %v2592 = vld [vmem:[#allocation5 + $0x598] sm:$0xff]
    %v2593 = vld [vmem:[#allocation5 + $0x5a0] sm:$0xff]
    %v2594 = vld [vmem:[#allocation5 + $0x5a8] sm:$0xff]
    %v2595 = vld [vmem:[#allocation5 + $0x5b0] sm:$0xff]
    %v2596 = vld [vmem:[#allocation5 + $0x5b8] sm:$0xff]
    %v2597 = vld [vmem:[#allocation5 + $0x5c0] sm:$0xff]
    %v2598 = vld [vmem:[#allocation5 + $0x5c8] sm:$0xff]
    %v2599 = vld [vmem:[#allocation5 + $0x5d0] sm:$0xff]
    %v2600 = vld [vmem:[#allocation5 + $0x5d8] sm:$0xff]
    %v2601 = vld [vmem:[#allocation5 + $0x5e0] sm:$0xff]
    %v2602 = vld [vmem:[#allocation5 + $0x5e8] sm:$0xff]
    %v2603 = vld [vmem:[#allocation5 + $0x5f0] sm:$0xff]
    %v2604 = vld [vmem:[#allocation5 + $0x5f8] sm:$0xff]
    %v2605 = vld [vmem:[#allocation5 + $0x600] sm:$0xff]
    %v2606 = vld [vmem:[#allocation5 + $0x608] sm:$0xff]
    %v2607 = vld [vmem:[#allocation5 + $0x610] sm:$0xff]
    %v2608 = vld [vmem:[#allocation5 + $0x618] sm:$0xff]
    %v2609 = vld [vmem:[#allocation5 + $0x620] sm:$0xff]
    %v2610 = vld [vmem:[#allocation5 + $0x628] sm:$0xff]
    %v2611 = vld [vmem:[#allocation5 + $0x630] sm:$0xff]
    %v2612 = vld [vmem:[#allocation5 + $0x638] sm:$0xff]
    %v2613 = vld [vmem:[#allocation5 + $0x640] sm:$0xff]
    %v2614 = vld [vmem:[#allocation5 + $0x648] sm:$0xff]
    %v2615 = vld [vmem:[#allocation5 + $0x650] sm:$0xff]
    %v2616 = vld [vmem:[#allocation5 + $0x658] sm:$0xff]
    %v2617 = vld [vmem:[#allocation5 + $0x660] sm:$0xff]
    %v2618 = vld [vmem:[#allocation5 + $0x668] sm:$0xff]
    %v2619 = vld [vmem:[#allocation5 + $0x670] sm:$0xff]
    %v2620 = vld [vmem:[#allocation5 + $0x678] sm:$0xff]
    %v2621 = vld [vmem:[#allocation5 + $0x680] sm:$0xff]
    %v2622 = vld [vmem:[#allocation5 + $0x688] sm:$0xff]
    %v2623 = vld [vmem:[#allocation5 + $0x690] sm:$0xff]
    %v2624 = vld [vmem:[#allocation5 + $0x698] sm:$0xff]
    %v2625 = vld [vmem:[#allocation5 + $0x6a0] sm:$0xff]
    %v2626 = vld [vmem:[#allocation5 + $0x6a8] sm:$0xff]
    %v2627 = vld [vmem:[#allocation5 + $0x6b0] sm:$0xff]
    %v2628 = vld [vmem:[#allocation5 + $0x6b8] sm:$0xff]
    %v2629 = vld [vmem:[#allocation5 + $0x6c0] sm:$0xff]
    %v2630 = vld [vmem:[#allocation5 + $0x6c8] sm:$0xff]
    %v2631 = vld [vmem:[#allocation5 + $0x6d0] sm:$0xff]
    %v2632 = vld [vmem:[#allocation5 + $0x6d8] sm:$0xff]
    %v2633 = vld [vmem:[#allocation5 + $0x6e0] sm:$0xff]
    %v2634 = vld [vmem:[#allocation5 + $0x6e8] sm:$0xff]
    %v2635 = vld [vmem:[#allocation5 + $0x6f0] sm:$0xff]
    %v2636 = vld [vmem:[#allocation5 + $0x6f8] sm:$0xff]
    %v2637 = vld [vmem:[#allocation5 + $0x700] sm:$0xff]
    %v2638 = vld [vmem:[#allocation5 + $0x708] sm:$0xff]
    %v2639 = vld [vmem:[#allocation5 + $0x710] sm:$0xff]
    %v2640 = vld [vmem:[#allocation5 + $0x718] sm:$0xff]
    %v2641 = vld [vmem:[#allocation5 + $0x720] sm:$0xff]
    %v2642 = vld [vmem:[#allocation5 + $0x728] sm:$0xff]
    %v2643 = vld [vmem:[#allocation5 + $0x730] sm:$0xff]
    %v2644 = vld [vmem:[#allocation5 + $0x738] sm:$0xff]
    %v2645 = vld [vmem:[#allocation5 + $0x740] sm:$0xff]
    %v2646 = vld [vmem:[#allocation5 + $0x748] sm:$0xff]
    %v2647 = vld [vmem:[#allocation5 + $0x750] sm:$0xff]
    %v2648 = vld [vmem:[#allocation5 + $0x758] sm:$0xff]
    %v2649 = vld [vmem:[#allocation5 + $0x760] sm:$0xff]
    %v2650 = vld [vmem:[#allocation5 + $0x768] sm:$0xff]
    %v2651 = vld [vmem:[#allocation5 + $0x770] sm:$0xff]
    %v2652 = vld [vmem:[#allocation5 + $0x778] sm:$0xff]
    %v2653 = vld [vmem:[#allocation5 + $0x780] sm:$0xff]
    %v2654 = vld [vmem:[#allocation5 + $0x788] sm:$0xff]
    %v2655 = vld [vmem:[#allocation5 + $0x790] sm:$0xff]
    %v2656 = vld [vmem:[#allocation5 + $0x798] sm:$0xff]
    %v2657 = vld [vmem:[#allocation5 + $0x7a0] sm:$0xff]
    %v2658 = vld [vmem:[#allocation5 + $0x7a8] sm:$0xff]
    %v2659 = vld [vmem:[#allocation5 + $0x7b0] sm:$0xff]
    %v2660 = vld [vmem:[#allocation5 + $0x7b8] sm:$0xff]
    %v2661 = vld [vmem:[#allocation5 + $0x7c0] sm:$0xff]
    %v2662 = vld [vmem:[#allocation5 + $0x7c8] sm:$0xff]
    %v2663 = vld [vmem:[#allocation5 + $0x7d0] sm:$0xff]
    %v2664 = vld [vmem:[#allocation5 + $0x7d8] sm:$0xff]
    %v2665 = vld [vmem:[#allocation5 + $0x7e0] sm:$0xff]
    %v2666 = vld [vmem:[#allocation5 + $0x7e8] sm:$0xff]
    %v2667 = vld [vmem:[#allocation5 + $0x7f0] sm:$0xff]
    %v2668 = vld [vmem:[#allocation5 + $0x7f8] sm:$0xff]
    %v2669 = vcombine.high %v2397, %v2397
    %2671 = vmatprep.subr.mxu0 %v2414
    %2672 = vmatpush1.msra.mxu0 %v2413
    %2673 = vmatprep.subr.mxu0 %v2422
    %2674 = vmatpush1.msra.mxu0 %v2421
    %2675 = vmatprep.subr.mxu0 %v2430
    %2676 = vmatpush1.msra.mxu0 %v2429
    %2677 = vmatprep.subr.mxu0 %v2438
    %2678 = vmatpush1.msra.mxu0 %v2437
    %2679 = vmatprep.subr.mxu0 %v2446
    %2680 = vmatpush1.msra.mxu0 %v2445
    %2681 = vmatprep.subr.mxu0 %v2454
    %2682 = vmatpush1.msra.mxu0 %v2453
    %2683 = vmatprep.subr.mxu0 %v2462
    %2684 = vmatpush1.msra.mxu0 %v2461
    %2685 = vmatprep.subr.mxu0 %v2470
    %2686 = vmatpush1.msra.mxu0 %v2469
    %2687 = vmatprep.subr.mxu0 %v2478
    %2688 = vmatpush1.msra.mxu0 %v2477
    %2689 = vmatprep.subr.mxu0 %v2486
    %2690 = vmatpush1.msra.mxu0 %v2485
    %2691 = vmatprep.subr.mxu0 %v2494
    %2692 = vmatpush1.msra.mxu0 %v2493
    %2693 = vmatprep.subr.mxu0 %v2502
    %2694 = vmatpush1.msra.mxu0 %v2501
    %2695 = vmatprep.subr.mxu0 %v2510
    %2696 = vmatpush1.msra.mxu0 %v2509
    %2697 = vmatprep.subr.mxu0 %v2518
    %2698 = vmatpush1.msra.mxu0 %v2517
    %2699 = vmatprep.subr.mxu0 %v2526
    %2700 = vmatpush1.msra.mxu0 %v2525
    %2701 = vmatprep.subr.mxu0 %v2534
    %2702 = vmatpush1.msra.mxu0 %v2533
    %2703 = vmatprep.subr.mxu0 %v2542
    %2704 = vmatpush1.msra.mxu0 %v2541
    %2705 = vmatprep.subr.mxu0 %v2550
    %2706 = vmatpush1.msra.mxu0 %v2549
    %2707 = vmatprep.subr.mxu0 %v2558
    %2708 = vmatpush1.msra.mxu0 %v2557
    %2709 = vmatprep.subr.mxu0 %v2566
    %2710 = vmatpush1.msra.mxu0 %v2565
    %2711 = vmatprep.subr.mxu0 %v2574
    %2712 = vmatpush1.msra.mxu0 %v2573
    %2713 = vmatprep.subr.mxu0 %v2582
    %2714 = vmatpush1.msra.mxu0 %v2581
    %2715 = vmatprep.subr.mxu0 %v2590
    %2716 = vmatpush1.msra.mxu0 %v2589
    %2717 = vmatprep.subr.mxu0 %v2598
    %2718 = vmatpush1.msra.mxu0 %v2597
    %2719 = vmatprep.subr.mxu0 %v2606
    %2720 = vmatpush1.msra.mxu0 %v2605
    %2721 = vmatprep.subr.mxu0 %v2614
    %2722 = vmatpush1.msra.mxu0 %v2613
    %2723 = vmatprep.subr.mxu0 %v2622
    %2724 = vmatpush1.msra.mxu0 %v2621
    %2725 = vmatprep.subr.mxu0 %v2630
    %2726 = vmatpush1.msra.mxu0 %v2629
    %2727 = vmatprep.subr.mxu0 %v2638
    %2728 = vmatpush1.msra.mxu0 %v2637
    %2729 = vmatprep.subr.mxu0 %v2646
    %2730 = vmatpush1.msra.mxu0 %v2645
    %2731 = vmatprep.subr.mxu0 %v2654
    %2732 = vmatpush1.msra.mxu0 %v2653
    %2733 = vmatprep.subr.mxu0 %v2662
    %2734 = vmatpush1.msra.mxu0 %v2661
    %2735 = vmatprep.mubr.f32.mxu0 %v2669
    %2736 = vmatmul.mubr.f32.gmra.mrb[0].mxu0 %v2397
    %v2737 = vpop.f32.mrb[0].mxu0
    %v2738 = vadd.f32 0.0, %v2737
    %v2739 = vpop.f32.mrb[0].mxu0
    %v2740 = vadd.f32 0.0, %v2739
    %2741 = vdwg.mxu0
    %2742 = vmatprep.subr.mxu0 %v2416
    %2743 = vmatpush1.msra.mxu0 %v2415
    %2744 = vmatprep.subr.mxu0 %v2424
    %2745 = vmatpush1.msra.mxu0 %v2423
    %2746 = vmatprep.subr.mxu0 %v2432
    %2747 = vmatpush1.msra.mxu0 %v2431
    %2748 = vmatprep.subr.mxu0 %v2440
    %2749 = vmatpush1.msra.mxu0 %v2439
    %2750 = vmatprep.subr.mxu0 %v2448
    %2751 = vmatpush1.msra.mxu0 %v2447
    %2752 = vmatprep.subr.mxu0 %v2456
    %2753 = vmatpush1.msra.mxu0 %v2455
    %2754 = vmatprep.subr.mxu0 %v2464
    %2755 = vmatpush1.msra.mxu0 %v2463
    %2756 = vmatprep.subr.mxu0 %v2472
    %2757 = vmatpush1.msra.mxu0 %v2471
    %2758 = vmatprep.subr.mxu0 %v2480
    %2759 = vmatpush1.msra.mxu0 %v2479
    %2760 = vmatprep.subr.mxu0 %v2488
    %2761 = vmatpush1.msra.mxu0 %v2487
    %2762 = vmatprep.subr.mxu0 %v2496
    %2763 = vmatpush1.msra.mxu0 %v2495
    %2764 = vmatprep.subr.mxu0 %v2504
    %2765 = vmatpush1.msra.mxu0 %v2503
    %2766 = vmatprep.subr.mxu0 %v2512
    %2767 = vmatpush1.msra.mxu0 %v2511
    %2768 = vmatprep.subr.mxu0 %v2520
    %2769 = vmatpush1.msra.mxu0 %v2519
    %2770 = vmatprep.subr.mxu0 %v2528
    %2771 = vmatpush1.msra.mxu0 %v2527
    %2772 = vmatprep.subr.mxu0 %v2536
    %2773 = vmatpush1.msra.mxu0 %v2535
    %2774 = vmatprep.subr.mxu0 %v2544
    %2775 = vmatpush1.msra.mxu0 %v2543
    %2776 = vmatprep.subr.mxu0 %v2552
    %2777 = vmatpush1.msra.mxu0 %v2551
    %2778 = vmatprep.subr.mxu0 %v2560
    %2779 = vmatpush1.msra.mxu0 %v2559
    %2780 = vmatprep.subr.mxu0 %v2568
    %2781 = vmatpush1.msra.mxu0 %v2567
    %2782 = vmatprep.subr.mxu0 %v2576
    %2783 = vmatpush1.msra.mxu0 %v2575
    %2784 = vmatprep.subr.mxu0 %v2584
    %2785 = vmatpush1.msra.mxu0 %v2583
    %2786 = vmatprep.subr.mxu0 %v2592
    %2787 = vmatpush1.msra.mxu0 %v2591
    %2788 = vmatprep.subr.mxu0 %v2600
    %2789 = vmatpush1.msra.mxu0 %v2599
    %2790 = vmatprep.subr.mxu0 %v2608
    %2791 = vmatpush1.msra.mxu0 %v2607
    %2792 = vmatprep.subr.mxu0 %v2616
    %2793 = vmatpush1.msra.mxu0 %v2615
    %2794 = vmatprep.subr.mxu0 %v2624
    %2795 = vmatpush1.msra.mxu0 %v2623
    %2796 = vmatprep.subr.mxu0 %v2632
    %2797 = vmatpush1.msra.mxu0 %v2631
    %2798 = vmatprep.subr.mxu0 %v2640
    %2799 = vmatpush1.msra.mxu0 %v2639
    %2800 = vmatprep.subr.mxu0 %v2648
    %2801 = vmatpush1.msra.mxu0 %v2647
    %2802 = vmatprep.subr.mxu0 %v2656
    %2803 = vmatpush1.msra.mxu0 %v2655
    %2804 = vmatprep.subr.mxu0 %v2664
    %2805 = vmatpush1.msra.mxu0 %v2663
    %2806 = vmatprep.mubr.f32.mxu0 %v2669
    %2807 = vmatmul.mubr.f32.gmra.mrb[0].mxu0 %v2397
    %v2808 = vpop.f32.mrb[0].mxu0
    %v2809 = vadd.f32 0.0, %v2808
    %v2810 = vpop.f32.mrb[0].mxu0
    %v2811 = vadd.f32 0.0, %v2810
    %2812 = vdwg.mxu0
    %2813 = vmatprep.subr.mxu0 %v2418
    %2814 = vmatpush1.msra.mxu0 %v2417
    %2815 = vmatprep.subr.mxu0 %v2426
    %2816 = vmatpush1.msra.mxu0 %v2425
    %2817 = vmatprep.subr.mxu0 %v2434
    %2818 = vmatpush1.msra.mxu0 %v2433
    %2819 = vmatprep.subr.mxu0 %v2442
    %2820 = vmatpush1.msra.mxu0 %v2441
    %2821 = vmatprep.subr.mxu0 %v2450
    %2822 = vmatpush1.msra.mxu0 %v2449
    %2823 = vmatprep.subr.mxu0 %v2458
    %2824 = vmatpush1.msra.mxu0 %v2457
    %2825 = vmatprep.subr.mxu0 %v2466
    %2826 = vmatpush1.msra.mxu0 %v2465
    %2827 = vmatprep.subr.mxu0 %v2474
    %2828 = vmatpush1.msra.mxu0 %v2473
    %2829 = vmatprep.subr.mxu0 %v2482
    %2830 = vmatpush1.msra.mxu0 %v2481
    %2831 = vmatprep.subr.mxu0 %v2490
    %2832 = vmatpush1.msra.mxu0 %v2489
    %2833 = vmatprep.subr.mxu0 %v2498
    %2834 = vmatpush1.msra.mxu0 %v2497
    %2835 = vmatprep.subr.mxu0 %v2506
    %2836 = vmatpush1.msra.mxu0 %v2505
    %2837 = vmatprep.subr.mxu0 %v2514
    %2838 = vmatpush1.msra.mxu0 %v2513
    %2839 = vmatprep.subr.mxu0 %v2522
    %2840 = vmatpush1.msra.mxu0 %v2521
    %2841 = vmatprep.subr.mxu0 %v2530
    %2842 = vmatpush1.msra.mxu0 %v2529
    %2843 = vmatprep.subr.mxu0 %v2538
    %2844 = vmatpush1.msra.mxu0 %v2537
    %2845 = vmatprep.subr.mxu0 %v2546
    %2846 = vmatpush1.msra.mxu0 %v2545
    %2847 = vmatprep.subr.mxu0 %v2554
    %2848 = vmatpush1.msra.mxu0 %v2553
    %2849 = vmatprep.subr.mxu0 %v2562
    %2850 = vmatpush1.msra.mxu0 %v2561
    %2851 = vmatprep.subr.mxu0 %v2570
    %2852 = vmatpush1.msra.mxu0 %v2569
    %2853 = vmatprep.subr.mxu0 %v2578
    %2854 = vmatpush1.msra.mxu0 %v2577
    %2855 = vmatprep.subr.mxu0 %v2586
    %2856 = vmatpush1.msra.mxu0 %v2585
    %2857 = vmatprep.subr.mxu0 %v2594
    %2858 = vmatpush1.msra.mxu0 %v2593
    %2859 = vmatprep.subr.mxu0 %v2602
    %2860 = vmatpush1.msra.mxu0 %v2601
    %2861 = vmatprep.subr.mxu0 %v2610
    %2862 = vmatpush1.msra.mxu0 %v2609
    %2863 = vmatprep.subr.mxu0 %v2618
    %2864 = vmatpush1.msra.mxu0 %v2617
    %2865 = vmatprep.subr.mxu0 %v2626
    %2866 = vmatpush1.msra.mxu0 %v2625
    %2867 = vmatprep.subr.mxu0 %v2634
    %2868 = vmatpush1.msra.mxu0 %v2633
    %2869 = vmatprep.subr.mxu0 %v2642
    %2870 = vmatpush1.msra.mxu0 %v2641
    %2871 = vmatprep.subr.mxu0 %v2650
    %2872 = vmatpush1.msra.mxu0 %v2649
    %2873 = vmatprep.subr.mxu0 %v2658
    %2874 = vmatpush1.msra.mxu0 %v2657
    %2875 = vmatprep.subr.mxu0 %v2666
    %2876 = vmatpush1.msra.mxu0 %v2665
    %2877 = vmatprep.mubr.f32.mxu0 %v2669
    %2878 = vmatmul.mubr.f32.gmra.mrb[0].mxu0 %v2397
    %v2879 = vpop.f32.mrb[0].mxu0
    %v2880 = vadd.f32 0.0, %v2879
    %v2881 = vpop.f32.mrb[0].mxu0
    %v2882 = vadd.f32 0.0, %v2881
    %2883 = vdwg.mxu0
    %2884 = vmatprep.subr.mxu0 %v2420
    %2885 = vmatpush1.msra.mxu0 %v2419
    %2886 = vmatprep.subr.mxu0 %v2428
    %2887 = vmatpush1.msra.mxu0 %v2427
    %2888 = vmatprep.subr.mxu0 %v2436
    %2889 = vmatpush1.msra.mxu0 %v2435
    %2890 = vmatprep.subr.mxu0 %v2444
    %2891 = vmatpush1.msra.mxu0 %v2443
    %2892 = vmatprep.subr.mxu0 %v2452
    %2893 = vmatpush1.msra.mxu0 %v2451
    %2894 = vmatprep.subr.mxu0 %v2460
    %2895 = vmatpush1.msra.mxu0 %v2459
    %2896 = vmatprep.subr.mxu0 %v2468
    %2897 = vmatpush1.msra.mxu0 %v2467
    %2898 = vmatprep.subr.mxu0 %v2476
    %2899 = vmatpush1.msra.mxu0 %v2475
    %2900 = vmatprep.subr.mxu0 %v2484
    %2901 = vmatpush1.msra.mxu0 %v2483
    %2902 = vmatprep.subr.mxu0 %v2492
    %2903 = vmatpush1.msra.mxu0 %v2491
    %2904 = vmatprep.subr.mxu0 %v2500
    %2905 = vmatpush1.msra.mxu0 %v2499
    %2906 = vmatprep.subr.mxu0 %v2508
    %2907 = vmatpush1.msra.mxu0 %v2507
    %2908 = vmatprep.subr.mxu0 %v2516
    %2909 = vmatpush1.msra.mxu0 %v2515
    %2910 = vmatprep.subr.mxu0 %v2524
    %2911 = vmatpush1.msra.mxu0 %v2523
    %2912 = vmatprep.subr.mxu0 %v2532
    %2913 = vmatpush1.msra.mxu0 %v2531
    %2914 = vmatprep.subr.mxu0 %v2540
    %2915 = vmatpush1.msra.mxu0 %v2539
    %2916 = vmatprep.subr.mxu0 %v2548
    %2917 = vmatpush1.msra.mxu0 %v2547
    %2918 = vmatprep.subr.mxu0 %v2556
    %2919 = vmatpush1.msra.mxu0 %v2555
    %2920 = vmatprep.subr.mxu0 %v2564
    %2921 = vmatpush1.msra.mxu0 %v2563
    %2922 = vmatprep.subr.mxu0 %v2572
    %2923 = vmatpush1.msra.mxu0 %v2571
    %2924 = vmatprep.subr.mxu0 %v2580
    %2925 = vmatpush1.msra.mxu0 %v2579
    %2926 = vmatprep.subr.mxu0 %v2588
    %2927 = vmatpush1.msra.mxu0 %v2587
    %2928 = vmatprep.subr.mxu0 %v2596
    %2929 = vmatpush1.msra.mxu0 %v2595
    %2930 = vmatprep.subr.mxu0 %v2604
    %2931 = vmatpush1.msra.mxu0 %v2603
    %2932 = vmatprep.subr.mxu0 %v2612
    %2933 = vmatpush1.msra.mxu0 %v2611
    %2934 = vmatprep.subr.mxu0 %v2620
    %2935 = vmatpush1.msra.mxu0 %v2619
    %2936 = vmatprep.subr.mxu0 %v2628
    %2937 = vmatpush1.msra.mxu0 %v2627
    %2938 = vmatprep.subr.mxu0 %v2636
    %2939 = vmatpush1.msra.mxu0 %v2635
    %2940 = vmatprep.subr.mxu0 %v2644
    %2941 = vmatpush1.msra.mxu0 %v2643
    %2942 = vmatprep.subr.mxu0 %v2652
    %2943 = vmatpush1.msra.mxu0 %v2651
    %2944 = vmatprep.subr.mxu0 %v2660
    %2945 = vmatpush1.msra.mxu0 %v2659
    %2946 = vmatprep.subr.mxu0 %v2668
    %2947 = vmatpush1.msra.mxu0 %v2667
    %2948 = vmatprep.mubr.f32.mxu0 %v2669
    %2949 = vmatmul.mubr.f32.gmra.mrb[0].mxu0 %v2397
    %v2950 = vpop.f32.mrb[0].mxu0
    %v2951 = vadd.f32 0.0, %v2950
    %v2952 = vpop.f32.mrb[0].mxu0
    %v2953 = vadd.f32 0.0, %v2952
    %2954 = vdwg.mxu0
    %v2955 = vld [vmem:[#allocation7] sm:$0xff]
    %v2956 = vld [vmem:[#allocation7 + $0x8] sm:$0xff]
    %v2957 = vld [vmem:[#allocation7 + $0x10] sm:$0xff]
    %v2958 = vld [vmem:[#allocation7 + $0x18] sm:$0xff]
    %v2959 = vld [vmem:[#allocation7 + $0x20] sm:$0xff]
    %v2960 = vld [vmem:[#allocation7 + $0x28] sm:$0xff]
    %v2961 = vld [vmem:[#allocation7 + $0x30] sm:$0xff]
    %v2962 = vld [vmem:[#allocation7 + $0x38] sm:$0xff]
    %v2963 = vld [vmem:[#allocation7 + $0x40] sm:$0xff]
    %v2964 = vld [vmem:[#allocation7 + $0x48] sm:$0xff]
    %v2965 = vld [vmem:[#allocation7 + $0x50] sm:$0xff]
    %v2966 = vld [vmem:[#allocation7 + $0x58] sm:$0xff]
    %v2967 = vld [vmem:[#allocation7 + $0x60] sm:$0xff]
    %v2968 = vld [vmem:[#allocation7 + $0x68] sm:$0xff]
    %v2969 = vld [vmem:[#allocation7 + $0x70] sm:$0xff]
    %v2970 = vld [vmem:[#allocation7 + $0x78] sm:$0xff]
    %v2971 = vld [vmem:[#allocation7 + $0x80] sm:$0xff]
    %v2972 = vld [vmem:[#allocation7 + $0x88] sm:$0xff]
    %v2973 = vld [vmem:[#allocation7 + $0x90] sm:$0xff]
    %v2974 = vld [vmem:[#allocation7 + $0x98] sm:$0xff]
    %v2975 = vld [vmem:[#allocation7 + $0xa0] sm:$0xff]
    %v2976 = vld [vmem:[#allocation7 + $0xa8] sm:$0xff]
    %v2977 = vld [vmem:[#allocation7 + $0xb0] sm:$0xff]
    %v2978 = vld [vmem:[#allocation7 + $0xb8] sm:$0xff]
    %v2979 = vld [vmem:[#allocation7 + $0xc0] sm:$0xff]
    %v2980 = vld [vmem:[#allocation7 + $0xc8] sm:$0xff]
    %v2981 = vld [vmem:[#allocation7 + $0xd0] sm:$0xff]
    %v2982 = vld [vmem:[#allocation7 + $0xd8] sm:$0xff]
    %v2983 = vld [vmem:[#allocation7 + $0xe0] sm:$0xff]
    %v2984 = vld [vmem:[#allocation7 + $0xe8] sm:$0xff]
    %v2985 = vld [vmem:[#allocation7 + $0xf0] sm:$0xff]
    %v2986 = vld [vmem:[#allocation7 + $0xf8] sm:$0xff]
    %v2987 = vld [vmem:[#allocation7 + $0x100] sm:$0xff]
    %v2988 = vld [vmem:[#allocation7 + $0x108] sm:$0xff]
    %v2989 = vld [vmem:[#allocation7 + $0x110] sm:$0xff]
    %v2990 = vld [vmem:[#allocation7 + $0x118] sm:$0xff]
    %v2991 = vld [vmem:[#allocation7 + $0x120] sm:$0xff]
    %v2992 = vld [vmem:[#allocation7 + $0x128] sm:$0xff]
    %v2993 = vld [vmem:[#allocation7 + $0x130] sm:$0xff]
    %v2994 = vld [vmem:[#allocation7 + $0x138] sm:$0xff]
    %v2995 = vld [vmem:[#allocation7 + $0x140] sm:$0xff]
    %v2996 = vld [vmem:[#allocation7 + $0x148] sm:$0xff]
    %v2997 = vld [vmem:[#allocation7 + $0x150] sm:$0xff]
    %v2998 = vld [vmem:[#allocation7 + $0x158] sm:$0xff]
    %v2999 = vld [vmem:[#allocation7 + $0x160] sm:$0xff]
    %v3000 = vld [vmem:[#allocation7 + $0x168] sm:$0xff]
    %v3001 = vld [vmem:[#allocation7 + $0x170] sm:$0xff]
    %v3002 = vld [vmem:[#allocation7 + $0x178] sm:$0xff]
    %v3003 = vld [vmem:[#allocation7 + $0x180] sm:$0xff]
    %v3004 = vld [vmem:[#allocation7 + $0x188] sm:$0xff]
    %v3005 = vld [vmem:[#allocation7 + $0x190] sm:$0xff]
    %v3006 = vld [vmem:[#allocation7 + $0x198] sm:$0xff]
    %v3007 = vld [vmem:[#allocation7 + $0x1a0] sm:$0xff]
    %v3008 = vld [vmem:[#allocation7 + $0x1a8] sm:$0xff]
    %v3009 = vld [vmem:[#allocation7 + $0x1b0] sm:$0xff]
    %v3010 = vld [vmem:[#allocation7 + $0x1b8] sm:$0xff]
    %v3011 = vld [vmem:[#allocation7 + $0x1c0] sm:$0xff]
    %v3012 = vld [vmem:[#allocation7 + $0x1c8] sm:$0xff]
    %v3013 = vld [vmem:[#allocation7 + $0x1d0] sm:$0xff]
    %v3014 = vld [vmem:[#allocation7 + $0x1d8] sm:$0xff]
    %v3015 = vld [vmem:[#allocation7 + $0x1e0] sm:$0xff]
    %v3016 = vld [vmem:[#allocation7 + $0x1e8] sm:$0xff]
    %v3017 = vld [vmem:[#allocation7 + $0x1f0] sm:$0xff]
    %v3018 = vld [vmem:[#allocation7 + $0x1f8] sm:$0xff]
    %v3019 = vld [vmem:[#allocation7 + $0x200] sm:$0xff]
    %v3020 = vld [vmem:[#allocation7 + $0x208] sm:$0xff]
    %v3021 = vld [vmem:[#allocation7 + $0x210] sm:$0xff]
    %v3022 = vld [vmem:[#allocation7 + $0x218] sm:$0xff]
    %v3023 = vld [vmem:[#allocation7 + $0x220] sm:$0xff]
    %v3024 = vld [vmem:[#allocation7 + $0x228] sm:$0xff]
    %v3025 = vld [vmem:[#allocation7 + $0x230] sm:$0xff]
    %v3026 = vld [vmem:[#allocation7 + $0x238] sm:$0xff]
    %v3027 = vld [vmem:[#allocation7 + $0x240] sm:$0xff]
    %v3028 = vld [vmem:[#allocation7 + $0x248] sm:$0xff]
    %v3029 = vld [vmem:[#allocation7 + $0x250] sm:$0xff]
    %v3030 = vld [vmem:[#allocation7 + $0x258] sm:$0xff]
    %v3031 = vld [vmem:[#allocation7 + $0x260] sm:$0xff]
    %v3032 = vld [vmem:[#allocation7 + $0x268] sm:$0xff]
    %v3033 = vld [vmem:[#allocation7 + $0x270] sm:$0xff]
    %v3034 = vld [vmem:[#allocation7 + $0x278] sm:$0xff]
    %v3035 = vld [vmem:[#allocation7 + $0x280] sm:$0xff]
    %v3036 = vld [vmem:[#allocation7 + $0x288] sm:$0xff]
    %v3037 = vld [vmem:[#allocation7 + $0x290] sm:$0xff]
    %v3038 = vld [vmem:[#allocation7 + $0x298] sm:$0xff]
    %v3039 = vld [vmem:[#allocation7 + $0x2a0] sm:$0xff]
    %v3040 = vld [vmem:[#allocation7 + $0x2a8] sm:$0xff]
    %v3041 = vld [vmem:[#allocation7 + $0x2b0] sm:$0xff]
    %v3042 = vld [vmem:[#allocation7 + $0x2b8] sm:$0xff]
    %v3043 = vld [vmem:[#allocation7 + $0x2c0] sm:$0xff]
    %v3044 = vld [vmem:[#allocation7 + $0x2c8] sm:$0xff]
    %v3045 = vld [vmem:[#allocation7 + $0x2d0] sm:$0xff]
    %v3046 = vld [vmem:[#allocation7 + $0x2d8] sm:$0xff]
    %v3047 = vld [vmem:[#allocation7 + $0x2e0] sm:$0xff]
    %v3048 = vld [vmem:[#allocation7 + $0x2e8] sm:$0xff]
    %v3049 = vld [vmem:[#allocation7 + $0x2f0] sm:$0xff]
    %v3050 = vld [vmem:[#allocation7 + $0x2f8] sm:$0xff]
    %v3051 = vld [vmem:[#allocation7 + $0x300] sm:$0xff]
    %v3052 = vld [vmem:[#allocation7 + $0x308] sm:$0xff]
    %v3053 = vld [vmem:[#allocation7 + $0x310] sm:$0xff]
    %v3054 = vld [vmem:[#allocation7 + $0x318] sm:$0xff]
    %v3055 = vld [vmem:[#allocation7 + $0x320] sm:$0xff]
    %v3056 = vld [vmem:[#allocation7 + $0x328] sm:$0xff]
    %v3057 = vld [vmem:[#allocation7 + $0x330] sm:$0xff]
    %v3058 = vld [vmem:[#allocation7 + $0x338] sm:$0xff]
    %v3059 = vld [vmem:[#allocation7 + $0x340] sm:$0xff]
    %v3060 = vld [vmem:[#allocation7 + $0x348] sm:$0xff]
    %v3061 = vld [vmem:[#allocation7 + $0x350] sm:$0xff]
    %v3062 = vld [vmem:[#allocation7 + $0x358] sm:$0xff]
    %v3063 = vld [vmem:[#allocation7 + $0x360] sm:$0xff]
    %v3064 = vld [vmem:[#allocation7 + $0x368] sm:$0xff]
    %v3065 = vld [vmem:[#allocation7 + $0x370] sm:$0xff]
    %v3066 = vld [vmem:[#allocation7 + $0x378] sm:$0xff]
    %v3067 = vld [vmem:[#allocation7 + $0x380] sm:$0xff]
    %v3068 = vld [vmem:[#allocation7 + $0x388] sm:$0xff]
    %v3069 = vld [vmem:[#allocation7 + $0x390] sm:$0xff]
    %v3070 = vld [vmem:[#allocation7 + $0x398] sm:$0xff]
    %v3071 = vld [vmem:[#allocation7 + $0x3a0] sm:$0xff]
    %v3072 = vld [vmem:[#allocation7 + $0x3a8] sm:$0xff]
    %v3073 = vld [vmem:[#allocation7 + $0x3b0] sm:$0xff]
    %v3074 = vld [vmem:[#allocation7 + $0x3b8] sm:$0xff]
    %v3075 = vld [vmem:[#allocation7 + $0x3c0] sm:$0xff]
    %v3076 = vld [vmem:[#allocation7 + $0x3c8] sm:$0xff]
    %v3077 = vld [vmem:[#allocation7 + $0x3d0] sm:$0xff]
    %v3078 = vld [vmem:[#allocation7 + $0x3d8] sm:$0xff]
    %v3079 = vld [vmem:[#allocation7 + $0x3e0] sm:$0xff]
    %v3080 = vld [vmem:[#allocation7 + $0x3e8] sm:$0xff]
    %v3081 = vld [vmem:[#allocation7 + $0x3f0] sm:$0xff]
    %v3082 = vld [vmem:[#allocation7 + $0x3f8] sm:$0xff]
    %v3083 = vld [vmem:[#allocation7 + $0x400] sm:$0xff]
    %v3084 = vld [vmem:[#allocation7 + $0x408] sm:$0xff]
    %v3085 = vld [vmem:[#allocation7 + $0x410] sm:$0xff]
    %v3086 = vld [vmem:[#allocation7 + $0x418] sm:$0xff]
    %v3087 = vld [vmem:[#allocation7 + $0x420] sm:$0xff]
    %v3088 = vld [vmem:[#allocation7 + $0x428] sm:$0xff]
    %v3089 = vld [vmem:[#allocation7 + $0x430] sm:$0xff]
    %v3090 = vld [vmem:[#allocation7 + $0x438] sm:$0xff]
    %v3091 = vld [vmem:[#allocation7 + $0x440] sm:$0xff]
    %v3092 = vld [vmem:[#allocation7 + $0x448] sm:$0xff]
    %v3093 = vld [vmem:[#allocation7 + $0x450] sm:$0xff]
    %v3094 = vld [vmem:[#allocation7 + $0x458] sm:$0xff]
    %v3095 = vld [vmem:[#allocation7 + $0x460] sm:$0xff]
    %v3096 = vld [vmem:[#allocation7 + $0x468] sm:$0xff]
    %v3097 = vld [vmem:[#allocation7 + $0x470] sm:$0xff]
    %v3098 = vld [vmem:[#allocation7 + $0x478] sm:$0xff]
    %v3099 = vld [vmem:[#allocation7 + $0x480] sm:$0xff]
    %v3100 = vld [vmem:[#allocation7 + $0x488] sm:$0xff]
    %v3101 = vld [vmem:[#allocation7 + $0x490] sm:$0xff]
    %v3102 = vld [vmem:[#allocation7 + $0x498] sm:$0xff]
    %v3103 = vld [vmem:[#allocation7 + $0x4a0] sm:$0xff]
    %v3104 = vld [vmem:[#allocation7 + $0x4a8] sm:$0xff]
    %v3105 = vld [vmem:[#allocation7 + $0x4b0] sm:$0xff]
    %v3106 = vld [vmem:[#allocation7 + $0x4b8] sm:$0xff]
    %v3107 = vld [vmem:[#allocation7 + $0x4c0] sm:$0xff]
    %v3108 = vld [vmem:[#allocation7 + $0x4c8] sm:$0xff]
    %v3109 = vld [vmem:[#allocation7 + $0x4d0] sm:$0xff]
    %v3110 = vld [vmem:[#allocation7 + $0x4d8] sm:$0xff]
    %v3111 = vld [vmem:[#allocation7 + $0x4e0] sm:$0xff]
    %v3112 = vld [vmem:[#allocation7 + $0x4e8] sm:$0xff]
    %v3113 = vld [vmem:[#allocation7 + $0x4f0] sm:$0xff]
    %v3114 = vld [vmem:[#allocation7 + $0x4f8] sm:$0xff]
    %v3115 = vld [vmem:[#allocation7 + $0x500] sm:$0xff]
    %v3116 = vld [vmem:[#allocation7 + $0x508] sm:$0xff]
    %v3117 = vld [vmem:[#allocation7 + $0x510] sm:$0xff]
    %v3118 = vld [vmem:[#allocation7 + $0x518] sm:$0xff]
    %v3119 = vld [vmem:[#allocation7 + $0x520] sm:$0xff]
    %v3120 = vld [vmem:[#allocation7 + $0x528] sm:$0xff]
    %v3121 = vld [vmem:[#allocation7 + $0x530] sm:$0xff]
    %v3122 = vld [vmem:[#allocation7 + $0x538] sm:$0xff]
    %v3123 = vld [vmem:[#allocation7 + $0x540] sm:$0xff]
    %v3124 = vld [vmem:[#allocation7 + $0x548] sm:$0xff]
    %v3125 = vld [vmem:[#allocation7 + $0x550] sm:$0xff]
    %v3126 = vld [vmem:[#allocation7 + $0x558] sm:$0xff]
    %v3127 = vld [vmem:[#allocation7 + $0x560] sm:$0xff]
    %v3128 = vld [vmem:[#allocation7 + $0x568] sm:$0xff]
    %v3129 = vld [vmem:[#allocation7 + $0x570] sm:$0xff]
    %v3130 = vld [vmem:[#allocation7 + $0x578] sm:$0xff]
    %v3131 = vld [vmem:[#allocation7 + $0x580] sm:$0xff]
    %v3132 = vld [vmem:[#allocation7 + $0x588] sm:$0xff]
    %v3133 = vld [vmem:[#allocation7 + $0x590] sm:$0xff]
    %v3134 = vld [vmem:[#allocation7 + $0x598] sm:$0xff]
    %v3135 = vld [vmem:[#allocation7 + $0x5a0] sm:$0xff]
    %v3136 = vld [vmem:[#allocation7 + $0x5a8] sm:$0xff]
    %v3137 = vld [vmem:[#allocation7 + $0x5b0] sm:$0xff]
    %v3138 = vld [vmem:[#allocation7 + $0x5b8] sm:$0xff]
    %v3139 = vld [vmem:[#allocation7 + $0x5c0] sm:$0xff]
    %v3140 = vld [vmem:[#allocation7 + $0x5c8] sm:$0xff]
    %v3141 = vld [vmem:[#allocation7 + $0x5d0] sm:$0xff]
    %v3142 = vld [vmem:[#allocation7 + $0x5d8] sm:$0xff]
    %v3143 = vld [vmem:[#allocation7 + $0x5e0] sm:$0xff]
    %v3144 = vld [vmem:[#allocation7 + $0x5e8] sm:$0xff]
    %v3145 = vld [vmem:[#allocation7 + $0x5f0] sm:$0xff]
    %v3146 = vld [vmem:[#allocation7 + $0x5f8] sm:$0xff]
    %v3147 = vld [vmem:[#allocation7 + $0x600] sm:$0xff]
    %v3148 = vld [vmem:[#allocation7 + $0x608] sm:$0xff]
    %v3149 = vld [vmem:[#allocation7 + $0x610] sm:$0xff]
    %v3150 = vld [vmem:[#allocation7 + $0x618] sm:$0xff]
    %v3151 = vld [vmem:[#allocation7 + $0x620] sm:$0xff]
    %v3152 = vld [vmem:[#allocation7 + $0x628] sm:$0xff]
    %v3153 = vld [vmem:[#allocation7 + $0x630] sm:$0xff]
    %v3154 = vld [vmem:[#allocation7 + $0x638] sm:$0xff]
    %v3155 = vld [vmem:[#allocation7 + $0x640] sm:$0xff]
    %v3156 = vld [vmem:[#allocation7 + $0x648] sm:$0xff]
    %v3157 = vld [vmem:[#allocation7 + $0x650] sm:$0xff]
    %v3158 = vld [vmem:[#allocation7 + $0x658] sm:$0xff]
    %v3159 = vld [vmem:[#allocation7 + $0x660] sm:$0xff]
    %v3160 = vld [vmem:[#allocation7 + $0x668] sm:$0xff]
    %v3161 = vld [vmem:[#allocation7 + $0x670] sm:$0xff]
    %v3162 = vld [vmem:[#allocation7 + $0x678] sm:$0xff]
    %v3163 = vld [vmem:[#allocation7 + $0x680] sm:$0xff]
    %v3164 = vld [vmem:[#allocation7 + $0x688] sm:$0xff]
    %v3165 = vld [vmem:[#allocation7 + $0x690] sm:$0xff]
    %v3166 = vld [vmem:[#allocation7 + $0x698] sm:$0xff]
    %v3167 = vld [vmem:[#allocation7 + $0x6a0] sm:$0xff]
    %v3168 = vld [vmem:[#allocation7 + $0x6a8] sm:$0xff]
    %v3169 = vld [vmem:[#allocation7 + $0x6b0] sm:$0xff]
    %v3170 = vld [vmem:[#allocation7 + $0x6b8] sm:$0xff]
    %v3171 = vld [vmem:[#allocation7 + $0x6c0] sm:$0xff]
    %v3172 = vld [vmem:[#allocation7 + $0x6c8] sm:$0xff]
    %v3173 = vld [vmem:[#allocation7 + $0x6d0] sm:$0xff]
    %v3174 = vld [vmem:[#allocation7 + $0x6d8] sm:$0xff]
    %v3175 = vld [vmem:[#allocation7 + $0x6e0] sm:$0xff]
    %v3176 = vld [vmem:[#allocation7 + $0x6e8] sm:$0xff]
    %v3177 = vld [vmem:[#allocation7 + $0x6f0] sm:$0xff]
    %v3178 = vld [vmem:[#allocation7 + $0x6f8] sm:$0xff]
    %v3179 = vld [vmem:[#allocation7 + $0x700] sm:$0xff]
    %v3180 = vld [vmem:[#allocation7 + $0x708] sm:$0xff]
    %v3181 = vld [vmem:[#allocation7 + $0x710] sm:$0xff]
    %v3182 = vld [vmem:[#allocation7 + $0x718] sm:$0xff]
    %v3183 = vld [vmem:[#allocation7 + $0x720] sm:$0xff]
    %v3184 = vld [vmem:[#allocation7 + $0x728] sm:$0xff]
    %v3185 = vld [vmem:[#allocation7 + $0x730] sm:$0xff]
    %v3186 = vld [vmem:[#allocation7 + $0x738] sm:$0xff]
    %v3187 = vld [vmem:[#allocation7 + $0x740] sm:$0xff]
    %v3188 = vld [vmem:[#allocation7 + $0x748] sm:$0xff]
    %v3189 = vld [vmem:[#allocation7 + $0x750] sm:$0xff]
    %v3190 = vld [vmem:[#allocation7 + $0x758] sm:$0xff]
    %v3191 = vld [vmem:[#allocation7 + $0x760] sm:$0xff]
    %v3192 = vld [vmem:[#allocation7 + $0x768] sm:$0xff]
    %v3193 = vld [vmem:[#allocation7 + $0x770] sm:$0xff]
    %v3194 = vld [vmem:[#allocation7 + $0x778] sm:$0xff]
    %v3195 = vld [vmem:[#allocation7 + $0x780] sm:$0xff]
    %v3196 = vld [vmem:[#allocation7 + $0x788] sm:$0xff]
    %v3197 = vld [vmem:[#allocation7 + $0x790] sm:$0xff]
    %v3198 = vld [vmem:[#allocation7 + $0x798] sm:$0xff]
    %v3199 = vld [vmem:[#allocation7 + $0x7a0] sm:$0xff]
    %v3200 = vld [vmem:[#allocation7 + $0x7a8] sm:$0xff]
    %v3201 = vld [vmem:[#allocation7 + $0x7b0] sm:$0xff]
    %v3202 = vld [vmem:[#allocation7 + $0x7b8] sm:$0xff]
    %v3203 = vld [vmem:[#allocation7 + $0x7c0] sm:$0xff]
    %v3204 = vld [vmem:[#allocation7 + $0x7c8] sm:$0xff]
    %v3205 = vld [vmem:[#allocation7 + $0x7d0] sm:$0xff]
    %v3206 = vld [vmem:[#allocation7 + $0x7d8] sm:$0xff]
    %v3207 = vld [vmem:[#allocation7 + $0x7e0] sm:$0xff]
    %v3208 = vld [vmem:[#allocation7 + $0x7e8] sm:$0xff]
    %v3209 = vld [vmem:[#allocation7 + $0x7f0] sm:$0xff]
    %v3210 = vld [vmem:[#allocation7 + $0x7f8] sm:$0xff]
    %v3211 = vrot.slane %v2397, 2
    %v3212 = vrot.slane %v2669, 2
    %3215 = vmatprep.subr.mxu0 %v2956
    %3216 = vmatpush1.msra.mxu0 %v2955
    %3217 = vmatprep.subr.mxu0 %v2964
    %3218 = vmatpush1.msra.mxu0 %v2963
    %3219 = vmatprep.subr.mxu0 %v2972
    %3220 = vmatpush1.msra.mxu0 %v2971
    %3221 = vmatprep.subr.mxu0 %v2980
    %3222 = vmatpush1.msra.mxu0 %v2979
    %3223 = vmatprep.subr.mxu0 %v2988
    %3224 = vmatpush1.msra.mxu0 %v2987
    %3225 = vmatprep.subr.mxu0 %v2996
    %3226 = vmatpush1.msra.mxu0 %v2995
    %3227 = vmatprep.subr.mxu0 %v3004
    %3228 = vmatpush1.msra.mxu0 %v3003
    %3229 = vmatprep.subr.mxu0 %v3012
    %3230 = vmatpush1.msra.mxu0 %v3011
    %3231 = vmatprep.subr.mxu0 %v3020
    %3232 = vmatpush1.msra.mxu0 %v3019
    %3233 = vmatprep.subr.mxu0 %v3028
    %3234 = vmatpush1.msra.mxu0 %v3027
    %3235 = vmatprep.subr.mxu0 %v3036
    %3236 = vmatpush1.msra.mxu0 %v3035
    %3237 = vmatprep.subr.mxu0 %v3044
    %3238 = vmatpush1.msra.mxu0 %v3043
    %3239 = vmatprep.subr.mxu0 %v3052
    %3240 = vmatpush1.msra.mxu0 %v3051
    %3241 = vmatprep.subr.mxu0 %v3060
    %3242 = vmatpush1.msra.mxu0 %v3059
    %3243 = vmatprep.subr.mxu0 %v3068
    %3244 = vmatpush1.msra.mxu0 %v3067
    %3245 = vmatprep.subr.mxu0 %v3076
    %3246 = vmatpush1.msra.mxu0 %v3075
    %3247 = vmatprep.subr.mxu0 %v3084
    %3248 = vmatpush1.msra.mxu0 %v3083
    %3249 = vmatprep.subr.mxu0 %v3092
    %3250 = vmatpush1.msra.mxu0 %v3091
    %3251 = vmatprep.subr.mxu0 %v3100
    %3252 = vmatpush1.msra.mxu0 %v3099
    %3253 = vmatprep.subr.mxu0 %v3108
    %3254 = vmatpush1.msra.mxu0 %v3107
    %3255 = vmatprep.subr.mxu0 %v3116
    %3256 = vmatpush1.msra.mxu0 %v3115
    %3257 = vmatprep.subr.mxu0 %v3124
    %3258 = vmatpush1.msra.mxu0 %v3123
    %3259 = vmatprep.subr.mxu0 %v3132
    %3260 = vmatpush1.msra.mxu0 %v3131
    %3261 = vmatprep.subr.mxu0 %v3140
    %3262 = vmatpush1.msra.mxu0 %v3139
    %3263 = vmatprep.subr.mxu0 %v3148
    %3264 = vmatpush1.msra.mxu0 %v3147
    %3265 = vmatprep.subr.mxu0 %v3156
    %3266 = vmatpush1.msra.mxu0 %v3155
    %3267 = vmatprep.subr.mxu0 %v3164
    %3268 = vmatpush1.msra.mxu0 %v3163
    %3269 = vmatprep.subr.mxu0 %v3172
    %3270 = vmatpush1.msra.mxu0 %v3171
    %3271 = vmatprep.subr.mxu0 %v3180
    %3272 = vmatpush1.msra.mxu0 %v3179
    %3273 = vmatprep.subr.mxu0 %v3188
    %3274 = vmatpush1.msra.mxu0 %v3187
    %3275 = vmatprep.subr.mxu0 %v3196
    %3276 = vmatpush1.msra.mxu0 %v3195
    %3277 = vmatprep.subr.mxu0 %v3204
    %3278 = vmatpush1.msra.mxu0 %v3203
    %3279 = vmatprep.mubr.f32.mxu0 %v3212
    %3280 = vmatmul.mubr.f32.gmra.mrb[0].mxu0 %v3211
    %v3281 = vpop.f32.mrb[0].mxu0
    %v3282 = vadd.f32 0.0, %v3281
    %v3283 = vpop.f32.mrb[0].mxu0
    %v3284 = vadd.f32 0.0, %v3283
    %3285 = vdwg.mxu0
    %3286 = vmatprep.subr.mxu0 %v2958
    %3287 = vmatpush1.msra.mxu0 %v2957
    %3288 = vmatprep.subr.mxu0 %v2966
    %3289 = vmatpush1.msra.mxu0 %v2965
    %3290 = vmatprep.subr.mxu0 %v2974
    %3291 = vmatpush1.msra.mxu0 %v2973
    %3292 = vmatprep.subr.mxu0 %v2982
    %3293 = vmatpush1.msra.mxu0 %v2981
    %3294 = vmatprep.subr.mxu0 %v2990
    %3295 = vmatpush1.msra.mxu0 %v2989
    %3296 = vmatprep.subr.mxu0 %v2998
    %3297 = vmatpush1.msra.mxu0 %v2997
    %3298 = vmatprep.subr.mxu0 %v3006
    %3299 = vmatpush1.msra.mxu0 %v3005
    %3300 = vmatprep.subr.mxu0 %v3014
    %3301 = vmatpush1.msra.mxu0 %v3013
    %3302 = vmatprep.subr.mxu0 %v3022
    %3303 = vmatpush1.msra.mxu0 %v3021
    %3304 = vmatprep.subr.mxu0 %v3030
    %3305 = vmatpush1.msra.mxu0 %v3029
    %3306 = vmatprep.subr.mxu0 %v3038
    %3307 = vmatpush1.msra.mxu0 %v3037
    %3308 = vmatprep.subr.mxu0 %v3046
    %3309 = vmatpush1.msra.mxu0 %v3045
    %3310 = vmatprep.subr.mxu0 %v3054
    %3311 = vmatpush1.msra.mxu0 %v3053
    %3312 = vmatprep.subr.mxu0 %v3062
    %3313 = vmatpush1.msra.mxu0 %v3061
    %3314 = vmatprep.subr.mxu0 %v3070
    %3315 = vmatpush1.msra.mxu0 %v3069
    %3316 = vmatprep.subr.mxu0 %v3078
    %3317 = vmatpush1.msra.mxu0 %v3077
    %3318 = vmatprep.subr.mxu0 %v3086
    %3319 = vmatpush1.msra.mxu0 %v3085
    %3320 = vmatprep.subr.mxu0 %v3094
    %3321 = vmatpush1.msra.mxu0 %v3093
    %3322 = vmatprep.subr.mxu0 %v3102
    %3323 = vmatpush1.msra.mxu0 %v3101
    %3324 = vmatprep.subr.mxu0 %v3110
    %3325 = vmatpush1.msra.mxu0 %v3109
    %3326 = vmatprep.subr.mxu0 %v3118
    %3327 = vmatpush1.msra.mxu0 %v3117
    %3328 = vmatprep.subr.mxu0 %v3126
    %3329 = vmatpush1.msra.mxu0 %v3125
    %3330 = vmatprep.subr.mxu0 %v3134
    %3331 = vmatpush1.msra.mxu0 %v3133
    %3332 = vmatprep.subr.mxu0 %v3142
    %3333 = vmatpush1.msra.mxu0 %v3141
    %3334 = vmatprep.subr.mxu0 %v3150
    %3335 = vmatpush1.msra.mxu0 %v3149
    %3336 = vmatprep.subr.mxu0 %v3158
    %3337 = vmatpush1.msra.mxu0 %v3157
    %3338 = vmatprep.subr.mxu0 %v3166
    %3339 = vmatpush1.msra.mxu0 %v3165
    %3340 = vmatprep.subr.mxu0 %v3174
    %3341 = vmatpush1.msra.mxu0 %v3173
    %3342 = vmatprep.subr.mxu0 %v3182
    %3343 = vmatpush1.msra.mxu0 %v3181
    %3344 = vmatprep.subr.mxu0 %v3190
    %3345 = vmatpush1.msra.mxu0 %v3189
    %3346 = vmatprep.subr.mxu0 %v3198
    %3347 = vmatpush1.msra.mxu0 %v3197
    %3348 = vmatprep.subr.mxu0 %v3206
    %3349 = vmatpush1.msra.mxu0 %v3205
    %3350 = vmatprep.mubr.f32.mxu0 %v3212
    %3351 = vmatmul.mubr.f32.gmra.mrb[0].mxu0 %v3211
    %v3352 = vpop.f32.mrb[0].mxu0
    %v3353 = vadd.f32 0.0, %v3352
    %v3354 = vpop.f32.mrb[0].mxu0
    %v3355 = vadd.f32 0.0, %v3354
    %3356 = vdwg.mxu0
    %3357 = vmatprep.subr.mxu0 %v2960
    %3358 = vmatpush1.msra.mxu0 %v2959
    %3359 = vmatprep.subr.mxu0 %v2968
    %3360 = vmatpush1.msra.mxu0 %v2967
    %3361 = vmatprep.subr.mxu0 %v2976
    %3362 = vmatpush1.msra.mxu0 %v2975
    %3363 = vmatprep.subr.mxu0 %v2984
    %3364 = vmatpush1.msra.mxu0 %v2983
    %3365 = vmatprep.subr.mxu0 %v2992
    %3366 = vmatpush1.msra.mxu0 %v2991
    %3367 = vmatprep.subr.mxu0 %v3000
    %3368 = vmatpush1.msra.mxu0 %v2999
    %3369 = vmatprep.subr.mxu0 %v3008
    %3370 = vmatpush1.msra.mxu0 %v3007
    %3371 = vmatprep.subr.mxu0 %v3016
    %3372 = vmatpush1.msra.mxu0 %v3015
    %3373 = vmatprep.subr.mxu0 %v3024
    %3374 = vmatpush1.msra.mxu0 %v3023
    %3375 = vmatprep.subr.mxu0 %v3032
    %3376 = vmatpush1.msra.mxu0 %v3031
    %3377 = vmatprep.subr.mxu0 %v3040
    %3378 = vmatpush1.msra.mxu0 %v3039
    %3379 = vmatprep.subr.mxu0 %v3048
    %3380 = vmatpush1.msra.mxu0 %v3047
    %3381 = vmatprep.subr.mxu0 %v3056
    %3382 = vmatpush1.msra.mxu0 %v3055
    %3383 = vmatprep.subr.mxu0 %v3064
    %3384 = vmatpush1.msra.mxu0 %v3063
    %3385 = vmatprep.subr.mxu0 %v3072
    %3386 = vmatpush1.msra.mxu0 %v3071
    %3387 = vmatprep.subr.mxu0 %v3080
    %3388 = vmatpush1.msra.mxu0 %v3079
    %3389 = vmatprep.subr.mxu0 %v3088
    %3390 = vmatpush1.msra.mxu0 %v3087
    %3391 = vmatprep.subr.mxu0 %v3096
    %3392 = vmatpush1.msra.mxu0 %v3095
    %3393 = vmatprep.subr.mxu0 %v3104
    %3394 = vmatpush1.msra.mxu0 %v3103
    %3395 = vmatprep.subr.mxu0 %v3112
    %3396 = vmatpush1.msra.mxu0 %v3111
    %3397 = vmatprep.subr.mxu0 %v3120
    %3398 = vmatpush1.msra.mxu0 %v3119
    %3399 = vmatprep.subr.mxu0 %v3128
    %3400 = vmatpush1.msra.mxu0 %v3127
    %3401 = vmatprep.subr.mxu0 %v3136
    %3402 = vmatpush1.msra.mxu0 %v3135
    %3403 = vmatprep.subr.mxu0 %v3144
    %3404 = vmatpush1.msra.mxu0 %v3143
    %3405 = vmatprep.subr.mxu0 %v3152
    %3406 = vmatpush1.msra.mxu0 %v3151
    %3407 = vmatprep.subr.mxu0 %v3160
    %3408 = vmatpush1.msra.mxu0 %v3159
    %3409 = vmatprep.subr.mxu0 %v3168
    %3410 = vmatpush1.msra.mxu0 %v3167
    %3411 = vmatprep.subr.mxu0 %v3176
    %3412 = vmatpush1.msra.mxu0 %v3175
    %3413 = vmatprep.subr.mxu0 %v3184
    %3414 = vmatpush1.msra.mxu0 %v3183
    %3415 = vmatprep.subr.mxu0 %v3192
    %3416 = vmatpush1.msra.mxu0 %v3191
    %3417 = vmatprep.subr.mxu0 %v3200
    %3418 = vmatpush1.msra.mxu0 %v3199
    %3419 = vmatprep.subr.mxu0 %v3208
    %3420 = vmatpush1.msra.mxu0 %v3207
    %3421 = vmatprep.mubr.f32.mxu0 %v3212
    %3422 = vmatmul.mubr.f32.gmra.mrb[0].mxu0 %v3211
    %v3423 = vpop.f32.mrb[0].mxu0
    %v3424 = vadd.f32 0.0, %v3423
    %v3425 = vpop.f32.mrb[0].mxu0
    %v3426 = vadd.f32 0.0, %v3425
    %3427 = vdwg.mxu0
    %3428 = vmatprep.subr.mxu0 %v2962
    %3429 = vmatpush1.msra.mxu0 %v2961
    %3430 = vmatprep.subr.mxu0 %v2970
    %3431 = vmatpush1.msra.mxu0 %v2969
    %3432 = vmatprep.subr.mxu0 %v2978
    %3433 = vmatpush1.msra.mxu0 %v2977
    %3434 = vmatprep.subr.mxu0 %v2986
    %3435 = vmatpush1.msra.mxu0 %v2985
    %3436 = vmatprep.subr.mxu0 %v2994
    %3437 = vmatpush1.msra.mxu0 %v2993
    %3438 = vmatprep.subr.mxu0 %v3002
    %3439 = vmatpush1.msra.mxu0 %v3001
    %3440 = vmatprep.subr.mxu0 %v3010
    %3441 = vmatpush1.msra.mxu0 %v3009
    %3442 = vmatprep.subr.mxu0 %v3018
    %3443 = vmatpush1.msra.mxu0 %v3017
    %3444 = vmatprep.subr.mxu0 %v3026
    %3445 = vmatpush1.msra.mxu0 %v3025
    %3446 = vmatprep.subr.mxu0 %v3034
    %3447 = vmatpush1.msra.mxu0 %v3033
    %3448 = vmatprep.subr.mxu0 %v3042
    %3449 = vmatpush1.msra.mxu0 %v3041
    %3450 = vmatprep.subr.mxu0 %v3050
    %3451 = vmatpush1.msra.mxu0 %v3049
    %3452 = vmatprep.subr.mxu0 %v3058
    %3453 = vmatpush1.msra.mxu0 %v3057
    %3454 = vmatprep.subr.mxu0 %v3066
    %3455 = vmatpush1.msra.mxu0 %v3065
    %3456 = vmatprep.subr.mxu0 %v3074
    %3457 = vmatpush1.msra.mxu0 %v3073
    %3458 = vmatprep.subr.mxu0 %v3082
    %3459 = vmatpush1.msra.mxu0 %v3081
    %3460 = vmatprep.subr.mxu0 %v3090
    %3461 = vmatpush1.msra.mxu0 %v3089
    %3462 = vmatprep.subr.mxu0 %v3098
    %3463 = vmatpush1.msra.mxu0 %v3097
    %3464 = vmatprep.subr.mxu0 %v3106
    %3465 = vmatpush1.msra.mxu0 %v3105
    %3466 = vmatprep.subr.mxu0 %v3114
    %3467 = vmatpush1.msra.mxu0 %v3113
    %3468 = vmatprep.subr.mxu0 %v3122
    %3469 = vmatpush1.msra.mxu0 %v3121
    %3470 = vmatprep.subr.mxu0 %v3130
    %3471 = vmatpush1.msra.mxu0 %v3129
    %3472 = vmatprep.subr.mxu0 %v3138
    %3473 = vmatpush1.msra.mxu0 %v3137
    %3474 = vmatprep.subr.mxu0 %v3146
    %3475 = vmatpush1.msra.mxu0 %v3145
    %3476 = vmatprep.subr.mxu0 %v3154
    %3477 = vmatpush1.msra.mxu0 %v3153
    %3478 = vmatprep.subr.mxu0 %v3162
    %3479 = vmatpush1.msra.mxu0 %v3161
    %3480 = vmatprep.subr.mxu0 %v3170
    %3481 = vmatpush1.msra.mxu0 %v3169
    %3482 = vmatprep.subr.mxu0 %v3178
    %3483 = vmatpush1.msra.mxu0 %v3177
    %3484 = vmatprep.subr.mxu0 %v3186
    %3485 = vmatpush1.msra.mxu0 %v3185
    %3486 = vmatprep.subr.mxu0 %v3194
    %3487 = vmatpush1.msra.mxu0 %v3193
    %3488 = vmatprep.subr.mxu0 %v3202
    %3489 = vmatpush1.msra.mxu0 %v3201
    %3490 = vmatprep.subr.mxu0 %v3210
    %3491 = vmatpush1.msra.mxu0 %v3209
    %3492 = vmatprep.mubr.f32.mxu0 %v3212
    %3493 = vmatmul.mubr.f32.gmra.mrb[0].mxu0 %v3211
    %v3494 = vpop.f32.mrb[0].mxu0
    %v3495 = vadd.f32 0.0, %v3494
    %v3496 = vpop.f32.mrb[0].mxu0
    %v3497 = vadd.f32 0.0, %v3496
    %3498 = vdwg.mxu0
    %s3499 = scalar_lea.vmem [#allocation2], 64
    %v3500 = vld [vmem:[%s3499] sm:$0xff]
    %v3501 = vld [vmem:[%s3499 + $0x8] sm:$0xff]
    %v3502 = vld [vmem:[%s3499 + $0x10] sm:$0xff]
    %v3503 = vld [vmem:[%s3499 + $0x18] sm:$0xff]
    %v3512 = vrot.slane %v3282, 6
    %v3513 = vrot.slane %v3284, 6
    %v3514 = vrot.slane %v3353, 6
    %v3515 = vrot.slane %v3355, 6
    %v3516 = vrot.slane %v3424, 6
    %v3517 = vrot.slane %v3426, 6
    %v3518 = vrot.slane %v3495, 6
    %v3519 = vrot.slane %v3497, 6
    %v3528 = vsel %vm1164, %v2738, %v3512
    %v3529 = vsel %vm1164, %v2740, %v3513
    %v3530 = vsel %vm1164, %v2809, %v3514
    %v3531 = vsel %vm1164, %v2811, %v3515
    %v3532 = vsel %vm1164, %v2880, %v3516
    %v3533 = vsel %vm1164, %v2882, %v3517
    %v3534 = vsel %vm1164, %v2951, %v3518
    %v3535 = vsel %vm1164, %v2953, %v3519
    %v3544 = vcombine.low %v3528, %v3529
    %v3545 = vcombine.low %v3530, %v3531
    %v3546 = vcombine.low %v3532, %v3533
    %v3547 = vcombine.low %v3534, %v3535
    %v3552 = vadd.f32 %v3500, %v3544
    %v3553 = vadd.f32 %v3501, %v3545
    %v3554 = vadd.f32 %v3502, %v3546
    %v3555 = vadd.f32 %v3503, %v3547
    %v3556 = vxor.u32 %v3552, 2147483648
    %v3557 = vxor.u32 %v3553, 2147483648
    %v3558 = vxor.u32 %v3554, 2147483648
    %v3559 = vmul.f32 %v3556, 1.442695
    %v3560 = vpow.pop %v3559
    %v3561 = vmul.f32 %v3557, 1.442695
    %v3562 = vpow.pop %v3561
    %v3563 = vmul.f32 %v3558, 1.442695
    %v3564 = vpow.pop %v3563
    %v3565 = vadd.f32 %v3560, 1.0
    %v3566 = vadd.f32 %v3562, 1.0
    %v3567 = vadd.f32 %v3564, 1.0
    %v3568 = vrcp.pop %v3565
    %v3569 = vmul.f32 1.0, %v3568
    %v3570 = vrcp.pop %v3566
    %v3571 = vmul.f32 1.0, %v3570
    %v3572 = vrcp.pop %v3567
    %v3573 = vmul.f32 1.0, %v3572
    %v3574 = vtanh.pop %v3555
    %v3575 = vmul.f32 %v3571, %v2395
    %v3576 = vmul.f32 %v3569, %v3574
    %v3577 = vadd.f32 %v3575, %v3576
    %v3578 = vtanh.pop %v3577
    %v3579 = vmul.f32 %v3573, %v3578
    %v3582 = vunpack.c.l.s4 1983009808
    %v3583 = vunpack.c.0.s8 %v3582
    %v3584 = vlaneseq
    %v3585 = vshrl.u32 %v3584, 7
    %v3586 = vsub.s32 %v3583, %v3585
    %v3587 = vrot.slane %v3579, %v3586
    %s3589 = scalar_lea.vmem [#allocation8], 16
    %3590 = vst [vmem:[%s3589] sm:$0xf] %v3587
    %v3591 = vcombine.high %v3587, %v3587
    %s3593 = scalar_lea.vmem [#allocation8], 40
    %3594 = vst [vmem:[%s3593 + $0x4] sm:$0xf] %v3591
    %v3595 = vld [vmem:[#allocation5] sm:$0xff]
    %v3596 = vld [vmem:[#allocation5 + $0x8] sm:$0xff]
    %v3597 = vld [vmem:[#allocation5 + $0x10] sm:$0xff]
    %v3598 = vld [vmem:[#allocation5 + $0x18] sm:$0xff]
    %v3599 = vld [vmem:[#allocation5 + $0x20] sm:$0xff]
    %v3600 = vld [vmem:[#allocation5 + $0x28] sm:$0xff]
    %v3601 = vld [vmem:[#allocation5 + $0x30] sm:$0xff]
    %v3602 = vld [vmem:[#allocation5 + $0x38] sm:$0xff]
    %v3603 = vld [vmem:[#allocation5 + $0x40] sm:$0xff]
    %v3604 = vld [vmem:[#allocation5 + $0x48] sm:$0xff]
    %v3605 = vld [vmem:[#allocation5 + $0x50] sm:$0xff]
    %v3606 = vld [vmem:[#allocation5 + $0x58] sm:$0xff]
    %v3607 = vld [vmem:[#allocation5 + $0x60] sm:$0xff]
    %v3608 = vld [vmem:[#allocation5 + $0x68] sm:$0xff]
    %v3609 = vld [vmem:[#allocation5 + $0x70] sm:$0xff]
    %v3610 = vld [vmem:[#allocation5 + $0x78] sm:$0xff]
    %v3611 = vld [vmem:[#allocation5 + $0x80] sm:$0xff]
    %v3612 = vld [vmem:[#allocation5 + $0x88] sm:$0xff]
    %v3613 = vld [vmem:[#allocation5 + $0x90] sm:$0xff]
    %v3614 = vld [vmem:[#allocation5 + $0x98] sm:$0xff]
    %v3615 = vld [vmem:[#allocation5 + $0xa0] sm:$0xff]
    %v3616 = vld [vmem:[#allocation5 + $0xa8] sm:$0xff]
    %v3617 = vld [vmem:[#allocation5 + $0xb0] sm:$0xff]
    %v3618 = vld [vmem:[#allocation5 + $0xb8] sm:$0xff]
    %v3619 = vld [vmem:[#allocation5 + $0xc0] sm:$0xff]
    %v3620 = vld [vmem:[#allocation5 + $0xc8] sm:$0xff]
    %v3621 = vld [vmem:[#allocation5 + $0xd0] sm:$0xff]
    %v3622 = vld [vmem:[#allocation5 + $0xd8] sm:$0xff]
    %v3623 = vld [vmem:[#allocation5 + $0xe0] sm:$0xff]
    %v3624 = vld [vmem:[#allocation5 + $0xe8] sm:$0xff]
    %v3625 = vld [vmem:[#allocation5 + $0xf0] sm:$0xff]
    %v3626 = vld [vmem:[#allocation5 + $0xf8] sm:$0xff]
    %v3627 = vld [vmem:[#allocation5 + $0x100] sm:$0xff]
    %v3628 = vld [vmem:[#allocation5 + $0x108] sm:$0xff]
    %v3629 = vld [vmem:[#allocation5 + $0x110] sm:$0xff]
    %v3630 = vld [vmem:[#allocation5 + $0x118] sm:$0xff]
    %v3631 = vld [vmem:[#allocation5 + $0x120] sm:$0xff]
    %v3632 = vld [vmem:[#allocation5 + $0x128] sm:$0xff]
    %v3633 = vld [vmem:[#allocation5 + $0x130] sm:$0xff]
    %v3634 = vld [vmem:[#allocation5 + $0x138] sm:$0xff]
    %v3635 = vld [vmem:[#allocation5 + $0x140] sm:$0xff]
    %v3636 = vld [vmem:[#allocation5 + $0x148] sm:$0xff]
    %v3637 = vld [vmem:[#allocation5 + $0x150] sm:$0xff]
    %v3638 = vld [vmem:[#allocation5 + $0x158] sm:$0xff]
    %v3639 = vld [vmem:[#allocation5 + $0x160] sm:$0xff]
    %v3640 = vld [vmem:[#allocation5 + $0x168] sm:$0xff]
    %v3641 = vld [vmem:[#allocation5 + $0x170] sm:$0xff]
    %v3642 = vld [vmem:[#allocation5 + $0x178] sm:$0xff]
    %v3643 = vld [vmem:[#allocation5 + $0x180] sm:$0xff]
    %v3644 = vld [vmem:[#allocation5 + $0x188] sm:$0xff]
    %v3645 = vld [vmem:[#allocation5 + $0x190] sm:$0xff]
    %v3646 = vld [vmem:[#allocation5 + $0x198] sm:$0xff]
    %v3647 = vld [vmem:[#allocation5 + $0x1a0] sm:$0xff]
    %v3648 = vld [vmem:[#allocation5 + $0x1a8] sm:$0xff]
    %v3649 = vld [vmem:[#allocation5 + $0x1b0] sm:$0xff]
    %v3650 = vld [vmem:[#allocation5 + $0x1b8] sm:$0xff]
    %v3651 = vld [vmem:[#allocation5 + $0x1c0] sm:$0xff]
    %v3652 = vld [vmem:[#allocation5 + $0x1c8] sm:$0xff]
    %v3653 = vld [vmem:[#allocation5 + $0x1d0] sm:$0xff]
    %v3654 = vld [vmem:[#allocation5 + $0x1d8] sm:$0xff]
    %v3655 = vld [vmem:[#allocation5 + $0x1e0] sm:$0xff]
    %v3656 = vld [vmem:[#allocation5 + $0x1e8] sm:$0xff]
    %v3657 = vld [vmem:[#allocation5 + $0x1f0] sm:$0xff]
    %v3658 = vld [vmem:[#allocation5 + $0x1f8] sm:$0xff]
    %v3659 = vld [vmem:[#allocation5 + $0x200] sm:$0xff]
    %v3660 = vld [vmem:[#allocation5 + $0x208] sm:$0xff]
    %v3661 = vld [vmem:[#allocation5 + $0x210] sm:$0xff]
    %v3662 = vld [vmem:[#allocation5 + $0x218] sm:$0xff]
    %v3663 = vld [vmem:[#allocation5 + $0x220] sm:$0xff]
    %v3664 = vld [vmem:[#allocation5 + $0x228] sm:$0xff]
    %v3665 = vld [vmem:[#allocation5 + $0x230] sm:$0xff]
    %v3666 = vld [vmem:[#allocation5 + $0x238] sm:$0xff]
    %v3667 = vld [vmem:[#allocation5 + $0x240] sm:$0xff]
    %v3668 = vld [vmem:[#allocation5 + $0x248] sm:$0xff]
    %v3669 = vld [vmem:[#allocation5 + $0x250] sm:$0xff]
    %v3670 = vld [vmem:[#allocation5 + $0x258] sm:$0xff]
    %v3671 = vld [vmem:[#allocation5 + $0x260] sm:$0xff]
    %v3672 = vld [vmem:[#allocation5 + $0x268] sm:$0xff]
    %v3673 = vld [vmem:[#allocation5 + $0x270] sm:$0xff]
    %v3674 = vld [vmem:[#allocation5 + $0x278] sm:$0xff]
    %v3675 = vld [vmem:[#allocation5 + $0x280] sm:$0xff]
    %v3676 = vld [vmem:[#allocation5 + $0x288] sm:$0xff]
    %v3677 = vld [vmem:[#allocation5 + $0x290] sm:$0xff]
    %v3678 = vld [vmem:[#allocation5 + $0x298] sm:$0xff]
    %v3679 = vld [vmem:[#allocation5 + $0x2a0] sm:$0xff]
    %v3680 = vld [vmem:[#allocation5 + $0x2a8] sm:$0xff]
    %v3681 = vld [vmem:[#allocation5 + $0x2b0] sm:$0xff]
    %v3682 = vld [vmem:[#allocation5 + $0x2b8] sm:$0xff]
    %v3683 = vld [vmem:[#allocation5 + $0x2c0] sm:$0xff]
    %v3684 = vld [vmem:[#allocation5 + $0x2c8] sm:$0xff]
    %v3685 = vld [vmem:[#allocation5 + $0x2d0] sm:$0xff]
    %v3686 = vld [vmem:[#allocation5 + $0x2d8] sm:$0xff]
    %v3687 = vld [vmem:[#allocation5 + $0x2e0] sm:$0xff]
    %v3688 = vld [vmem:[#allocation5 + $0x2e8] sm:$0xff]
    %v3689 = vld [vmem:[#allocation5 + $0x2f0] sm:$0xff]
    %v3690 = vld [vmem:[#allocation5 + $0x2f8] sm:$0xff]
    %v3691 = vld [vmem:[#allocation5 + $0x300] sm:$0xff]
    %v3692 = vld [vmem:[#allocation5 + $0x308] sm:$0xff]
    %v3693 = vld [vmem:[#allocation5 + $0x310] sm:$0xff]
    %v3694 = vld [vmem:[#allocation5 + $0x318] sm:$0xff]
    %v3695 = vld [vmem:[#allocation5 + $0x320] sm:$0xff]
    %v3696 = vld [vmem:[#allocation5 + $0x328] sm:$0xff]
    %v3697 = vld [vmem:[#allocation5 + $0x330] sm:$0xff]
    %v3698 = vld [vmem:[#allocation5 + $0x338] sm:$0xff]
    %v3699 = vld [vmem:[#allocation5 + $0x340] sm:$0xff]
    %v3700 = vld [vmem:[#allocation5 + $0x348] sm:$0xff]
    %v3701 = vld [vmem:[#allocation5 + $0x350] sm:$0xff]
    %v3702 = vld [vmem:[#allocation5 + $0x358] sm:$0xff]
    %v3703 = vld [vmem:[#allocation5 + $0x360] sm:$0xff]
    %v3704 = vld [vmem:[#allocation5 + $0x368] sm:$0xff]
    %v3705 = vld [vmem:[#allocation5 + $0x370] sm:$0xff]
    %v3706 = vld [vmem:[#allocation5 + $0x378] sm:$0xff]
    %v3707 = vld [vmem:[#allocation5 + $0x380] sm:$0xff]
    %v3708 = vld [vmem:[#allocation5 + $0x388] sm:$0xff]
    %v3709 = vld [vmem:[#allocation5 + $0x390] sm:$0xff]
    %v3710 = vld [vmem:[#allocation5 + $0x398] sm:$0xff]
    %v3711 = vld [vmem:[#allocation5 + $0x3a0] sm:$0xff]
    %v3712 = vld [vmem:[#allocation5 + $0x3a8] sm:$0xff]
    %v3713 = vld [vmem:[#allocation5 + $0x3b0] sm:$0xff]
    %v3714 = vld [vmem:[#allocation5 + $0x3b8] sm:$0xff]
    %v3715 = vld [vmem:[#allocation5 + $0x3c0] sm:$0xff]
    %v3716 = vld [vmem:[#allocation5 + $0x3c8] sm:$0xff]
    %v3717 = vld [vmem:[#allocation5 + $0x3d0] sm:$0xff]
    %v3718 = vld [vmem:[#allocation5 + $0x3d8] sm:$0xff]
    %v3719 = vld [vmem:[#allocation5 + $0x3e0] sm:$0xff]
    %v3720 = vld [vmem:[#allocation5 + $0x3e8] sm:$0xff]
    %v3721 = vld [vmem:[#allocation5 + $0x3f0] sm:$0xff]
    %v3722 = vld [vmem:[#allocation5 + $0x3f8] sm:$0xff]
    %v3723 = vld [vmem:[#allocation5 + $0x400] sm:$0xff]
    %v3724 = vld [vmem:[#allocation5 + $0x408] sm:$0xff]
    %v3725 = vld [vmem:[#allocation5 + $0x410] sm:$0xff]
    %v3726 = vld [vmem:[#allocation5 + $0x418] sm:$0xff]
    %v3727 = vld [vmem:[#allocation5 + $0x420] sm:$0xff]
    %v3728 = vld [vmem:[#allocation5 + $0x428] sm:$0xff]
    %v3729 = vld [vmem:[#allocation5 + $0x430] sm:$0xff]
    %v3730 = vld [vmem:[#allocation5 + $0x438] sm:$0xff]
    %v3731 = vld [vmem:[#allocation5 + $0x440] sm:$0xff]
    %v3732 = vld [vmem:[#allocation5 + $0x448] sm:$0xff]
    %v3733 = vld [vmem:[#allocation5 + $0x450] sm:$0xff]
    %v3734 = vld [vmem:[#allocation5 + $0x458] sm:$0xff]
    %v3735 = vld [vmem:[#allocation5 + $0x460] sm:$0xff]
    %v3736 = vld [vmem:[#allocation5 + $0x468] sm:$0xff]
    %v3737 = vld [vmem:[#allocation5 + $0x470] sm:$0xff]
    %v3738 = vld [vmem:[#allocation5 + $0x478] sm:$0xff]
    %v3739 = vld [vmem:[#allocation5 + $0x480] sm:$0xff]
    %v3740 = vld [vmem:[#allocation5 + $0x488] sm:$0xff]
    %v3741 = vld [vmem:[#allocation5 + $0x490] sm:$0xff]
    %v3742 = vld [vmem:[#allocation5 + $0x498] sm:$0xff]
    %v3743 = vld [vmem:[#allocation5 + $0x4a0] sm:$0xff]
    %v3744 = vld [vmem:[#allocation5 + $0x4a8] sm:$0xff]
    %v3745 = vld [vmem:[#allocation5 + $0x4b0] sm:$0xff]
    %v3746 = vld [vmem:[#allocation5 + $0x4b8] sm:$0xff]
    %v3747 = vld [vmem:[#allocation5 + $0x4c0] sm:$0xff]
    %v3748 = vld [vmem:[#allocation5 + $0x4c8] sm:$0xff]
    %v3749 = vld [vmem:[#allocation5 + $0x4d0] sm:$0xff]
    %v3750 = vld [vmem:[#allocation5 + $0x4d8] sm:$0xff]
    %v3751 = vld [vmem:[#allocation5 + $0x4e0] sm:$0xff]
    %v3752 = vld [vmem:[#allocation5 + $0x4e8] sm:$0xff]
    %v3753 = vld [vmem:[#allocation5 + $0x4f0] sm:$0xff]
    %v3754 = vld [vmem:[#allocation5 + $0x4f8] sm:$0xff]
    %v3755 = vld [vmem:[#allocation5 + $0x500] sm:$0xff]
    %v3756 = vld [vmem:[#allocation5 + $0x508] sm:$0xff]
    %v3757 = vld [vmem:[#allocation5 + $0x510] sm:$0xff]
    %v3758 = vld [vmem:[#allocation5 + $0x518] sm:$0xff]
    %v3759 = vld [vmem:[#allocation5 + $0x520] sm:$0xff]
    %v3760 = vld [vmem:[#allocation5 + $0x528] sm:$0xff]
    %v3761 = vld [vmem:[#allocation5 + $0x530] sm:$0xff]
    %v3762 = vld [vmem:[#allocation5 + $0x538] sm:$0xff]
    %v3763 = vld [vmem:[#allocation5 + $0x540] sm:$0xff]
    %v3764 = vld [vmem:[#allocation5 + $0x548] sm:$0xff]
    %v3765 = vld [vmem:[#allocation5 + $0x550] sm:$0xff]
    %v3766 = vld [vmem:[#allocation5 + $0x558] sm:$0xff]
    %v3767 = vld [vmem:[#allocation5 + $0x560] sm:$0xff]
    %v3768 = vld [vmem:[#allocation5 + $0x568] sm:$0xff]
    %v3769 = vld [vmem:[#allocation5 + $0x570] sm:$0xff]
    %v3770 = vld [vmem:[#allocation5 + $0x578] sm:$0xff]
    %v3771 = vld [vmem:[#allocation5 + $0x580] sm:$0xff]
    %v3772 = vld [vmem:[#allocation5 + $0x588] sm:$0xff]
    %v3773 = vld [vmem:[#allocation5 + $0x590] sm:$0xff]
    %v3774 = vld [vmem:[#allocation5 + $0x598] sm:$0xff]
    %v3775 = vld [vmem:[#allocation5 + $0x5a0] sm:$0xff]
    %v3776 = vld [vmem:[#allocation5 + $0x5a8] sm:$0xff]
    %v3777 = vld [vmem:[#allocation5 + $0x5b0] sm:$0xff]
    %v3778 = vld [vmem:[#allocation5 + $0x5b8] sm:$0xff]
    %v3779 = vld [vmem:[#allocation5 + $0x5c0] sm:$0xff]
    %v3780 = vld [vmem:[#allocation5 + $0x5c8] sm:$0xff]
    %v3781 = vld [vmem:[#allocation5 + $0x5d0] sm:$0xff]
    %v3782 = vld [vmem:[#allocation5 + $0x5d8] sm:$0xff]
    %v3783 = vld [vmem:[#allocation5 + $0x5e0] sm:$0xff]
    %v3784 = vld [vmem:[#allocation5 + $0x5e8] sm:$0xff]
    %v3785 = vld [vmem:[#allocation5 + $0x5f0] sm:$0xff]
    %v3786 = vld [vmem:[#allocation5 + $0x5f8] sm:$0xff]
    %v3787 = vld [vmem:[#allocation5 + $0x600] sm:$0xff]
    %v3788 = vld [vmem:[#allocation5 + $0x608] sm:$0xff]
    %v3789 = vld [vmem:[#allocation5 + $0x610] sm:$0xff]
    %v3790 = vld [vmem:[#allocation5 + $0x618] sm:$0xff]
    %v3791 = vld [vmem:[#allocation5 + $0x620] sm:$0xff]
    %v3792 = vld [vmem:[#allocation5 + $0x628] sm:$0xff]
    %v3793 = vld [vmem:[#allocation5 + $0x630] sm:$0xff]
    %v3794 = vld [vmem:[#allocation5 + $0x638] sm:$0xff]
    %v3795 = vld [vmem:[#allocation5 + $0x640] sm:$0xff]
    %v3796 = vld [vmem:[#allocation5 + $0x648] sm:$0xff]
    %v3797 = vld [vmem:[#allocation5 + $0x650] sm:$0xff]
    %v3798 = vld [vmem:[#allocation5 + $0x658] sm:$0xff]
    %v3799 = vld [vmem:[#allocation5 + $0x660] sm:$0xff]
    %v3800 = vld [vmem:[#allocation5 + $0x668] sm:$0xff]
    %v3801 = vld [vmem:[#allocation5 + $0x670] sm:$0xff]
    %v3802 = vld [vmem:[#allocation5 + $0x678] sm:$0xff]
    %v3803 = vld [vmem:[#allocation5 + $0x680] sm:$0xff]
    %v3804 = vld [vmem:[#allocation5 + $0x688] sm:$0xff]
    %v3805 = vld [vmem:[#allocation5 + $0x690] sm:$0xff]
    %v3806 = vld [vmem:[#allocation5 + $0x698] sm:$0xff]
    %v3807 = vld [vmem:[#allocation5 + $0x6a0] sm:$0xff]
    %v3808 = vld [vmem:[#allocation5 + $0x6a8] sm:$0xff]
    %v3809 = vld [vmem:[#allocation5 + $0x6b0] sm:$0xff]
    %v3810 = vld [vmem:[#allocation5 + $0x6b8] sm:$0xff]
    %v3811 = vld [vmem:[#allocation5 + $0x6c0] sm:$0xff]
    %v3812 = vld [vmem:[#allocation5 + $0x6c8] sm:$0xff]
    %v3813 = vld [vmem:[#allocation5 + $0x6d0] sm:$0xff]
    %v3814 = vld [vmem:[#allocation5 + $0x6d8] sm:$0xff]
    %v3815 = vld [vmem:[#allocation5 + $0x6e0] sm:$0xff]
    %v3816 = vld [vmem:[#allocation5 + $0x6e8] sm:$0xff]
    %v3817 = vld [vmem:[#allocation5 + $0x6f0] sm:$0xff]
    %v3818 = vld [vmem:[#allocation5 + $0x6f8] sm:$0xff]
    %v3819 = vld [vmem:[#allocation5 + $0x700] sm:$0xff]
    %v3820 = vld [vmem:[#allocation5 + $0x708] sm:$0xff]
    %v3821 = vld [vmem:[#allocation5 + $0x710] sm:$0xff]
    %v3822 = vld [vmem:[#allocation5 + $0x718] sm:$0xff]
    %v3823 = vld [vmem:[#allocation5 + $0x720] sm:$0xff]
    %v3824 = vld [vmem:[#allocation5 + $0x728] sm:$0xff]
    %v3825 = vld [vmem:[#allocation5 + $0x730] sm:$0xff]
    %v3826 = vld [vmem:[#allocation5 + $0x738] sm:$0xff]
    %v3827 = vld [vmem:[#allocation5 + $0x740] sm:$0xff]
    %v3828 = vld [vmem:[#allocation5 + $0x748] sm:$0xff]
    %v3829 = vld [vmem:[#allocation5 + $0x750] sm:$0xff]
    %v3830 = vld [vmem:[#allocation5 + $0x758] sm:$0xff]
    %v3831 = vld [vmem:[#allocation5 + $0x760] sm:$0xff]
    %v3832 = vld [vmem:[#allocation5 + $0x768] sm:$0xff]
    %v3833 = vld [vmem:[#allocation5 + $0x770] sm:$0xff]
    %v3834 = vld [vmem:[#allocation5 + $0x778] sm:$0xff]
    %v3835 = vld [vmem:[#allocation5 + $0x780] sm:$0xff]
    %v3836 = vld [vmem:[#allocation5 + $0x788] sm:$0xff]
    %v3837 = vld [vmem:[#allocation5 + $0x790] sm:$0xff]
    %v3838 = vld [vmem:[#allocation5 + $0x798] sm:$0xff]
    %v3839 = vld [vmem:[#allocation5 + $0x7a0] sm:$0xff]
    %v3840 = vld [vmem:[#allocation5 + $0x7a8] sm:$0xff]
    %v3841 = vld [vmem:[#allocation5 + $0x7b0] sm:$0xff]
    %v3842 = vld [vmem:[#allocation5 + $0x7b8] sm:$0xff]
    %v3843 = vld [vmem:[#allocation5 + $0x7c0] sm:$0xff]
    %v3844 = vld [vmem:[#allocation5 + $0x7c8] sm:$0xff]
    %v3845 = vld [vmem:[#allocation5 + $0x7d0] sm:$0xff]
    %v3846 = vld [vmem:[#allocation5 + $0x7d8] sm:$0xff]
    %v3847 = vld [vmem:[#allocation5 + $0x7e0] sm:$0xff]
    %v3848 = vld [vmem:[#allocation5 + $0x7e8] sm:$0xff]
    %v3849 = vld [vmem:[#allocation5 + $0x7f0] sm:$0xff]
    %v3850 = vld [vmem:[#allocation5 + $0x7f8] sm:$0xff]
    %v3851 = vcombine.high %v3579, %v3579
    %3853 = vmatprep.subr.mxu0 %v3596
    %3854 = vmatpush1.msra.mxu0 %v3595
    %3855 = vmatprep.subr.mxu0 %v3604
    %3856 = vmatpush1.msra.mxu0 %v3603
    %3857 = vmatprep.subr.mxu0 %v3612
    %3858 = vmatpush1.msra.mxu0 %v3611
    %3859 = vmatprep.subr.mxu0 %v3620
    %3860 = vmatpush1.msra.mxu0 %v3619
    %3861 = vmatprep.subr.mxu0 %v3628
    %3862 = vmatpush1.msra.mxu0 %v3627
    %3863 = vmatprep.subr.mxu0 %v3636
    %3864 = vmatpush1.msra.mxu0 %v3635
    %3865 = vmatprep.subr.mxu0 %v3644
    %3866 = vmatpush1.msra.mxu0 %v3643
    %3867 = vmatprep.subr.mxu0 %v3652
    %3868 = vmatpush1.msra.mxu0 %v3651
    %3869 = vmatprep.subr.mxu0 %v3660
    %3870 = vmatpush1.msra.mxu0 %v3659
    %3871 = vmatprep.subr.mxu0 %v3668
    %3872 = vmatpush1.msra.mxu0 %v3667
    %3873 = vmatprep.subr.mxu0 %v3676
    %3874 = vmatpush1.msra.mxu0 %v3675
    %3875 = vmatprep.subr.mxu0 %v3684
    %3876 = vmatpush1.msra.mxu0 %v3683
    %3877 = vmatprep.subr.mxu0 %v3692
    %3878 = vmatpush1.msra.mxu0 %v3691
    %3879 = vmatprep.subr.mxu0 %v3700
    %3880 = vmatpush1.msra.mxu0 %v3699
    %3881 = vmatprep.subr.mxu0 %v3708
    %3882 = vmatpush1.msra.mxu0 %v3707
    %3883 = vmatprep.subr.mxu0 %v3716
    %3884 = vmatpush1.msra.mxu0 %v3715
    %3885 = vmatprep.subr.mxu0 %v3724
    %3886 = vmatpush1.msra.mxu0 %v3723
    %3887 = vmatprep.subr.mxu0 %v3732
    %3888 = vmatpush1.msra.mxu0 %v3731
    %3889 = vmatprep.subr.mxu0 %v3740
    %3890 = vmatpush1.msra.mxu0 %v3739
    %3891 = vmatprep.subr.mxu0 %v3748
    %3892 = vmatpush1.msra.mxu0 %v3747
    %3893 = vmatprep.subr.mxu0 %v3756
    %3894 = vmatpush1.msra.mxu0 %v3755
    %3895 = vmatprep.subr.mxu0 %v3764
    %3896 = vmatpush1.msra.mxu0 %v3763
    %3897 = vmatprep.subr.mxu0 %v3772
    %3898 = vmatpush1.msra.mxu0 %v3771
    %3899 = vmatprep.subr.mxu0 %v3780
    %3900 = vmatpush1.msra.mxu0 %v3779
    %3901 = vmatprep.subr.mxu0 %v3788
    %3902 = vmatpush1.msra.mxu0 %v3787
    %3903 = vmatprep.subr.mxu0 %v3796
    %3904 = vmatpush1.msra.mxu0 %v3795
    %3905 = vmatprep.subr.mxu0 %v3804
    %3906 = vmatpush1.msra.mxu0 %v3803
    %3907 = vmatprep.subr.mxu0 %v3812
    %3908 = vmatpush1.msra.mxu0 %v3811
    %3909 = vmatprep.subr.mxu0 %v3820
    %3910 = vmatpush1.msra.mxu0 %v3819
    %3911 = vmatprep.subr.mxu0 %v3828
    %3912 = vmatpush1.msra.mxu0 %v3827
    %3913 = vmatprep.subr.mxu0 %v3836
    %3914 = vmatpush1.msra.mxu0 %v3835
    %3915 = vmatprep.subr.mxu0 %v3844
    %3916 = vmatpush1.msra.mxu0 %v3843
    %3917 = vmatprep.mubr.f32.mxu0 %v3851
    %3918 = vmatmul.mubr.f32.gmra.mrb[0].mxu0 %v3579
    %v3919 = vpop.f32.mrb[0].mxu0
    %v3920 = vadd.f32 0.0, %v3919
    %v3921 = vpop.f32.mrb[0].mxu0
    %v3922 = vadd.f32 0.0, %v3921
    %3923 = vdwg.mxu0
    %3924 = vmatprep.subr.mxu0 %v3598
    %3925 = vmatpush1.msra.mxu0 %v3597
    %3926 = vmatprep.subr.mxu0 %v3606
    %3927 = vmatpush1.msra.mxu0 %v3605
    %3928 = vmatprep.subr.mxu0 %v3614
    %3929 = vmatpush1.msra.mxu0 %v3613
    %3930 = vmatprep.subr.mxu0 %v3622
    %3931 = vmatpush1.msra.mxu0 %v3621
    %3932 = vmatprep.subr.mxu0 %v3630
    %3933 = vmatpush1.msra.mxu0 %v3629
    %3934 = vmatprep.subr.mxu0 %v3638
    %3935 = vmatpush1.msra.mxu0 %v3637
    %3936 = vmatprep.subr.mxu0 %v3646
    %3937 = vmatpush1.msra.mxu0 %v3645
    %3938 = vmatprep.subr.mxu0 %v3654
    %3939 = vmatpush1.msra.mxu0 %v3653
    %3940 = vmatprep.subr.mxu0 %v3662
    %3941 = vmatpush1.msra.mxu0 %v3661
    %3942 = vmatprep.subr.mxu0 %v3670
    %3943 = vmatpush1.msra.mxu0 %v3669
    %3944 = vmatprep.subr.mxu0 %v3678
    %3945 = vmatpush1.msra.mxu0 %v3677
    %3946 = vmatprep.subr.mxu0 %v3686
    %3947 = vmatpush1.msra.mxu0 %v3685
    %3948 = vmatprep.subr.mxu0 %v3694
    %3949 = vmatpush1.msra.mxu0 %v3693
    %3950 = vmatprep.subr.mxu0 %v3702
    %3951 = vmatpush1.msra.mxu0 %v3701
    %3952 = vmatprep.subr.mxu0 %v3710
    %3953 = vmatpush1.msra.mxu0 %v3709
    %3954 = vmatprep.subr.mxu0 %v3718
    %3955 = vmatpush1.msra.mxu0 %v3717
    %3956 = vmatprep.subr.mxu0 %v3726
    %3957 = vmatpush1.msra.mxu0 %v3725
    %3958 = vmatprep.subr.mxu0 %v3734
    %3959 = vmatpush1.msra.mxu0 %v3733
    %3960 = vmatprep.subr.mxu0 %v3742
    %3961 = vmatpush1.msra.mxu0 %v3741
    %3962 = vmatprep.subr.mxu0 %v3750
    %3963 = vmatpush1.msra.mxu0 %v3749
    %3964 = vmatprep.subr.mxu0 %v3758
    %3965 = vmatpush1.msra.mxu0 %v3757
    %3966 = vmatprep.subr.mxu0 %v3766
    %3967 = vmatpush1.msra.mxu0 %v3765
    %3968 = vmatprep.subr.mxu0 %v3774
    %3969 = vmatpush1.msra.mxu0 %v3773
    %3970 = vmatprep.subr.mxu0 %v3782
    %3971 = vmatpush1.msra.mxu0 %v3781
    %3972 = vmatprep.subr.mxu0 %v3790
    %3973 = vmatpush1.msra.mxu0 %v3789
    %3974 = vmatprep.subr.mxu0 %v3798
    %3975 = vmatpush1.msra.mxu0 %v3797
    %3976 = vmatprep.subr.mxu0 %v3806
    %3977 = vmatpush1.msra.mxu0 %v3805
    %3978 = vmatprep.subr.mxu0 %v3814
    %3979 = vmatpush1.msra.mxu0 %v3813
    %3980 = vmatprep.subr.mxu0 %v3822
    %3981 = vmatpush1.msra.mxu0 %v3821
    %3982 = vmatprep.subr.mxu0 %v3830
    %3983 = vmatpush1.msra.mxu0 %v3829
    %3984 = vmatprep.subr.mxu0 %v3838
    %3985 = vmatpush1.msra.mxu0 %v3837
    %3986 = vmatprep.subr.mxu0 %v3846
    %3987 = vmatpush1.msra.mxu0 %v3845
    %3988 = vmatprep.mubr.f32.mxu0 %v3851
    %3989 = vmatmul.mubr.f32.gmra.mrb[0].mxu0 %v3579
    %v3990 = vpop.f32.mrb[0].mxu0
    %v3991 = vadd.f32 0.0, %v3990
    %v3992 = vpop.f32.mrb[0].mxu0
    %v3993 = vadd.f32 0.0, %v3992
    %3994 = vdwg.mxu0
    %3995 = vmatprep.subr.mxu0 %v3600
    %3996 = vmatpush1.msra.mxu0 %v3599
    %3997 = vmatprep.subr.mxu0 %v3608
    %3998 = vmatpush1.msra.mxu0 %v3607
    %3999 = vmatprep.subr.mxu0 %v3616
    %4000 = vmatpush1.msra.mxu0 %v3615
    %4001 = vmatprep.subr.mxu0 %v3624
    %4002 = vmatpush1.msra.mxu0 %v3623
    %4003 = vmatprep.subr.mxu0 %v3632
    %4004 = vmatpush1.msra.mxu0 %v3631
    %4005 = vmatprep.subr.mxu0 %v3640
    %4006 = vmatpush1.msra.mxu0 %v3639
    %4007 = vmatprep.subr.mxu0 %v3648
    %4008 = vmatpush1.msra.mxu0 %v3647
    %4009 = vmatprep.subr.mxu0 %v3656
    %4010 = vmatpush1.msra.mxu0 %v3655
    %4011 = vmatprep.subr.mxu0 %v3664
    %4012 = vmatpush1.msra.mxu0 %v3663
    %4013 = vmatprep.subr.mxu0 %v3672
    %4014 = vmatpush1.msra.mxu0 %v3671
    %4015 = vmatprep.subr.mxu0 %v3680
    %4016 = vmatpush1.msra.mxu0 %v3679
    %4017 = vmatprep.subr.mxu0 %v3688
    %4018 = vmatpush1.msra.mxu0 %v3687
    %4019 = vmatprep.subr.mxu0 %v3696
    %4020 = vmatpush1.msra.mxu0 %v3695
    %4021 = vmatprep.subr.mxu0 %v3704
    %4022 = vmatpush1.msra.mxu0 %v3703
    %4023 = vmatprep.subr.mxu0 %v3712
    %4024 = vmatpush1.msra.mxu0 %v3711
    %4025 = vmatprep.subr.mxu0 %v3720
    %4026 = vmatpush1.msra.mxu0 %v3719
    %4027 = vmatprep.subr.mxu0 %v3728
    %4028 = vmatpush1.msra.mxu0 %v3727
    %4029 = vmatprep.subr.mxu0 %v3736
    %4030 = vmatpush1.msra.mxu0 %v3735
    %4031 = vmatprep.subr.mxu0 %v3744
    %4032 = vmatpush1.msra.mxu0 %v3743
    %4033 = vmatprep.subr.mxu0 %v3752
    %4034 = vmatpush1.msra.mxu0 %v3751
    %4035 = vmatprep.subr.mxu0 %v3760
    %4036 = vmatpush1.msra.mxu0 %v3759
    %4037 = vmatprep.subr.mxu0 %v3768
    %4038 = vmatpush1.msra.mxu0 %v3767
    %4039 = vmatprep.subr.mxu0 %v3776
    %4040 = vmatpush1.msra.mxu0 %v3775
    %4041 = vmatprep.subr.mxu0 %v3784
    %4042 = vmatpush1.msra.mxu0 %v3783
    %4043 = vmatprep.subr.mxu0 %v3792
    %4044 = vmatpush1.msra.mxu0 %v3791
    %4045 = vmatprep.subr.mxu0 %v3800
    %4046 = vmatpush1.msra.mxu0 %v3799
    %4047 = vmatprep.subr.mxu0 %v3808
    %4048 = vmatpush1.msra.mxu0 %v3807
    %4049 = vmatprep.subr.mxu0 %v3816
    %4050 = vmatpush1.msra.mxu0 %v3815
    %4051 = vmatprep.subr.mxu0 %v3824
    %4052 = vmatpush1.msra.mxu0 %v3823
    %4053 = vmatprep.subr.mxu0 %v3832
    %4054 = vmatpush1.msra.mxu0 %v3831
    %4055 = vmatprep.subr.mxu0 %v3840
    %4056 = vmatpush1.msra.mxu0 %v3839
    %4057 = vmatprep.subr.mxu0 %v3848
    %4058 = vmatpush1.msra.mxu0 %v3847
    %4059 = vmatprep.mubr.f32.mxu0 %v3851
    %4060 = vmatmul.mubr.f32.gmra.mrb[0].mxu0 %v3579
    %v4061 = vpop.f32.mrb[0].mxu0
    %v4062 = vadd.f32 0.0, %v4061
    %v4063 = vpop.f32.mrb[0].mxu0
    %v4064 = vadd.f32 0.0, %v4063
    %4065 = vdwg.mxu0
    %4066 = vmatprep.subr.mxu0 %v3602
    %4067 = vmatpush1.msra.mxu0 %v3601
    %4068 = vmatprep.subr.mxu0 %v3610
    %4069 = vmatpush1.msra.mxu0 %v3609
    %4070 = vmatprep.subr.mxu0 %v3618
    %4071 = vmatpush1.msra.mxu0 %v3617
    %4072 = vmatprep.subr.mxu0 %v3626
    %4073 = vmatpush1.msra.mxu0 %v3625
    %4074 = vmatprep.subr.mxu0 %v3634
    %4075 = vmatpush1.msra.mxu0 %v3633
    %4076 = vmatprep.subr.mxu0 %v3642
    %4077 = vmatpush1.msra.mxu0 %v3641
    %4078 = vmatprep.subr.mxu0 %v3650
    %4079 = vmatpush1.msra.mxu0 %v3649
    %4080 = vmatprep.subr.mxu0 %v3658
    %4081 = vmatpush1.msra.mxu0 %v3657
    %4082 = vmatprep.subr.mxu0 %v3666
    %4083 = vmatpush1.msra.mxu0 %v3665
    %4084 = vmatprep.subr.mxu0 %v3674
    %4085 = vmatpush1.msra.mxu0 %v3673
    %4086 = vmatprep.subr.mxu0 %v3682
    %4087 = vmatpush1.msra.mxu0 %v3681
    %4088 = vmatprep.subr.mxu0 %v3690
    %4089 = vmatpush1.msra.mxu0 %v3689
    %4090 = vmatprep.subr.mxu0 %v3698
    %4091 = vmatpush1.msra.mxu0 %v3697
    %4092 = vmatprep.subr.mxu0 %v3706
    %4093 = vmatpush1.msra.mxu0 %v3705
    %4094 = vmatprep.subr.mxu0 %v3714
    %4095 = vmatpush1.msra.mxu0 %v3713
    %4096 = vmatprep.subr.mxu0 %v3722
    %4097 = vmatpush1.msra.mxu0 %v3721
    %4098 = vmatprep.subr.mxu0 %v3730
    %4099 = vmatpush1.msra.mxu0 %v3729
    %4100 = vmatprep.subr.mxu0 %v3738
    %4101 = vmatpush1.msra.mxu0 %v3737
    %4102 = vmatprep.subr.mxu0 %v3746
    %4103 = vmatpush1.msra.mxu0 %v3745
    %4104 = vmatprep.subr.mxu0 %v3754
    %4105 = vmatpush1.msra.mxu0 %v3753
    %4106 = vmatprep.subr.mxu0 %v3762
    %4107 = vmatpush1.msra.mxu0 %v3761
    %4108 = vmatprep.subr.mxu0 %v3770
    %4109 = vmatpush1.msra.mxu0 %v3769
    %4110 = vmatprep.subr.mxu0 %v3778
    %4111 = vmatpush1.msra.mxu0 %v3777
    %4112 = vmatprep.subr.mxu0 %v3786
    %4113 = vmatpush1.msra.mxu0 %v3785
    %4114 = vmatprep.subr.mxu0 %v3794
    %4115 = vmatpush1.msra.mxu0 %v3793
    %4116 = vmatprep.subr.mxu0 %v3802
    %4117 = vmatpush1.msra.mxu0 %v3801
    %4118 = vmatprep.subr.mxu0 %v3810
    %4119 = vmatpush1.msra.mxu0 %v3809
    %4120 = vmatprep.subr.mxu0 %v3818
    %4121 = vmatpush1.msra.mxu0 %v3817
    %4122 = vmatprep.subr.mxu0 %v3826
    %4123 = vmatpush1.msra.mxu0 %v3825
    %4124 = vmatprep.subr.mxu0 %v3834
    %4125 = vmatpush1.msra.mxu0 %v3833
    %4126 = vmatprep.subr.mxu0 %v3842
    %4127 = vmatpush1.msra.mxu0 %v3841
    %4128 = vmatprep.subr.mxu0 %v3850
    %4129 = vmatpush1.msra.mxu0 %v3849
    %4130 = vmatprep.mubr.f32.mxu0 %v3851
    %4131 = vmatmul.mubr.f32.gmra.mrb[0].mxu0 %v3579
    %v4132 = vpop.f32.mrb[0].mxu0
    %v4133 = vadd.f32 0.0, %v4132
    %v4134 = vpop.f32.mrb[0].mxu0
    %v4135 = vadd.f32 0.0, %v4134
    %4136 = vdwg.mxu0
    %v4137 = vld [vmem:[#allocation7] sm:$0xff]
    %v4138 = vld [vmem:[#allocation7 + $0x8] sm:$0xff]
    %v4139 = vld [vmem:[#allocation7 + $0x10] sm:$0xff]
    %v4140 = vld [vmem:[#allocation7 + $0x18] sm:$0xff]
    %v4141 = vld [vmem:[#allocation7 + $0x20] sm:$0xff]
    %v4142 = vld [vmem:[#allocation7 + $0x28] sm:$0xff]
    %v4143 = vld [vmem:[#allocation7 + $0x30] sm:$0xff]
    %v4144 = vld [vmem:[#allocation7 + $0x38] sm:$0xff]
    %v4145 = vld [vmem:[#allocation7 + $0x40] sm:$0xff]
    %v4146 = vld [vmem:[#allocation7 + $0x48] sm:$0xff]
    %v4147 = vld [vmem:[#allocation7 + $0x50] sm:$0xff]
    %v4148 = vld [vmem:[#allocation7 + $0x58] sm:$0xff]
    %v4149 = vld [vmem:[#allocation7 + $0x60] sm:$0xff]
    %v4150 = vld [vmem:[#allocation7 + $0x68] sm:$0xff]
    %v4151 = vld [vmem:[#allocation7 + $0x70] sm:$0xff]
    %v4152 = vld [vmem:[#allocation7 + $0x78] sm:$0xff]
    %v4153 = vld [vmem:[#allocation7 + $0x80] sm:$0xff]
    %v4154 = vld [vmem:[#allocation7 + $0x88] sm:$0xff]
    %v4155 = vld [vmem:[#allocation7 + $0x90] sm:$0xff]
    %v4156 = vld [vmem:[#allocation7 + $0x98] sm:$0xff]
    %v4157 = vld [vmem:[#allocation7 + $0xa0] sm:$0xff]
    %v4158 = vld [vmem:[#allocation7 + $0xa8] sm:$0xff]
    %v4159 = vld [vmem:[#allocation7 + $0xb0] sm:$0xff]
    %v4160 = vld [vmem:[#allocation7 + $0xb8] sm:$0xff]
    %v4161 = vld [vmem:[#allocation7 + $0xc0] sm:$0xff]
    %v4162 = vld [vmem:[#allocation7 + $0xc8] sm:$0xff]
    %v4163 = vld [vmem:[#allocation7 + $0xd0] sm:$0xff]
    %v4164 = vld [vmem:[#allocation7 + $0xd8] sm:$0xff]
    %v4165 = vld [vmem:[#allocation7 + $0xe0] sm:$0xff]
    %v4166 = vld [vmem:[#allocation7 + $0xe8] sm:$0xff]
    %v4167 = vld [vmem:[#allocation7 + $0xf0] sm:$0xff]
    %v4168 = vld [vmem:[#allocation7 + $0xf8] sm:$0xff]
    %v4169 = vld [vmem:[#allocation7 + $0x100] sm:$0xff]
    %v4170 = vld [vmem:[#allocation7 + $0x108] sm:$0xff]
    %v4171 = vld [vmem:[#allocation7 + $0x110] sm:$0xff]
    %v4172 = vld [vmem:[#allocation7 + $0x118] sm:$0xff]
    %v4173 = vld [vmem:[#allocation7 + $0x120] sm:$0xff]
    %v4174 = vld [vmem:[#allocation7 + $0x128] sm:$0xff]
    %v4175 = vld [vmem:[#allocation7 + $0x130] sm:$0xff]
    %v4176 = vld [vmem:[#allocation7 + $0x138] sm:$0xff]
    %v4177 = vld [vmem:[#allocation7 + $0x140] sm:$0xff]
    %v4178 = vld [vmem:[#allocation7 + $0x148] sm:$0xff]
    %v4179 = vld [vmem:[#allocation7 + $0x150] sm:$0xff]
    %v4180 = vld [vmem:[#allocation7 + $0x158] sm:$0xff]
    %v4181 = vld [vmem:[#allocation7 + $0x160] sm:$0xff]
    %v4182 = vld [vmem:[#allocation7 + $0x168] sm:$0xff]
    %v4183 = vld [vmem:[#allocation7 + $0x170] sm:$0xff]
    %v4184 = vld [vmem:[#allocation7 + $0x178] sm:$0xff]
    %v4185 = vld [vmem:[#allocation7 + $0x180] sm:$0xff]
    %v4186 = vld [vmem:[#allocation7 + $0x188] sm:$0xff]
    %v4187 = vld [vmem:[#allocation7 + $0x190] sm:$0xff]
    %v4188 = vld [vmem:[#allocation7 + $0x198] sm:$0xff]
    %v4189 = vld [vmem:[#allocation7 + $0x1a0] sm:$0xff]
    %v4190 = vld [vmem:[#allocation7 + $0x1a8] sm:$0xff]
    %v4191 = vld [vmem:[#allocation7 + $0x1b0] sm:$0xff]
    %v4192 = vld [vmem:[#allocation7 + $0x1b8] sm:$0xff]
    %v4193 = vld [vmem:[#allocation7 + $0x1c0] sm:$0xff]
    %v4194 = vld [vmem:[#allocation7 + $0x1c8] sm:$0xff]
    %v4195 = vld [vmem:[#allocation7 + $0x1d0] sm:$0xff]
    %v4196 = vld [vmem:[#allocation7 + $0x1d8] sm:$0xff]
    %v4197 = vld [vmem:[#allocation7 + $0x1e0] sm:$0xff]
    %v4198 = vld [vmem:[#allocation7 + $0x1e8] sm:$0xff]
    %v4199 = vld [vmem:[#allocation7 + $0x1f0] sm:$0xff]
    %v4200 = vld [vmem:[#allocation7 + $0x1f8] sm:$0xff]
    %v4201 = vld [vmem:[#allocation7 + $0x200] sm:$0xff]
    %v4202 = vld [vmem:[#allocation7 + $0x208] sm:$0xff]
    %v4203 = vld [vmem:[#allocation7 + $0x210] sm:$0xff]
    %v4204 = vld [vmem:[#allocation7 + $0x218] sm:$0xff]
    %v4205 = vld [vmem:[#allocation7 + $0x220] sm:$0xff]
    %v4206 = vld [vmem:[#allocation7 + $0x228] sm:$0xff]
    %v4207 = vld [vmem:[#allocation7 + $0x230] sm:$0xff]
    %v4208 = vld [vmem:[#allocation7 + $0x238] sm:$0xff]
    %v4209 = vld [vmem:[#allocation7 + $0x240] sm:$0xff]
    %v4210 = vld [vmem:[#allocation7 + $0x248] sm:$0xff]
    %v4211 = vld [vmem:[#allocation7 + $0x250] sm:$0xff]
    %v4212 = vld [vmem:[#allocation7 + $0x258] sm:$0xff]
    %v4213 = vld [vmem:[#allocation7 + $0x260] sm:$0xff]
    %v4214 = vld [vmem:[#allocation7 + $0x268] sm:$0xff]
    %v4215 = vld [vmem:[#allocation7 + $0x270] sm:$0xff]
    %v4216 = vld [vmem:[#allocation7 + $0x278] sm:$0xff]
    %v4217 = vld [vmem:[#allocation7 + $0x280] sm:$0xff]
    %v4218 = vld [vmem:[#allocation7 + $0x288] sm:$0xff]
    %v4219 = vld [vmem:[#allocation7 + $0x290] sm:$0xff]
    %v4220 = vld [vmem:[#allocation7 + $0x298] sm:$0xff]
    %v4221 = vld [vmem:[#allocation7 + $0x2a0] sm:$0xff]
    %v4222 = vld [vmem:[#allocation7 + $0x2a8] sm:$0xff]
    %v4223 = vld [vmem:[#allocation7 + $0x2b0] sm:$0xff]
    %v4224 = vld [vmem:[#allocation7 + $0x2b8] sm:$0xff]
    %v4225 = vld [vmem:[#allocation7 + $0x2c0] sm:$0xff]
    %v4226 = vld [vmem:[#allocation7 + $0x2c8] sm:$0xff]
    %v4227 = vld [vmem:[#allocation7 + $0x2d0] sm:$0xff]
    %v4228 = vld [vmem:[#allocation7 + $0x2d8] sm:$0xff]
    %v4229 = vld [vmem:[#allocation7 + $0x2e0] sm:$0xff]
    %v4230 = vld [vmem:[#allocation7 + $0x2e8] sm:$0xff]
    %v4231 = vld [vmem:[#allocation7 + $0x2f0] sm:$0xff]
    %v4232 = vld [vmem:[#allocation7 + $0x2f8] sm:$0xff]
    %v4233 = vld [vmem:[#allocation7 + $0x300] sm:$0xff]
    %v4234 = vld [vmem:[#allocation7 + $0x308] sm:$0xff]
    %v4235 = vld [vmem:[#allocation7 + $0x310] sm:$0xff]
    %v4236 = vld [vmem:[#allocation7 + $0x318] sm:$0xff]
    %v4237 = vld [vmem:[#allocation7 + $0x320] sm:$0xff]
    %v4238 = vld [vmem:[#allocation7 + $0x328] sm:$0xff]
    %v4239 = vld [vmem:[#allocation7 + $0x330] sm:$0xff]
    %v4240 = vld [vmem:[#allocation7 + $0x338] sm:$0xff]
    %v4241 = vld [vmem:[#allocation7 + $0x340] sm:$0xff]
    %v4242 = vld [vmem:[#allocation7 + $0x348] sm:$0xff]
    %v4243 = vld [vmem:[#allocation7 + $0x350] sm:$0xff]
    %v4244 = vld [vmem:[#allocation7 + $0x358] sm:$0xff]
    %v4245 = vld [vmem:[#allocation7 + $0x360] sm:$0xff]
    %v4246 = vld [vmem:[#allocation7 + $0x368] sm:$0xff]
    %v4247 = vld [vmem:[#allocation7 + $0x370] sm:$0xff]
    %v4248 = vld [vmem:[#allocation7 + $0x378] sm:$0xff]
    %v4249 = vld [vmem:[#allocation7 + $0x380] sm:$0xff]
    %v4250 = vld [vmem:[#allocation7 + $0x388] sm:$0xff]
    %v4251 = vld [vmem:[#allocation7 + $0x390] sm:$0xff]
    %v4252 = vld [vmem:[#allocation7 + $0x398] sm:$0xff]
    %v4253 = vld [vmem:[#allocation7 + $0x3a0] sm:$0xff]
    %v4254 = vld [vmem:[#allocation7 + $0x3a8] sm:$0xff]
    %v4255 = vld [vmem:[#allocation7 + $0x3b0] sm:$0xff]
    %v4256 = vld [vmem:[#allocation7 + $0x3b8] sm:$0xff]
    %v4257 = vld [vmem:[#allocation7 + $0x3c0] sm:$0xff]
    %v4258 = vld [vmem:[#allocation7 + $0x3c8] sm:$0xff]
    %v4259 = vld [vmem:[#allocation7 + $0x3d0] sm:$0xff]
    %v4260 = vld [vmem:[#allocation7 + $0x3d8] sm:$0xff]
    %v4261 = vld [vmem:[#allocation7 + $0x3e0] sm:$0xff]
    %v4262 = vld [vmem:[#allocation7 + $0x3e8] sm:$0xff]
    %v4263 = vld [vmem:[#allocation7 + $0x3f0] sm:$0xff]
    %v4264 = vld [vmem:[#allocation7 + $0x3f8] sm:$0xff]
    %v4265 = vld [vmem:[#allocation7 + $0x400] sm:$0xff]
    %v4266 = vld [vmem:[#allocation7 + $0x408] sm:$0xff]
    %v4267 = vld [vmem:[#allocation7 + $0x410] sm:$0xff]
    %v4268 = vld [vmem:[#allocation7 + $0x418] sm:$0xff]
    %v4269 = vld [vmem:[#allocation7 + $0x420] sm:$0xff]
    %v4270 = vld [vmem:[#allocation7 + $0x428] sm:$0xff]
    %v4271 = vld [vmem:[#allocation7 + $0x430] sm:$0xff]
    %v4272 = vld [vmem:[#allocation7 + $0x438] sm:$0xff]
    %v4273 = vld [vmem:[#allocation7 + $0x440] sm:$0xff]
    %v4274 = vld [vmem:[#allocation7 + $0x448] sm:$0xff]
    %v4275 = vld [vmem:[#allocation7 + $0x450] sm:$0xff]
    %v4276 = vld [vmem:[#allocation7 + $0x458] sm:$0xff]
    %v4277 = vld [vmem:[#allocation7 + $0x460] sm:$0xff]
    %v4278 = vld [vmem:[#allocation7 + $0x468] sm:$0xff]
    %v4279 = vld [vmem:[#allocation7 + $0x470] sm:$0xff]
    %v4280 = vld [vmem:[#allocation7 + $0x478] sm:$0xff]
    %v4281 = vld [vmem:[#allocation7 + $0x480] sm:$0xff]
    %v4282 = vld [vmem:[#allocation7 + $0x488] sm:$0xff]
    %v4283 = vld [vmem:[#allocation7 + $0x490] sm:$0xff]
    %v4284 = vld [vmem:[#allocation7 + $0x498] sm:$0xff]
    %v4285 = vld [vmem:[#allocation7 + $0x4a0] sm:$0xff]
    %v4286 = vld [vmem:[#allocation7 + $0x4a8] sm:$0xff]
    %v4287 = vld [vmem:[#allocation7 + $0x4b0] sm:$0xff]
    %v4288 = vld [vmem:[#allocation7 + $0x4b8] sm:$0xff]
    %v4289 = vld [vmem:[#allocation7 + $0x4c0] sm:$0xff]
    %v4290 = vld [vmem:[#allocation7 + $0x4c8] sm:$0xff]
    %v4291 = vld [vmem:[#allocation7 + $0x4d0] sm:$0xff]
    %v4292 = vld [vmem:[#allocation7 + $0x4d8] sm:$0xff]
    %v4293 = vld [vmem:[#allocation7 + $0x4e0] sm:$0xff]
    %v4294 = vld [vmem:[#allocation7 + $0x4e8] sm:$0xff]
    %v4295 = vld [vmem:[#allocation7 + $0x4f0] sm:$0xff]
    %v4296 = vld [vmem:[#allocation7 + $0x4f8] sm:$0xff]
    %v4297 = vld [vmem:[#allocation7 + $0x500] sm:$0xff]
    %v4298 = vld [vmem:[#allocation7 + $0x508] sm:$0xff]
    %v4299 = vld [vmem:[#allocation7 + $0x510] sm:$0xff]
    %v4300 = vld [vmem:[#allocation7 + $0x518] sm:$0xff]
    %v4301 = vld [vmem:[#allocation7 + $0x520] sm:$0xff]
    %v4302 = vld [vmem:[#allocation7 + $0x528] sm:$0xff]
    %v4303 = vld [vmem:[#allocation7 + $0x530] sm:$0xff]
    %v4304 = vld [vmem:[#allocation7 + $0x538] sm:$0xff]
    %v4305 = vld [vmem:[#allocation7 + $0x540] sm:$0xff]
    %v4306 = vld [vmem:[#allocation7 + $0x548] sm:$0xff]
    %v4307 = vld [vmem:[#allocation7 + $0x550] sm:$0xff]
    %v4308 = vld [vmem:[#allocation7 + $0x558] sm:$0xff]
    %v4309 = vld [vmem:[#allocation7 + $0x560] sm:$0xff]
    %v4310 = vld [vmem:[#allocation7 + $0x568] sm:$0xff]
    %v4311 = vld [vmem:[#allocation7 + $0x570] sm:$0xff]
    %v4312 = vld [vmem:[#allocation7 + $0x578] sm:$0xff]
    %v4313 = vld [vmem:[#allocation7 + $0x580] sm:$0xff]
    %v4314 = vld [vmem:[#allocation7 + $0x588] sm:$0xff]
    %v4315 = vld [vmem:[#allocation7 + $0x590] sm:$0xff]
    %v4316 = vld [vmem:[#allocation7 + $0x598] sm:$0xff]
    %v4317 = vld [vmem:[#allocation7 + $0x5a0] sm:$0xff]
    %v4318 = vld [vmem:[#allocation7 + $0x5a8] sm:$0xff]
    %v4319 = vld [vmem:[#allocation7 + $0x5b0] sm:$0xff]
    %v4320 = vld [vmem:[#allocation7 + $0x5b8] sm:$0xff]
    %v4321 = vld [vmem:[#allocation7 + $0x5c0] sm:$0xff]
    %v4322 = vld [vmem:[#allocation7 + $0x5c8] sm:$0xff]
    %v4323 = vld [vmem:[#allocation7 + $0x5d0] sm:$0xff]
    %v4324 = vld [vmem:[#allocation7 + $0x5d8] sm:$0xff]
    %v4325 = vld [vmem:[#allocation7 + $0x5e0] sm:$0xff]
    %v4326 = vld [vmem:[#allocation7 + $0x5e8] sm:$0xff]
    %v4327 = vld [vmem:[#allocation7 + $0x5f0] sm:$0xff]
    %v4328 = vld [vmem:[#allocation7 + $0x5f8] sm:$0xff]
    %v4329 = vld [vmem:[#allocation7 + $0x600] sm:$0xff]
    %v4330 = vld [vmem:[#allocation7 + $0x608] sm:$0xff]
    %v4331 = vld [vmem:[#allocation7 + $0x610] sm:$0xff]
    %v4332 = vld [vmem:[#allocation7 + $0x618] sm:$0xff]
    %v4333 = vld [vmem:[#allocation7 + $0x620] sm:$0xff]
    %v4334 = vld [vmem:[#allocation7 + $0x628] sm:$0xff]
    %v4335 = vld [vmem:[#allocation7 + $0x630] sm:$0xff]
    %v4336 = vld [vmem:[#allocation7 + $0x638] sm:$0xff]
    %v4337 = vld [vmem:[#allocation7 + $0x640] sm:$0xff]
    %v4338 = vld [vmem:[#allocation7 + $0x648] sm:$0xff]
    %v4339 = vld [vmem:[#allocation7 + $0x650] sm:$0xff]
    %v4340 = vld [vmem:[#allocation7 + $0x658] sm:$0xff]
    %v4341 = vld [vmem:[#allocation7 + $0x660] sm:$0xff]
    %v4342 = vld [vmem:[#allocation7 + $0x668] sm:$0xff]
    %v4343 = vld [vmem:[#allocation7 + $0x670] sm:$0xff]
    %v4344 = vld [vmem:[#allocation7 + $0x678] sm:$0xff]
    %v4345 = vld [vmem:[#allocation7 + $0x680] sm:$0xff]
    %v4346 = vld [vmem:[#allocation7 + $0x688] sm:$0xff]
    %v4347 = vld [vmem:[#allocation7 + $0x690] sm:$0xff]
    %v4348 = vld [vmem:[#allocation7 + $0x698] sm:$0xff]
    %v4349 = vld [vmem:[#allocation7 + $0x6a0] sm:$0xff]
    %v4350 = vld [vmem:[#allocation7 + $0x6a8] sm:$0xff]
    %v4351 = vld [vmem:[#allocation7 + $0x6b0] sm:$0xff]
    %v4352 = vld [vmem:[#allocation7 + $0x6b8] sm:$0xff]
    %v4353 = vld [vmem:[#allocation7 + $0x6c0] sm:$0xff]
    %v4354 = vld [vmem:[#allocation7 + $0x6c8] sm:$0xff]
    %v4355 = vld [vmem:[#allocation7 + $0x6d0] sm:$0xff]
    %v4356 = vld [vmem:[#allocation7 + $0x6d8] sm:$0xff]
    %v4357 = vld [vmem:[#allocation7 + $0x6e0] sm:$0xff]
    %v4358 = vld [vmem:[#allocation7 + $0x6e8] sm:$0xff]
    %v4359 = vld [vmem:[#allocation7 + $0x6f0] sm:$0xff]
    %v4360 = vld [vmem:[#allocation7 + $0x6f8] sm:$0xff]
    %v4361 = vld [vmem:[#allocation7 + $0x700] sm:$0xff]
    %v4362 = vld [vmem:[#allocation7 + $0x708] sm:$0xff]
    %v4363 = vld [vmem:[#allocation7 + $0x710] sm:$0xff]
    %v4364 = vld [vmem:[#allocation7 + $0x718] sm:$0xff]
    %v4365 = vld [vmem:[#allocation7 + $0x720] sm:$0xff]
    %v4366 = vld [vmem:[#allocation7 + $0x728] sm:$0xff]
    %v4367 = vld [vmem:[#allocation7 + $0x730] sm:$0xff]
    %v4368 = vld [vmem:[#allocation7 + $0x738] sm:$0xff]
    %v4369 = vld [vmem:[#allocation7 + $0x740] sm:$0xff]
    %v4370 = vld [vmem:[#allocation7 + $0x748] sm:$0xff]
    %v4371 = vld [vmem:[#allocation7 + $0x750] sm:$0xff]
    %v4372 = vld [vmem:[#allocation7 + $0x758] sm:$0xff]
    %v4373 = vld [vmem:[#allocation7 + $0x760] sm:$0xff]
    %v4374 = vld [vmem:[#allocation7 + $0x768] sm:$0xff]
    %v4375 = vld [vmem:[#allocation7 + $0x770] sm:$0xff]
    %v4376 = vld [vmem:[#allocation7 + $0x778] sm:$0xff]
    %v4377 = vld [vmem:[#allocation7 + $0x780] sm:$0xff]
    %v4378 = vld [vmem:[#allocation7 + $0x788] sm:$0xff]
    %v4379 = vld [vmem:[#allocation7 + $0x790] sm:$0xff]
    %v4380 = vld [vmem:[#allocation7 + $0x798] sm:$0xff]
    %v4381 = vld [vmem:[#allocation7 + $0x7a0] sm:$0xff]
    %v4382 = vld [vmem:[#allocation7 + $0x7a8] sm:$0xff]
    %v4383 = vld [vmem:[#allocation7 + $0x7b0] sm:$0xff]
    %v4384 = vld [vmem:[#allocation7 + $0x7b8] sm:$0xff]
    %v4385 = vld [vmem:[#allocation7 + $0x7c0] sm:$0xff]
    %v4386 = vld [vmem:[#allocation7 + $0x7c8] sm:$0xff]
    %v4387 = vld [vmem:[#allocation7 + $0x7d0] sm:$0xff]
    %v4388 = vld [vmem:[#allocation7 + $0x7d8] sm:$0xff]
    %v4389 = vld [vmem:[#allocation7 + $0x7e0] sm:$0xff]
    %v4390 = vld [vmem:[#allocation7 + $0x7e8] sm:$0xff]
    %v4391 = vld [vmem:[#allocation7 + $0x7f0] sm:$0xff]
    %v4392 = vld [vmem:[#allocation7 + $0x7f8] sm:$0xff]
    %v4393 = vrot.slane %v3579, 2
    %v4394 = vrot.slane %v3851, 2
    %4397 = vmatprep.subr.mxu0 %v4138
    %4398 = vmatpush1.msra.mxu0 %v4137
    %4399 = vmatprep.subr.mxu0 %v4146
    %4400 = vmatpush1.msra.mxu0 %v4145
    %4401 = vmatprep.subr.mxu0 %v4154
    %4402 = vmatpush1.msra.mxu0 %v4153
    %4403 = vmatprep.subr.mxu0 %v4162
    %4404 = vmatpush1.msra.mxu0 %v4161
    %4405 = vmatprep.subr.mxu0 %v4170
    %4406 = vmatpush1.msra.mxu0 %v4169
    %4407 = vmatprep.subr.mxu0 %v4178
    %4408 = vmatpush1.msra.mxu0 %v4177
    %4409 = vmatprep.subr.mxu0 %v4186
    %4410 = vmatpush1.msra.mxu0 %v4185
    %4411 = vmatprep.subr.mxu0 %v4194
    %4412 = vmatpush1.msra.mxu0 %v4193
    %4413 = vmatprep.subr.mxu0 %v4202
    %4414 = vmatpush1.msra.mxu0 %v4201
    %4415 = vmatprep.subr.mxu0 %v4210
    %4416 = vmatpush1.msra.mxu0 %v4209
    %4417 = vmatprep.subr.mxu0 %v4218
    %4418 = vmatpush1.msra.mxu0 %v4217
    %4419 = vmatprep.subr.mxu0 %v4226
    %4420 = vmatpush1.msra.mxu0 %v4225
    %4421 = vmatprep.subr.mxu0 %v4234
    %4422 = vmatpush1.msra.mxu0 %v4233
    %4423 = vmatprep.subr.mxu0 %v4242
    %4424 = vmatpush1.msra.mxu0 %v4241
    %4425 = vmatprep.subr.mxu0 %v4250
    %4426 = vmatpush1.msra.mxu0 %v4249
    %4427 = vmatprep.subr.mxu0 %v4258
    %4428 = vmatpush1.msra.mxu0 %v4257
    %4429 = vmatprep.subr.mxu0 %v4266
    %4430 = vmatpush1.msra.mxu0 %v4265
    %4431 = vmatprep.subr.mxu0 %v4274
    %4432 = vmatpush1.msra.mxu0 %v4273
    %4433 = vmatprep.subr.mxu0 %v4282
    %4434 = vmatpush1.msra.mxu0 %v4281
    %4435 = vmatprep.subr.mxu0 %v4290
    %4436 = vmatpush1.msra.mxu0 %v4289
    %4437 = vmatprep.subr.mxu0 %v4298
    %4438 = vmatpush1.msra.mxu0 %v4297
    %4439 = vmatprep.subr.mxu0 %v4306
    %4440 = vmatpush1.msra.mxu0 %v4305
    %4441 = vmatprep.subr.mxu0 %v4314
    %4442 = vmatpush1.msra.mxu0 %v4313
    %4443 = vmatprep.subr.mxu0 %v4322
    %4444 = vmatpush1.msra.mxu0 %v4321
    %4445 = vmatprep.subr.mxu0 %v4330
    %4446 = vmatpush1.msra.mxu0 %v4329
    %4447 = vmatprep.subr.mxu0 %v4338
    %4448 = vmatpush1.msra.mxu0 %v4337
    %4449 = vmatprep.subr.mxu0 %v4346
    %4450 = vmatpush1.msra.mxu0 %v4345
    %4451 = vmatprep.subr.mxu0 %v4354
    %4452 = vmatpush1.msra.mxu0 %v4353
    %4453 = vmatprep.subr.mxu0 %v4362
    %4454 = vmatpush1.msra.mxu0 %v4361
    %4455 = vmatprep.subr.mxu0 %v4370
    %4456 = vmatpush1.msra.mxu0 %v4369
    %4457 = vmatprep.subr.mxu0 %v4378
    %4458 = vmatpush1.msra.mxu0 %v4377
    %4459 = vmatprep.subr.mxu0 %v4386
    %4460 = vmatpush1.msra.mxu0 %v4385
    %4461 = vmatprep.mubr.f32.mxu0 %v4394
    %4462 = vmatmul.mubr.f32.gmra.mrb[0].mxu0 %v4393
    %v4463 = vpop.f32.mrb[0].mxu0
    %v4464 = vadd.f32 0.0, %v4463
    %v4465 = vpop.f32.mrb[0].mxu0
    %v4466 = vadd.f32 0.0, %v4465
    %4467 = vdwg.mxu0
    %4468 = vmatprep.subr.mxu0 %v4140
    %4469 = vmatpush1.msra.mxu0 %v4139
    %4470 = vmatprep.subr.mxu0 %v4148
    %4471 = vmatpush1.msra.mxu0 %v4147
    %4472 = vmatprep.subr.mxu0 %v4156
    %4473 = vmatpush1.msra.mxu0 %v4155
    %4474 = vmatprep.subr.mxu0 %v4164
    %4475 = vmatpush1.msra.mxu0 %v4163
    %4476 = vmatprep.subr.mxu0 %v4172
    %4477 = vmatpush1.msra.mxu0 %v4171
    %4478 = vmatprep.subr.mxu0 %v4180
    %4479 = vmatpush1.msra.mxu0 %v4179
    %4480 = vmatprep.subr.mxu0 %v4188
    %4481 = vmatpush1.msra.mxu0 %v4187
    %4482 = vmatprep.subr.mxu0 %v4196
    %4483 = vmatpush1.msra.mxu0 %v4195
    %4484 = vmatprep.subr.mxu0 %v4204
    %4485 = vmatpush1.msra.mxu0 %v4203
    %4486 = vmatprep.subr.mxu0 %v4212
    %4487 = vmatpush1.msra.mxu0 %v4211
    %4488 = vmatprep.subr.mxu0 %v4220
    %4489 = vmatpush1.msra.mxu0 %v4219
    %4490 = vmatprep.subr.mxu0 %v4228
    %4491 = vmatpush1.msra.mxu0 %v4227
    %4492 = vmatprep.subr.mxu0 %v4236
    %4493 = vmatpush1.msra.mxu0 %v4235
    %4494 = vmatprep.subr.mxu0 %v4244
    %4495 = vmatpush1.msra.mxu0 %v4243
    %4496 = vmatprep.subr.mxu0 %v4252
    %4497 = vmatpush1.msra.mxu0 %v4251
    %4498 = vmatprep.subr.mxu0 %v4260
    %4499 = vmatpush1.msra.mxu0 %v4259
    %4500 = vmatprep.subr.mxu0 %v4268
    %4501 = vmatpush1.msra.mxu0 %v4267
    %4502 = vmatprep.subr.mxu0 %v4276
    %4503 = vmatpush1.msra.mxu0 %v4275
    %4504 = vmatprep.subr.mxu0 %v4284
    %4505 = vmatpush1.msra.mxu0 %v4283
    %4506 = vmatprep.subr.mxu0 %v4292
    %4507 = vmatpush1.msra.mxu0 %v4291
    %4508 = vmatprep.subr.mxu0 %v4300
    %4509 = vmatpush1.msra.mxu0 %v4299
    %4510 = vmatprep.subr.mxu0 %v4308
    %4511 = vmatpush1.msra.mxu0 %v4307
    %4512 = vmatprep.subr.mxu0 %v4316
    %4513 = vmatpush1.msra.mxu0 %v4315
    %4514 = vmatprep.subr.mxu0 %v4324
    %4515 = vmatpush1.msra.mxu0 %v4323
    %4516 = vmatprep.subr.mxu0 %v4332
    %4517 = vmatpush1.msra.mxu0 %v4331
    %4518 = vmatprep.subr.mxu0 %v4340
    %4519 = vmatpush1.msra.mxu0 %v4339
    %4520 = vmatprep.subr.mxu0 %v4348
    %4521 = vmatpush1.msra.mxu0 %v4347
    %4522 = vmatprep.subr.mxu0 %v4356
    %4523 = vmatpush1.msra.mxu0 %v4355
    %4524 = vmatprep.subr.mxu0 %v4364
    %4525 = vmatpush1.msra.mxu0 %v4363
    %4526 = vmatprep.subr.mxu0 %v4372
    %4527 = vmatpush1.msra.mxu0 %v4371
    %4528 = vmatprep.subr.mxu0 %v4380
    %4529 = vmatpush1.msra.mxu0 %v4379
    %4530 = vmatprep.subr.mxu0 %v4388
    %4531 = vmatpush1.msra.mxu0 %v4387
    %4532 = vmatprep.mubr.f32.mxu0 %v4394
    %4533 = vmatmul.mubr.f32.gmra.mrb[0].mxu0 %v4393
    %v4534 = vpop.f32.mrb[0].mxu0
    %v4535 = vadd.f32 0.0, %v4534
    %v4536 = vpop.f32.mrb[0].mxu0
    %v4537 = vadd.f32 0.0, %v4536
    %4538 = vdwg.mxu0
    %4539 = vmatprep.subr.mxu0 %v4142
    %4540 = vmatpush1.msra.mxu0 %v4141
    %4541 = vmatprep.subr.mxu0 %v4150
    %4542 = vmatpush1.msra.mxu0 %v4149
    %4543 = vmatprep.subr.mxu0 %v4158
    %4544 = vmatpush1.msra.mxu0 %v4157
    %4545 = vmatprep.subr.mxu0 %v4166
    %4546 = vmatpush1.msra.mxu0 %v4165
    %4547 = vmatprep.subr.mxu0 %v4174
    %4548 = vmatpush1.msra.mxu0 %v4173
    %4549 = vmatprep.subr.mxu0 %v4182
    %4550 = vmatpush1.msra.mxu0 %v4181
    %4551 = vmatprep.subr.mxu0 %v4190
    %4552 = vmatpush1.msra.mxu0 %v4189
    %4553 = vmatprep.subr.mxu0 %v4198
    %4554 = vmatpush1.msra.mxu0 %v4197
    %4555 = vmatprep.subr.mxu0 %v4206
    %4556 = vmatpush1.msra.mxu0 %v4205
    %4557 = vmatprep.subr.mxu0 %v4214
    %4558 = vmatpush1.msra.mxu0 %v4213
    %4559 = vmatprep.subr.mxu0 %v4222
    %4560 = vmatpush1.msra.mxu0 %v4221
    %4561 = vmatprep.subr.mxu0 %v4230
    %4562 = vmatpush1.msra.mxu0 %v4229
    %4563 = vmatprep.subr.mxu0 %v4238
    %4564 = vmatpush1.msra.mxu0 %v4237
    %4565 = vmatprep.subr.mxu0 %v4246
    %4566 = vmatpush1.msra.mxu0 %v4245
    %4567 = vmatprep.subr.mxu0 %v4254
    %4568 = vmatpush1.msra.mxu0 %v4253
    %4569 = vmatprep.subr.mxu0 %v4262
    %4570 = vmatpush1.msra.mxu0 %v4261
    %4571 = vmatprep.subr.mxu0 %v4270
    %4572 = vmatpush1.msra.mxu0 %v4269
    %4573 = vmatprep.subr.mxu0 %v4278
    %4574 = vmatpush1.msra.mxu0 %v4277
    %4575 = vmatprep.subr.mxu0 %v4286
    %4576 = vmatpush1.msra.mxu0 %v4285
    %4577 = vmatprep.subr.mxu0 %v4294
    %4578 = vmatpush1.msra.mxu0 %v4293
    %4579 = vmatprep.subr.mxu0 %v4302
    %4580 = vmatpush1.msra.mxu0 %v4301
    %4581 = vmatprep.subr.mxu0 %v4310
    %4582 = vmatpush1.msra.mxu0 %v4309
    %4583 = vmatprep.subr.mxu0 %v4318
    %4584 = vmatpush1.msra.mxu0 %v4317
    %4585 = vmatprep.subr.mxu0 %v4326
    %4586 = vmatpush1.msra.mxu0 %v4325
    %4587 = vmatprep.subr.mxu0 %v4334
    %4588 = vmatpush1.msra.mxu0 %v4333
    %4589 = vmatprep.subr.mxu0 %v4342
    %4590 = vmatpush1.msra.mxu0 %v4341
    %4591 = vmatprep.subr.mxu0 %v4350
    %4592 = vmatpush1.msra.mxu0 %v4349
    %4593 = vmatprep.subr.mxu0 %v4358
    %4594 = vmatpush1.msra.mxu0 %v4357
    %4595 = vmatprep.subr.mxu0 %v4366
    %4596 = vmatpush1.msra.mxu0 %v4365
    %4597 = vmatprep.subr.mxu0 %v4374
    %4598 = vmatpush1.msra.mxu0 %v4373
    %4599 = vmatprep.subr.mxu0 %v4382
    %4600 = vmatpush1.msra.mxu0 %v4381
    %4601 = vmatprep.subr.mxu0 %v4390
    %4602 = vmatpush1.msra.mxu0 %v4389
    %4603 = vmatprep.mubr.f32.mxu0 %v4394
    %4604 = vmatmul.mubr.f32.gmra.mrb[0].mxu0 %v4393
    %v4605 = vpop.f32.mrb[0].mxu0
    %v4606 = vadd.f32 0.0, %v4605
    %v4607 = vpop.f32.mrb[0].mxu0
    %v4608 = vadd.f32 0.0, %v4607
    %4609 = vdwg.mxu0
    %4610 = vmatprep.subr.mxu0 %v4144
    %4611 = vmatpush1.msra.mxu0 %v4143
    %4612 = vmatprep.subr.mxu0 %v4152
    %4613 = vmatpush1.msra.mxu0 %v4151
    %4614 = vmatprep.subr.mxu0 %v4160
    %4615 = vmatpush1.msra.mxu0 %v4159
    %4616 = vmatprep.subr.mxu0 %v4168
    %4617 = vmatpush1.msra.mxu0 %v4167
    %4618 = vmatprep.subr.mxu0 %v4176
    %4619 = vmatpush1.msra.mxu0 %v4175
    %4620 = vmatprep.subr.mxu0 %v4184
    %4621 = vmatpush1.msra.mxu0 %v4183
    %4622 = vmatprep.subr.mxu0 %v4192
    %4623 = vmatpush1.msra.mxu0 %v4191
    %4624 = vmatprep.subr.mxu0 %v4200
    %4625 = vmatpush1.msra.mxu0 %v4199
    %4626 = vmatprep.subr.mxu0 %v4208
    %4627 = vmatpush1.msra.mxu0 %v4207
    %4628 = vmatprep.subr.mxu0 %v4216
    %4629 = vmatpush1.msra.mxu0 %v4215
    %4630 = vmatprep.subr.mxu0 %v4224
    %4631 = vmatpush1.msra.mxu0 %v4223
    %4632 = vmatprep.subr.mxu0 %v4232
    %4633 = vmatpush1.msra.mxu0 %v4231
    %4634 = vmatprep.subr.mxu0 %v4240
    %4635 = vmatpush1.msra.mxu0 %v4239
    %4636 = vmatprep.subr.mxu0 %v4248
    %4637 = vmatpush1.msra.mxu0 %v4247
    %4638 = vmatprep.subr.mxu0 %v4256
    %4639 = vmatpush1.msra.mxu0 %v4255
    %4640 = vmatprep.subr.mxu0 %v4264
    %4641 = vmatpush1.msra.mxu0 %v4263
    %4642 = vmatprep.subr.mxu0 %v4272
    %4643 = vmatpush1.msra.mxu0 %v4271
    %4644 = vmatprep.subr.mxu0 %v4280
    %4645 = vmatpush1.msra.mxu0 %v4279
    %4646 = vmatprep.subr.mxu0 %v4288
    %4647 = vmatpush1.msra.mxu0 %v4287
    %4648 = vmatprep.subr.mxu0 %v4296
    %4649 = vmatpush1.msra.mxu0 %v4295
    %4650 = vmatprep.subr.mxu0 %v4304
    %4651 = vmatpush1.msra.mxu0 %v4303
    %4652 = vmatprep.subr.mxu0 %v4312
    %4653 = vmatpush1.msra.mxu0 %v4311
    %4654 = vmatprep.subr.mxu0 %v4320
    %4655 = vmatpush1.msra.mxu0 %v4319
    %4656 = vmatprep.subr.mxu0 %v4328
    %4657 = vmatpush1.msra.mxu0 %v4327
    %4658 = vmatprep.subr.mxu0 %v4336
    %4659 = vmatpush1.msra.mxu0 %v4335
    %4660 = vmatprep.subr.mxu0 %v4344
    %4661 = vmatpush1.msra.mxu0 %v4343
    %4662 = vmatprep.subr.mxu0 %v4352
    %4663 = vmatpush1.msra.mxu0 %v4351
    %4664 = vmatprep.subr.mxu0 %v4360
    %4665 = vmatpush1.msra.mxu0 %v4359
    %4666 = vmatprep.subr.mxu0 %v4368
    %4667 = vmatpush1.msra.mxu0 %v4367
    %4668 = vmatprep.subr.mxu0 %v4376
    %4669 = vmatpush1.msra.mxu0 %v4375
    %4670 = vmatprep.subr.mxu0 %v4384
    %4671 = vmatpush1.msra.mxu0 %v4383
    %4672 = vmatprep.subr.mxu0 %v4392
    %4673 = vmatpush1.msra.mxu0 %v4391
    %4674 = vmatprep.mubr.f32.mxu0 %v4394
    %4675 = vmatmul.mubr.f32.gmra.mrb[0].mxu0 %v4393
    %v4676 = vpop.f32.mrb[0].mxu0
    %v4677 = vadd.f32 0.0, %v4676
    %v4678 = vpop.f32.mrb[0].mxu0
    %v4679 = vadd.f32 0.0, %v4678
    %4680 = vdwg.mxu0
    %s4681 = scalar_lea.vmem [#allocation2], 96
    %v4682 = vld [vmem:[%s4681] sm:$0xff]
    %v4683 = vld [vmem:[%s4681 + $0x8] sm:$0xff]
    %v4684 = vld [vmem:[%s4681 + $0x10] sm:$0xff]
    %v4685 = vld [vmem:[%s4681 + $0x18] sm:$0xff]
    %v4694 = vrot.slane %v4464, 6
    %v4695 = vrot.slane %v4466, 6
    %v4696 = vrot.slane %v4535, 6
    %v4697 = vrot.slane %v4537, 6
    %v4698 = vrot.slane %v4606, 6
    %v4699 = vrot.slane %v4608, 6
    %v4700 = vrot.slane %v4677, 6
    %v4701 = vrot.slane %v4679, 6
    %v4710 = vsel %vm1164, %v3920, %v4694
    %v4711 = vsel %vm1164, %v3922, %v4695
    %v4712 = vsel %vm1164, %v3991, %v4696
    %v4713 = vsel %vm1164, %v3993, %v4697
    %v4714 = vsel %vm1164, %v4062, %v4698
    %v4715 = vsel %vm1164, %v4064, %v4699
    %v4716 = vsel %vm1164, %v4133, %v4700
    %v4717 = vsel %vm1164, %v4135, %v4701
    %v4726 = vcombine.low %v4710, %v4711
    %v4727 = vcombine.low %v4712, %v4713
    %v4728 = vcombine.low %v4714, %v4715
    %v4729 = vcombine.low %v4716, %v4717
    %v4734 = vadd.f32 %v4682, %v4726
    %v4735 = vadd.f32 %v4683, %v4727
    %v4736 = vadd.f32 %v4684, %v4728
    %v4737 = vadd.f32 %v4685, %v4729
    %v4738 = vxor.u32 %v4734, 2147483648
    %v4739 = vxor.u32 %v4735, 2147483648
    %v4740 = vxor.u32 %v4736, 2147483648
    %v4741 = vmul.f32 %v4738, 1.442695
    %v4742 = vpow.pop %v4741
    %v4743 = vmul.f32 %v4739, 1.442695
    %v4744 = vpow.pop %v4743
    %v4745 = vmul.f32 %v4740, 1.442695
    %v4746 = vpow.pop %v4745
    %v4747 = vadd.f32 %v4742, 1.0
    %v4748 = vadd.f32 %v4744, 1.0
    %v4749 = vadd.f32 %v4746, 1.0
    %v4750 = vrcp.pop %v4747
    %v4751 = vmul.f32 1.0, %v4750
    %v4752 = vrcp.pop %v4748
    %v4753 = vmul.f32 1.0, %v4752
    %v4754 = vrcp.pop %v4749
    %v4755 = vmul.f32 1.0, %v4754
    %v4756 = vtanh.pop %v4737
    %v4757 = vmul.f32 %v4753, %v3577
    %v4758 = vmul.f32 %v4751, %v4756
    %v4759 = vadd.f32 %v4757, %v4758
    %v4760 = vtanh.pop %v4759
    %v4761 = vmul.f32 %v4755, %v4760
    %v4764 = vunpack.c.l.s4 1983009808
    %v4765 = vunpack.c.0.s8 %v4764
    %v4766 = vlaneseq
    %v4767 = vshrl.u32 %v4766, 7
    %v4768 = vsub.s32 %v4765, %v4767
    %v4769 = vrot.slane %v4761, %v4768
    %s4771 = scalar_lea.vmem [#allocation8], 24
    %4772 = vst [vmem:[%s4771] sm:$0xf] %v4769
    %v4773 = vcombine.high %v4769, %v4769
    %s4775 = scalar_lea.vmem [#allocation8], 32
    %4776 = vst [vmem:[%s4775 + $0x4] sm:$0xf] %v4773
    %v4777 = vld [vmem:[#allocation5] sm:$0xff]
    %v4778 = vld [vmem:[#allocation5 + $0x8] sm:$0xff]
    %v4779 = vld [vmem:[#allocation5 + $0x10] sm:$0xff]
    %v4780 = vld [vmem:[#allocation5 + $0x18] sm:$0xff]
    %v4781 = vld [vmem:[#allocation5 + $0x20] sm:$0xff]
    %v4782 = vld [vmem:[#allocation5 + $0x28] sm:$0xff]
    %v4783 = vld [vmem:[#allocation5 + $0x30] sm:$0xff]
    %v4784 = vld [vmem:[#allocation5 + $0x38] sm:$0xff]
    %v4785 = vld [vmem:[#allocation5 + $0x40] sm:$0xff]
    %v4786 = vld [vmem:[#allocation5 + $0x48] sm:$0xff]
    %v4787 = vld [vmem:[#allocation5 + $0x50] sm:$0xff]
    %v4788 = vld [vmem:[#allocation5 + $0x58] sm:$0xff]
    %v4789 = vld [vmem:[#allocation5 + $0x60] sm:$0xff]
    %v4790 = vld [vmem:[#allocation5 + $0x68] sm:$0xff]
    %v4791 = vld [vmem:[#allocation5 + $0x70] sm:$0xff]
    %v4792 = vld [vmem:[#allocation5 + $0x78] sm:$0xff]
    %v4793 = vld [vmem:[#allocation5 + $0x80] sm:$0xff]
    %v4794 = vld [vmem:[#allocation5 + $0x88] sm:$0xff]
    %v4795 = vld [vmem:[#allocation5 + $0x90] sm:$0xff]
    %v4796 = vld [vmem:[#allocation5 + $0x98] sm:$0xff]
    %v4797 = vld [vmem:[#allocation5 + $0xa0] sm:$0xff]
    %v4798 = vld [vmem:[#allocation5 + $0xa8] sm:$0xff]
    %v4799 = vld [vmem:[#allocation5 + $0xb0] sm:$0xff]
    %v4800 = vld [vmem:[#allocation5 + $0xb8] sm:$0xff]
    %v4801 = vld [vmem:[#allocation5 + $0xc0] sm:$0xff]
    %v4802 = vld [vmem:[#allocation5 + $0xc8] sm:$0xff]
    %v4803 = vld [vmem:[#allocation5 + $0xd0] sm:$0xff]
    %v4804 = vld [vmem:[#allocation5 + $0xd8] sm:$0xff]
    %v4805 = vld [vmem:[#allocation5 + $0xe0] sm:$0xff]
    %v4806 = vld [vmem:[#allocation5 + $0xe8] sm:$0xff]
    %v4807 = vld [vmem:[#allocation5 + $0xf0] sm:$0xff]
    %v4808 = vld [vmem:[#allocation5 + $0xf8] sm:$0xff]
    %v4809 = vld [vmem:[#allocation5 + $0x100] sm:$0xff]
    %v4810 = vld [vmem:[#allocation5 + $0x108] sm:$0xff]
    %v4811 = vld [vmem:[#allocation5 + $0x110] sm:$0xff]
    %v4812 = vld [vmem:[#allocation5 + $0x118] sm:$0xff]
    %v4813 = vld [vmem:[#allocation5 + $0x120] sm:$0xff]
    %v4814 = vld [vmem:[#allocation5 + $0x128] sm:$0xff]
    %v4815 = vld [vmem:[#allocation5 + $0x130] sm:$0xff]
    %v4816 = vld [vmem:[#allocation5 + $0x138] sm:$0xff]
    %v4817 = vld [vmem:[#allocation5 + $0x140] sm:$0xff]
    %v4818 = vld [vmem:[#allocation5 + $0x148] sm:$0xff]
    %v4819 = vld [vmem:[#allocation5 + $0x150] sm:$0xff]
    %v4820 = vld [vmem:[#allocation5 + $0x158] sm:$0xff]
    %v4821 = vld [vmem:[#allocation5 + $0x160] sm:$0xff]
    %v4822 = vld [vmem:[#allocation5 + $0x168] sm:$0xff]
    %v4823 = vld [vmem:[#allocation5 + $0x170] sm:$0xff]
    %v4824 = vld [vmem:[#allocation5 + $0x178] sm:$0xff]
    %v4825 = vld [vmem:[#allocation5 + $0x180] sm:$0xff]
    %v4826 = vld [vmem:[#allocation5 + $0x188] sm:$0xff]
    %v4827 = vld [vmem:[#allocation5 + $0x190] sm:$0xff]
    %v4828 = vld [vmem:[#allocation5 + $0x198] sm:$0xff]
    %v4829 = vld [vmem:[#allocation5 + $0x1a0] sm:$0xff]
    %v4830 = vld [vmem:[#allocation5 + $0x1a8] sm:$0xff]
    %v4831 = vld [vmem:[#allocation5 + $0x1b0] sm:$0xff]
    %v4832 = vld [vmem:[#allocation5 + $0x1b8] sm:$0xff]
    %v4833 = vld [vmem:[#allocation5 + $0x1c0] sm:$0xff]
    %v4834 = vld [vmem:[#allocation5 + $0x1c8] sm:$0xff]
    %v4835 = vld [vmem:[#allocation5 + $0x1d0] sm:$0xff]
    %v4836 = vld [vmem:[#allocation5 + $0x1d8] sm:$0xff]
    %v4837 = vld [vmem:[#allocation5 + $0x1e0] sm:$0xff]
    %v4838 = vld [vmem:[#allocation5 + $0x1e8] sm:$0xff]
    %v4839 = vld [vmem:[#allocation5 + $0x1f0] sm:$0xff]
    %v4840 = vld [vmem:[#allocation5 + $0x1f8] sm:$0xff]
    %v4841 = vld [vmem:[#allocation5 + $0x200] sm:$0xff]
    %v4842 = vld [vmem:[#allocation5 + $0x208] sm:$0xff]
    %v4843 = vld [vmem:[#allocation5 + $0x210] sm:$0xff]
    %v4844 = vld [vmem:[#allocation5 + $0x218] sm:$0xff]
    %v4845 = vld [vmem:[#allocation5 + $0x220] sm:$0xff]
    %v4846 = vld [vmem:[#allocation5 + $0x228] sm:$0xff]
    %v4847 = vld [vmem:[#allocation5 + $0x230] sm:$0xff]
    %v4848 = vld [vmem:[#allocation5 + $0x238] sm:$0xff]
    %v4849 = vld [vmem:[#allocation5 + $0x240] sm:$0xff]
    %v4850 = vld [vmem:[#allocation5 + $0x248] sm:$0xff]
    %v4851 = vld [vmem:[#allocation5 + $0x250] sm:$0xff]
    %v4852 = vld [vmem:[#allocation5 + $0x258] sm:$0xff]
    %v4853 = vld [vmem:[#allocation5 + $0x260] sm:$0xff]
    %v4854 = vld [vmem:[#allocation5 + $0x268] sm:$0xff]
    %v4855 = vld [vmem:[#allocation5 + $0x270] sm:$0xff]
    %v4856 = vld [vmem:[#allocation5 + $0x278] sm:$0xff]
    %v4857 = vld [vmem:[#allocation5 + $0x280] sm:$0xff]
    %v4858 = vld [vmem:[#allocation5 + $0x288] sm:$0xff]
    %v4859 = vld [vmem:[#allocation5 + $0x290] sm:$0xff]
    %v4860 = vld [vmem:[#allocation5 + $0x298] sm:$0xff]
    %v4861 = vld [vmem:[#allocation5 + $0x2a0] sm:$0xff]
    %v4862 = vld [vmem:[#allocation5 + $0x2a8] sm:$0xff]
    %v4863 = vld [vmem:[#allocation5 + $0x2b0] sm:$0xff]
    %v4864 = vld [vmem:[#allocation5 + $0x2b8] sm:$0xff]
    %v4865 = vld [vmem:[#allocation5 + $0x2c0] sm:$0xff]
    %v4866 = vld [vmem:[#allocation5 + $0x2c8] sm:$0xff]
    %v4867 = vld [vmem:[#allocation5 + $0x2d0] sm:$0xff]
    %v4868 = vld [vmem:[#allocation5 + $0x2d8] sm:$0xff]
    %v4869 = vld [vmem:[#allocation5 + $0x2e0] sm:$0xff]
    %v4870 = vld [vmem:[#allocation5 + $0x2e8] sm:$0xff]
    %v4871 = vld [vmem:[#allocation5 + $0x2f0] sm:$0xff]
    %v4872 = vld [vmem:[#allocation5 + $0x2f8] sm:$0xff]
    %v4873 = vld [vmem:[#allocation5 + $0x300] sm:$0xff]
    %v4874 = vld [vmem:[#allocation5 + $0x308] sm:$0xff]
    %v4875 = vld [vmem:[#allocation5 + $0x310] sm:$0xff]
    %v4876 = vld [vmem:[#allocation5 + $0x318] sm:$0xff]
    %v4877 = vld [vmem:[#allocation5 + $0x320] sm:$0xff]
    %v4878 = vld [vmem:[#allocation5 + $0x328] sm:$0xff]
    %v4879 = vld [vmem:[#allocation5 + $0x330] sm:$0xff]
    %v4880 = vld [vmem:[#allocation5 + $0x338] sm:$0xff]
    %v4881 = vld [vmem:[#allocation5 + $0x340] sm:$0xff]
    %v4882 = vld [vmem:[#allocation5 + $0x348] sm:$0xff]
    %v4883 = vld [vmem:[#allocation5 + $0x350] sm:$0xff]
    %v4884 = vld [vmem:[#allocation5 + $0x358] sm:$0xff]
    %v4885 = vld [vmem:[#allocation5 + $0x360] sm:$0xff]
    %v4886 = vld [vmem:[#allocation5 + $0x368] sm:$0xff]
    %v4887 = vld [vmem:[#allocation5 + $0x370] sm:$0xff]
    %v4888 = vld [vmem:[#allocation5 + $0x378] sm:$0xff]
    %v4889 = vld [vmem:[#allocation5 + $0x380] sm:$0xff]
    %v4890 = vld [vmem:[#allocation5 + $0x388] sm:$0xff]
    %v4891 = vld [vmem:[#allocation5 + $0x390] sm:$0xff]
    %v4892 = vld [vmem:[#allocation5 + $0x398] sm:$0xff]
    %v4893 = vld [vmem:[#allocation5 + $0x3a0] sm:$0xff]
    %v4894 = vld [vmem:[#allocation5 + $0x3a8] sm:$0xff]
    %v4895 = vld [vmem:[#allocation5 + $0x3b0] sm:$0xff]
    %v4896 = vld [vmem:[#allocation5 + $0x3b8] sm:$0xff]
    %v4897 = vld [vmem:[#allocation5 + $0x3c0] sm:$0xff]
    %v4898 = vld [vmem:[#allocation5 + $0x3c8] sm:$0xff]
    %v4899 = vld [vmem:[#allocation5 + $0x3d0] sm:$0xff]
    %v4900 = vld [vmem:[#allocation5 + $0x3d8] sm:$0xff]
    %v4901 = vld [vmem:[#allocation5 + $0x3e0] sm:$0xff]
    %v4902 = vld [vmem:[#allocation5 + $0x3e8] sm:$0xff]
    %v4903 = vld [vmem:[#allocation5 + $0x3f0] sm:$0xff]
    %v4904 = vld [vmem:[#allocation5 + $0x3f8] sm:$0xff]
    %v4905 = vld [vmem:[#allocation5 + $0x400] sm:$0xff]
    %v4906 = vld [vmem:[#allocation5 + $0x408] sm:$0xff]
    %v4907 = vld [vmem:[#allocation5 + $0x410] sm:$0xff]
    %v4908 = vld [vmem:[#allocation5 + $0x418] sm:$0xff]
    %v4909 = vld [vmem:[#allocation5 + $0x420] sm:$0xff]
    %v4910 = vld [vmem:[#allocation5 + $0x428] sm:$0xff]
    %v4911 = vld [vmem:[#allocation5 + $0x430] sm:$0xff]
    %v4912 = vld [vmem:[#allocation5 + $0x438] sm:$0xff]
    %v4913 = vld [vmem:[#allocation5 + $0x440] sm:$0xff]
    %v4914 = vld [vmem:[#allocation5 + $0x448] sm:$0xff]
    %v4915 = vld [vmem:[#allocation5 + $0x450] sm:$0xff]
    %v4916 = vld [vmem:[#allocation5 + $0x458] sm:$0xff]
    %v4917 = vld [vmem:[#allocation5 + $0x460] sm:$0xff]
    %v4918 = vld [vmem:[#allocation5 + $0x468] sm:$0xff]
    %v4919 = vld [vmem:[#allocation5 + $0x470] sm:$0xff]
    %v4920 = vld [vmem:[#allocation5 + $0x478] sm:$0xff]
    %v4921 = vld [vmem:[#allocation5 + $0x480] sm:$0xff]
    %v4922 = vld [vmem:[#allocation5 + $0x488] sm:$0xff]
    %v4923 = vld [vmem:[#allocation5 + $0x490] sm:$0xff]
    %v4924 = vld [vmem:[#allocation5 + $0x498] sm:$0xff]
    %v4925 = vld [vmem:[#allocation5 + $0x4a0] sm:$0xff]
    %v4926 = vld [vmem:[#allocation5 + $0x4a8] sm:$0xff]
    %v4927 = vld [vmem:[#allocation5 + $0x4b0] sm:$0xff]
    %v4928 = vld [vmem:[#allocation5 + $0x4b8] sm:$0xff]
    %v4929 = vld [vmem:[#allocation5 + $0x4c0] sm:$0xff]
    %v4930 = vld [vmem:[#allocation5 + $0x4c8] sm:$0xff]
    %v4931 = vld [vmem:[#allocation5 + $0x4d0] sm:$0xff]
    %v4932 = vld [vmem:[#allocation5 + $0x4d8] sm:$0xff]
    %v4933 = vld [vmem:[#allocation5 + $0x4e0] sm:$0xff]
    %v4934 = vld [vmem:[#allocation5 + $0x4e8] sm:$0xff]
    %v4935 = vld [vmem:[#allocation5 + $0x4f0] sm:$0xff]
    %v4936 = vld [vmem:[#allocation5 + $0x4f8] sm:$0xff]
    %v4937 = vld [vmem:[#allocation5 + $0x500] sm:$0xff]
    %v4938 = vld [vmem:[#allocation5 + $0x508] sm:$0xff]
    %v4939 = vld [vmem:[#allocation5 + $0x510] sm:$0xff]
    %v4940 = vld [vmem:[#allocation5 + $0x518] sm:$0xff]
    %v4941 = vld [vmem:[#allocation5 + $0x520] sm:$0xff]
    %v4942 = vld [vmem:[#allocation5 + $0x528] sm:$0xff]
    %v4943 = vld [vmem:[#allocation5 + $0x530] sm:$0xff]
    %v4944 = vld [vmem:[#allocation5 + $0x538] sm:$0xff]
    %v4945 = vld [vmem:[#allocation5 + $0x540] sm:$0xff]
    %v4946 = vld [vmem:[#allocation5 + $0x548] sm:$0xff]
    %v4947 = vld [vmem:[#allocation5 + $0x550] sm:$0xff]
    %v4948 = vld [vmem:[#allocation5 + $0x558] sm:$0xff]
    %v4949 = vld [vmem:[#allocation5 + $0x560] sm:$0xff]
    %v4950 = vld [vmem:[#allocation5 + $0x568] sm:$0xff]
    %v4951 = vld [vmem:[#allocation5 + $0x570] sm:$0xff]
    %v4952 = vld [vmem:[#allocation5 + $0x578] sm:$0xff]
    %v4953 = vld [vmem:[#allocation5 + $0x580] sm:$0xff]
    %v4954 = vld [vmem:[#allocation5 + $0x588] sm:$0xff]
    %v4955 = vld [vmem:[#allocation5 + $0x590] sm:$0xff]
    %v4956 = vld [vmem:[#allocation5 + $0x598] sm:$0xff]
    %v4957 = vld [vmem:[#allocation5 + $0x5a0] sm:$0xff]
    %v4958 = vld [vmem:[#allocation5 + $0x5a8] sm:$0xff]
    %v4959 = vld [vmem:[#allocation5 + $0x5b0] sm:$0xff]
    %v4960 = vld [vmem:[#allocation5 + $0x5b8] sm:$0xff]
    %v4961 = vld [vmem:[#allocation5 + $0x5c0] sm:$0xff]
    %v4962 = vld [vmem:[#allocation5 + $0x5c8] sm:$0xff]
    %v4963 = vld [vmem:[#allocation5 + $0x5d0] sm:$0xff]
    %v4964 = vld [vmem:[#allocation5 + $0x5d8] sm:$0xff]
    %v4965 = vld [vmem:[#allocation5 + $0x5e0] sm:$0xff]
    %v4966 = vld [vmem:[#allocation5 + $0x5e8] sm:$0xff]
    %v4967 = vld [vmem:[#allocation5 + $0x5f0] sm:$0xff]
    %v4968 = vld [vmem:[#allocation5 + $0x5f8] sm:$0xff]
    %v4969 = vld [vmem:[#allocation5 + $0x600] sm:$0xff]
    %v4970 = vld [vmem:[#allocation5 + $0x608] sm:$0xff]
    %v4971 = vld [vmem:[#allocation5 + $0x610] sm:$0xff]
    %v4972 = vld [vmem:[#allocation5 + $0x618] sm:$0xff]
    %v4973 = vld [vmem:[#allocation5 + $0x620] sm:$0xff]
    %v4974 = vld [vmem:[#allocation5 + $0x628] sm:$0xff]
    %v4975 = vld [vmem:[#allocation5 + $0x630] sm:$0xff]
    %v4976 = vld [vmem:[#allocation5 + $0x638] sm:$0xff]
    %v4977 = vld [vmem:[#allocation5 + $0x640] sm:$0xff]
    %v4978 = vld [vmem:[#allocation5 + $0x648] sm:$0xff]
    %v4979 = vld [vmem:[#allocation5 + $0x650] sm:$0xff]
    %v4980 = vld [vmem:[#allocation5 + $0x658] sm:$0xff]
    %v4981 = vld [vmem:[#allocation5 + $0x660] sm:$0xff]
    %v4982 = vld [vmem:[#allocation5 + $0x668] sm:$0xff]
    %v4983 = vld [vmem:[#allocation5 + $0x670] sm:$0xff]
    %v4984 = vld [vmem:[#allocation5 + $0x678] sm:$0xff]
    %v4985 = vld [vmem:[#allocation5 + $0x680] sm:$0xff]
    %v4986 = vld [vmem:[#allocation5 + $0x688] sm:$0xff]
    %v4987 = vld [vmem:[#allocation5 + $0x690] sm:$0xff]
    %v4988 = vld [vmem:[#allocation5 + $0x698] sm:$0xff]
    %v4989 = vld [vmem:[#allocation5 + $0x6a0] sm:$0xff]
    %v4990 = vld [vmem:[#allocation5 + $0x6a8] sm:$0xff]
    %v4991 = vld [vmem:[#allocation5 + $0x6b0] sm:$0xff]
    %v4992 = vld [vmem:[#allocation5 + $0x6b8] sm:$0xff]
    %v4993 = vld [vmem:[#allocation5 + $0x6c0] sm:$0xff]
    %v4994 = vld [vmem:[#allocation5 + $0x6c8] sm:$0xff]
    %v4995 = vld [vmem:[#allocation5 + $0x6d0] sm:$0xff]
    %v4996 = vld [vmem:[#allocation5 + $0x6d8] sm:$0xff]
    %v4997 = vld [vmem:[#allocation5 + $0x6e0] sm:$0xff]
    %v4998 = vld [vmem:[#allocation5 + $0x6e8] sm:$0xff]
    %v4999 = vld [vmem:[#allocation5 + $0x6f0] sm:$0xff]
    %v5000 = vld [vmem:[#allocation5 + $0x6f8] sm:$0xff]
    %v5001 = vld [vmem:[#allocation5 + $0x700] sm:$0xff]
    %v5002 = vld [vmem:[#allocation5 + $0x708] sm:$0xff]
    %v5003 = vld [vmem:[#allocation5 + $0x710] sm:$0xff]
    %v5004 = vld [vmem:[#allocation5 + $0x718] sm:$0xff]
    %v5005 = vld [vmem:[#allocation5 + $0x720] sm:$0xff]
    %v5006 = vld [vmem:[#allocation5 + $0x728] sm:$0xff]
    %v5007 = vld [vmem:[#allocation5 + $0x730] sm:$0xff]
    %v5008 = vld [vmem:[#allocation5 + $0x738] sm:$0xff]
    %v5009 = vld [vmem:[#allocation5 + $0x740] sm:$0xff]
    %v5010 = vld [vmem:[#allocation5 + $0x748] sm:$0xff]
    %v5011 = vld [vmem:[#allocation5 + $0x750] sm:$0xff]
    %v5012 = vld [vmem:[#allocation5 + $0x758] sm:$0xff]
    %v5013 = vld [vmem:[#allocation5 + $0x760] sm:$0xff]
    %v5014 = vld [vmem:[#allocation5 + $0x768] sm:$0xff]
    %v5015 = vld [vmem:[#allocation5 + $0x770] sm:$0xff]
    %v5016 = vld [vmem:[#allocation5 + $0x778] sm:$0xff]
    %v5017 = vld [vmem:[#allocation5 + $0x780] sm:$0xff]
    %v5018 = vld [vmem:[#allocation5 + $0x788] sm:$0xff]
    %v5019 = vld [vmem:[#allocation5 + $0x790] sm:$0xff]
    %v5020 = vld [vmem:[#allocation5 + $0x798] sm:$0xff]
    %v5021 = vld [vmem:[#allocation5 + $0x7a0] sm:$0xff]
    %v5022 = vld [vmem:[#allocation5 + $0x7a8] sm:$0xff]
    %v5023 = vld [vmem:[#allocation5 + $0x7b0] sm:$0xff]
    %v5024 = vld [vmem:[#allocation5 + $0x7b8] sm:$0xff]
    %v5025 = vld [vmem:[#allocation5 + $0x7c0] sm:$0xff]
    %v5026 = vld [vmem:[#allocation5 + $0x7c8] sm:$0xff]
    %v5027 = vld [vmem:[#allocation5 + $0x7d0] sm:$0xff]
    %v5028 = vld [vmem:[#allocation5 + $0x7d8] sm:$0xff]
    %v5029 = vld [vmem:[#allocation5 + $0x7e0] sm:$0xff]
    %v5030 = vld [vmem:[#allocation5 + $0x7e8] sm:$0xff]
    %v5031 = vld [vmem:[#allocation5 + $0x7f0] sm:$0xff]
    %v5032 = vld [vmem:[#allocation5 + $0x7f8] sm:$0xff]
    %v5033 = vcombine.high %v4761, %v4761
    %5035 = vmatprep.subr.mxu0 %v4778
    %5036 = vmatpush1.msra.mxu0 %v4777
    %5037 = vmatprep.subr.mxu0 %v4786
    %5038 = vmatpush1.msra.mxu0 %v4785
    %5039 = vmatprep.subr.mxu0 %v4794
    %5040 = vmatpush1.msra.mxu0 %v4793
    %5041 = vmatprep.subr.mxu0 %v4802
    %5042 = vmatpush1.msra.mxu0 %v4801
    %5043 = vmatprep.subr.mxu0 %v4810
    %5044 = vmatpush1.msra.mxu0 %v4809
    %5045 = vmatprep.subr.mxu0 %v4818
    %5046 = vmatpush1.msra.mxu0 %v4817
    %5047 = vmatprep.subr.mxu0 %v4826
    %5048 = vmatpush1.msra.mxu0 %v4825
    %5049 = vmatprep.subr.mxu0 %v4834
    %5050 = vmatpush1.msra.mxu0 %v4833
    %5051 = vmatprep.subr.mxu0 %v4842
    %5052 = vmatpush1.msra.mxu0 %v4841
    %5053 = vmatprep.subr.mxu0 %v4850
    %5054 = vmatpush1.msra.mxu0 %v4849
    %5055 = vmatprep.subr.mxu0 %v4858
    %5056 = vmatpush1.msra.mxu0 %v4857
    %5057 = vmatprep.subr.mxu0 %v4866
    %5058 = vmatpush1.msra.mxu0 %v4865
    %5059 = vmatprep.subr.mxu0 %v4874
    %5060 = vmatpush1.msra.mxu0 %v4873
    %5061 = vmatprep.subr.mxu0 %v4882
    %5062 = vmatpush1.msra.mxu0 %v4881
    %5063 = vmatprep.subr.mxu0 %v4890
    %5064 = vmatpush1.msra.mxu0 %v4889
    %5065 = vmatprep.subr.mxu0 %v4898
    %5066 = vmatpush1.msra.mxu0 %v4897
    %5067 = vmatprep.subr.mxu0 %v4906
    %5068 = vmatpush1.msra.mxu0 %v4905
    %5069 = vmatprep.subr.mxu0 %v4914
    %5070 = vmatpush1.msra.mxu0 %v4913
    %5071 = vmatprep.subr.mxu0 %v4922
    %5072 = vmatpush1.msra.mxu0 %v4921
    %5073 = vmatprep.subr.mxu0 %v4930
    %5074 = vmatpush1.msra.mxu0 %v4929
    %5075 = vmatprep.subr.mxu0 %v4938
    %5076 = vmatpush1.msra.mxu0 %v4937
    %5077 = vmatprep.subr.mxu0 %v4946
    %5078 = vmatpush1.msra.mxu0 %v4945
    %5079 = vmatprep.subr.mxu0 %v4954
    %5080 = vmatpush1.msra.mxu0 %v4953
    %5081 = vmatprep.subr.mxu0 %v4962
    %5082 = vmatpush1.msra.mxu0 %v4961
    %5083 = vmatprep.subr.mxu0 %v4970
    %5084 = vmatpush1.msra.mxu0 %v4969
    %5085 = vmatprep.subr.mxu0 %v4978
    %5086 = vmatpush1.msra.mxu0 %v4977
    %5087 = vmatprep.subr.mxu0 %v4986
    %5088 = vmatpush1.msra.mxu0 %v4985
    %5089 = vmatprep.subr.mxu0 %v4994
    %5090 = vmatpush1.msra.mxu0 %v4993
    %5091 = vmatprep.subr.mxu0 %v5002
    %5092 = vmatpush1.msra.mxu0 %v5001
    %5093 = vmatprep.subr.mxu0 %v5010
    %5094 = vmatpush1.msra.mxu0 %v5009
    %5095 = vmatprep.subr.mxu0 %v5018
    %5096 = vmatpush1.msra.mxu0 %v5017
    %5097 = vmatprep.subr.mxu0 %v5026
    %5098 = vmatpush1.msra.mxu0 %v5025
    %5099 = vmatprep.mubr.f32.mxu0 %v5033
    %5100 = vmatmul.mubr.f32.gmra.mrb[0].mxu0 %v4761
    %v5101 = vpop.f32.mrb[0].mxu0
    %v5102 = vadd.f32 0.0, %v5101
    %v5103 = vpop.f32.mrb[0].mxu0
    %v5104 = vadd.f32 0.0, %v5103
    %5105 = vdwg.mxu0
    %5106 = vmatprep.subr.mxu0 %v4780
    %5107 = vmatpush1.msra.mxu0 %v4779
    %5108 = vmatprep.subr.mxu0 %v4788
    %5109 = vmatpush1.msra.mxu0 %v4787
    %5110 = vmatprep.subr.mxu0 %v4796
    %5111 = vmatpush1.msra.mxu0 %v4795
    %5112 = vmatprep.subr.mxu0 %v4804
    %5113 = vmatpush1.msra.mxu0 %v4803
    %5114 = vmatprep.subr.mxu0 %v4812
    %5115 = vmatpush1.msra.mxu0 %v4811
    %5116 = vmatprep.subr.mxu0 %v4820
    %5117 = vmatpush1.msra.mxu0 %v4819
    %5118 = vmatprep.subr.mxu0 %v4828
    %5119 = vmatpush1.msra.mxu0 %v4827
    %5120 = vmatprep.subr.mxu0 %v4836
    %5121 = vmatpush1.msra.mxu0 %v4835
    %5122 = vmatprep.subr.mxu0 %v4844
    %5123 = vmatpush1.msra.mxu0 %v4843
    %5124 = vmatprep.subr.mxu0 %v4852
    %5125 = vmatpush1.msra.mxu0 %v4851
    %5126 = vmatprep.subr.mxu0 %v4860
    %5127 = vmatpush1.msra.mxu0 %v4859
    %5128 = vmatprep.subr.mxu0 %v4868
    %5129 = vmatpush1.msra.mxu0 %v4867
    %5130 = vmatprep.subr.mxu0 %v4876
    %5131 = vmatpush1.msra.mxu0 %v4875
    %5132 = vmatprep.subr.mxu0 %v4884
    %5133 = vmatpush1.msra.mxu0 %v4883
    %5134 = vmatprep.subr.mxu0 %v4892
    %5135 = vmatpush1.msra.mxu0 %v4891
    %5136 = vmatprep.subr.mxu0 %v4900
    %5137 = vmatpush1.msra.mxu0 %v4899
    %5138 = vmatprep.subr.mxu0 %v4908
    %5139 = vmatpush1.msra.mxu0 %v4907
    %5140 = vmatprep.subr.mxu0 %v4916
    %5141 = vmatpush1.msra.mxu0 %v4915
    %5142 = vmatprep.subr.mxu0 %v4924
    %5143 = vmatpush1.msra.mxu0 %v4923
    %5144 = vmatprep.subr.mxu0 %v4932
    %5145 = vmatpush1.msra.mxu0 %v4931
    %5146 = vmatprep.subr.mxu0 %v4940
    %5147 = vmatpush1.msra.mxu0 %v4939
    %5148 = vmatprep.subr.mxu0 %v4948
    %5149 = vmatpush1.msra.mxu0 %v4947
    %5150 = vmatprep.subr.mxu0 %v4956
    %5151 = vmatpush1.msra.mxu0 %v4955
    %5152 = vmatprep.subr.mxu0 %v4964
    %5153 = vmatpush1.msra.mxu0 %v4963
    %5154 = vmatprep.subr.mxu0 %v4972
    %5155 = vmatpush1.msra.mxu0 %v4971
    %5156 = vmatprep.subr.mxu0 %v4980
    %5157 = vmatpush1.msra.mxu0 %v4979
    %5158 = vmatprep.subr.mxu0 %v4988
    %5159 = vmatpush1.msra.mxu0 %v4987
    %5160 = vmatprep.subr.mxu0 %v4996
    %5161 = vmatpush1.msra.mxu0 %v4995
    %5162 = vmatprep.subr.mxu0 %v5004
    %5163 = vmatpush1.msra.mxu0 %v5003
    %5164 = vmatprep.subr.mxu0 %v5012
    %5165 = vmatpush1.msra.mxu0 %v5011
    %5166 = vmatprep.subr.mxu0 %v5020
    %5167 = vmatpush1.msra.mxu0 %v5019
    %5168 = vmatprep.subr.mxu0 %v5028
    %5169 = vmatpush1.msra.mxu0 %v5027
    %5170 = vmatprep.mubr.f32.mxu0 %v5033
    %5171 = vmatmul.mubr.f32.gmra.mrb[0].mxu0 %v4761
    %v5172 = vpop.f32.mrb[0].mxu0
    %v5173 = vadd.f32 0.0, %v5172
    %v5174 = vpop.f32.mrb[0].mxu0
    %v5175 = vadd.f32 0.0, %v5174
    %5176 = vdwg.mxu0
    %5177 = vmatprep.subr.mxu0 %v4782
    %5178 = vmatpush1.msra.mxu0 %v4781
    %5179 = vmatprep.subr.mxu0 %v4790
    %5180 = vmatpush1.msra.mxu0 %v4789
    %5181 = vmatprep.subr.mxu0 %v4798
    %5182 = vmatpush1.msra.mxu0 %v4797
    %5183 = vmatprep.subr.mxu0 %v4806
    %5184 = vmatpush1.msra.mxu0 %v4805
    %5185 = vmatprep.subr.mxu0 %v4814
    %5186 = vmatpush1.msra.mxu0 %v4813
    %5187 = vmatprep.subr.mxu0 %v4822
    %5188 = vmatpush1.msra.mxu0 %v4821
    %5189 = vmatprep.subr.mxu0 %v4830
    %5190 = vmatpush1.msra.mxu0 %v4829
    %5191 = vmatprep.subr.mxu0 %v4838
    %5192 = vmatpush1.msra.mxu0 %v4837
    %5193 = vmatprep.subr.mxu0 %v4846
    %5194 = vmatpush1.msra.mxu0 %v4845
    %5195 = vmatprep.subr.mxu0 %v4854
    %5196 = vmatpush1.msra.mxu0 %v4853
    %5197 = vmatprep.subr.mxu0 %v4862
    %5198 = vmatpush1.msra.mxu0 %v4861
    %5199 = vmatprep.subr.mxu0 %v4870
    %5200 = vmatpush1.msra.mxu0 %v4869
    %5201 = vmatprep.subr.mxu0 %v4878
    %5202 = vmatpush1.msra.mxu0 %v4877
    %5203 = vmatprep.subr.mxu0 %v4886
    %5204 = vmatpush1.msra.mxu0 %v4885
    %5205 = vmatprep.subr.mxu0 %v4894
    %5206 = vmatpush1.msra.mxu0 %v4893
    %5207 = vmatprep.subr.mxu0 %v4902
    %5208 = vmatpush1.msra.mxu0 %v4901
    %5209 = vmatprep.subr.mxu0 %v4910
    %5210 = vmatpush1.msra.mxu0 %v4909
    %5211 = vmatprep.subr.mxu0 %v4918
    %5212 = vmatpush1.msra.mxu0 %v4917
    %5213 = vmatprep.subr.mxu0 %v4926
    %5214 = vmatpush1.msra.mxu0 %v4925
    %5215 = vmatprep.subr.mxu0 %v4934
    %5216 = vmatpush1.msra.mxu0 %v4933
    %5217 = vmatprep.subr.mxu0 %v4942
    %5218 = vmatpush1.msra.mxu0 %v4941
    %5219 = vmatprep.subr.mxu0 %v4950
    %5220 = vmatpush1.msra.mxu0 %v4949
    %5221 = vmatprep.subr.mxu0 %v4958
    %5222 = vmatpush1.msra.mxu0 %v4957
    %5223 = vmatprep.subr.mxu0 %v4966
    %5224 = vmatpush1.msra.mxu0 %v4965
    %5225 = vmatprep.subr.mxu0 %v4974
    %5226 = vmatpush1.msra.mxu0 %v4973
    %5227 = vmatprep.subr.mxu0 %v4982
    %5228 = vmatpush1.msra.mxu0 %v4981
    %5229 = vmatprep.subr.mxu0 %v4990
    %5230 = vmatpush1.msra.mxu0 %v4989
    %5231 = vmatprep.subr.mxu0 %v4998
    %5232 = vmatpush1.msra.mxu0 %v4997
    %5233 = vmatprep.subr.mxu0 %v5006
    %5234 = vmatpush1.msra.mxu0 %v5005
    %5235 = vmatprep.subr.mxu0 %v5014
    %5236 = vmatpush1.msra.mxu0 %v5013
    %5237 = vmatprep.subr.mxu0 %v5022
    %5238 = vmatpush1.msra.mxu0 %v5021
    %5239 = vmatprep.subr.mxu0 %v5030
    %5240 = vmatpush1.msra.mxu0 %v5029
    %5241 = vmatprep.mubr.f32.mxu0 %v5033
    %5242 = vmatmul.mubr.f32.gmra.mrb[0].mxu0 %v4761
    %v5243 = vpop.f32.mrb[0].mxu0
    %v5244 = vadd.f32 0.0, %v5243
    %v5245 = vpop.f32.mrb[0].mxu0
    %v5246 = vadd.f32 0.0, %v5245
    %5247 = vdwg.mxu0
    %5248 = vmatprep.subr.mxu0 %v4784
    %5249 = vmatpush1.msra.mxu0 %v4783
    %5250 = vmatprep.subr.mxu0 %v4792
    %5251 = vmatpush1.msra.mxu0 %v4791
    %5252 = vmatprep.subr.mxu0 %v4800
    %5253 = vmatpush1.msra.mxu0 %v4799
    %5254 = vmatprep.subr.mxu0 %v4808
    %5255 = vmatpush1.msra.mxu0 %v4807
    %5256 = vmatprep.subr.mxu0 %v4816
    %5257 = vmatpush1.msra.mxu0 %v4815
    %5258 = vmatprep.subr.mxu0 %v4824
    %5259 = vmatpush1.msra.mxu0 %v4823
    %5260 = vmatprep.subr.mxu0 %v4832
    %5261 = vmatpush1.msra.mxu0 %v4831
    %5262 = vmatprep.subr.mxu0 %v4840
    %5263 = vmatpush1.msra.mxu0 %v4839
    %5264 = vmatprep.subr.mxu0 %v4848
    %5265 = vmatpush1.msra.mxu0 %v4847
    %5266 = vmatprep.subr.mxu0 %v4856
    %5267 = vmatpush1.msra.mxu0 %v4855
    %5268 = vmatprep.subr.mxu0 %v4864
    %5269 = vmatpush1.msra.mxu0 %v4863
    %5270 = vmatprep.subr.mxu0 %v4872
    %5271 = vmatpush1.msra.mxu0 %v4871
    %5272 = vmatprep.subr.mxu0 %v4880
    %5273 = vmatpush1.msra.mxu0 %v4879
    %5274 = vmatprep.subr.mxu0 %v4888
    %5275 = vmatpush1.msra.mxu0 %v4887
    %5276 = vmatprep.subr.mxu0 %v4896
    %5277 = vmatpush1.msra.mxu0 %v4895
    %5278 = vmatprep.subr.mxu0 %v4904
    %5279 = vmatpush1.msra.mxu0 %v4903
    %5280 = vmatprep.subr.mxu0 %v4912
    %5281 = vmatpush1.msra.mxu0 %v4911
    %5282 = vmatprep.subr.mxu0 %v4920
    %5283 = vmatpush1.msra.mxu0 %v4919
    %5284 = vmatprep.subr.mxu0 %v4928
    %5285 = vmatpush1.msra.mxu0 %v4927
    %5286 = vmatprep.subr.mxu0 %v4936
    %5287 = vmatpush1.msra.mxu0 %v4935
    %5288 = vmatprep.subr.mxu0 %v4944
    %5289 = vmatpush1.msra.mxu0 %v4943
    %5290 = vmatprep.subr.mxu0 %v4952
    %5291 = vmatpush1.msra.mxu0 %v4951
    %5292 = vmatprep.subr.mxu0 %v4960
    %5293 = vmatpush1.msra.mxu0 %v4959
    %5294 = vmatprep.subr.mxu0 %v4968
    %5295 = vmatpush1.msra.mxu0 %v4967
    %5296 = vmatprep.subr.mxu0 %v4976
    %5297 = vmatpush1.msra.mxu0 %v4975
    %5298 = vmatprep.subr.mxu0 %v4984
    %5299 = vmatpush1.msra.mxu0 %v4983
    %5300 = vmatprep.subr.mxu0 %v4992
    %5301 = vmatpush1.msra.mxu0 %v4991
    %5302 = vmatprep.subr.mxu0 %v5000
    %5303 = vmatpush1.msra.mxu0 %v4999
    %5304 = vmatprep.subr.mxu0 %v5008
    %5305 = vmatpush1.msra.mxu0 %v5007
    %5306 = vmatprep.subr.mxu0 %v5016
    %5307 = vmatpush1.msra.mxu0 %v5015
    %5308 = vmatprep.subr.mxu0 %v5024
    %5309 = vmatpush1.msra.mxu0 %v5023
    %5310 = vmatprep.subr.mxu0 %v5032
    %5311 = vmatpush1.msra.mxu0 %v5031
    %5312 = vmatprep.mubr.f32.mxu0 %v5033
    %5313 = vmatmul.mubr.f32.gmra.mrb[0].mxu0 %v4761
    %v5314 = vpop.f32.mrb[0].mxu0
    %v5315 = vadd.f32 0.0, %v5314
    %v5316 = vpop.f32.mrb[0].mxu0
    %v5317 = vadd.f32 0.0, %v5316
    %5318 = vdwg.mxu0
    %v5319 = vld [vmem:[#allocation7] sm:$0xff]
    %v5320 = vld [vmem:[#allocation7 + $0x8] sm:$0xff]
    %v5321 = vld [vmem:[#allocation7 + $0x10] sm:$0xff]
    %v5322 = vld [vmem:[#allocation7 + $0x18] sm:$0xff]
    %v5323 = vld [vmem:[#allocation7 + $0x20] sm:$0xff]
    %v5324 = vld [vmem:[#allocation7 + $0x28] sm:$0xff]
    %v5325 = vld [vmem:[#allocation7 + $0x30] sm:$0xff]
    %v5326 = vld [vmem:[#allocation7 + $0x38] sm:$0xff]
    %v5327 = vld [vmem:[#allocation7 + $0x40] sm:$0xff]
    %v5328 = vld [vmem:[#allocation7 + $0x48] sm:$0xff]
    %v5329 = vld [vmem:[#allocation7 + $0x50] sm:$0xff]
    %v5330 = vld [vmem:[#allocation7 + $0x58] sm:$0xff]
    %v5331 = vld [vmem:[#allocation7 + $0x60] sm:$0xff]
    %v5332 = vld [vmem:[#allocation7 + $0x68] sm:$0xff]
    %v5333 = vld [vmem:[#allocation7 + $0x70] sm:$0xff]
    %v5334 = vld [vmem:[#allocation7 + $0x78] sm:$0xff]
    %v5335 = vld [vmem:[#allocation7 + $0x80] sm:$0xff]
    %v5336 = vld [vmem:[#allocation7 + $0x88] sm:$0xff]
    %v5337 = vld [vmem:[#allocation7 + $0x90] sm:$0xff]
    %v5338 = vld [vmem:[#allocation7 + $0x98] sm:$0xff]
    %v5339 = vld [vmem:[#allocation7 + $0xa0] sm:$0xff]
    %v5340 = vld [vmem:[#allocation7 + $0xa8] sm:$0xff]
    %v5341 = vld [vmem:[#allocation7 + $0xb0] sm:$0xff]
    %v5342 = vld [vmem:[#allocation7 + $0xb8] sm:$0xff]
    %v5343 = vld [vmem:[#allocation7 + $0xc0] sm:$0xff]
    %v5344 = vld [vmem:[#allocation7 + $0xc8] sm:$0xff]
    %v5345 = vld [vmem:[#allocation7 + $0xd0] sm:$0xff]
    %v5346 = vld [vmem:[#allocation7 + $0xd8] sm:$0xff]
    %v5347 = vld [vmem:[#allocation7 + $0xe0] sm:$0xff]
    %v5348 = vld [vmem:[#allocation7 + $0xe8] sm:$0xff]
    %v5349 = vld [vmem:[#allocation7 + $0xf0] sm:$0xff]
    %v5350 = vld [vmem:[#allocation7 + $0xf8] sm:$0xff]
    %v5351 = vld [vmem:[#allocation7 + $0x100] sm:$0xff]
    %v5352 = vld [vmem:[#allocation7 + $0x108] sm:$0xff]
    %v5353 = vld [vmem:[#allocation7 + $0x110] sm:$0xff]
    %v5354 = vld [vmem:[#allocation7 + $0x118] sm:$0xff]
    %v5355 = vld [vmem:[#allocation7 + $0x120] sm:$0xff]
    %v5356 = vld [vmem:[#allocation7 + $0x128] sm:$0xff]
    %v5357 = vld [vmem:[#allocation7 + $0x130] sm:$0xff]
    %v5358 = vld [vmem:[#allocation7 + $0x138] sm:$0xff]
    %v5359 = vld [vmem:[#allocation7 + $0x140] sm:$0xff]
    %v5360 = vld [vmem:[#allocation7 + $0x148] sm:$0xff]
    %v5361 = vld [vmem:[#allocation7 + $0x150] sm:$0xff]
    %v5362 = vld [vmem:[#allocation7 + $0x158] sm:$0xff]
    %v5363 = vld [vmem:[#allocation7 + $0x160] sm:$0xff]
    %v5364 = vld [vmem:[#allocation7 + $0x168] sm:$0xff]
    %v5365 = vld [vmem:[#allocation7 + $0x170] sm:$0xff]
    %v5366 = vld [vmem:[#allocation7 + $0x178] sm:$0xff]
    %v5367 = vld [vmem:[#allocation7 + $0x180] sm:$0xff]
    %v5368 = vld [vmem:[#allocation7 + $0x188] sm:$0xff]
    %v5369 = vld [vmem:[#allocation7 + $0x190] sm:$0xff]
    %v5370 = vld [vmem:[#allocation7 + $0x198] sm:$0xff]
    %v5371 = vld [vmem:[#allocation7 + $0x1a0] sm:$0xff]
    %v5372 = vld [vmem:[#allocation7 + $0x1a8] sm:$0xff]
    %v5373 = vld [vmem:[#allocation7 + $0x1b0] sm:$0xff]
    %v5374 = vld [vmem:[#allocation7 + $0x1b8] sm:$0xff]
    %v5375 = vld [vmem:[#allocation7 + $0x1c0] sm:$0xff]
    %v5376 = vld [vmem:[#allocation7 + $0x1c8] sm:$0xff]
    %v5377 = vld [vmem:[#allocation7 + $0x1d0] sm:$0xff]
    %v5378 = vld [vmem:[#allocation7 + $0x1d8] sm:$0xff]
    %v5379 = vld [vmem:[#allocation7 + $0x1e0] sm:$0xff]
    %v5380 = vld [vmem:[#allocation7 + $0x1e8] sm:$0xff]
    %v5381 = vld [vmem:[#allocation7 + $0x1f0] sm:$0xff]
    %v5382 = vld [vmem:[#allocation7 + $0x1f8] sm:$0xff]
    %v5383 = vld [vmem:[#allocation7 + $0x200] sm:$0xff]
    %v5384 = vld [vmem:[#allocation7 + $0x208] sm:$0xff]
    %v5385 = vld [vmem:[#allocation7 + $0x210] sm:$0xff]
    %v5386 = vld [vmem:[#allocation7 + $0x218] sm:$0xff]
    %v5387 = vld [vmem:[#allocation7 + $0x220] sm:$0xff]
    %v5388 = vld [vmem:[#allocation7 + $0x228] sm:$0xff]
    %v5389 = vld [vmem:[#allocation7 + $0x230] sm:$0xff]
    %v5390 = vld [vmem:[#allocation7 + $0x238] sm:$0xff]
    %v5391 = vld [vmem:[#allocation7 + $0x240] sm:$0xff]
    %v5392 = vld [vmem:[#allocation7 + $0x248] sm:$0xff]
    %v5393 = vld [vmem:[#allocation7 + $0x250] sm:$0xff]
    %v5394 = vld [vmem:[#allocation7 + $0x258] sm:$0xff]
    %v5395 = vld [vmem:[#allocation7 + $0x260] sm:$0xff]
    %v5396 = vld [vmem:[#allocation7 + $0x268] sm:$0xff]
    %v5397 = vld [vmem:[#allocation7 + $0x270] sm:$0xff]
    %v5398 = vld [vmem:[#allocation7 + $0x278] sm:$0xff]
    %v5399 = vld [vmem:[#allocation7 + $0x280] sm:$0xff]
    %v5400 = vld [vmem:[#allocation7 + $0x288] sm:$0xff]
    %v5401 = vld [vmem:[#allocation7 + $0x290] sm:$0xff]
    %v5402 = vld [vmem:[#allocation7 + $0x298] sm:$0xff]
    %v5403 = vld [vmem:[#allocation7 + $0x2a0] sm:$0xff]
    %v5404 = vld [vmem:[#allocation7 + $0x2a8] sm:$0xff]
    %v5405 = vld [vmem:[#allocation7 + $0x2b0] sm:$0xff]
    %v5406 = vld [vmem:[#allocation7 + $0x2b8] sm:$0xff]
    %v5407 = vld [vmem:[#allocation7 + $0x2c0] sm:$0xff]
    %v5408 = vld [vmem:[#allocation7 + $0x2c8] sm:$0xff]
    %v5409 = vld [vmem:[#allocation7 + $0x2d0] sm:$0xff]
    %v5410 = vld [vmem:[#allocation7 + $0x2d8] sm:$0xff]
    %v5411 = vld [vmem:[#allocation7 + $0x2e0] sm:$0xff]
    %v5412 = vld [vmem:[#allocation7 + $0x2e8] sm:$0xff]
    %v5413 = vld [vmem:[#allocation7 + $0x2f0] sm:$0xff]
    %v5414 = vld [vmem:[#allocation7 + $0x2f8] sm:$0xff]
    %v5415 = vld [vmem:[#allocation7 + $0x300] sm:$0xff]
    %v5416 = vld [vmem:[#allocation7 + $0x308] sm:$0xff]
    %v5417 = vld [vmem:[#allocation7 + $0x310] sm:$0xff]
    %v5418 = vld [vmem:[#allocation7 + $0x318] sm:$0xff]
    %v5419 = vld [vmem:[#allocation7 + $0x320] sm:$0xff]
    %v5420 = vld [vmem:[#allocation7 + $0x328] sm:$0xff]
    %v5421 = vld [vmem:[#allocation7 + $0x330] sm:$0xff]
    %v5422 = vld [vmem:[#allocation7 + $0x338] sm:$0xff]
    %v5423 = vld [vmem:[#allocation7 + $0x340] sm:$0xff]
    %v5424 = vld [vmem:[#allocation7 + $0x348] sm:$0xff]
    %v5425 = vld [vmem:[#allocation7 + $0x350] sm:$0xff]
    %v5426 = vld [vmem:[#allocation7 + $0x358] sm:$0xff]
    %v5427 = vld [vmem:[#allocation7 + $0x360] sm:$0xff]
    %v5428 = vld [vmem:[#allocation7 + $0x368] sm:$0xff]
    %v5429 = vld [vmem:[#allocation7 + $0x370] sm:$0xff]
    %v5430 = vld [vmem:[#allocation7 + $0x378] sm:$0xff]
    %v5431 = vld [vmem:[#allocation7 + $0x380] sm:$0xff]
    %v5432 = vld [vmem:[#allocation7 + $0x388] sm:$0xff]
    %v5433 = vld [vmem:[#allocation7 + $0x390] sm:$0xff]
    %v5434 = vld [vmem:[#allocation7 + $0x398] sm:$0xff]
    %v5435 = vld [vmem:[#allocation7 + $0x3a0] sm:$0xff]
    %v5436 = vld [vmem:[#allocation7 + $0x3a8] sm:$0xff]
    %v5437 = vld [vmem:[#allocation7 + $0x3b0] sm:$0xff]
    %v5438 = vld [vmem:[#allocation7 + $0x3b8] sm:$0xff]
    %v5439 = vld [vmem:[#allocation7 + $0x3c0] sm:$0xff]
    %v5440 = vld [vmem:[#allocation7 + $0x3c8] sm:$0xff]
    %v5441 = vld [vmem:[#allocation7 + $0x3d0] sm:$0xff]
    %v5442 = vld [vmem:[#allocation7 + $0x3d8] sm:$0xff]
    %v5443 = vld [vmem:[#allocation7 + $0x3e0] sm:$0xff]
    %v5444 = vld [vmem:[#allocation7 + $0x3e8] sm:$0xff]
    %v5445 = vld [vmem:[#allocation7 + $0x3f0] sm:$0xff]
    %v5446 = vld [vmem:[#allocation7 + $0x3f8] sm:$0xff]
    %v5447 = vld [vmem:[#allocation7 + $0x400] sm:$0xff]
    %v5448 = vld [vmem:[#allocation7 + $0x408] sm:$0xff]
    %v5449 = vld [vmem:[#allocation7 + $0x410] sm:$0xff]
    %v5450 = vld [vmem:[#allocation7 + $0x418] sm:$0xff]
    %v5451 = vld [vmem:[#allocation7 + $0x420] sm:$0xff]
    %v5452 = vld [vmem:[#allocation7 + $0x428] sm:$0xff]
    %v5453 = vld [vmem:[#allocation7 + $0x430] sm:$0xff]
    %v5454 = vld [vmem:[#allocation7 + $0x438] sm:$0xff]
    %v5455 = vld [vmem:[#allocation7 + $0x440] sm:$0xff]
    %v5456 = vld [vmem:[#allocation7 + $0x448] sm:$0xff]
    %v5457 = vld [vmem:[#allocation7 + $0x450] sm:$0xff]
    %v5458 = vld [vmem:[#allocation7 + $0x458] sm:$0xff]
    %v5459 = vld [vmem:[#allocation7 + $0x460] sm:$0xff]
    %v5460 = vld [vmem:[#allocation7 + $0x468] sm:$0xff]
    %v5461 = vld [vmem:[#allocation7 + $0x470] sm:$0xff]
    %v5462 = vld [vmem:[#allocation7 + $0x478] sm:$0xff]
    %v5463 = vld [vmem:[#allocation7 + $0x480] sm:$0xff]
    %v5464 = vld [vmem:[#allocation7 + $0x488] sm:$0xff]
    %v5465 = vld [vmem:[#allocation7 + $0x490] sm:$0xff]
    %v5466 = vld [vmem:[#allocation7 + $0x498] sm:$0xff]
    %v5467 = vld [vmem:[#allocation7 + $0x4a0] sm:$0xff]
    %v5468 = vld [vmem:[#allocation7 + $0x4a8] sm:$0xff]
    %v5469 = vld [vmem:[#allocation7 + $0x4b0] sm:$0xff]
    %v5470 = vld [vmem:[#allocation7 + $0x4b8] sm:$0xff]
    %v5471 = vld [vmem:[#allocation7 + $0x4c0] sm:$0xff]
    %v5472 = vld [vmem:[#allocation7 + $0x4c8] sm:$0xff]
    %v5473 = vld [vmem:[#allocation7 + $0x4d0] sm:$0xff]
    %v5474 = vld [vmem:[#allocation7 + $0x4d8] sm:$0xff]
    %v5475 = vld [vmem:[#allocation7 + $0x4e0] sm:$0xff]
    %v5476 = vld [vmem:[#allocation7 + $0x4e8] sm:$0xff]
    %v5477 = vld [vmem:[#allocation7 + $0x4f0] sm:$0xff]
    %v5478 = vld [vmem:[#allocation7 + $0x4f8] sm:$0xff]
    %v5479 = vld [vmem:[#allocation7 + $0x500] sm:$0xff]
    %v5480 = vld [vmem:[#allocation7 + $0x508] sm:$0xff]
    %v5481 = vld [vmem:[#allocation7 + $0x510] sm:$0xff]
    %v5482 = vld [vmem:[#allocation7 + $0x518] sm:$0xff]
    %v5483 = vld [vmem:[#allocation7 + $0x520] sm:$0xff]
    %v5484 = vld [vmem:[#allocation7 + $0x528] sm:$0xff]
    %v5485 = vld [vmem:[#allocation7 + $0x530] sm:$0xff]
    %v5486 = vld [vmem:[#allocation7 + $0x538] sm:$0xff]
    %v5487 = vld [vmem:[#allocation7 + $0x540] sm:$0xff]
    %v5488 = vld [vmem:[#allocation7 + $0x548] sm:$0xff]
    %v5489 = vld [vmem:[#allocation7 + $0x550] sm:$0xff]
    %v5490 = vld [vmem:[#allocation7 + $0x558] sm:$0xff]
    %v5491 = vld [vmem:[#allocation7 + $0x560] sm:$0xff]
    %v5492 = vld [vmem:[#allocation7 + $0x568] sm:$0xff]
    %v5493 = vld [vmem:[#allocation7 + $0x570] sm:$0xff]
    %v5494 = vld [vmem:[#allocation7 + $0x578] sm:$0xff]
    %v5495 = vld [vmem:[#allocation7 + $0x580] sm:$0xff]
    %v5496 = vld [vmem:[#allocation7 + $0x588] sm:$0xff]
    %v5497 = vld [vmem:[#allocation7 + $0x590] sm:$0xff]
    %v5498 = vld [vmem:[#allocation7 + $0x598] sm:$0xff]
    %v5499 = vld [vmem:[#allocation7 + $0x5a0] sm:$0xff]
    %v5500 = vld [vmem:[#allocation7 + $0x5a8] sm:$0xff]
    %v5501 = vld [vmem:[#allocation7 + $0x5b0] sm:$0xff]
    %v5502 = vld [vmem:[#allocation7 + $0x5b8] sm:$0xff]
    %v5503 = vld [vmem:[#allocation7 + $0x5c0] sm:$0xff]
    %v5504 = vld [vmem:[#allocation7 + $0x5c8] sm:$0xff]
    %v5505 = vld [vmem:[#allocation7 + $0x5d0] sm:$0xff]
    %v5506 = vld [vmem:[#allocation7 + $0x5d8] sm:$0xff]
    %v5507 = vld [vmem:[#allocation7 + $0x5e0] sm:$0xff]
    %v5508 = vld [vmem:[#allocation7 + $0x5e8] sm:$0xff]
    %v5509 = vld [vmem:[#allocation7 + $0x5f0] sm:$0xff]
    %v5510 = vld [vmem:[#allocation7 + $0x5f8] sm:$0xff]
    %v5511 = vld [vmem:[#allocation7 + $0x600] sm:$0xff]
    %v5512 = vld [vmem:[#allocation7 + $0x608] sm:$0xff]
    %v5513 = vld [vmem:[#allocation7 + $0x610] sm:$0xff]
    %v5514 = vld [vmem:[#allocation7 + $0x618] sm:$0xff]
    %v5515 = vld [vmem:[#allocation7 + $0x620] sm:$0xff]
    %v5516 = vld [vmem:[#allocation7 + $0x628] sm:$0xff]
    %v5517 = vld [vmem:[#allocation7 + $0x630] sm:$0xff]
    %v5518 = vld [vmem:[#allocation7 + $0x638] sm:$0xff]
    %v5519 = vld [vmem:[#allocation7 + $0x640] sm:$0xff]
    %v5520 = vld [vmem:[#allocation7 + $0x648] sm:$0xff]
    %v5521 = vld [vmem:[#allocation7 + $0x650] sm:$0xff]
    %v5522 = vld [vmem:[#allocation7 + $0x658] sm:$0xff]
    %v5523 = vld [vmem:[#allocation7 + $0x660] sm:$0xff]
    %v5524 = vld [vmem:[#allocation7 + $0x668] sm:$0xff]
    %v5525 = vld [vmem:[#allocation7 + $0x670] sm:$0xff]
    %v5526 = vld [vmem:[#allocation7 + $0x678] sm:$0xff]
    %v5527 = vld [vmem:[#allocation7 + $0x680] sm:$0xff]
    %v5528 = vld [vmem:[#allocation7 + $0x688] sm:$0xff]
    %v5529 = vld [vmem:[#allocation7 + $0x690] sm:$0xff]
    %v5530 = vld [vmem:[#allocation7 + $0x698] sm:$0xff]
    %v5531 = vld [vmem:[#allocation7 + $0x6a0] sm:$0xff]
    %v5532 = vld [vmem:[#allocation7 + $0x6a8] sm:$0xff]
    %v5533 = vld [vmem:[#allocation7 + $0x6b0] sm:$0xff]
    %v5534 = vld [vmem:[#allocation7 + $0x6b8] sm:$0xff]
    %v5535 = vld [vmem:[#allocation7 + $0x6c0] sm:$0xff]
    %v5536 = vld [vmem:[#allocation7 + $0x6c8] sm:$0xff]
    %v5537 = vld [vmem:[#allocation7 + $0x6d0] sm:$0xff]
    %v5538 = vld [vmem:[#allocation7 + $0x6d8] sm:$0xff]
    %v5539 = vld [vmem:[#allocation7 + $0x6e0] sm:$0xff]
    %v5540 = vld [vmem:[#allocation7 + $0x6e8] sm:$0xff]
    %v5541 = vld [vmem:[#allocation7 + $0x6f0] sm:$0xff]
    %v5542 = vld [vmem:[#allocation7 + $0x6f8] sm:$0xff]
    %v5543 = vld [vmem:[#allocation7 + $0x700] sm:$0xff]
    %v5544 = vld [vmem:[#allocation7 + $0x708] sm:$0xff]
    %v5545 = vld [vmem:[#allocation7 + $0x710] sm:$0xff]
    %v5546 = vld [vmem:[#allocation7 + $0x718] sm:$0xff]
    %v5547 = vld [vmem:[#allocation7 + $0x720] sm:$0xff]
    %v5548 = vld [vmem:[#allocation7 + $0x728] sm:$0xff]
    %v5549 = vld [vmem:[#allocation7 + $0x730] sm:$0xff]
    %v5550 = vld [vmem:[#allocation7 + $0x738] sm:$0xff]
    %v5551 = vld [vmem:[#allocation7 + $0x740] sm:$0xff]
    %v5552 = vld [vmem:[#allocation7 + $0x748] sm:$0xff]
    %v5553 = vld [vmem:[#allocation7 + $0x750] sm:$0xff]
    %v5554 = vld [vmem:[#allocation7 + $0x758] sm:$0xff]
    %v5555 = vld [vmem:[#allocation7 + $0x760] sm:$0xff]
    %v5556 = vld [vmem:[#allocation7 + $0x768] sm:$0xff]
    %v5557 = vld [vmem:[#allocation7 + $0x770] sm:$0xff]
    %v5558 = vld [vmem:[#allocation7 + $0x778] sm:$0xff]
    %v5559 = vld [vmem:[#allocation7 + $0x780] sm:$0xff]
    %v5560 = vld [vmem:[#allocation7 + $0x788] sm:$0xff]
    %v5561 = vld [vmem:[#allocation7 + $0x790] sm:$0xff]
    %v5562 = vld [vmem:[#allocation7 + $0x798] sm:$0xff]
    %v5563 = vld [vmem:[#allocation7 + $0x7a0] sm:$0xff]
    %v5564 = vld [vmem:[#allocation7 + $0x7a8] sm:$0xff]
    %v5565 = vld [vmem:[#allocation7 + $0x7b0] sm:$0xff]
    %v5566 = vld [vmem:[#allocation7 + $0x7b8] sm:$0xff]
    %v5567 = vld [vmem:[#allocation7 + $0x7c0] sm:$0xff]
    %v5568 = vld [vmem:[#allocation7 + $0x7c8] sm:$0xff]
    %v5569 = vld [vmem:[#allocation7 + $0x7d0] sm:$0xff]
    %v5570 = vld [vmem:[#allocation7 + $0x7d8] sm:$0xff]
    %v5571 = vld [vmem:[#allocation7 + $0x7e0] sm:$0xff]
    %v5572 = vld [vmem:[#allocation7 + $0x7e8] sm:$0xff]
    %v5573 = vld [vmem:[#allocation7 + $0x7f0] sm:$0xff]
    %v5574 = vld [vmem:[#allocation7 + $0x7f8] sm:$0xff]
    %v5575 = vrot.slane %v4761, 2
    %v5576 = vrot.slane %v5033, 2
    %5579 = vmatprep.subr.mxu0 %v5320
    %5580 = vmatpush1.msra.mxu0 %v5319
    %5581 = vmatprep.subr.mxu0 %v5328
    %5582 = vmatpush1.msra.mxu0 %v5327
    %5583 = vmatprep.subr.mxu0 %v5336
    %5584 = vmatpush1.msra.mxu0 %v5335
    %5585 = vmatprep.subr.mxu0 %v5344
    %5586 = vmatpush1.msra.mxu0 %v5343
    %5587 = vmatprep.subr.mxu0 %v5352
    %5588 = vmatpush1.msra.mxu0 %v5351
    %5589 = vmatprep.subr.mxu0 %v5360
    %5590 = vmatpush1.msra.mxu0 %v5359
    %5591 = vmatprep.subr.mxu0 %v5368
    %5592 = vmatpush1.msra.mxu0 %v5367
    %5593 = vmatprep.subr.mxu0 %v5376
    %5594 = vmatpush1.msra.mxu0 %v5375
    %5595 = vmatprep.subr.mxu0 %v5384
    %5596 = vmatpush1.msra.mxu0 %v5383
    %5597 = vmatprep.subr.mxu0 %v5392
    %5598 = vmatpush1.msra.mxu0 %v5391
    %5599 = vmatprep.subr.mxu0 %v5400
    %5600 = vmatpush1.msra.mxu0 %v5399
    %5601 = vmatprep.subr.mxu0 %v5408
    %5602 = vmatpush1.msra.mxu0 %v5407
    %5603 = vmatprep.subr.mxu0 %v5416
    %5604 = vmatpush1.msra.mxu0 %v5415
    %5605 = vmatprep.subr.mxu0 %v5424
    %5606 = vmatpush1.msra.mxu0 %v5423
    %5607 = vmatprep.subr.mxu0 %v5432
    %5608 = vmatpush1.msra.mxu0 %v5431
    %5609 = vmatprep.subr.mxu0 %v5440
    %5610 = vmatpush1.msra.mxu0 %v5439
    %5611 = vmatprep.subr.mxu0 %v5448
    %5612 = vmatpush1.msra.mxu0 %v5447
    %5613 = vmatprep.subr.mxu0 %v5456
    %5614 = vmatpush1.msra.mxu0 %v5455
    %5615 = vmatprep.subr.mxu0 %v5464
    %5616 = vmatpush1.msra.mxu0 %v5463
    %5617 = vmatprep.subr.mxu0 %v5472
    %5618 = vmatpush1.msra.mxu0 %v5471
    %5619 = vmatprep.subr.mxu0 %v5480
    %5620 = vmatpush1.msra.mxu0 %v5479
    %5621 = vmatprep.subr.mxu0 %v5488
    %5622 = vmatpush1.msra.mxu0 %v5487
    %5623 = vmatprep.subr.mxu0 %v5496
    %5624 = vmatpush1.msra.mxu0 %v5495
    %5625 = vmatprep.subr.mxu0 %v5504
    %5626 = vmatpush1.msra.mxu0 %v5503
    %5627 = vmatprep.subr.mxu0 %v5512
    %5628 = vmatpush1.msra.mxu0 %v5511
    %5629 = vmatprep.subr.mxu0 %v5520
    %5630 = vmatpush1.msra.mxu0 %v5519
    %5631 = vmatprep.subr.mxu0 %v5528
    %5632 = vmatpush1.msra.mxu0 %v5527
    %5633 = vmatprep.subr.mxu0 %v5536
    %5634 = vmatpush1.msra.mxu0 %v5535
    %5635 = vmatprep.subr.mxu0 %v5544
    %5636 = vmatpush1.msra.mxu0 %v5543
    %5637 = vmatprep.subr.mxu0 %v5552
    %5638 = vmatpush1.msra.mxu0 %v5551
    %5639 = vmatprep.subr.mxu0 %v5560
    %5640 = vmatpush1.msra.mxu0 %v5559
    %5641 = vmatprep.subr.mxu0 %v5568
    %5642 = vmatpush1.msra.mxu0 %v5567
    %5643 = vmatprep.mubr.f32.mxu0 %v5576
    %5644 = vmatmul.mubr.f32.gmra.mrb[0].mxu0 %v5575
    %v5645 = vpop.f32.mrb[0].mxu0
    %v5646 = vadd.f32 0.0, %v5645
    %v5647 = vpop.f32.mrb[0].mxu0
    %v5648 = vadd.f32 0.0, %v5647
    %5649 = vdwg.mxu0
    %5650 = vmatprep.subr.mxu0 %v5322
    %5651 = vmatpush1.msra.mxu0 %v5321
    %5652 = vmatprep.subr.mxu0 %v5330
    %5653 = vmatpush1.msra.mxu0 %v5329
    %5654 = vmatprep.subr.mxu0 %v5338
    %5655 = vmatpush1.msra.mxu0 %v5337
    %5656 = vmatprep.subr.mxu0 %v5346
    %5657 = vmatpush1.msra.mxu0 %v5345
    %5658 = vmatprep.subr.mxu0 %v5354
    %5659 = vmatpush1.msra.mxu0 %v5353
    %5660 = vmatprep.subr.mxu0 %v5362
    %5661 = vmatpush1.msra.mxu0 %v5361
    %5662 = vmatprep.subr.mxu0 %v5370
    %5663 = vmatpush1.msra.mxu0 %v5369
    %5664 = vmatprep.subr.mxu0 %v5378
    %5665 = vmatpush1.msra.mxu0 %v5377
    %5666 = vmatprep.subr.mxu0 %v5386
    %5667 = vmatpush1.msra.mxu0 %v5385
    %5668 = vmatprep.subr.mxu0 %v5394
    %5669 = vmatpush1.msra.mxu0 %v5393
    %5670 = vmatprep.subr.mxu0 %v5402
    %5671 = vmatpush1.msra.mxu0 %v5401
    %5672 = vmatprep.subr.mxu0 %v5410
    %5673 = vmatpush1.msra.mxu0 %v5409
    %5674 = vmatprep.subr.mxu0 %v5418
    %5675 = vmatpush1.msra.mxu0 %v5417
    %5676 = vmatprep.subr.mxu0 %v5426
    %5677 = vmatpush1.msra.mxu0 %v5425
    %5678 = vmatprep.subr.mxu0 %v5434
    %5679 = vmatpush1.msra.mxu0 %v5433
    %5680 = vmatprep.subr.mxu0 %v5442
    %5681 = vmatpush1.msra.mxu0 %v5441
    %5682 = vmatprep.subr.mxu0 %v5450
    %5683 = vmatpush1.msra.mxu0 %v5449
    %5684 = vmatprep.subr.mxu0 %v5458
    %5685 = vmatpush1.msra.mxu0 %v5457
    %5686 = vmatprep.subr.mxu0 %v5466
    %5687 = vmatpush1.msra.mxu0 %v5465
    %5688 = vmatprep.subr.mxu0 %v5474
    %5689 = vmatpush1.msra.mxu0 %v5473
    %5690 = vmatprep.subr.mxu0 %v5482
    %5691 = vmatpush1.msra.mxu0 %v5481
    %5692 = vmatprep.subr.mxu0 %v5490
    %5693 = vmatpush1.msra.mxu0 %v5489
    %5694 = vmatprep.subr.mxu0 %v5498
    %5695 = vmatpush1.msra.mxu0 %v5497
    %5696 = vmatprep.subr.mxu0 %v5506
    %5697 = vmatpush1.msra.mxu0 %v5505
    %5698 = vmatprep.subr.mxu0 %v5514
    %5699 = vmatpush1.msra.mxu0 %v5513
    %5700 = vmatprep.subr.mxu0 %v5522
    %5701 = vmatpush1.msra.mxu0 %v5521
    %5702 = vmatprep.subr.mxu0 %v5530
    %5703 = vmatpush1.msra.mxu0 %v5529
    %5704 = vmatprep.subr.mxu0 %v5538
    %5705 = vmatpush1.msra.mxu0 %v5537
    %5706 = vmatprep.subr.mxu0 %v5546
    %5707 = vmatpush1.msra.mxu0 %v5545
    %5708 = vmatprep.subr.mxu0 %v5554
    %5709 = vmatpush1.msra.mxu0 %v5553
    %5710 = vmatprep.subr.mxu0 %v5562
    %5711 = vmatpush1.msra.mxu0 %v5561
    %5712 = vmatprep.subr.mxu0 %v5570
    %5713 = vmatpush1.msra.mxu0 %v5569
    %5714 = vmatprep.mubr.f32.mxu0 %v5576
    %5715 = vmatmul.mubr.f32.gmra.mrb[0].mxu0 %v5575
    %v5716 = vpop.f32.mrb[0].mxu0
    %v5717 = vadd.f32 0.0, %v5716
    %v5718 = vpop.f32.mrb[0].mxu0
    %v5719 = vadd.f32 0.0, %v5718
    %5720 = vdwg.mxu0
    %5721 = vmatprep.subr.mxu0 %v5324
    %5722 = vmatpush1.msra.mxu0 %v5323
    %5723 = vmatprep.subr.mxu0 %v5332
    %5724 = vmatpush1.msra.mxu0 %v5331
    %5725 = vmatprep.subr.mxu0 %v5340
    %5726 = vmatpush1.msra.mxu0 %v5339
    %5727 = vmatprep.subr.mxu0 %v5348
    %5728 = vmatpush1.msra.mxu0 %v5347
    %5729 = vmatprep.subr.mxu0 %v5356
    %5730 = vmatpush1.msra.mxu0 %v5355
    %5731 = vmatprep.subr.mxu0 %v5364
    %5732 = vmatpush1.msra.mxu0 %v5363
    %5733 = vmatprep.subr.mxu0 %v5372
    %5734 = vmatpush1.msra.mxu0 %v5371
    %5735 = vmatprep.subr.mxu0 %v5380
    %5736 = vmatpush1.msra.mxu0 %v5379
    %5737 = vmatprep.subr.mxu0 %v5388
    %5738 = vmatpush1.msra.mxu0 %v5387
    %5739 = vmatprep.subr.mxu0 %v5396
    %5740 = vmatpush1.msra.mxu0 %v5395
    %5741 = vmatprep.subr.mxu0 %v5404
    %5742 = vmatpush1.msra.mxu0 %v5403
    %5743 = vmatprep.subr.mxu0 %v5412
    %5744 = vmatpush1.msra.mxu0 %v5411
    %5745 = vmatprep.subr.mxu0 %v5420
    %5746 = vmatpush1.msra.mxu0 %v5419
    %5747 = vmatprep.subr.mxu0 %v5428
    %5748 = vmatpush1.msra.mxu0 %v5427
    %5749 = vmatprep.subr.mxu0 %v5436
    %5750 = vmatpush1.msra.mxu0 %v5435
    %5751 = vmatprep.subr.mxu0 %v5444
    %5752 = vmatpush1.msra.mxu0 %v5443
    %5753 = vmatprep.subr.mxu0 %v5452
    %5754 = vmatpush1.msra.mxu0 %v5451
    %5755 = vmatprep.subr.mxu0 %v5460
    %5756 = vmatpush1.msra.mxu0 %v5459
    %5757 = vmatprep.subr.mxu0 %v5468
    %5758 = vmatpush1.msra.mxu0 %v5467
    %5759 = vmatprep.subr.mxu0 %v5476
    %5760 = vmatpush1.msra.mxu0 %v5475
    %5761 = vmatprep.subr.mxu0 %v5484
    %5762 = vmatpush1.msra.mxu0 %v5483
    %5763 = vmatprep.subr.mxu0 %v5492
    %5764 = vmatpush1.msra.mxu0 %v5491
    %5765 = vmatprep.subr.mxu0 %v5500
    %5766 = vmatpush1.msra.mxu0 %v5499
    %5767 = vmatprep.subr.mxu0 %v5508
    %5768 = vmatpush1.msra.mxu0 %v5507
    %5769 = vmatprep.subr.mxu0 %v5516
    %5770 = vmatpush1.msra.mxu0 %v5515
    %5771 = vmatprep.subr.mxu0 %v5524
    %5772 = vmatpush1.msra.mxu0 %v5523
    %5773 = vmatprep.subr.mxu0 %v5532
    %5774 = vmatpush1.msra.mxu0 %v5531
    %5775 = vmatprep.subr.mxu0 %v5540
    %5776 = vmatpush1.msra.mxu0 %v5539
    %5777 = vmatprep.subr.mxu0 %v5548
    %5778 = vmatpush1.msra.mxu0 %v5547
    %5779 = vmatprep.subr.mxu0 %v5556
    %5780 = vmatpush1.msra.mxu0 %v5555
    %5781 = vmatprep.subr.mxu0 %v5564
    %5782 = vmatpush1.msra.mxu0 %v5563
    %5783 = vmatprep.subr.mxu0 %v5572
    %5784 = vmatpush1.msra.mxu0 %v5571
    %5785 = vmatprep.mubr.f32.mxu0 %v5576
    %5786 = vmatmul.mubr.f32.gmra.mrb[0].mxu0 %v5575
    %v5787 = vpop.f32.mrb[0].mxu0
    %v5788 = vadd.f32 0.0, %v5787
    %v5789 = vpop.f32.mrb[0].mxu0
    %v5790 = vadd.f32 0.0, %v5789
    %5791 = vdwg.mxu0
    %5792 = vmatprep.subr.mxu0 %v5326
    %5793 = vmatpush1.msra.mxu0 %v5325
    %5794 = vmatprep.subr.mxu0 %v5334
    %5795 = vmatpush1.msra.mxu0 %v5333
    %5796 = vmatprep.subr.mxu0 %v5342
    %5797 = vmatpush1.msra.mxu0 %v5341
    %5798 = vmatprep.subr.mxu0 %v5350
    %5799 = vmatpush1.msra.mxu0 %v5349
    %5800 = vmatprep.subr.mxu0 %v5358
    %5801 = vmatpush1.msra.mxu0 %v5357
    %5802 = vmatprep.subr.mxu0 %v5366
    %5803 = vmatpush1.msra.mxu0 %v5365
    %5804 = vmatprep.subr.mxu0 %v5374
    %5805 = vmatpush1.msra.mxu0 %v5373
    %5806 = vmatprep.subr.mxu0 %v5382
    %5807 = vmatpush1.msra.mxu0 %v5381
    %5808 = vmatprep.subr.mxu0 %v5390
    %5809 = vmatpush1.msra.mxu0 %v5389
    %5810 = vmatprep.subr.mxu0 %v5398
    %5811 = vmatpush1.msra.mxu0 %v5397
    %5812 = vmatprep.subr.mxu0 %v5406
    %5813 = vmatpush1.msra.mxu0 %v5405
    %5814 = vmatprep.subr.mxu0 %v5414
    %5815 = vmatpush1.msra.mxu0 %v5413
    %5816 = vmatprep.subr.mxu0 %v5422
    %5817 = vmatpush1.msra.mxu0 %v5421
    %5818 = vmatprep.subr.mxu0 %v5430
    %5819 = vmatpush1.msra.mxu0 %v5429
    %5820 = vmatprep.subr.mxu0 %v5438
    %5821 = vmatpush1.msra.mxu0 %v5437
    %5822 = vmatprep.subr.mxu0 %v5446
    %5823 = vmatpush1.msra.mxu0 %v5445
    %5824 = vmatprep.subr.mxu0 %v5454
    %5825 = vmatpush1.msra.mxu0 %v5453
    %5826 = vmatprep.subr.mxu0 %v5462
    %5827 = vmatpush1.msra.mxu0 %v5461
    %5828 = vmatprep.subr.mxu0 %v5470
    %5829 = vmatpush1.msra.mxu0 %v5469
    %5830 = vmatprep.subr.mxu0 %v5478
    %5831 = vmatpush1.msra.mxu0 %v5477
    %5832 = vmatprep.subr.mxu0 %v5486
    %5833 = vmatpush1.msra.mxu0 %v5485
    %5834 = vmatprep.subr.mxu0 %v5494
    %5835 = vmatpush1.msra.mxu0 %v5493
    %5836 = vmatprep.subr.mxu0 %v5502
    %5837 = vmatpush1.msra.mxu0 %v5501
    %5838 = vmatprep.subr.mxu0 %v5510
    %5839 = vmatpush1.msra.mxu0 %v5509
    %5840 = vmatprep.subr.mxu0 %v5518
    %5841 = vmatpush1.msra.mxu0 %v5517
    %5842 = vmatprep.subr.mxu0 %v5526
    %5843 = vmatpush1.msra.mxu0 %v5525
    %5844 = vmatprep.subr.mxu0 %v5534
    %5845 = vmatpush1.msra.mxu0 %v5533
    %5846 = vmatprep.subr.mxu0 %v5542
    %5847 = vmatpush1.msra.mxu0 %v5541
    %5848 = vmatprep.subr.mxu0 %v5550
    %5849 = vmatpush1.msra.mxu0 %v5549
    %5850 = vmatprep.subr.mxu0 %v5558
    %5851 = vmatpush1.msra.mxu0 %v5557
    %5852 = vmatprep.subr.mxu0 %v5566
    %5853 = vmatpush1.msra.mxu0 %v5565
    %5854 = vmatprep.subr.mxu0 %v5574
    %5855 = vmatpush1.msra.mxu0 %v5573
    %5856 = vmatprep.mubr.f32.mxu0 %v5576
    %5857 = vmatmul.mubr.f32.gmra.mrb[0].mxu0 %v5575
    %v5858 = vpop.f32.mrb[0].mxu0
    %v5859 = vadd.f32 0.0, %v5858
    %v5860 = vpop.f32.mrb[0].mxu0
    %v5861 = vadd.f32 0.0, %v5860
    %5862 = vdwg.mxu0
    %s5863 = scalar_lea.vmem [#allocation2], 128
    %v5864 = vld [vmem:[%s5863] sm:$0xff]
    %v5865 = vld [vmem:[%s5863 + $0x8] sm:$0xff]
    %v5866 = vld [vmem:[%s5863 + $0x10] sm:$0xff]
    %v5867 = vld [vmem:[%s5863 + $0x18] sm:$0xff]
    %v5876 = vrot.slane %v5646, 6
    %v5877 = vrot.slane %v5648, 6
    %v5878 = vrot.slane %v5717, 6
    %v5879 = vrot.slane %v5719, 6
    %v5880 = vrot.slane %v5788, 6
    %v5881 = vrot.slane %v5790, 6
    %v5882 = vrot.slane %v5859, 6
    %v5883 = vrot.slane %v5861, 6
    %v5892 = vsel %vm1164, %v5102, %v5876
    %v5893 = vsel %vm1164, %v5104, %v5877
    %v5894 = vsel %vm1164, %v5173, %v5878
    %v5895 = vsel %vm1164, %v5175, %v5879
    %v5896 = vsel %vm1164, %v5244, %v5880
    %v5897 = vsel %vm1164, %v5246, %v5881
    %v5898 = vsel %vm1164, %v5315, %v5882
    %v5899 = vsel %vm1164, %v5317, %v5883
    %v5908 = vcombine.low %v5892, %v5893
    %v5909 = vcombine.low %v5894, %v5895
    %v5910 = vcombine.low %v5896, %v5897
    %v5911 = vcombine.low %v5898, %v5899
    %v5916 = vadd.f32 %v5864, %v5908
    %v5917 = vadd.f32 %v5865, %v5909
    %v5918 = vadd.f32 %v5866, %v5910
    %v5919 = vadd.f32 %v5867, %v5911
    %v5920 = vxor.u32 %v5916, 2147483648
    %v5921 = vxor.u32 %v5917, 2147483648
    %v5922 = vxor.u32 %v5918, 2147483648
    %v5923 = vmul.f32 %v5920, 1.442695
    %v5924 = vpow.pop %v5923
    %v5925 = vmul.f32 %v5921, 1.442695
    %v5926 = vpow.pop %v5925
    %v5927 = vmul.f32 %v5922, 1.442695
    %v5928 = vpow.pop %v5927
    %v5929 = vadd.f32 %v5924, 1.0
    %v5930 = vadd.f32 %v5926, 1.0
    %v5931 = vadd.f32 %v5928, 1.0
    %v5932 = vrcp.pop %v5929
    %v5933 = vmul.f32 1.0, %v5932
    %v5934 = vrcp.pop %v5930
    %v5935 = vmul.f32 1.0, %v5934
    %v5936 = vrcp.pop %v5931
    %v5937 = vmul.f32 1.0, %v5936
    %v5938 = vtanh.pop %v5919
    %v5939 = vmul.f32 %v5935, %v4759
    %v5940 = vmul.f32 %v5933, %v5938
    %v5941 = vadd.f32 %v5939, %v5940
    %v5942 = vtanh.pop %v5941
    %v5943 = vmul.f32 %v5937, %v5942
    %v5946 = vunpack.c.l.s4 1983009808
    %v5947 = vunpack.c.0.s8 %v5946
    %v5948 = vlaneseq
    %v5949 = vshrl.u32 %v5948, 7
    %v5950 = vsub.s32 %v5947, %v5949
    %v5951 = vrot.slane %v5943, %v5950
    %5953 = vst [vmem:[%s4775] sm:$0xf] %v5951
    %v5954 = vcombine.high %v5951, %v5951
    %5956 = vst [vmem:[%s4771 + $0x4] sm:$0xf] %v5954
    %v5957 = vld [vmem:[#allocation5] sm:$0xff]
    %v5958 = vld [vmem:[#allocation5 + $0x8] sm:$0xff]
    %v5959 = vld [vmem:[#allocation5 + $0x10] sm:$0xff]
    %v5960 = vld [vmem:[#allocation5 + $0x18] sm:$0xff]
    %v5961 = vld [vmem:[#allocation5 + $0x20] sm:$0xff]
    %v5962 = vld [vmem:[#allocation5 + $0x28] sm:$0xff]
    %v5963 = vld [vmem:[#allocation5 + $0x30] sm:$0xff]
    %v5964 = vld [vmem:[#allocation5 + $0x38] sm:$0xff]
    %v5965 = vld [vmem:[#allocation5 + $0x40] sm:$0xff]
    %v5966 = vld [vmem:[#allocation5 + $0x48] sm:$0xff]
    %v5967 = vld [vmem:[#allocation5 + $0x50] sm:$0xff]
    %v5968 = vld [vmem:[#allocation5 + $0x58] sm:$0xff]
    %v5969 = vld [vmem:[#allocation5 + $0x60] sm:$0xff]
    %v5970 = vld [vmem:[#allocation5 + $0x68] sm:$0xff]
    %v5971 = vld [vmem:[#allocation5 + $0x70] sm:$0xff]
    %v5972 = vld [vmem:[#allocation5 + $0x78] sm:$0xff]
    %v5973 = vld [vmem:[#allocation5 + $0x80] sm:$0xff]
    %v5974 = vld [vmem:[#allocation5 + $0x88] sm:$0xff]
    %v5975 = vld [vmem:[#allocation5 + $0x90] sm:$0xff]
    %v5976 = vld [vmem:[#allocation5 + $0x98] sm:$0xff]
    %v5977 = vld [vmem:[#allocation5 + $0xa0] sm:$0xff]
    %v5978 = vld [vmem:[#allocation5 + $0xa8] sm:$0xff]
    %v5979 = vld [vmem:[#allocation5 + $0xb0] sm:$0xff]
    %v5980 = vld [vmem:[#allocation5 + $0xb8] sm:$0xff]
    %v5981 = vld [vmem:[#allocation5 + $0xc0] sm:$0xff]
    %v5982 = vld [vmem:[#allocation5 + $0xc8] sm:$0xff]
    %v5983 = vld [vmem:[#allocation5 + $0xd0] sm:$0xff]
    %v5984 = vld [vmem:[#allocation5 + $0xd8] sm:$0xff]
    %v5985 = vld [vmem:[#allocation5 + $0xe0] sm:$0xff]
    %v5986 = vld [vmem:[#allocation5 + $0xe8] sm:$0xff]
    %v5987 = vld [vmem:[#allocation5 + $0xf0] sm:$0xff]
    %v5988 = vld [vmem:[#allocation5 + $0xf8] sm:$0xff]
    %v5989 = vld [vmem:[#allocation5 + $0x100] sm:$0xff]
    %v5990 = vld [vmem:[#allocation5 + $0x108] sm:$0xff]
    %v5991 = vld [vmem:[#allocation5 + $0x110] sm:$0xff]
    %v5992 = vld [vmem:[#allocation5 + $0x118] sm:$0xff]
    %v5993 = vld [vmem:[#allocation5 + $0x120] sm:$0xff]
    %v5994 = vld [vmem:[#allocation5 + $0x128] sm:$0xff]
    %v5995 = vld [vmem:[#allocation5 + $0x130] sm:$0xff]
    %v5996 = vld [vmem:[#allocation5 + $0x138] sm:$0xff]
    %v5997 = vld [vmem:[#allocation5 + $0x140] sm:$0xff]
    %v5998 = vld [vmem:[#allocation5 + $0x148] sm:$0xff]
    %v5999 = vld [vmem:[#allocation5 + $0x150] sm:$0xff]
    %v6000 = vld [vmem:[#allocation5 + $0x158] sm:$0xff]
    %v6001 = vld [vmem:[#allocation5 + $0x160] sm:$0xff]
    %v6002 = vld [vmem:[#allocation5 + $0x168] sm:$0xff]
    %v6003 = vld [vmem:[#allocation5 + $0x170] sm:$0xff]
    %v6004 = vld [vmem:[#allocation5 + $0x178] sm:$0xff]
    %v6005 = vld [vmem:[#allocation5 + $0x180] sm:$0xff]
    %v6006 = vld [vmem:[#allocation5 + $0x188] sm:$0xff]
    %v6007 = vld [vmem:[#allocation5 + $0x190] sm:$0xff]
    %v6008 = vld [vmem:[#allocation5 + $0x198] sm:$0xff]
    %v6009 = vld [vmem:[#allocation5 + $0x1a0] sm:$0xff]
    %v6010 = vld [vmem:[#allocation5 + $0x1a8] sm:$0xff]
    %v6011 = vld [vmem:[#allocation5 + $0x1b0] sm:$0xff]
    %v6012 = vld [vmem:[#allocation5 + $0x1b8] sm:$0xff]
    %v6013 = vld [vmem:[#allocation5 + $0x1c0] sm:$0xff]
    %v6014 = vld [vmem:[#allocation5 + $0x1c8] sm:$0xff]
    %v6015 = vld [vmem:[#allocation5 + $0x1d0] sm:$0xff]
    %v6016 = vld [vmem:[#allocation5 + $0x1d8] sm:$0xff]
    %v6017 = vld [vmem:[#allocation5 + $0x1e0] sm:$0xff]
    %v6018 = vld [vmem:[#allocation5 + $0x1e8] sm:$0xff]
    %v6019 = vld [vmem:[#allocation5 + $0x1f0] sm:$0xff]
    %v6020 = vld [vmem:[#allocation5 + $0x1f8] sm:$0xff]
    %v6021 = vld [vmem:[#allocation5 + $0x200] sm:$0xff]
    %v6022 = vld [vmem:[#allocation5 + $0x208] sm:$0xff]
    %v6023 = vld [vmem:[#allocation5 + $0x210] sm:$0xff]
    %v6024 = vld [vmem:[#allocation5 + $0x218] sm:$0xff]
    %v6025 = vld [vmem:[#allocation5 + $0x220] sm:$0xff]
    %v6026 = vld [vmem:[#allocation5 + $0x228] sm:$0xff]
    %v6027 = vld [vmem:[#allocation5 + $0x230] sm:$0xff]
    %v6028 = vld [vmem:[#allocation5 + $0x238] sm:$0xff]
    %v6029 = vld [vmem:[#allocation5 + $0x240] sm:$0xff]
    %v6030 = vld [vmem:[#allocation5 + $0x248] sm:$0xff]
    %v6031 = vld [vmem:[#allocation5 + $0x250] sm:$0xff]
    %v6032 = vld [vmem:[#allocation5 + $0x258] sm:$0xff]
    %v6033 = vld [vmem:[#allocation5 + $0x260] sm:$0xff]
    %v6034 = vld [vmem:[#allocation5 + $0x268] sm:$0xff]
    %v6035 = vld [vmem:[#allocation5 + $0x270] sm:$0xff]
    %v6036 = vld [vmem:[#allocation5 + $0x278] sm:$0xff]
    %v6037 = vld [vmem:[#allocation5 + $0x280] sm:$0xff]
    %v6038 = vld [vmem:[#allocation5 + $0x288] sm:$0xff]
    %v6039 = vld [vmem:[#allocation5 + $0x290] sm:$0xff]
    %v6040 = vld [vmem:[#allocation5 + $0x298] sm:$0xff]
    %v6041 = vld [vmem:[#allocation5 + $0x2a0] sm:$0xff]
    %v6042 = vld [vmem:[#allocation5 + $0x2a8] sm:$0xff]
    %v6043 = vld [vmem:[#allocation5 + $0x2b0] sm:$0xff]
    %v6044 = vld [vmem:[#allocation5 + $0x2b8] sm:$0xff]
    %v6045 = vld [vmem:[#allocation5 + $0x2c0] sm:$0xff]
    %v6046 = vld [vmem:[#allocation5 + $0x2c8] sm:$0xff]
    %v6047 = vld [vmem:[#allocation5 + $0x2d0] sm:$0xff]
    %v6048 = vld [vmem:[#allocation5 + $0x2d8] sm:$0xff]
    %v6049 = vld [vmem:[#allocation5 + $0x2e0] sm:$0xff]
    %v6050 = vld [vmem:[#allocation5 + $0x2e8] sm:$0xff]
    %v6051 = vld [vmem:[#allocation5 + $0x2f0] sm:$0xff]
    %v6052 = vld [vmem:[#allocation5 + $0x2f8] sm:$0xff]
    %v6053 = vld [vmem:[#allocation5 + $0x300] sm:$0xff]
    %v6054 = vld [vmem:[#allocation5 + $0x308] sm:$0xff]
    %v6055 = vld [vmem:[#allocation5 + $0x310] sm:$0xff]
    %v6056 = vld [vmem:[#allocation5 + $0x318] sm:$0xff]
    %v6057 = vld [vmem:[#allocation5 + $0x320] sm:$0xff]
    %v6058 = vld [vmem:[#allocation5 + $0x328] sm:$0xff]
    %v6059 = vld [vmem:[#allocation5 + $0x330] sm:$0xff]
    %v6060 = vld [vmem:[#allocation5 + $0x338] sm:$0xff]
    %v6061 = vld [vmem:[#allocation5 + $0x340] sm:$0xff]
    %v6062 = vld [vmem:[#allocation5 + $0x348] sm:$0xff]
    %v6063 = vld [vmem:[#allocation5 + $0x350] sm:$0xff]
    %v6064 = vld [vmem:[#allocation5 + $0x358] sm:$0xff]
    %v6065 = vld [vmem:[#allocation5 + $0x360] sm:$0xff]
    %v6066 = vld [vmem:[#allocation5 + $0x368] sm:$0xff]
    %v6067 = vld [vmem:[#allocation5 + $0x370] sm:$0xff]
    %v6068 = vld [vmem:[#allocation5 + $0x378] sm:$0xff]
    %v6069 = vld [vmem:[#allocation5 + $0x380] sm:$0xff]
    %v6070 = vld [vmem:[#allocation5 + $0x388] sm:$0xff]
    %v6071 = vld [vmem:[#allocation5 + $0x390] sm:$0xff]
    %v6072 = vld [vmem:[#allocation5 + $0x398] sm:$0xff]
    %v6073 = vld [vmem:[#allocation5 + $0x3a0] sm:$0xff]
    %v6074 = vld [vmem:[#allocation5 + $0x3a8] sm:$0xff]
    %v6075 = vld [vmem:[#allocation5 + $0x3b0] sm:$0xff]
    %v6076 = vld [vmem:[#allocation5 + $0x3b8] sm:$0xff]
    %v6077 = vld [vmem:[#allocation5 + $0x3c0] sm:$0xff]
    %v6078 = vld [vmem:[#allocation5 + $0x3c8] sm:$0xff]
    %v6079 = vld [vmem:[#allocation5 + $0x3d0] sm:$0xff]
    %v6080 = vld [vmem:[#allocation5 + $0x3d8] sm:$0xff]
    %v6081 = vld [vmem:[#allocation5 + $0x3e0] sm:$0xff]
    %v6082 = vld [vmem:[#allocation5 + $0x3e8] sm:$0xff]
    %v6083 = vld [vmem:[#allocation5 + $0x3f0] sm:$0xff]
    %v6084 = vld [vmem:[#allocation5 + $0x3f8] sm:$0xff]
    %v6085 = vld [vmem:[#allocation5 + $0x400] sm:$0xff]
    %v6086 = vld [vmem:[#allocation5 + $0x408] sm:$0xff]
    %v6087 = vld [vmem:[#allocation5 + $0x410] sm:$0xff]
    %v6088 = vld [vmem:[#allocation5 + $0x418] sm:$0xff]
    %v6089 = vld [vmem:[#allocation5 + $0x420] sm:$0xff]
    %v6090 = vld [vmem:[#allocation5 + $0x428] sm:$0xff]
    %v6091 = vld [vmem:[#allocation5 + $0x430] sm:$0xff]
    %v6092 = vld [vmem:[#allocation5 + $0x438] sm:$0xff]
    %v6093 = vld [vmem:[#allocation5 + $0x440] sm:$0xff]
    %v6094 = vld [vmem:[#allocation5 + $0x448] sm:$0xff]
    %v6095 = vld [vmem:[#allocation5 + $0x450] sm:$0xff]
    %v6096 = vld [vmem:[#allocation5 + $0x458] sm:$0xff]
    %v6097 = vld [vmem:[#allocation5 + $0x460] sm:$0xff]
    %v6098 = vld [vmem:[#allocation5 + $0x468] sm:$0xff]
    %v6099 = vld [vmem:[#allocation5 + $0x470] sm:$0xff]
    %v6100 = vld [vmem:[#allocation5 + $0x478] sm:$0xff]
    %v6101 = vld [vmem:[#allocation5 + $0x480] sm:$0xff]
    %v6102 = vld [vmem:[#allocation5 + $0x488] sm:$0xff]
    %v6103 = vld [vmem:[#allocation5 + $0x490] sm:$0xff]
    %v6104 = vld [vmem:[#allocation5 + $0x498] sm:$0xff]
    %v6105 = vld [vmem:[#allocation5 + $0x4a0] sm:$0xff]
    %v6106 = vld [vmem:[#allocation5 + $0x4a8] sm:$0xff]
    %v6107 = vld [vmem:[#allocation5 + $0x4b0] sm:$0xff]
    %v6108 = vld [vmem:[#allocation5 + $0x4b8] sm:$0xff]
    %v6109 = vld [vmem:[#allocation5 + $0x4c0] sm:$0xff]
    %v6110 = vld [vmem:[#allocation5 + $0x4c8] sm:$0xff]
    %v6111 = vld [vmem:[#allocation5 + $0x4d0] sm:$0xff]
    %v6112 = vld [vmem:[#allocation5 + $0x4d8] sm:$0xff]
    %v6113 = vld [vmem:[#allocation5 + $0x4e0] sm:$0xff]
    %v6114 = vld [vmem:[#allocation5 + $0x4e8] sm:$0xff]
    %v6115 = vld [vmem:[#allocation5 + $0x4f0] sm:$0xff]
    %v6116 = vld [vmem:[#allocation5 + $0x4f8] sm:$0xff]
    %v6117 = vld [vmem:[#allocation5 + $0x500] sm:$0xff]
    %v6118 = vld [vmem:[#allocation5 + $0x508] sm:$0xff]
    %v6119 = vld [vmem:[#allocation5 + $0x510] sm:$0xff]
    %v6120 = vld [vmem:[#allocation5 + $0x518] sm:$0xff]
    %v6121 = vld [vmem:[#allocation5 + $0x520] sm:$0xff]
    %v6122 = vld [vmem:[#allocation5 + $0x528] sm:$0xff]
    %v6123 = vld [vmem:[#allocation5 + $0x530] sm:$0xff]
    %v6124 = vld [vmem:[#allocation5 + $0x538] sm:$0xff]
    %v6125 = vld [vmem:[#allocation5 + $0x540] sm:$0xff]
    %v6126 = vld [vmem:[#allocation5 + $0x548] sm:$0xff]
    %v6127 = vld [vmem:[#allocation5 + $0x550] sm:$0xff]
    %v6128 = vld [vmem:[#allocation5 + $0x558] sm:$0xff]
    %v6129 = vld [vmem:[#allocation5 + $0x560] sm:$0xff]
    %v6130 = vld [vmem:[#allocation5 + $0x568] sm:$0xff]
    %v6131 = vld [vmem:[#allocation5 + $0x570] sm:$0xff]
    %v6132 = vld [vmem:[#allocation5 + $0x578] sm:$0xff]
    %v6133 = vld [vmem:[#allocation5 + $0x580] sm:$0xff]
    %v6134 = vld [vmem:[#allocation5 + $0x588] sm:$0xff]
    %v6135 = vld [vmem:[#allocation5 + $0x590] sm:$0xff]
    %v6136 = vld [vmem:[#allocation5 + $0x598] sm:$0xff]
    %v6137 = vld [vmem:[#allocation5 + $0x5a0] sm:$0xff]
    %v6138 = vld [vmem:[#allocation5 + $0x5a8] sm:$0xff]
    %v6139 = vld [vmem:[#allocation5 + $0x5b0] sm:$0xff]
    %v6140 = vld [vmem:[#allocation5 + $0x5b8] sm:$0xff]
    %v6141 = vld [vmem:[#allocation5 + $0x5c0] sm:$0xff]
    %v6142 = vld [vmem:[#allocation5 + $0x5c8] sm:$0xff]
    %v6143 = vld [vmem:[#allocation5 + $0x5d0] sm:$0xff]
    %v6144 = vld [vmem:[#allocation5 + $0x5d8] sm:$0xff]
    %v6145 = vld [vmem:[#allocation5 + $0x5e0] sm:$0xff]
    %v6146 = vld [vmem:[#allocation5 + $0x5e8] sm:$0xff]
    %v6147 = vld [vmem:[#allocation5 + $0x5f0] sm:$0xff]
    %v6148 = vld [vmem:[#allocation5 + $0x5f8] sm:$0xff]
    %v6149 = vld [vmem:[#allocation5 + $0x600] sm:$0xff]
    %v6150 = vld [vmem:[#allocation5 + $0x608] sm:$0xff]
    %v6151 = vld [vmem:[#allocation5 + $0x610] sm:$0xff]
    %v6152 = vld [vmem:[#allocation5 + $0x618] sm:$0xff]
    %v6153 = vld [vmem:[#allocation5 + $0x620] sm:$0xff]
    %v6154 = vld [vmem:[#allocation5 + $0x628] sm:$0xff]
    %v6155 = vld [vmem:[#allocation5 + $0x630] sm:$0xff]
    %v6156 = vld [vmem:[#allocation5 + $0x638] sm:$0xff]
    %v6157 = vld [vmem:[#allocation5 + $0x640] sm:$0xff]
    %v6158 = vld [vmem:[#allocation5 + $0x648] sm:$0xff]
    %v6159 = vld [vmem:[#allocation5 + $0x650] sm:$0xff]
    %v6160 = vld [vmem:[#allocation5 + $0x658] sm:$0xff]
    %v6161 = vld [vmem:[#allocation5 + $0x660] sm:$0xff]
    %v6162 = vld [vmem:[#allocation5 + $0x668] sm:$0xff]
    %v6163 = vld [vmem:[#allocation5 + $0x670] sm:$0xff]
    %v6164 = vld [vmem:[#allocation5 + $0x678] sm:$0xff]
    %v6165 = vld [vmem:[#allocation5 + $0x680] sm:$0xff]
    %v6166 = vld [vmem:[#allocation5 + $0x688] sm:$0xff]
    %v6167 = vld [vmem:[#allocation5 + $0x690] sm:$0xff]
    %v6168 = vld [vmem:[#allocation5 + $0x698] sm:$0xff]
    %v6169 = vld [vmem:[#allocation5 + $0x6a0] sm:$0xff]
    %v6170 = vld [vmem:[#allocation5 + $0x6a8] sm:$0xff]
    %v6171 = vld [vmem:[#allocation5 + $0x6b0] sm:$0xff]
    %v6172 = vld [vmem:[#allocation5 + $0x6b8] sm:$0xff]
    %v6173 = vld [vmem:[#allocation5 + $0x6c0] sm:$0xff]
    %v6174 = vld [vmem:[#allocation5 + $0x6c8] sm:$0xff]
    %v6175 = vld [vmem:[#allocation5 + $0x6d0] sm:$0xff]
    %v6176 = vld [vmem:[#allocation5 + $0x6d8] sm:$0xff]
    %v6177 = vld [vmem:[#allocation5 + $0x6e0] sm:$0xff]
    %v6178 = vld [vmem:[#allocation5 + $0x6e8] sm:$0xff]
    %v6179 = vld [vmem:[#allocation5 + $0x6f0] sm:$0xff]
    %v6180 = vld [vmem:[#allocation5 + $0x6f8] sm:$0xff]
    %v6181 = vld [vmem:[#allocation5 + $0x700] sm:$0xff]
    %v6182 = vld [vmem:[#allocation5 + $0x708] sm:$0xff]
    %v6183 = vld [vmem:[#allocation5 + $0x710] sm:$0xff]
    %v6184 = vld [vmem:[#allocation5 + $0x718] sm:$0xff]
    %v6185 = vld [vmem:[#allocation5 + $0x720] sm:$0xff]
    %v6186 = vld [vmem:[#allocation5 + $0x728] sm:$0xff]
    %v6187 = vld [vmem:[#allocation5 + $0x730] sm:$0xff]
    %v6188 = vld [vmem:[#allocation5 + $0x738] sm:$0xff]
    %v6189 = vld [vmem:[#allocation5 + $0x740] sm:$0xff]
    %v6190 = vld [vmem:[#allocation5 + $0x748] sm:$0xff]
    %v6191 = vld [vmem:[#allocation5 + $0x750] sm:$0xff]
    %v6192 = vld [vmem:[#allocation5 + $0x758] sm:$0xff]
    %v6193 = vld [vmem:[#allocation5 + $0x760] sm:$0xff]
    %v6194 = vld [vmem:[#allocation5 + $0x768] sm:$0xff]
    %v6195 = vld [vmem:[#allocation5 + $0x770] sm:$0xff]
    %v6196 = vld [vmem:[#allocation5 + $0x778] sm:$0xff]
    %v6197 = vld [vmem:[#allocation5 + $0x780] sm:$0xff]
    %v6198 = vld [vmem:[#allocation5 + $0x788] sm:$0xff]
    %v6199 = vld [vmem:[#allocation5 + $0x790] sm:$0xff]
    %v6200 = vld [vmem:[#allocation5 + $0x798] sm:$0xff]
    %v6201 = vld [vmem:[#allocation5 + $0x7a0] sm:$0xff]
    %v6202 = vld [vmem:[#allocation5 + $0x7a8] sm:$0xff]
    %v6203 = vld [vmem:[#allocation5 + $0x7b0] sm:$0xff]
    %v6204 = vld [vmem:[#allocation5 + $0x7b8] sm:$0xff]
    %v6205 = vld [vmem:[#allocation5 + $0x7c0] sm:$0xff]
    %v6206 = vld [vmem:[#allocation5 + $0x7c8] sm:$0xff]
    %v6207 = vld [vmem:[#allocation5 + $0x7d0] sm:$0xff]
    %v6208 = vld [vmem:[#allocation5 + $0x7d8] sm:$0xff]
    %v6209 = vld [vmem:[#allocation5 + $0x7e0] sm:$0xff]
    %v6210 = vld [vmem:[#allocation5 + $0x7e8] sm:$0xff]
    %v6211 = vld [vmem:[#allocation5 + $0x7f0] sm:$0xff]
    %v6212 = vld [vmem:[#allocation5 + $0x7f8] sm:$0xff]
    %v6213 = vcombine.high %v5943, %v5943
    %6215 = vmatprep.subr.mxu0 %v5958
    %6216 = vmatpush1.msra.mxu0 %v5957
    %6217 = vmatprep.subr.mxu0 %v5966
    %6218 = vmatpush1.msra.mxu0 %v5965
    %6219 = vmatprep.subr.mxu0 %v5974
    %6220 = vmatpush1.msra.mxu0 %v5973
    %6221 = vmatprep.subr.mxu0 %v5982
    %6222 = vmatpush1.msra.mxu0 %v5981
    %6223 = vmatprep.subr.mxu0 %v5990
    %6224 = vmatpush1.msra.mxu0 %v5989
    %6225 = vmatprep.subr.mxu0 %v5998
    %6226 = vmatpush1.msra.mxu0 %v5997
    %6227 = vmatprep.subr.mxu0 %v6006
    %6228 = vmatpush1.msra.mxu0 %v6005
    %6229 = vmatprep.subr.mxu0 %v6014
    %6230 = vmatpush1.msra.mxu0 %v6013
    %6231 = vmatprep.subr.mxu0 %v6022
    %6232 = vmatpush1.msra.mxu0 %v6021
    %6233 = vmatprep.subr.mxu0 %v6030
    %6234 = vmatpush1.msra.mxu0 %v6029
    %6235 = vmatprep.subr.mxu0 %v6038
    %6236 = vmatpush1.msra.mxu0 %v6037
    %6237 = vmatprep.subr.mxu0 %v6046
    %6238 = vmatpush1.msra.mxu0 %v6045
    %6239 = vmatprep.subr.mxu0 %v6054
    %6240 = vmatpush1.msra.mxu0 %v6053
    %6241 = vmatprep.subr.mxu0 %v6062
    %6242 = vmatpush1.msra.mxu0 %v6061
    %6243 = vmatprep.subr.mxu0 %v6070
    %6244 = vmatpush1.msra.mxu0 %v6069
    %6245 = vmatprep.subr.mxu0 %v6078
    %6246 = vmatpush1.msra.mxu0 %v6077
    %6247 = vmatprep.subr.mxu0 %v6086
    %6248 = vmatpush1.msra.mxu0 %v6085
    %6249 = vmatprep.subr.mxu0 %v6094
    %6250 = vmatpush1.msra.mxu0 %v6093
    %6251 = vmatprep.subr.mxu0 %v6102
    %6252 = vmatpush1.msra.mxu0 %v6101
    %6253 = vmatprep.subr.mxu0 %v6110
    %6254 = vmatpush1.msra.mxu0 %v6109
    %6255 = vmatprep.subr.mxu0 %v6118
    %6256 = vmatpush1.msra.mxu0 %v6117
    %6257 = vmatprep.subr.mxu0 %v6126
    %6258 = vmatpush1.msra.mxu0 %v6125
    %6259 = vmatprep.subr.mxu0 %v6134
    %6260 = vmatpush1.msra.mxu0 %v6133
    %6261 = vmatprep.subr.mxu0 %v6142
    %6262 = vmatpush1.msra.mxu0 %v6141
    %6263 = vmatprep.subr.mxu0 %v6150
    %6264 = vmatpush1.msra.mxu0 %v6149
    %6265 = vmatprep.subr.mxu0 %v6158
    %6266 = vmatpush1.msra.mxu0 %v6157
    %6267 = vmatprep.subr.mxu0 %v6166
    %6268 = vmatpush1.msra.mxu0 %v6165
    %6269 = vmatprep.subr.mxu0 %v6174
    %6270 = vmatpush1.msra.mxu0 %v6173
    %6271 = vmatprep.subr.mxu0 %v6182
    %6272 = vmatpush1.msra.mxu0 %v6181
    %6273 = vmatprep.subr.mxu0 %v6190
    %6274 = vmatpush1.msra.mxu0 %v6189
    %6275 = vmatprep.subr.mxu0 %v6198
    %6276 = vmatpush1.msra.mxu0 %v6197
    %6277 = vmatprep.subr.mxu0 %v6206
    %6278 = vmatpush1.msra.mxu0 %v6205
    %6279 = vmatprep.mubr.f32.mxu0 %v6213
    %6280 = vmatmul.mubr.f32.gmra.mrb[0].mxu0 %v5943
    %v6281 = vpop.f32.mrb[0].mxu0
    %v6282 = vadd.f32 0.0, %v6281
    %v6283 = vpop.f32.mrb[0].mxu0
    %v6284 = vadd.f32 0.0, %v6283
    %6285 = vdwg.mxu0
    %6286 = vmatprep.subr.mxu0 %v5960
    %6287 = vmatpush1.msra.mxu0 %v5959
    %6288 = vmatprep.subr.mxu0 %v5968
    %6289 = vmatpush1.msra.mxu0 %v5967
    %6290 = vmatprep.subr.mxu0 %v5976
    %6291 = vmatpush1.msra.mxu0 %v5975
    %6292 = vmatprep.subr.mxu0 %v5984
    %6293 = vmatpush1.msra.mxu0 %v5983
    %6294 = vmatprep.subr.mxu0 %v5992
    %6295 = vmatpush1.msra.mxu0 %v5991
    %6296 = vmatprep.subr.mxu0 %v6000
    %6297 = vmatpush1.msra.mxu0 %v5999
    %6298 = vmatprep.subr.mxu0 %v6008
    %6299 = vmatpush1.msra.mxu0 %v6007
    %6300 = vmatprep.subr.mxu0 %v6016
    %6301 = vmatpush1.msra.mxu0 %v6015
    %6302 = vmatprep.subr.mxu0 %v6024
    %6303 = vmatpush1.msra.mxu0 %v6023
    %6304 = vmatprep.subr.mxu0 %v6032
    %6305 = vmatpush1.msra.mxu0 %v6031
    %6306 = vmatprep.subr.mxu0 %v6040
    %6307 = vmatpush1.msra.mxu0 %v6039
    %6308 = vmatprep.subr.mxu0 %v6048
    %6309 = vmatpush1.msra.mxu0 %v6047
    %6310 = vmatprep.subr.mxu0 %v6056
    %6311 = vmatpush1.msra.mxu0 %v6055
    %6312 = vmatprep.subr.mxu0 %v6064
    %6313 = vmatpush1.msra.mxu0 %v6063
    %6314 = vmatprep.subr.mxu0 %v6072
    %6315 = vmatpush1.msra.mxu0 %v6071
    %6316 = vmatprep.subr.mxu0 %v6080
    %6317 = vmatpush1.msra.mxu0 %v6079
    %6318 = vmatprep.subr.mxu0 %v6088
    %6319 = vmatpush1.msra.mxu0 %v6087
    %6320 = vmatprep.subr.mxu0 %v6096
    %6321 = vmatpush1.msra.mxu0 %v6095
    %6322 = vmatprep.subr.mxu0 %v6104
    %6323 = vmatpush1.msra.mxu0 %v6103
    %6324 = vmatprep.subr.mxu0 %v6112
    %6325 = vmatpush1.msra.mxu0 %v6111
    %6326 = vmatprep.subr.mxu0 %v6120
    %6327 = vmatpush1.msra.mxu0 %v6119
    %6328 = vmatprep.subr.mxu0 %v6128
    %6329 = vmatpush1.msra.mxu0 %v6127
    %6330 = vmatprep.subr.mxu0 %v6136
    %6331 = vmatpush1.msra.mxu0 %v6135
    %6332 = vmatprep.subr.mxu0 %v6144
    %6333 = vmatpush1.msra.mxu0 %v6143
    %6334 = vmatprep.subr.mxu0 %v6152
    %6335 = vmatpush1.msra.mxu0 %v6151
    %6336 = vmatprep.subr.mxu0 %v6160
    %6337 = vmatpush1.msra.mxu0 %v6159
    %6338 = vmatprep.subr.mxu0 %v6168
    %6339 = vmatpush1.msra.mxu0 %v6167
    %6340 = vmatprep.subr.mxu0 %v6176
    %6341 = vmatpush1.msra.mxu0 %v6175
    %6342 = vmatprep.subr.mxu0 %v6184
    %6343 = vmatpush1.msra.mxu0 %v6183
    %6344 = vmatprep.subr.mxu0 %v6192
    %6345 = vmatpush1.msra.mxu0 %v6191
    %6346 = vmatprep.subr.mxu0 %v6200
    %6347 = vmatpush1.msra.mxu0 %v6199
    %6348 = vmatprep.subr.mxu0 %v6208
    %6349 = vmatpush1.msra.mxu0 %v6207
    %6350 = vmatprep.mubr.f32.mxu0 %v6213
    %6351 = vmatmul.mubr.f32.gmra.mrb[0].mxu0 %v5943
    %v6352 = vpop.f32.mrb[0].mxu0
    %v6353 = vadd.f32 0.0, %v6352
    %v6354 = vpop.f32.mrb[0].mxu0
    %v6355 = vadd.f32 0.0, %v6354
    %6356 = vdwg.mxu0
    %6357 = vmatprep.subr.mxu0 %v5962
    %6358 = vmatpush1.msra.mxu0 %v5961
    %6359 = vmatprep.subr.mxu0 %v5970
    %6360 = vmatpush1.msra.mxu0 %v5969
    %6361 = vmatprep.subr.mxu0 %v5978
    %6362 = vmatpush1.msra.mxu0 %v5977
    %6363 = vmatprep.subr.mxu0 %v5986
    %6364 = vmatpush1.msra.mxu0 %v5985
    %6365 = vmatprep.subr.mxu0 %v5994
    %6366 = vmatpush1.msra.mxu0 %v5993
    %6367 = vmatprep.subr.mxu0 %v6002
    %6368 = vmatpush1.msra.mxu0 %v6001
    %6369 = vmatprep.subr.mxu0 %v6010
    %6370 = vmatpush1.msra.mxu0 %v6009
    %6371 = vmatprep.subr.mxu0 %v6018
    %6372 = vmatpush1.msra.mxu0 %v6017
    %6373 = vmatprep.subr.mxu0 %v6026
    %6374 = vmatpush1.msra.mxu0 %v6025
    %6375 = vmatprep.subr.mxu0 %v6034
    %6376 = vmatpush1.msra.mxu0 %v6033
    %6377 = vmatprep.subr.mxu0 %v6042
    %6378 = vmatpush1.msra.mxu0 %v6041
    %6379 = vmatprep.subr.mxu0 %v6050
    %6380 = vmatpush1.msra.mxu0 %v6049
    %6381 = vmatprep.subr.mxu0 %v6058
    %6382 = vmatpush1.msra.mxu0 %v6057
    %6383 = vmatprep.subr.mxu0 %v6066
    %6384 = vmatpush1.msra.mxu0 %v6065
    %6385 = vmatprep.subr.mxu0 %v6074
    %6386 = vmatpush1.msra.mxu0 %v6073
    %6387 = vmatprep.subr.mxu0 %v6082
    %6388 = vmatpush1.msra.mxu0 %v6081
    %6389 = vmatprep.subr.mxu0 %v6090
    %6390 = vmatpush1.msra.mxu0 %v6089
    %6391 = vmatprep.subr.mxu0 %v6098
    %6392 = vmatpush1.msra.mxu0 %v6097
    %6393 = vmatprep.subr.mxu0 %v6106
    %6394 = vmatpush1.msra.mxu0 %v6105
    %6395 = vmatprep.subr.mxu0 %v6114
    %6396 = vmatpush1.msra.mxu0 %v6113
    %6397 = vmatprep.subr.mxu0 %v6122
    %6398 = vmatpush1.msra.mxu0 %v6121
    %6399 = vmatprep.subr.mxu0 %v6130
    %6400 = vmatpush1.msra.mxu0 %v6129
    %6401 = vmatprep.subr.mxu0 %v6138
    %6402 = vmatpush1.msra.mxu0 %v6137
    %6403 = vmatprep.subr.mxu0 %v6146
    %6404 = vmatpush1.msra.mxu0 %v6145
    %6405 = vmatprep.subr.mxu0 %v6154
    %6406 = vmatpush1.msra.mxu0 %v6153
    %6407 = vmatprep.subr.mxu0 %v6162
    %6408 = vmatpush1.msra.mxu0 %v6161
    %6409 = vmatprep.subr.mxu0 %v6170
    %6410 = vmatpush1.msra.mxu0 %v6169
    %6411 = vmatprep.subr.mxu0 %v6178
    %6412 = vmatpush1.msra.mxu0 %v6177
    %6413 = vmatprep.subr.mxu0 %v6186
    %6414 = vmatpush1.msra.mxu0 %v6185
    %6415 = vmatprep.subr.mxu0 %v6194
    %6416 = vmatpush1.msra.mxu0 %v6193
    %6417 = vmatprep.subr.mxu0 %v6202
    %6418 = vmatpush1.msra.mxu0 %v6201
    %6419 = vmatprep.subr.mxu0 %v6210
    %6420 = vmatpush1.msra.mxu0 %v6209
    %6421 = vmatprep.mubr.f32.mxu0 %v6213
    %6422 = vmatmul.mubr.f32.gmra.mrb[0].mxu0 %v5943
    %v6423 = vpop.f32.mrb[0].mxu0
    %v6424 = vadd.f32 0.0, %v6423
    %v6425 = vpop.f32.mrb[0].mxu0
    %v6426 = vadd.f32 0.0, %v6425
    %6427 = vdwg.mxu0
    %6428 = vmatprep.subr.mxu0 %v5964
    %6429 = vmatpush1.msra.mxu0 %v5963
    %6430 = vmatprep.subr.mxu0 %v5972
    %6431 = vmatpush1.msra.mxu0 %v5971
    %6432 = vmatprep.subr.mxu0 %v5980
    %6433 = vmatpush1.msra.mxu0 %v5979
    %6434 = vmatprep.subr.mxu0 %v5988
    %6435 = vmatpush1.msra.mxu0 %v5987
    %6436 = vmatprep.subr.mxu0 %v5996
    %6437 = vmatpush1.msra.mxu0 %v5995
    %6438 = vmatprep.subr.mxu0 %v6004
    %6439 = vmatpush1.msra.mxu0 %v6003
    %6440 = vmatprep.subr.mxu0 %v6012
    %6441 = vmatpush1.msra.mxu0 %v6011
    %6442 = vmatprep.subr.mxu0 %v6020
    %6443 = vmatpush1.msra.mxu0 %v6019
    %6444 = vmatprep.subr.mxu0 %v6028
    %6445 = vmatpush1.msra.mxu0 %v6027
    %6446 = vmatprep.subr.mxu0 %v6036
    %6447 = vmatpush1.msra.mxu0 %v6035
    %6448 = vmatprep.subr.mxu0 %v6044
    %6449 = vmatpush1.msra.mxu0 %v6043
    %6450 = vmatprep.subr.mxu0 %v6052
    %6451 = vmatpush1.msra.mxu0 %v6051
    %6452 = vmatprep.subr.mxu0 %v6060
    %6453 = vmatpush1.msra.mxu0 %v6059
    %6454 = vmatprep.subr.mxu0 %v6068
    %6455 = vmatpush1.msra.mxu0 %v6067
    %6456 = vmatprep.subr.mxu0 %v6076
    %6457 = vmatpush1.msra.mxu0 %v6075
    %6458 = vmatprep.subr.mxu0 %v6084
    %6459 = vmatpush1.msra.mxu0 %v6083
    %6460 = vmatprep.subr.mxu0 %v6092
    %6461 = vmatpush1.msra.mxu0 %v6091
    %6462 = vmatprep.subr.mxu0 %v6100
    %6463 = vmatpush1.msra.mxu0 %v6099
    %6464 = vmatprep.subr.mxu0 %v6108
    %6465 = vmatpush1.msra.mxu0 %v6107
    %6466 = vmatprep.subr.mxu0 %v6116
    %6467 = vmatpush1.msra.mxu0 %v6115
    %6468 = vmatprep.subr.mxu0 %v6124
    %6469 = vmatpush1.msra.mxu0 %v6123
    %6470 = vmatprep.subr.mxu0 %v6132
    %6471 = vmatpush1.msra.mxu0 %v6131
    %6472 = vmatprep.subr.mxu0 %v6140
    %6473 = vmatpush1.msra.mxu0 %v6139
    %6474 = vmatprep.subr.mxu0 %v6148
    %6475 = vmatpush1.msra.mxu0 %v6147
    %6476 = vmatprep.subr.mxu0 %v6156
    %6477 = vmatpush1.msra.mxu0 %v6155
    %6478 = vmatprep.subr.mxu0 %v6164
    %6479 = vmatpush1.msra.mxu0 %v6163
    %6480 = vmatprep.subr.mxu0 %v6172
    %6481 = vmatpush1.msra.mxu0 %v6171
    %6482 = vmatprep.subr.mxu0 %v6180
    %6483 = vmatpush1.msra.mxu0 %v6179
    %6484 = vmatprep.subr.mxu0 %v6188
    %6485 = vmatpush1.msra.mxu0 %v6187
    %6486 = vmatprep.subr.mxu0 %v6196
    %6487 = vmatpush1.msra.mxu0 %v6195
    %6488 = vmatprep.subr.mxu0 %v6204
    %6489 = vmatpush1.msra.mxu0 %v6203
    %6490 = vmatprep.subr.mxu0 %v6212
    %6491 = vmatpush1.msra.mxu0 %v6211
    %6492 = vmatprep.mubr.f32.mxu0 %v6213
    %6493 = vmatmul.mubr.f32.gmra.mrb[0].mxu0 %v5943
    %v6494 = vpop.f32.mrb[0].mxu0
    %v6495 = vadd.f32 0.0, %v6494
    %v6496 = vpop.f32.mrb[0].mxu0
    %v6497 = vadd.f32 0.0, %v6496
    %6498 = vdwg.mxu0
    %v6499 = vld [vmem:[#allocation7] sm:$0xff]
    %v6500 = vld [vmem:[#allocation7 + $0x8] sm:$0xff]
    %v6501 = vld [vmem:[#allocation7 + $0x10] sm:$0xff]
    %v6502 = vld [vmem:[#allocation7 + $0x18] sm:$0xff]
    %v6503 = vld [vmem:[#allocation7 + $0x20] sm:$0xff]
    %v6504 = vld [vmem:[#allocation7 + $0x28] sm:$0xff]
    %v6505 = vld [vmem:[#allocation7 + $0x30] sm:$0xff]
    %v6506 = vld [vmem:[#allocation7 + $0x38] sm:$0xff]
    %v6507 = vld [vmem:[#allocation7 + $0x40] sm:$0xff]
    %v6508 = vld [vmem:[#allocation7 + $0x48] sm:$0xff]
    %v6509 = vld [vmem:[#allocation7 + $0x50] sm:$0xff]
    %v6510 = vld [vmem:[#allocation7 + $0x58] sm:$0xff]
    %v6511 = vld [vmem:[#allocation7 + $0x60] sm:$0xff]
    %v6512 = vld [vmem:[#allocation7 + $0x68] sm:$0xff]
    %v6513 = vld [vmem:[#allocation7 + $0x70] sm:$0xff]
    %v6514 = vld [vmem:[#allocation7 + $0x78] sm:$0xff]
    %v6515 = vld [vmem:[#allocation7 + $0x80] sm:$0xff]
    %v6516 = vld [vmem:[#allocation7 + $0x88] sm:$0xff]
    %v6517 = vld [vmem:[#allocation7 + $0x90] sm:$0xff]
    %v6518 = vld [vmem:[#allocation7 + $0x98] sm:$0xff]
    %v6519 = vld [vmem:[#allocation7 + $0xa0] sm:$0xff]
    %v6520 = vld [vmem:[#allocation7 + $0xa8] sm:$0xff]
    %v6521 = vld [vmem:[#allocation7 + $0xb0] sm:$0xff]
    %v6522 = vld [vmem:[#allocation7 + $0xb8] sm:$0xff]
    %v6523 = vld [vmem:[#allocation7 + $0xc0] sm:$0xff]
    %v6524 = vld [vmem:[#allocation7 + $0xc8] sm:$0xff]
    %v6525 = vld [vmem:[#allocation7 + $0xd0] sm:$0xff]
    %v6526 = vld [vmem:[#allocation7 + $0xd8] sm:$0xff]
    %v6527 = vld [vmem:[#allocation7 + $0xe0] sm:$0xff]
    %v6528 = vld [vmem:[#allocation7 + $0xe8] sm:$0xff]
    %v6529 = vld [vmem:[#allocation7 + $0xf0] sm:$0xff]
    %v6530 = vld [vmem:[#allocation7 + $0xf8] sm:$0xff]
    %v6531 = vld [vmem:[#allocation7 + $0x100] sm:$0xff]
    %v6532 = vld [vmem:[#allocation7 + $0x108] sm:$0xff]
    %v6533 = vld [vmem:[#allocation7 + $0x110] sm:$0xff]
    %v6534 = vld [vmem:[#allocation7 + $0x118] sm:$0xff]
    %v6535 = vld [vmem:[#allocation7 + $0x120] sm:$0xff]
    %v6536 = vld [vmem:[#allocation7 + $0x128] sm:$0xff]
    %v6537 = vld [vmem:[#allocation7 + $0x130] sm:$0xff]
    %v6538 = vld [vmem:[#allocation7 + $0x138] sm:$0xff]
    %v6539 = vld [vmem:[#allocation7 + $0x140] sm:$0xff]
    %v6540 = vld [vmem:[#allocation7 + $0x148] sm:$0xff]
    %v6541 = vld [vmem:[#allocation7 + $0x150] sm:$0xff]
    %v6542 = vld [vmem:[#allocation7 + $0x158] sm:$0xff]
    %v6543 = vld [vmem:[#allocation7 + $0x160] sm:$0xff]
    %v6544 = vld [vmem:[#allocation7 + $0x168] sm:$0xff]
    %v6545 = vld [vmem:[#allocation7 + $0x170] sm:$0xff]
    %v6546 = vld [vmem:[#allocation7 + $0x178] sm:$0xff]
    %v6547 = vld [vmem:[#allocation7 + $0x180] sm:$0xff]
    %v6548 = vld [vmem:[#allocation7 + $0x188] sm:$0xff]
    %v6549 = vld [vmem:[#allocation7 + $0x190] sm:$0xff]
    %v6550 = vld [vmem:[#allocation7 + $0x198] sm:$0xff]
    %v6551 = vld [vmem:[#allocation7 + $0x1a0] sm:$0xff]
    %v6552 = vld [vmem:[#allocation7 + $0x1a8] sm:$0xff]
    %v6553 = vld [vmem:[#allocation7 + $0x1b0] sm:$0xff]
    %v6554 = vld [vmem:[#allocation7 + $0x1b8] sm:$0xff]
    %v6555 = vld [vmem:[#allocation7 + $0x1c0] sm:$0xff]
    %v6556 = vld [vmem:[#allocation7 + $0x1c8] sm:$0xff]
    %v6557 = vld [vmem:[#allocation7 + $0x1d0] sm:$0xff]
    %v6558 = vld [vmem:[#allocation7 + $0x1d8] sm:$0xff]
    %v6559 = vld [vmem:[#allocation7 + $0x1e0] sm:$0xff]
    %v6560 = vld [vmem:[#allocation7 + $0x1e8] sm:$0xff]
    %v6561 = vld [vmem:[#allocation7 + $0x1f0] sm:$0xff]
    %v6562 = vld [vmem:[#allocation7 + $0x1f8] sm:$0xff]
    %v6563 = vld [vmem:[#allocation7 + $0x200] sm:$0xff]
    %v6564 = vld [vmem:[#allocation7 + $0x208] sm:$0xff]
    %v6565 = vld [vmem:[#allocation7 + $0x210] sm:$0xff]
    %v6566 = vld [vmem:[#allocation7 + $0x218] sm:$0xff]
    %v6567 = vld [vmem:[#allocation7 + $0x220] sm:$0xff]
    %v6568 = vld [vmem:[#allocation7 + $0x228] sm:$0xff]
    %v6569 = vld [vmem:[#allocation7 + $0x230] sm:$0xff]
    %v6570 = vld [vmem:[#allocation7 + $0x238] sm:$0xff]
    %v6571 = vld [vmem:[#allocation7 + $0x240] sm:$0xff]
    %v6572 = vld [vmem:[#allocation7 + $0x248] sm:$0xff]
    %v6573 = vld [vmem:[#allocation7 + $0x250] sm:$0xff]
    %v6574 = vld [vmem:[#allocation7 + $0x258] sm:$0xff]
    %v6575 = vld [vmem:[#allocation7 + $0x260] sm:$0xff]
    %v6576 = vld [vmem:[#allocation7 + $0x268] sm:$0xff]
    %v6577 = vld [vmem:[#allocation7 + $0x270] sm:$0xff]
    %v6578 = vld [vmem:[#allocation7 + $0x278] sm:$0xff]
    %v6579 = vld [vmem:[#allocation7 + $0x280] sm:$0xff]
    %v6580 = vld [vmem:[#allocation7 + $0x288] sm:$0xff]
    %v6581 = vld [vmem:[#allocation7 + $0x290] sm:$0xff]
    %v6582 = vld [vmem:[#allocation7 + $0x298] sm:$0xff]
    %v6583 = vld [vmem:[#allocation7 + $0x2a0] sm:$0xff]
    %v6584 = vld [vmem:[#allocation7 + $0x2a8] sm:$0xff]
    %v6585 = vld [vmem:[#allocation7 + $0x2b0] sm:$0xff]
    %v6586 = vld [vmem:[#allocation7 + $0x2b8] sm:$0xff]
    %v6587 = vld [vmem:[#allocation7 + $0x2c0] sm:$0xff]
    %v6588 = vld [vmem:[#allocation7 + $0x2c8] sm:$0xff]
    %v6589 = vld [vmem:[#allocation7 + $0x2d0] sm:$0xff]
    %v6590 = vld [vmem:[#allocation7 + $0x2d8] sm:$0xff]
    %v6591 = vld [vmem:[#allocation7 + $0x2e0] sm:$0xff]
    %v6592 = vld [vmem:[#allocation7 + $0x2e8] sm:$0xff]
    %v6593 = vld [vmem:[#allocation7 + $0x2f0] sm:$0xff]
    %v6594 = vld [vmem:[#allocation7 + $0x2f8] sm:$0xff]
    %v6595 = vld [vmem:[#allocation7 + $0x300] sm:$0xff]
    %v6596 = vld [vmem:[#allocation7 + $0x308] sm:$0xff]
    %v6597 = vld [vmem:[#allocation7 + $0x310] sm:$0xff]
    %v6598 = vld [vmem:[#allocation7 + $0x318] sm:$0xff]
    %v6599 = vld [vmem:[#allocation7 + $0x320] sm:$0xff]
    %v6600 = vld [vmem:[#allocation7 + $0x328] sm:$0xff]
    %v6601 = vld [vmem:[#allocation7 + $0x330] sm:$0xff]
    %v6602 = vld [vmem:[#allocation7 + $0x338] sm:$0xff]
    %v6603 = vld [vmem:[#allocation7 + $0x340] sm:$0xff]
    %v6604 = vld [vmem:[#allocation7 + $0x348] sm:$0xff]
    %v6605 = vld [vmem:[#allocation7 + $0x350] sm:$0xff]
    %v6606 = vld [vmem:[#allocation7 + $0x358] sm:$0xff]
    %v6607 = vld [vmem:[#allocation7 + $0x360] sm:$0xff]
    %v6608 = vld [vmem:[#allocation7 + $0x368] sm:$0xff]
    %v6609 = vld [vmem:[#allocation7 + $0x370] sm:$0xff]
    %v6610 = vld [vmem:[#allocation7 + $0x378] sm:$0xff]
    %v6611 = vld [vmem:[#allocation7 + $0x380] sm:$0xff]
    %v6612 = vld [vmem:[#allocation7 + $0x388] sm:$0xff]
    %v6613 = vld [vmem:[#allocation7 + $0x390] sm:$0xff]
    %v6614 = vld [vmem:[#allocation7 + $0x398] sm:$0xff]
    %v6615 = vld [vmem:[#allocation7 + $0x3a0] sm:$0xff]
    %v6616 = vld [vmem:[#allocation7 + $0x3a8] sm:$0xff]
    %v6617 = vld [vmem:[#allocation7 + $0x3b0] sm:$0xff]
    %v6618 = vld [vmem:[#allocation7 + $0x3b8] sm:$0xff]
    %v6619 = vld [vmem:[#allocation7 + $0x3c0] sm:$0xff]
    %v6620 = vld [vmem:[#allocation7 + $0x3c8] sm:$0xff]
    %v6621 = vld [vmem:[#allocation7 + $0x3d0] sm:$0xff]
    %v6622 = vld [vmem:[#allocation7 + $0x3d8] sm:$0xff]
    %v6623 = vld [vmem:[#allocation7 + $0x3e0] sm:$0xff]
    %v6624 = vld [vmem:[#allocation7 + $0x3e8] sm:$0xff]
    %v6625 = vld [vmem:[#allocation7 + $0x3f0] sm:$0xff]
    %v6626 = vld [vmem:[#allocation7 + $0x3f8] sm:$0xff]
    %v6627 = vld [vmem:[#allocation7 + $0x400] sm:$0xff]
    %v6628 = vld [vmem:[#allocation7 + $0x408] sm:$0xff]
    %v6629 = vld [vmem:[#allocation7 + $0x410] sm:$0xff]
    %v6630 = vld [vmem:[#allocation7 + $0x418] sm:$0xff]
    %v6631 = vld [vmem:[#allocation7 + $0x420] sm:$0xff]
    %v6632 = vld [vmem:[#allocation7 + $0x428] sm:$0xff]
    %v6633 = vld [vmem:[#allocation7 + $0x430] sm:$0xff]
    %v6634 = vld [vmem:[#allocation7 + $0x438] sm:$0xff]
    %v6635 = vld [vmem:[#allocation7 + $0x440] sm:$0xff]
    %v6636 = vld [vmem:[#allocation7 + $0x448] sm:$0xff]
    %v6637 = vld [vmem:[#allocation7 + $0x450] sm:$0xff]
    %v6638 = vld [vmem:[#allocation7 + $0x458] sm:$0xff]
    %v6639 = vld [vmem:[#allocation7 + $0x460] sm:$0xff]
    %v6640 = vld [vmem:[#allocation7 + $0x468] sm:$0xff]
    %v6641 = vld [vmem:[#allocation7 + $0x470] sm:$0xff]
    %v6642 = vld [vmem:[#allocation7 + $0x478] sm:$0xff]
    %v6643 = vld [vmem:[#allocation7 + $0x480] sm:$0xff]
    %v6644 = vld [vmem:[#allocation7 + $0x488] sm:$0xff]
    %v6645 = vld [vmem:[#allocation7 + $0x490] sm:$0xff]
    %v6646 = vld [vmem:[#allocation7 + $0x498] sm:$0xff]
    %v6647 = vld [vmem:[#allocation7 + $0x4a0] sm:$0xff]
    %v6648 = vld [vmem:[#allocation7 + $0x4a8] sm:$0xff]
    %v6649 = vld [vmem:[#allocation7 + $0x4b0] sm:$0xff]
    %v6650 = vld [vmem:[#allocation7 + $0x4b8] sm:$0xff]
    %v6651 = vld [vmem:[#allocation7 + $0x4c0] sm:$0xff]
    %v6652 = vld [vmem:[#allocation7 + $0x4c8] sm:$0xff]
    %v6653 = vld [vmem:[#allocation7 + $0x4d0] sm:$0xff]
    %v6654 = vld [vmem:[#allocation7 + $0x4d8] sm:$0xff]
    %v6655 = vld [vmem:[#allocation7 + $0x4e0] sm:$0xff]
    %v6656 = vld [vmem:[#allocation7 + $0x4e8] sm:$0xff]
    %v6657 = vld [vmem:[#allocation7 + $0x4f0] sm:$0xff]
    %v6658 = vld [vmem:[#allocation7 + $0x4f8] sm:$0xff]
    %v6659 = vld [vmem:[#allocation7 + $0x500] sm:$0xff]
    %v6660 = vld [vmem:[#allocation7 + $0x508] sm:$0xff]
    %v6661 = vld [vmem:[#allocation7 + $0x510] sm:$0xff]
    %v6662 = vld [vmem:[#allocation7 + $0x518] sm:$0xff]
    %v6663 = vld [vmem:[#allocation7 + $0x520] sm:$0xff]
    %v6664 = vld [vmem:[#allocation7 + $0x528] sm:$0xff]
    %v6665 = vld [vmem:[#allocation7 + $0x530] sm:$0xff]
    %v6666 = vld [vmem:[#allocation7 + $0x538] sm:$0xff]
    %v6667 = vld [vmem:[#allocation7 + $0x540] sm:$0xff]
    %v6668 = vld [vmem:[#allocation7 + $0x548] sm:$0xff]
    %v6669 = vld [vmem:[#allocation7 + $0x550] sm:$0xff]
    %v6670 = vld [vmem:[#allocation7 + $0x558] sm:$0xff]
    %v6671 = vld [vmem:[#allocation7 + $0x560] sm:$0xff]
    %v6672 = vld [vmem:[#allocation7 + $0x568] sm:$0xff]
    %v6673 = vld [vmem:[#allocation7 + $0x570] sm:$0xff]
    %v6674 = vld [vmem:[#allocation7 + $0x578] sm:$0xff]
    %v6675 = vld [vmem:[#allocation7 + $0x580] sm:$0xff]
    %v6676 = vld [vmem:[#allocation7 + $0x588] sm:$0xff]
    %v6677 = vld [vmem:[#allocation7 + $0x590] sm:$0xff]
    %v6678 = vld [vmem:[#allocation7 + $0x598] sm:$0xff]
    %v6679 = vld [vmem:[#allocation7 + $0x5a0] sm:$0xff]
    %v6680 = vld [vmem:[#allocation7 + $0x5a8] sm:$0xff]
    %v6681 = vld [vmem:[#allocation7 + $0x5b0] sm:$0xff]
    %v6682 = vld [vmem:[#allocation7 + $0x5b8] sm:$0xff]
    %v6683 = vld [vmem:[#allocation7 + $0x5c0] sm:$0xff]
    %v6684 = vld [vmem:[#allocation7 + $0x5c8] sm:$0xff]
    %v6685 = vld [vmem:[#allocation7 + $0x5d0] sm:$0xff]
    %v6686 = vld [vmem:[#allocation7 + $0x5d8] sm:$0xff]
    %v6687 = vld [vmem:[#allocation7 + $0x5e0] sm:$0xff]
    %v6688 = vld [vmem:[#allocation7 + $0x5e8] sm:$0xff]
    %v6689 = vld [vmem:[#allocation7 + $0x5f0] sm:$0xff]
    %v6690 = vld [vmem:[#allocation7 + $0x5f8] sm:$0xff]
    %v6691 = vld [vmem:[#allocation7 + $0x600] sm:$0xff]
    %v6692 = vld [vmem:[#allocation7 + $0x608] sm:$0xff]
    %v6693 = vld [vmem:[#allocation7 + $0x610] sm:$0xff]
    %v6694 = vld [vmem:[#allocation7 + $0x618] sm:$0xff]
    %v6695 = vld [vmem:[#allocation7 + $0x620] sm:$0xff]
    %v6696 = vld [vmem:[#allocation7 + $0x628] sm:$0xff]
    %v6697 = vld [vmem:[#allocation7 + $0x630] sm:$0xff]
    %v6698 = vld [vmem:[#allocation7 + $0x638] sm:$0xff]
    %v6699 = vld [vmem:[#allocation7 + $0x640] sm:$0xff]
    %v6700 = vld [vmem:[#allocation7 + $0x648] sm:$0xff]
    %v6701 = vld [vmem:[#allocation7 + $0x650] sm:$0xff]
    %v6702 = vld [vmem:[#allocation7 + $0x658] sm:$0xff]
    %v6703 = vld [vmem:[#allocation7 + $0x660] sm:$0xff]
    %v6704 = vld [vmem:[#allocation7 + $0x668] sm:$0xff]
    %v6705 = vld [vmem:[#allocation7 + $0x670] sm:$0xff]
    %v6706 = vld [vmem:[#allocation7 + $0x678] sm:$0xff]
    %v6707 = vld [vmem:[#allocation7 + $0x680] sm:$0xff]
    %v6708 = vld [vmem:[#allocation7 + $0x688] sm:$0xff]
    %v6709 = vld [vmem:[#allocation7 + $0x690] sm:$0xff]
    %v6710 = vld [vmem:[#allocation7 + $0x698] sm:$0xff]
    %v6711 = vld [vmem:[#allocation7 + $0x6a0] sm:$0xff]
    %v6712 = vld [vmem:[#allocation7 + $0x6a8] sm:$0xff]
    %v6713 = vld [vmem:[#allocation7 + $0x6b0] sm:$0xff]
    %v6714 = vld [vmem:[#allocation7 + $0x6b8] sm:$0xff]
    %v6715 = vld [vmem:[#allocation7 + $0x6c0] sm:$0xff]
    %v6716 = vld [vmem:[#allocation7 + $0x6c8] sm:$0xff]
    %v6717 = vld [vmem:[#allocation7 + $0x6d0] sm:$0xff]
    %v6718 = vld [vmem:[#allocation7 + $0x6d8] sm:$0xff]
    %v6719 = vld [vmem:[#allocation7 + $0x6e0] sm:$0xff]
    %v6720 = vld [vmem:[#allocation7 + $0x6e8] sm:$0xff]
    %v6721 = vld [vmem:[#allocation7 + $0x6f0] sm:$0xff]
    %v6722 = vld [vmem:[#allocation7 + $0x6f8] sm:$0xff]
    %v6723 = vld [vmem:[#allocation7 + $0x700] sm:$0xff]
    %v6724 = vld [vmem:[#allocation7 + $0x708] sm:$0xff]
    %v6725 = vld [vmem:[#allocation7 + $0x710] sm:$0xff]
    %v6726 = vld [vmem:[#allocation7 + $0x718] sm:$0xff]
    %v6727 = vld [vmem:[#allocation7 + $0x720] sm:$0xff]
    %v6728 = vld [vmem:[#allocation7 + $0x728] sm:$0xff]
    %v6729 = vld [vmem:[#allocation7 + $0x730] sm:$0xff]
    %v6730 = vld [vmem:[#allocation7 + $0x738] sm:$0xff]
    %v6731 = vld [vmem:[#allocation7 + $0x740] sm:$0xff]
    %v6732 = vld [vmem:[#allocation7 + $0x748] sm:$0xff]
    %v6733 = vld [vmem:[#allocation7 + $0x750] sm:$0xff]
    %v6734 = vld [vmem:[#allocation7 + $0x758] sm:$0xff]
    %v6735 = vld [vmem:[#allocation7 + $0x760] sm:$0xff]
    %v6736 = vld [vmem:[#allocation7 + $0x768] sm:$0xff]
    %v6737 = vld [vmem:[#allocation7 + $0x770] sm:$0xff]
    %v6738 = vld [vmem:[#allocation7 + $0x778] sm:$0xff]
    %v6739 = vld [vmem:[#allocation7 + $0x780] sm:$0xff]
    %v6740 = vld [vmem:[#allocation7 + $0x788] sm:$0xff]
    %v6741 = vld [vmem:[#allocation7 + $0x790] sm:$0xff]
    %v6742 = vld [vmem:[#allocation7 + $0x798] sm:$0xff]
    %v6743 = vld [vmem:[#allocation7 + $0x7a0] sm:$0xff]
    %v6744 = vld [vmem:[#allocation7 + $0x7a8] sm:$0xff]
    %v6745 = vld [vmem:[#allocation7 + $0x7b0] sm:$0xff]
    %v6746 = vld [vmem:[#allocation7 + $0x7b8] sm:$0xff]
    %v6747 = vld [vmem:[#allocation7 + $0x7c0] sm:$0xff]
    %v6748 = vld [vmem:[#allocation7 + $0x7c8] sm:$0xff]
    %v6749 = vld [vmem:[#allocation7 + $0x7d0] sm:$0xff]
    %v6750 = vld [vmem:[#allocation7 + $0x7d8] sm:$0xff]
    %v6751 = vld [vmem:[#allocation7 + $0x7e0] sm:$0xff]
    %v6752 = vld [vmem:[#allocation7 + $0x7e8] sm:$0xff]
    %v6753 = vld [vmem:[#allocation7 + $0x7f0] sm:$0xff]
    %v6754 = vld [vmem:[#allocation7 + $0x7f8] sm:$0xff]
    %v6755 = vrot.slane %v5943, 2
    %v6756 = vrot.slane %v6213, 2
    %6759 = vmatprep.subr.mxu0 %v6500
    %6760 = vmatpush1.msra.mxu0 %v6499
    %6761 = vmatprep.subr.mxu0 %v6508
    %6762 = vmatpush1.msra.mxu0 %v6507
    %6763 = vmatprep.subr.mxu0 %v6516
    %6764 = vmatpush1.msra.mxu0 %v6515
    %6765 = vmatprep.subr.mxu0 %v6524
    %6766 = vmatpush1.msra.mxu0 %v6523
    %6767 = vmatprep.subr.mxu0 %v6532
    %6768 = vmatpush1.msra.mxu0 %v6531
    %6769 = vmatprep.subr.mxu0 %v6540
    %6770 = vmatpush1.msra.mxu0 %v6539
    %6771 = vmatprep.subr.mxu0 %v6548
    %6772 = vmatpush1.msra.mxu0 %v6547
    %6773 = vmatprep.subr.mxu0 %v6556
    %6774 = vmatpush1.msra.mxu0 %v6555
    %6775 = vmatprep.subr.mxu0 %v6564
    %6776 = vmatpush1.msra.mxu0 %v6563
    %6777 = vmatprep.subr.mxu0 %v6572
    %6778 = vmatpush1.msra.mxu0 %v6571
    %6779 = vmatprep.subr.mxu0 %v6580
    %6780 = vmatpush1.msra.mxu0 %v6579
    %6781 = vmatprep.subr.mxu0 %v6588
    %6782 = vmatpush1.msra.mxu0 %v6587
    %6783 = vmatprep.subr.mxu0 %v6596
    %6784 = vmatpush1.msra.mxu0 %v6595
    %6785 = vmatprep.subr.mxu0 %v6604
    %6786 = vmatpush1.msra.mxu0 %v6603
    %6787 = vmatprep.subr.mxu0 %v6612
    %6788 = vmatpush1.msra.mxu0 %v6611
    %6789 = vmatprep.subr.mxu0 %v6620
    %6790 = vmatpush1.msra.mxu0 %v6619
    %6791 = vmatprep.subr.mxu0 %v6628
    %6792 = vmatpush1.msra.mxu0 %v6627
    %6793 = vmatprep.subr.mxu0 %v6636
    %6794 = vmatpush1.msra.mxu0 %v6635
    %6795 = vmatprep.subr.mxu0 %v6644
    %6796 = vmatpush1.msra.mxu0 %v6643
    %6797 = vmatprep.subr.mxu0 %v6652
    %6798 = vmatpush1.msra.mxu0 %v6651
    %6799 = vmatprep.subr.mxu0 %v6660
    %6800 = vmatpush1.msra.mxu0 %v6659
    %6801 = vmatprep.subr.mxu0 %v6668
    %6802 = vmatpush1.msra.mxu0 %v6667
    %6803 = vmatprep.subr.mxu0 %v6676
    %6804 = vmatpush1.msra.mxu0 %v6675
    %6805 = vmatprep.subr.mxu0 %v6684
    %6806 = vmatpush1.msra.mxu0 %v6683
    %6807 = vmatprep.subr.mxu0 %v6692
    %6808 = vmatpush1.msra.mxu0 %v6691
    %6809 = vmatprep.subr.mxu0 %v6700
    %6810 = vmatpush1.msra.mxu0 %v6699
    %6811 = vmatprep.subr.mxu0 %v6708
    %6812 = vmatpush1.msra.mxu0 %v6707
    %6813 = vmatprep.subr.mxu0 %v6716
    %6814 = vmatpush1.msra.mxu0 %v6715
    %6815 = vmatprep.subr.mxu0 %v6724
    %6816 = vmatpush1.msra.mxu0 %v6723
    %6817 = vmatprep.subr.mxu0 %v6732
    %6818 = vmatpush1.msra.mxu0 %v6731
    %6819 = vmatprep.subr.mxu0 %v6740
    %6820 = vmatpush1.msra.mxu0 %v6739
    %6821 = vmatprep.subr.mxu0 %v6748
    %6822 = vmatpush1.msra.mxu0 %v6747
    %6823 = vmatprep.mubr.f32.mxu0 %v6756
    %6824 = vmatmul.mubr.f32.gmra.mrb[0].mxu0 %v6755
    %v6825 = vpop.f32.mrb[0].mxu0
    %v6826 = vadd.f32 0.0, %v6825
    %v6827 = vpop.f32.mrb[0].mxu0
    %v6828 = vadd.f32 0.0, %v6827
    %6829 = vdwg.mxu0
    %6830 = vmatprep.subr.mxu0 %v6502
    %6831 = vmatpush1.msra.mxu0 %v6501
    %6832 = vmatprep.subr.mxu0 %v6510
    %6833 = vmatpush1.msra.mxu0 %v6509
    %6834 = vmatprep.subr.mxu0 %v6518
    %6835 = vmatpush1.msra.mxu0 %v6517
    %6836 = vmatprep.subr.mxu0 %v6526
    %6837 = vmatpush1.msra.mxu0 %v6525
    %6838 = vmatprep.subr.mxu0 %v6534
    %6839 = vmatpush1.msra.mxu0 %v6533
    %6840 = vmatprep.subr.mxu0 %v6542
    %6841 = vmatpush1.msra.mxu0 %v6541
    %6842 = vmatprep.subr.mxu0 %v6550
    %6843 = vmatpush1.msra.mxu0 %v6549
    %6844 = vmatprep.subr.mxu0 %v6558
    %6845 = vmatpush1.msra.mxu0 %v6557
    %6846 = vmatprep.subr.mxu0 %v6566
    %6847 = vmatpush1.msra.mxu0 %v6565
    %6848 = vmatprep.subr.mxu0 %v6574
    %6849 = vmatpush1.msra.mxu0 %v6573
    %6850 = vmatprep.subr.mxu0 %v6582
    %6851 = vmatpush1.msra.mxu0 %v6581
    %6852 = vmatprep.subr.mxu0 %v6590
    %6853 = vmatpush1.msra.mxu0 %v6589
    %6854 = vmatprep.subr.mxu0 %v6598
    %6855 = vmatpush1.msra.mxu0 %v6597
    %6856 = vmatprep.subr.mxu0 %v6606
    %6857 = vmatpush1.msra.mxu0 %v6605
    %6858 = vmatprep.subr.mxu0 %v6614
    %6859 = vmatpush1.msra.mxu0 %v6613
    %6860 = vmatprep.subr.mxu0 %v6622
    %6861 = vmatpush1.msra.mxu0 %v6621
    %6862 = vmatprep.subr.mxu0 %v6630
    %6863 = vmatpush1.msra.mxu0 %v6629
    %6864 = vmatprep.subr.mxu0 %v6638
    %6865 = vmatpush1.msra.mxu0 %v6637
    %6866 = vmatprep.subr.mxu0 %v6646
    %6867 = vmatpush1.msra.mxu0 %v6645
    %6868 = vmatprep.subr.mxu0 %v6654
    %6869 = vmatpush1.msra.mxu0 %v6653
    %6870 = vmatprep.subr.mxu0 %v6662
    %6871 = vmatpush1.msra.mxu0 %v6661
    %6872 = vmatprep.subr.mxu0 %v6670
    %6873 = vmatpush1.msra.mxu0 %v6669
    %6874 = vmatprep.subr.mxu0 %v6678
    %6875 = vmatpush1.msra.mxu0 %v6677
    %6876 = vmatprep.subr.mxu0 %v6686
    %6877 = vmatpush1.msra.mxu0 %v6685
    %6878 = vmatprep.subr.mxu0 %v6694
    %6879 = vmatpush1.msra.mxu0 %v6693
    %6880 = vmatprep.subr.mxu0 %v6702
    %6881 = vmatpush1.msra.mxu0 %v6701
    %6882 = vmatprep.subr.mxu0 %v6710
    %6883 = vmatpush1.msra.mxu0 %v6709
    %6884 = vmatprep.subr.mxu0 %v6718
    %6885 = vmatpush1.msra.mxu0 %v6717
    %6886 = vmatprep.subr.mxu0 %v6726
    %6887 = vmatpush1.msra.mxu0 %v6725
    %6888 = vmatprep.subr.mxu0 %v6734
    %6889 = vmatpush1.msra.mxu0 %v6733
    %6890 = vmatprep.subr.mxu0 %v6742
    %6891 = vmatpush1.msra.mxu0 %v6741
    %6892 = vmatprep.subr.mxu0 %v6750
    %6893 = vmatpush1.msra.mxu0 %v6749
    %6894 = vmatprep.mubr.f32.mxu0 %v6756
    %6895 = vmatmul.mubr.f32.gmra.mrb[0].mxu0 %v6755
    %v6896 = vpop.f32.mrb[0].mxu0
    %v6897 = vadd.f32 0.0, %v6896
    %v6898 = vpop.f32.mrb[0].mxu0
    %v6899 = vadd.f32 0.0, %v6898
    %6900 = vdwg.mxu0
    %6901 = vmatprep.subr.mxu0 %v6504
    %6902 = vmatpush1.msra.mxu0 %v6503
    %6903 = vmatprep.subr.mxu0 %v6512
    %6904 = vmatpush1.msra.mxu0 %v6511
    %6905 = vmatprep.subr.mxu0 %v6520
    %6906 = vmatpush1.msra.mxu0 %v6519
    %6907 = vmatprep.subr.mxu0 %v6528
    %6908 = vmatpush1.msra.mxu0 %v6527
    %6909 = vmatprep.subr.mxu0 %v6536
    %6910 = vmatpush1.msra.mxu0 %v6535
    %6911 = vmatprep.subr.mxu0 %v6544
    %6912 = vmatpush1.msra.mxu0 %v6543
    %6913 = vmatprep.subr.mxu0 %v6552
    %6914 = vmatpush1.msra.mxu0 %v6551
    %6915 = vmatprep.subr.mxu0 %v6560
    %6916 = vmatpush1.msra.mxu0 %v6559
    %6917 = vmatprep.subr.mxu0 %v6568
    %6918 = vmatpush1.msra.mxu0 %v6567
    %6919 = vmatprep.subr.mxu0 %v6576
    %6920 = vmatpush1.msra.mxu0 %v6575
    %6921 = vmatprep.subr.mxu0 %v6584
    %6922 = vmatpush1.msra.mxu0 %v6583
    %6923 = vmatprep.subr.mxu0 %v6592
    %6924 = vmatpush1.msra.mxu0 %v6591
    %6925 = vmatprep.subr.mxu0 %v6600
    %6926 = vmatpush1.msra.mxu0 %v6599
    %6927 = vmatprep.subr.mxu0 %v6608
    %6928 = vmatpush1.msra.mxu0 %v6607
    %6929 = vmatprep.subr.mxu0 %v6616
    %6930 = vmatpush1.msra.mxu0 %v6615
    %6931 = vmatprep.subr.mxu0 %v6624
    %6932 = vmatpush1.msra.mxu0 %v6623
    %6933 = vmatprep.subr.mxu0 %v6632
    %6934 = vmatpush1.msra.mxu0 %v6631
    %6935 = vmatprep.subr.mxu0 %v6640
    %6936 = vmatpush1.msra.mxu0 %v6639
    %6937 = vmatprep.subr.mxu0 %v6648
    %6938 = vmatpush1.msra.mxu0 %v6647
    %6939 = vmatprep.subr.mxu0 %v6656
    %6940 = vmatpush1.msra.mxu0 %v6655
    %6941 = vmatprep.subr.mxu0 %v6664
    %6942 = vmatpush1.msra.mxu0 %v6663
    %6943 = vmatprep.subr.mxu0 %v6672
    %6944 = vmatpush1.msra.mxu0 %v6671
    %6945 = vmatprep.subr.mxu0 %v6680
    %6946 = vmatpush1.msra.mxu0 %v6679
    %6947 = vmatprep.subr.mxu0 %v6688
    %6948 = vmatpush1.msra.mxu0 %v6687
    %6949 = vmatprep.subr.mxu0 %v6696
    %6950 = vmatpush1.msra.mxu0 %v6695
    %6951 = vmatprep.subr.mxu0 %v6704
    %6952 = vmatpush1.msra.mxu0 %v6703
    %6953 = vmatprep.subr.mxu0 %v6712
    %6954 = vmatpush1.msra.mxu0 %v6711
    %6955 = vmatprep.subr.mxu0 %v6720
    %6956 = vmatpush1.msra.mxu0 %v6719
    %6957 = vmatprep.subr.mxu0 %v6728
    %6958 = vmatpush1.msra.mxu0 %v6727
    %6959 = vmatprep.subr.mxu0 %v6736
    %6960 = vmatpush1.msra.mxu0 %v6735
    %6961 = vmatprep.subr.mxu0 %v6744
    %6962 = vmatpush1.msra.mxu0 %v6743
    %6963 = vmatprep.subr.mxu0 %v6752
    %6964 = vmatpush1.msra.mxu0 %v6751
    %6965 = vmatprep.mubr.f32.mxu0 %v6756
    %6966 = vmatmul.mubr.f32.gmra.mrb[0].mxu0 %v6755
    %v6967 = vpop.f32.mrb[0].mxu0
    %v6968 = vadd.f32 0.0, %v6967
    %v6969 = vpop.f32.mrb[0].mxu0
    %v6970 = vadd.f32 0.0, %v6969
    %6971 = vdwg.mxu0
    %6972 = vmatprep.subr.mxu0 %v6506
    %6973 = vmatpush1.msra.mxu0 %v6505
    %6974 = vmatprep.subr.mxu0 %v6514
    %6975 = vmatpush1.msra.mxu0 %v6513
    %6976 = vmatprep.subr.mxu0 %v6522
    %6977 = vmatpush1.msra.mxu0 %v6521
    %6978 = vmatprep.subr.mxu0 %v6530
    %6979 = vmatpush1.msra.mxu0 %v6529
    %6980 = vmatprep.subr.mxu0 %v6538
    %6981 = vmatpush1.msra.mxu0 %v6537
    %6982 = vmatprep.subr.mxu0 %v6546
    %6983 = vmatpush1.msra.mxu0 %v6545
    %6984 = vmatprep.subr.mxu0 %v6554
    %6985 = vmatpush1.msra.mxu0 %v6553
    %6986 = vmatprep.subr.mxu0 %v6562
    %6987 = vmatpush1.msra.mxu0 %v6561
    %6988 = vmatprep.subr.mxu0 %v6570
    %6989 = vmatpush1.msra.mxu0 %v6569
    %6990 = vmatprep.subr.mxu0 %v6578
    %6991 = vmatpush1.msra.mxu0 %v6577
    %6992 = vmatprep.subr.mxu0 %v6586
    %6993 = vmatpush1.msra.mxu0 %v6585
    %6994 = vmatprep.subr.mxu0 %v6594
    %6995 = vmatpush1.msra.mxu0 %v6593
    %6996 = vmatprep.subr.mxu0 %v6602
    %6997 = vmatpush1.msra.mxu0 %v6601
    %6998 = vmatprep.subr.mxu0 %v6610
    %6999 = vmatpush1.msra.mxu0 %v6609
    %7000 = vmatprep.subr.mxu0 %v6618
    %7001 = vmatpush1.msra.mxu0 %v6617
    %7002 = vmatprep.subr.mxu0 %v6626
    %7003 = vmatpush1.msra.mxu0 %v6625
    %7004 = vmatprep.subr.mxu0 %v6634
    %7005 = vmatpush1.msra.mxu0 %v6633
    %7006 = vmatprep.subr.mxu0 %v6642
    %7007 = vmatpush1.msra.mxu0 %v6641
    %7008 = vmatprep.subr.mxu0 %v6650
    %7009 = vmatpush1.msra.mxu0 %v6649
    %7010 = vmatprep.subr.mxu0 %v6658
    %7011 = vmatpush1.msra.mxu0 %v6657
    %7012 = vmatprep.subr.mxu0 %v6666
    %7013 = vmatpush1.msra.mxu0 %v6665
    %7014 = vmatprep.subr.mxu0 %v6674
    %7015 = vmatpush1.msra.mxu0 %v6673
    %7016 = vmatprep.subr.mxu0 %v6682
    %7017 = vmatpush1.msra.mxu0 %v6681
    %7018 = vmatprep.subr.mxu0 %v6690
    %7019 = vmatpush1.msra.mxu0 %v6689
    %7020 = vmatprep.subr.mxu0 %v6698
    %7021 = vmatpush1.msra.mxu0 %v6697
    %7022 = vmatprep.subr.mxu0 %v6706
    %7023 = vmatpush1.msra.mxu0 %v6705
    %7024 = vmatprep.subr.mxu0 %v6714
    %7025 = vmatpush1.msra.mxu0 %v6713
    %7026 = vmatprep.subr.mxu0 %v6722
    %7027 = vmatpush1.msra.mxu0 %v6721
    %7028 = vmatprep.subr.mxu0 %v6730
    %7029 = vmatpush1.msra.mxu0 %v6729
    %7030 = vmatprep.subr.mxu0 %v6738
    %7031 = vmatpush1.msra.mxu0 %v6737
    %7032 = vmatprep.subr.mxu0 %v6746
    %7033 = vmatpush1.msra.mxu0 %v6745
    %7034 = vmatprep.subr.mxu0 %v6754
    %7035 = vmatpush1.msra.mxu0 %v6753
    %7036 = vmatprep.mubr.f32.mxu0 %v6756
    %7037 = vmatmul.mubr.f32.gmra.mrb[0].mxu0 %v6755
    %v7038 = vpop.f32.mrb[0].mxu0
    %v7039 = vadd.f32 0.0, %v7038
    %v7040 = vpop.f32.mrb[0].mxu0
    %v7041 = vadd.f32 0.0, %v7040
    %7042 = vdwg.mxu0
    %s7043 = scalar_lea.vmem [#allocation2], 160
    %v7044 = vld [vmem:[%s7043] sm:$0xff]
    %v7045 = vld [vmem:[%s7043 + $0x8] sm:$0xff]
    %v7046 = vld [vmem:[%s7043 + $0x10] sm:$0xff]
    %v7047 = vld [vmem:[%s7043 + $0x18] sm:$0xff]
    %v7056 = vrot.slane %v6826, 6
    %v7057 = vrot.slane %v6828, 6
    %v7058 = vrot.slane %v6897, 6
    %v7059 = vrot.slane %v6899, 6
    %v7060 = vrot.slane %v6968, 6
    %v7061 = vrot.slane %v6970, 6
    %v7062 = vrot.slane %v7039, 6
    %v7063 = vrot.slane %v7041, 6
    %v7072 = vsel %vm1164, %v6282, %v7056
    %v7073 = vsel %vm1164, %v6284, %v7057
    %v7074 = vsel %vm1164, %v6353, %v7058
    %v7075 = vsel %vm1164, %v6355, %v7059
    %v7076 = vsel %vm1164, %v6424, %v7060
    %v7077 = vsel %vm1164, %v6426, %v7061
    %v7078 = vsel %vm1164, %v6495, %v7062
    %v7079 = vsel %vm1164, %v6497, %v7063
    %v7088 = vcombine.low %v7072, %v7073
    %v7089 = vcombine.low %v7074, %v7075
    %v7090 = vcombine.low %v7076, %v7077
    %v7091 = vcombine.low %v7078, %v7079
    %v7096 = vadd.f32 %v7044, %v7088
    %v7097 = vadd.f32 %v7045, %v7089
    %v7098 = vadd.f32 %v7046, %v7090
    %v7099 = vadd.f32 %v7047, %v7091
    %v7100 = vxor.u32 %v7096, 2147483648
    %v7101 = vxor.u32 %v7097, 2147483648
    %v7102 = vxor.u32 %v7098, 2147483648
    %v7103 = vmul.f32 %v7100, 1.442695
    %v7104 = vpow.pop %v7103
    %v7105 = vmul.f32 %v7101, 1.442695
    %v7106 = vpow.pop %v7105
    %v7107 = vmul.f32 %v7102, 1.442695
    %v7108 = vpow.pop %v7107
    %v7109 = vadd.f32 %v7104, 1.0
    %v7110 = vadd.f32 %v7106, 1.0
    %v7111 = vadd.f32 %v7108, 1.0
    %v7112 = vrcp.pop %v7109
    %v7113 = vmul.f32 1.0, %v7112
    %v7114 = vrcp.pop %v7110
    %v7115 = vmul.f32 1.0, %v7114
    %v7116 = vrcp.pop %v7111
    %v7117 = vmul.f32 1.0, %v7116
    %v7118 = vtanh.pop %v7099
    %v7119 = vmul.f32 %v7115, %v5941
    %v7120 = vmul.f32 %v7113, %v7118
    %v7121 = vadd.f32 %v7119, %v7120
    %v7122 = vtanh.pop %v7121
    %v7123 = vmul.f32 %v7117, %v7122
    %v7126 = vunpack.c.l.s4 1983009808
    %v7127 = vunpack.c.0.s8 %v7126
    %v7128 = vlaneseq
    %v7129 = vshrl.u32 %v7128, 7
    %v7130 = vsub.s32 %v7127, %v7129
    %v7131 = vrot.slane %v7123, %v7130
    %7133 = vst [vmem:[%s3593] sm:$0xf] %v7131
    %v7134 = vcombine.high %v7131, %v7131
    %7136 = vst [vmem:[%s3589 + $0x4] sm:$0xf] %v7134
    %v7137 = vld [vmem:[#allocation5] sm:$0xff]
    %v7138 = vld [vmem:[#allocation5 + $0x8] sm:$0xff]
    %v7139 = vld [vmem:[#allocation5 + $0x10] sm:$0xff]
    %v7140 = vld [vmem:[#allocation5 + $0x18] sm:$0xff]
    %v7141 = vld [vmem:[#allocation5 + $0x20] sm:$0xff]
    %v7142 = vld [vmem:[#allocation5 + $0x28] sm:$0xff]
    %v7143 = vld [vmem:[#allocation5 + $0x30] sm:$0xff]
    %v7144 = vld [vmem:[#allocation5 + $0x38] sm:$0xff]
    %v7145 = vld [vmem:[#allocation5 + $0x40] sm:$0xff]
    %v7146 = vld [vmem:[#allocation5 + $0x48] sm:$0xff]
    %v7147 = vld [vmem:[#allocation5 + $0x50] sm:$0xff]
    %v7148 = vld [vmem:[#allocation5 + $0x58] sm:$0xff]
    %v7149 = vld [vmem:[#allocation5 + $0x60] sm:$0xff]
    %v7150 = vld [vmem:[#allocation5 + $0x68] sm:$0xff]
    %v7151 = vld [vmem:[#allocation5 + $0x70] sm:$0xff]
    %v7152 = vld [vmem:[#allocation5 + $0x78] sm:$0xff]
    %v7153 = vld [vmem:[#allocation5 + $0x80] sm:$0xff]
    %v7154 = vld [vmem:[#allocation5 + $0x88] sm:$0xff]
    %v7155 = vld [vmem:[#allocation5 + $0x90] sm:$0xff]
    %v7156 = vld [vmem:[#allocation5 + $0x98] sm:$0xff]
    %v7157 = vld [vmem:[#allocation5 + $0xa0] sm:$0xff]
    %v7158 = vld [vmem:[#allocation5 + $0xa8] sm:$0xff]
    %v7159 = vld [vmem:[#allocation5 + $0xb0] sm:$0xff]
    %v7160 = vld [vmem:[#allocation5 + $0xb8] sm:$0xff]
    %v7161 = vld [vmem:[#allocation5 + $0xc0] sm:$0xff]
    %v7162 = vld [vmem:[#allocation5 + $0xc8] sm:$0xff]
    %v7163 = vld [vmem:[#allocation5 + $0xd0] sm:$0xff]
    %v7164 = vld [vmem:[#allocation5 + $0xd8] sm:$0xff]
    %v7165 = vld [vmem:[#allocation5 + $0xe0] sm:$0xff]
    %v7166 = vld [vmem:[#allocation5 + $0xe8] sm:$0xff]
    %v7167 = vld [vmem:[#allocation5 + $0xf0] sm:$0xff]
    %v7168 = vld [vmem:[#allocation5 + $0xf8] sm:$0xff]
    %v7169 = vld [vmem:[#allocation5 + $0x100] sm:$0xff]
    %v7170 = vld [vmem:[#allocation5 + $0x108] sm:$0xff]
    %v7171 = vld [vmem:[#allocation5 + $0x110] sm:$0xff]
    %v7172 = vld [vmem:[#allocation5 + $0x118] sm:$0xff]
    %v7173 = vld [vmem:[#allocation5 + $0x120] sm:$0xff]
    %v7174 = vld [vmem:[#allocation5 + $0x128] sm:$0xff]
    %v7175 = vld [vmem:[#allocation5 + $0x130] sm:$0xff]
    %v7176 = vld [vmem:[#allocation5 + $0x138] sm:$0xff]
    %v7177 = vld [vmem:[#allocation5 + $0x140] sm:$0xff]
    %v7178 = vld [vmem:[#allocation5 + $0x148] sm:$0xff]
    %v7179 = vld [vmem:[#allocation5 + $0x150] sm:$0xff]
    %v7180 = vld [vmem:[#allocation5 + $0x158] sm:$0xff]
    %v7181 = vld [vmem:[#allocation5 + $0x160] sm:$0xff]
    %v7182 = vld [vmem:[#allocation5 + $0x168] sm:$0xff]
    %v7183 = vld [vmem:[#allocation5 + $0x170] sm:$0xff]
    %v7184 = vld [vmem:[#allocation5 + $0x178] sm:$0xff]
    %v7185 = vld [vmem:[#allocation5 + $0x180] sm:$0xff]
    %v7186 = vld [vmem:[#allocation5 + $0x188] sm:$0xff]
    %v7187 = vld [vmem:[#allocation5 + $0x190] sm:$0xff]
    %v7188 = vld [vmem:[#allocation5 + $0x198] sm:$0xff]
    %v7189 = vld [vmem:[#allocation5 + $0x1a0] sm:$0xff]
    %v7190 = vld [vmem:[#allocation5 + $0x1a8] sm:$0xff]
    %v7191 = vld [vmem:[#allocation5 + $0x1b0] sm:$0xff]
    %v7192 = vld [vmem:[#allocation5 + $0x1b8] sm:$0xff]
    %v7193 = vld [vmem:[#allocation5 + $0x1c0] sm:$0xff]
    %v7194 = vld [vmem:[#allocation5 + $0x1c8] sm:$0xff]
    %v7195 = vld [vmem:[#allocation5 + $0x1d0] sm:$0xff]
    %v7196 = vld [vmem:[#allocation5 + $0x1d8] sm:$0xff]
    %v7197 = vld [vmem:[#allocation5 + $0x1e0] sm:$0xff]
    %v7198 = vld [vmem:[#allocation5 + $0x1e8] sm:$0xff]
    %v7199 = vld [vmem:[#allocation5 + $0x1f0] sm:$0xff]
    %v7200 = vld [vmem:[#allocation5 + $0x1f8] sm:$0xff]
    %v7201 = vld [vmem:[#allocation5 + $0x200] sm:$0xff]
    %v7202 = vld [vmem:[#allocation5 + $0x208] sm:$0xff]
    %v7203 = vld [vmem:[#allocation5 + $0x210] sm:$0xff]
    %v7204 = vld [vmem:[#allocation5 + $0x218] sm:$0xff]
    %v7205 = vld [vmem:[#allocation5 + $0x220] sm:$0xff]
    %v7206 = vld [vmem:[#allocation5 + $0x228] sm:$0xff]
    %v7207 = vld [vmem:[#allocation5 + $0x230] sm:$0xff]
    %v7208 = vld [vmem:[#allocation5 + $0x238] sm:$0xff]
    %v7209 = vld [vmem:[#allocation5 + $0x240] sm:$0xff]
    %v7210 = vld [vmem:[#allocation5 + $0x248] sm:$0xff]
    %v7211 = vld [vmem:[#allocation5 + $0x250] sm:$0xff]
    %v7212 = vld [vmem:[#allocation5 + $0x258] sm:$0xff]
    %v7213 = vld [vmem:[#allocation5 + $0x260] sm:$0xff]
    %v7214 = vld [vmem:[#allocation5 + $0x268] sm:$0xff]
    %v7215 = vld [vmem:[#allocation5 + $0x270] sm:$0xff]
    %v7216 = vld [vmem:[#allocation5 + $0x278] sm:$0xff]
    %v7217 = vld [vmem:[#allocation5 + $0x280] sm:$0xff]
    %v7218 = vld [vmem:[#allocation5 + $0x288] sm:$0xff]
    %v7219 = vld [vmem:[#allocation5 + $0x290] sm:$0xff]
    %v7220 = vld [vmem:[#allocation5 + $0x298] sm:$0xff]
    %v7221 = vld [vmem:[#allocation5 + $0x2a0] sm:$0xff]
    %v7222 = vld [vmem:[#allocation5 + $0x2a8] sm:$0xff]
    %v7223 = vld [vmem:[#allocation5 + $0x2b0] sm:$0xff]
    %v7224 = vld [vmem:[#allocation5 + $0x2b8] sm:$0xff]
    %v7225 = vld [vmem:[#allocation5 + $0x2c0] sm:$0xff]
    %v7226 = vld [vmem:[#allocation5 + $0x2c8] sm:$0xff]
    %v7227 = vld [vmem:[#allocation5 + $0x2d0] sm:$0xff]
    %v7228 = vld [vmem:[#allocation5 + $0x2d8] sm:$0xff]
    %v7229 = vld [vmem:[#allocation5 + $0x2e0] sm:$0xff]
    %v7230 = vld [vmem:[#allocation5 + $0x2e8] sm:$0xff]
    %v7231 = vld [vmem:[#allocation5 + $0x2f0] sm:$0xff]
    %v7232 = vld [vmem:[#allocation5 + $0x2f8] sm:$0xff]
    %v7233 = vld [vmem:[#allocation5 + $0x300] sm:$0xff]
    %v7234 = vld [vmem:[#allocation5 + $0x308] sm:$0xff]
    %v7235 = vld [vmem:[#allocation5 + $0x310] sm:$0xff]
    %v7236 = vld [vmem:[#allocation5 + $0x318] sm:$0xff]
    %v7237 = vld [vmem:[#allocation5 + $0x320] sm:$0xff]
    %v7238 = vld [vmem:[#allocation5 + $0x328] sm:$0xff]
    %v7239 = vld [vmem:[#allocation5 + $0x330] sm:$0xff]
    %v7240 = vld [vmem:[#allocation5 + $0x338] sm:$0xff]
    %v7241 = vld [vmem:[#allocation5 + $0x340] sm:$0xff]
    %v7242 = vld [vmem:[#allocation5 + $0x348] sm:$0xff]
    %v7243 = vld [vmem:[#allocation5 + $0x350] sm:$0xff]
    %v7244 = vld [vmem:[#allocation5 + $0x358] sm:$0xff]
    %v7245 = vld [vmem:[#allocation5 + $0x360] sm:$0xff]
    %v7246 = vld [vmem:[#allocation5 + $0x368] sm:$0xff]
    %v7247 = vld [vmem:[#allocation5 + $0x370] sm:$0xff]
    %v7248 = vld [vmem:[#allocation5 + $0x378] sm:$0xff]
    %v7249 = vld [vmem:[#allocation5 + $0x380] sm:$0xff]
    %v7250 = vld [vmem:[#allocation5 + $0x388] sm:$0xff]
    %v7251 = vld [vmem:[#allocation5 + $0x390] sm:$0xff]
    %v7252 = vld [vmem:[#allocation5 + $0x398] sm:$0xff]
    %v7253 = vld [vmem:[#allocation5 + $0x3a0] sm:$0xff]
    %v7254 = vld [vmem:[#allocation5 + $0x3a8] sm:$0xff]
    %v7255 = vld [vmem:[#allocation5 + $0x3b0] sm:$0xff]
    %v7256 = vld [vmem:[#allocation5 + $0x3b8] sm:$0xff]
    %v7257 = vld [vmem:[#allocation5 + $0x3c0] sm:$0xff]
    %v7258 = vld [vmem:[#allocation5 + $0x3c8] sm:$0xff]
    %v7259 = vld [vmem:[#allocation5 + $0x3d0] sm:$0xff]
    %v7260 = vld [vmem:[#allocation5 + $0x3d8] sm:$0xff]
    %v7261 = vld [vmem:[#allocation5 + $0x3e0] sm:$0xff]
    %v7262 = vld [vmem:[#allocation5 + $0x3e8] sm:$0xff]
    %v7263 = vld [vmem:[#allocation5 + $0x3f0] sm:$0xff]
    %v7264 = vld [vmem:[#allocation5 + $0x3f8] sm:$0xff]
    %v7265 = vld [vmem:[#allocation5 + $0x400] sm:$0xff]
    %v7266 = vld [vmem:[#allocation5 + $0x408] sm:$0xff]
    %v7267 = vld [vmem:[#allocation5 + $0x410] sm:$0xff]
    %v7268 = vld [vmem:[#allocation5 + $0x418] sm:$0xff]
    %v7269 = vld [vmem:[#allocation5 + $0x420] sm:$0xff]
    %v7270 = vld [vmem:[#allocation5 + $0x428] sm:$0xff]
    %v7271 = vld [vmem:[#allocation5 + $0x430] sm:$0xff]
    %v7272 = vld [vmem:[#allocation5 + $0x438] sm:$0xff]
    %v7273 = vld [vmem:[#allocation5 + $0x440] sm:$0xff]
    %v7274 = vld [vmem:[#allocation5 + $0x448] sm:$0xff]
    %v7275 = vld [vmem:[#allocation5 + $0x450] sm:$0xff]
    %v7276 = vld [vmem:[#allocation5 + $0x458] sm:$0xff]
    %v7277 = vld [vmem:[#allocation5 + $0x460] sm:$0xff]
    %v7278 = vld [vmem:[#allocation5 + $0x468] sm:$0xff]
    %v7279 = vld [vmem:[#allocation5 + $0x470] sm:$0xff]
    %v7280 = vld [vmem:[#allocation5 + $0x478] sm:$0xff]
    %v7281 = vld [vmem:[#allocation5 + $0x480] sm:$0xff]
    %v7282 = vld [vmem:[#allocation5 + $0x488] sm:$0xff]
    %v7283 = vld [vmem:[#allocation5 + $0x490] sm:$0xff]
    %v7284 = vld [vmem:[#allocation5 + $0x498] sm:$0xff]
    %v7285 = vld [vmem:[#allocation5 + $0x4a0] sm:$0xff]
    %v7286 = vld [vmem:[#allocation5 + $0x4a8] sm:$0xff]
    %v7287 = vld [vmem:[#allocation5 + $0x4b0] sm:$0xff]
    %v7288 = vld [vmem:[#allocation5 + $0x4b8] sm:$0xff]
    %v7289 = vld [vmem:[#allocation5 + $0x4c0] sm:$0xff]
    %v7290 = vld [vmem:[#allocation5 + $0x4c8] sm:$0xff]
    %v7291 = vld [vmem:[#allocation5 + $0x4d0] sm:$0xff]
    %v7292 = vld [vmem:[#allocation5 + $0x4d8] sm:$0xff]
    %v7293 = vld [vmem:[#allocation5 + $0x4e0] sm:$0xff]
    %v7294 = vld [vmem:[#allocation5 + $0x4e8] sm:$0xff]
    %v7295 = vld [vmem:[#allocation5 + $0x4f0] sm:$0xff]
    %v7296 = vld [vmem:[#allocation5 + $0x4f8] sm:$0xff]
    %v7297 = vld [vmem:[#allocation5 + $0x500] sm:$0xff]
    %v7298 = vld [vmem:[#allocation5 + $0x508] sm:$0xff]
    %v7299 = vld [vmem:[#allocation5 + $0x510] sm:$0xff]
    %v7300 = vld [vmem:[#allocation5 + $0x518] sm:$0xff]
    %v7301 = vld [vmem:[#allocation5 + $0x520] sm:$0xff]
    %v7302 = vld [vmem:[#allocation5 + $0x528] sm:$0xff]
    %v7303 = vld [vmem:[#allocation5 + $0x530] sm:$0xff]
    %v7304 = vld [vmem:[#allocation5 + $0x538] sm:$0xff]
    %v7305 = vld [vmem:[#allocation5 + $0x540] sm:$0xff]
    %v7306 = vld [vmem:[#allocation5 + $0x548] sm:$0xff]
    %v7307 = vld [vmem:[#allocation5 + $0x550] sm:$0xff]
    %v7308 = vld [vmem:[#allocation5 + $0x558] sm:$0xff]
    %v7309 = vld [vmem:[#allocation5 + $0x560] sm:$0xff]
    %v7310 = vld [vmem:[#allocation5 + $0x568] sm:$0xff]
    %v7311 = vld [vmem:[#allocation5 + $0x570] sm:$0xff]
    %v7312 = vld [vmem:[#allocation5 + $0x578] sm:$0xff]
    %v7313 = vld [vmem:[#allocation5 + $0x580] sm:$0xff]
    %v7314 = vld [vmem:[#allocation5 + $0x588] sm:$0xff]
    %v7315 = vld [vmem:[#allocation5 + $0x590] sm:$0xff]
    %v7316 = vld [vmem:[#allocation5 + $0x598] sm:$0xff]
    %v7317 = vld [vmem:[#allocation5 + $0x5a0] sm:$0xff]
    %v7318 = vld [vmem:[#allocation5 + $0x5a8] sm:$0xff]
    %v7319 = vld [vmem:[#allocation5 + $0x5b0] sm:$0xff]
    %v7320 = vld [vmem:[#allocation5 + $0x5b8] sm:$0xff]
    %v7321 = vld [vmem:[#allocation5 + $0x5c0] sm:$0xff]
    %v7322 = vld [vmem:[#allocation5 + $0x5c8] sm:$0xff]
    %v7323 = vld [vmem:[#allocation5 + $0x5d0] sm:$0xff]
    %v7324 = vld [vmem:[#allocation5 + $0x5d8] sm:$0xff]
    %v7325 = vld [vmem:[#allocation5 + $0x5e0] sm:$0xff]
    %v7326 = vld [vmem:[#allocation5 + $0x5e8] sm:$0xff]
    %v7327 = vld [vmem:[#allocation5 + $0x5f0] sm:$0xff]
    %v7328 = vld [vmem:[#allocation5 + $0x5f8] sm:$0xff]
    %v7329 = vld [vmem:[#allocation5 + $0x600] sm:$0xff]
    %v7330 = vld [vmem:[#allocation5 + $0x608] sm:$0xff]
    %v7331 = vld [vmem:[#allocation5 + $0x610] sm:$0xff]
    %v7332 = vld [vmem:[#allocation5 + $0x618] sm:$0xff]
    %v7333 = vld [vmem:[#allocation5 + $0x620] sm:$0xff]
    %v7334 = vld [vmem:[#allocation5 + $0x628] sm:$0xff]
    %v7335 = vld [vmem:[#allocation5 + $0x630] sm:$0xff]
    %v7336 = vld [vmem:[#allocation5 + $0x638] sm:$0xff]
    %v7337 = vld [vmem:[#allocation5 + $0x640] sm:$0xff]
    %v7338 = vld [vmem:[#allocation5 + $0x648] sm:$0xff]
    %v7339 = vld [vmem:[#allocation5 + $0x650] sm:$0xff]
    %v7340 = vld [vmem:[#allocation5 + $0x658] sm:$0xff]
    %v7341 = vld [vmem:[#allocation5 + $0x660] sm:$0xff]
    %v7342 = vld [vmem:[#allocation5 + $0x668] sm:$0xff]
    %v7343 = vld [vmem:[#allocation5 + $0x670] sm:$0xff]
    %v7344 = vld [vmem:[#allocation5 + $0x678] sm:$0xff]
    %v7345 = vld [vmem:[#allocation5 + $0x680] sm:$0xff]
    %v7346 = vld [vmem:[#allocation5 + $0x688] sm:$0xff]
    %v7347 = vld [vmem:[#allocation5 + $0x690] sm:$0xff]
    %v7348 = vld [vmem:[#allocation5 + $0x698] sm:$0xff]
    %v7349 = vld [vmem:[#allocation5 + $0x6a0] sm:$0xff]
    %v7350 = vld [vmem:[#allocation5 + $0x6a8] sm:$0xff]
    %v7351 = vld [vmem:[#allocation5 + $0x6b0] sm:$0xff]
    %v7352 = vld [vmem:[#allocation5 + $0x6b8] sm:$0xff]
    %v7353 = vld [vmem:[#allocation5 + $0x6c0] sm:$0xff]
    %v7354 = vld [vmem:[#allocation5 + $0x6c8] sm:$0xff]
    %v7355 = vld [vmem:[#allocation5 + $0x6d0] sm:$0xff]
    %v7356 = vld [vmem:[#allocation5 + $0x6d8] sm:$0xff]
    %v7357 = vld [vmem:[#allocation5 + $0x6e0] sm:$0xff]
    %v7358 = vld [vmem:[#allocation5 + $0x6e8] sm:$0xff]
    %v7359 = vld [vmem:[#allocation5 + $0x6f0] sm:$0xff]
    %v7360 = vld [vmem:[#allocation5 + $0x6f8] sm:$0xff]
    %v7361 = vld [vmem:[#allocation5 + $0x700] sm:$0xff]
    %v7362 = vld [vmem:[#allocation5 + $0x708] sm:$0xff]
    %v7363 = vld [vmem:[#allocation5 + $0x710] sm:$0xff]
    %v7364 = vld [vmem:[#allocation5 + $0x718] sm:$0xff]
    %v7365 = vld [vmem:[#allocation5 + $0x720] sm:$0xff]
    %v7366 = vld [vmem:[#allocation5 + $0x728] sm:$0xff]
    %v7367 = vld [vmem:[#allocation5 + $0x730] sm:$0xff]
    %v7368 = vld [vmem:[#allocation5 + $0x738] sm:$0xff]
    %v7369 = vld [vmem:[#allocation5 + $0x740] sm:$0xff]
    %v7370 = vld [vmem:[#allocation5 + $0x748] sm:$0xff]
    %v7371 = vld [vmem:[#allocation5 + $0x750] sm:$0xff]
    %v7372 = vld [vmem:[#allocation5 + $0x758] sm:$0xff]
    %v7373 = vld [vmem:[#allocation5 + $0x760] sm:$0xff]
    %v7374 = vld [vmem:[#allocation5 + $0x768] sm:$0xff]
    %v7375 = vld [vmem:[#allocation5 + $0x770] sm:$0xff]
    %v7376 = vld [vmem:[#allocation5 + $0x778] sm:$0xff]
    %v7377 = vld [vmem:[#allocation5 + $0x780] sm:$0xff]
    %v7378 = vld [vmem:[#allocation5 + $0x788] sm:$0xff]
    %v7379 = vld [vmem:[#allocation5 + $0x790] sm:$0xff]
    %v7380 = vld [vmem:[#allocation5 + $0x798] sm:$0xff]
    %v7381 = vld [vmem:[#allocation5 + $0x7a0] sm:$0xff]
    %v7382 = vld [vmem:[#allocation5 + $0x7a8] sm:$0xff]
    %v7383 = vld [vmem:[#allocation5 + $0x7b0] sm:$0xff]
    %v7384 = vld [vmem:[#allocation5 + $0x7b8] sm:$0xff]
    %v7385 = vld [vmem:[#allocation5 + $0x7c0] sm:$0xff]
    %v7386 = vld [vmem:[#allocation5 + $0x7c8] sm:$0xff]
    %v7387 = vld [vmem:[#allocation5 + $0x7d0] sm:$0xff]
    %v7388 = vld [vmem:[#allocation5 + $0x7d8] sm:$0xff]
    %v7389 = vld [vmem:[#allocation5 + $0x7e0] sm:$0xff]
    %v7390 = vld [vmem:[#allocation5 + $0x7e8] sm:$0xff]
    %v7391 = vld [vmem:[#allocation5 + $0x7f0] sm:$0xff]
    %v7392 = vld [vmem:[#allocation5 + $0x7f8] sm:$0xff]
    %v7393 = vcombine.high %v7123, %v7123
    %7395 = vmatprep.subr.mxu0 %v7138
    %7396 = vmatpush1.msra.mxu0 %v7137
    %7397 = vmatprep.subr.mxu0 %v7146
    %7398 = vmatpush1.msra.mxu0 %v7145
    %7399 = vmatprep.subr.mxu0 %v7154
    %7400 = vmatpush1.msra.mxu0 %v7153
    %7401 = vmatprep.subr.mxu0 %v7162
    %7402 = vmatpush1.msra.mxu0 %v7161
    %7403 = vmatprep.subr.mxu0 %v7170
    %7404 = vmatpush1.msra.mxu0 %v7169
    %7405 = vmatprep.subr.mxu0 %v7178
    %7406 = vmatpush1.msra.mxu0 %v7177
    %7407 = vmatprep.subr.mxu0 %v7186
    %7408 = vmatpush1.msra.mxu0 %v7185
    %7409 = vmatprep.subr.mxu0 %v7194
    %7410 = vmatpush1.msra.mxu0 %v7193
    %7411 = vmatprep.subr.mxu0 %v7202
    %7412 = vmatpush1.msra.mxu0 %v7201
    %7413 = vmatprep.subr.mxu0 %v7210
    %7414 = vmatpush1.msra.mxu0 %v7209
    %7415 = vmatprep.subr.mxu0 %v7218
    %7416 = vmatpush1.msra.mxu0 %v7217
    %7417 = vmatprep.subr.mxu0 %v7226
    %7418 = vmatpush1.msra.mxu0 %v7225
    %7419 = vmatprep.subr.mxu0 %v7234
    %7420 = vmatpush1.msra.mxu0 %v7233
    %7421 = vmatprep.subr.mxu0 %v7242
    %7422 = vmatpush1.msra.mxu0 %v7241
    %7423 = vmatprep.subr.mxu0 %v7250
    %7424 = vmatpush1.msra.mxu0 %v7249
    %7425 = vmatprep.subr.mxu0 %v7258
    %7426 = vmatpush1.msra.mxu0 %v7257
    %7427 = vmatprep.subr.mxu0 %v7266
    %7428 = vmatpush1.msra.mxu0 %v7265
    %7429 = vmatprep.subr.mxu0 %v7274
    %7430 = vmatpush1.msra.mxu0 %v7273
    %7431 = vmatprep.subr.mxu0 %v7282
    %7432 = vmatpush1.msra.mxu0 %v7281
    %7433 = vmatprep.subr.mxu0 %v7290
    %7434 = vmatpush1.msra.mxu0 %v7289
    %7435 = vmatprep.subr.mxu0 %v7298
    %7436 = vmatpush1.msra.mxu0 %v7297
    %7437 = vmatprep.subr.mxu0 %v7306
    %7438 = vmatpush1.msra.mxu0 %v7305
    %7439 = vmatprep.subr.mxu0 %v7314
    %7440 = vmatpush1.msra.mxu0 %v7313
    %7441 = vmatprep.subr.mxu0 %v7322
    %7442 = vmatpush1.msra.mxu0 %v7321
    %7443 = vmatprep.subr.mxu0 %v7330
    %7444 = vmatpush1.msra.mxu0 %v7329
    %7445 = vmatprep.subr.mxu0 %v7338
    %7446 = vmatpush1.msra.mxu0 %v7337
    %7447 = vmatprep.subr.mxu0 %v7346
    %7448 = vmatpush1.msra.mxu0 %v7345
    %7449 = vmatprep.subr.mxu0 %v7354
    %7450 = vmatpush1.msra.mxu0 %v7353
    %7451 = vmatprep.subr.mxu0 %v7362
    %7452 = vmatpush1.msra.mxu0 %v7361
    %7453 = vmatprep.subr.mxu0 %v7370
    %7454 = vmatpush1.msra.mxu0 %v7369
    %7455 = vmatprep.subr.mxu0 %v7378
    %7456 = vmatpush1.msra.mxu0 %v7377
    %7457 = vmatprep.subr.mxu0 %v7386
    %7458 = vmatpush1.msra.mxu0 %v7385
    %7459 = vmatprep.mubr.f32.mxu0 %v7393
    %7460 = vmatmul.mubr.f32.gmra.mrb[0].mxu0 %v7123
    %v7461 = vpop.f32.mrb[0].mxu0
    %v7462 = vadd.f32 0.0, %v7461
    %v7463 = vpop.f32.mrb[0].mxu0
    %v7464 = vadd.f32 0.0, %v7463
    %7465 = vdwg.mxu0
    %7466 = vmatprep.subr.mxu0 %v7140
    %7467 = vmatpush1.msra.mxu0 %v7139
    %7468 = vmatprep.subr.mxu0 %v7148
    %7469 = vmatpush1.msra.mxu0 %v7147
    %7470 = vmatprep.subr.mxu0 %v7156
    %7471 = vmatpush1.msra.mxu0 %v7155
    %7472 = vmatprep.subr.mxu0 %v7164
    %7473 = vmatpush1.msra.mxu0 %v7163
    %7474 = vmatprep.subr.mxu0 %v7172
    %7475 = vmatpush1.msra.mxu0 %v7171
    %7476 = vmatprep.subr.mxu0 %v7180
    %7477 = vmatpush1.msra.mxu0 %v7179
    %7478 = vmatprep.subr.mxu0 %v7188
    %7479 = vmatpush1.msra.mxu0 %v7187
    %7480 = vmatprep.subr.mxu0 %v7196
    %7481 = vmatpush1.msra.mxu0 %v7195
    %7482 = vmatprep.subr.mxu0 %v7204
    %7483 = vmatpush1.msra.mxu0 %v7203
    %7484 = vmatprep.subr.mxu0 %v7212
    %7485 = vmatpush1.msra.mxu0 %v7211
    %7486 = vmatprep.subr.mxu0 %v7220
    %7487 = vmatpush1.msra.mxu0 %v7219
    %7488 = vmatprep.subr.mxu0 %v7228
    %7489 = vmatpush1.msra.mxu0 %v7227
    %7490 = vmatprep.subr.mxu0 %v7236
    %7491 = vmatpush1.msra.mxu0 %v7235
    %7492 = vmatprep.subr.mxu0 %v7244
    %7493 = vmatpush1.msra.mxu0 %v7243
    %7494 = vmatprep.subr.mxu0 %v7252
    %7495 = vmatpush1.msra.mxu0 %v7251
    %7496 = vmatprep.subr.mxu0 %v7260
    %7497 = vmatpush1.msra.mxu0 %v7259
    %7498 = vmatprep.subr.mxu0 %v7268
    %7499 = vmatpush1.msra.mxu0 %v7267
    %7500 = vmatprep.subr.mxu0 %v7276
    %7501 = vmatpush1.msra.mxu0 %v7275
    %7502 = vmatprep.subr.mxu0 %v7284
    %7503 = vmatpush1.msra.mxu0 %v7283
    %7504 = vmatprep.subr.mxu0 %v7292
    %7505 = vmatpush1.msra.mxu0 %v7291
    %7506 = vmatprep.subr.mxu0 %v7300
    %7507 = vmatpush1.msra.mxu0 %v7299
    %7508 = vmatprep.subr.mxu0 %v7308
    %7509 = vmatpush1.msra.mxu0 %v7307
    %7510 = vmatprep.subr.mxu0 %v7316
    %7511 = vmatpush1.msra.mxu0 %v7315
    %7512 = vmatprep.subr.mxu0 %v7324
    %7513 = vmatpush1.msra.mxu0 %v7323
    %7514 = vmatprep.subr.mxu0 %v7332
    %7515 = vmatpush1.msra.mxu0 %v7331
    %7516 = vmatprep.subr.mxu0 %v7340
    %7517 = vmatpush1.msra.mxu0 %v7339
    %7518 = vmatprep.subr.mxu0 %v7348
    %7519 = vmatpush1.msra.mxu0 %v7347
    %7520 = vmatprep.subr.mxu0 %v7356
    %7521 = vmatpush1.msra.mxu0 %v7355
    %7522 = vmatprep.subr.mxu0 %v7364
    %7523 = vmatpush1.msra.mxu0 %v7363
    %7524 = vmatprep.subr.mxu0 %v7372
    %7525 = vmatpush1.msra.mxu0 %v7371
    %7526 = vmatprep.subr.mxu0 %v7380
    %7527 = vmatpush1.msra.mxu0 %v7379
    %7528 = vmatprep.subr.mxu0 %v7388
    %7529 = vmatpush1.msra.mxu0 %v7387
    %7530 = vmatprep.mubr.f32.mxu0 %v7393
    %7531 = vmatmul.mubr.f32.gmra.mrb[0].mxu0 %v7123
    %v7532 = vpop.f32.mrb[0].mxu0
    %v7533 = vadd.f32 0.0, %v7532
    %v7534 = vpop.f32.mrb[0].mxu0
    %v7535 = vadd.f32 0.0, %v7534
    %7536 = vdwg.mxu0
    %7537 = vmatprep.subr.mxu0 %v7142
    %7538 = vmatpush1.msra.mxu0 %v7141
    %7539 = vmatprep.subr.mxu0 %v7150
    %7540 = vmatpush1.msra.mxu0 %v7149
    %7541 = vmatprep.subr.mxu0 %v7158
    %7542 = vmatpush1.msra.mxu0 %v7157
    %7543 = vmatprep.subr.mxu0 %v7166
    %7544 = vmatpush1.msra.mxu0 %v7165
    %7545 = vmatprep.subr.mxu0 %v7174
    %7546 = vmatpush1.msra.mxu0 %v7173
    %7547 = vmatprep.subr.mxu0 %v7182
    %7548 = vmatpush1.msra.mxu0 %v7181
    %7549 = vmatprep.subr.mxu0 %v7190
    %7550 = vmatpush1.msra.mxu0 %v7189
    %7551 = vmatprep.subr.mxu0 %v7198
    %7552 = vmatpush1.msra.mxu0 %v7197
    %7553 = vmatprep.subr.mxu0 %v7206
    %7554 = vmatpush1.msra.mxu0 %v7205
    %7555 = vmatprep.subr.mxu0 %v7214
    %7556 = vmatpush1.msra.mxu0 %v7213
    %7557 = vmatprep.subr.mxu0 %v7222
    %7558 = vmatpush1.msra.mxu0 %v7221
    %7559 = vmatprep.subr.mxu0 %v7230
    %7560 = vmatpush1.msra.mxu0 %v7229
    %7561 = vmatprep.subr.mxu0 %v7238
    %7562 = vmatpush1.msra.mxu0 %v7237
    %7563 = vmatprep.subr.mxu0 %v7246
    %7564 = vmatpush1.msra.mxu0 %v7245
    %7565 = vmatprep.subr.mxu0 %v7254
    %7566 = vmatpush1.msra.mxu0 %v7253
    %7567 = vmatprep.subr.mxu0 %v7262
    %7568 = vmatpush1.msra.mxu0 %v7261
    %7569 = vmatprep.subr.mxu0 %v7270
    %7570 = vmatpush1.msra.mxu0 %v7269
    %7571 = vmatprep.subr.mxu0 %v7278
    %7572 = vmatpush1.msra.mxu0 %v7277
    %7573 = vmatprep.subr.mxu0 %v7286
    %7574 = vmatpush1.msra.mxu0 %v7285
    %7575 = vmatprep.subr.mxu0 %v7294
    %7576 = vmatpush1.msra.mxu0 %v7293
    %7577 = vmatprep.subr.mxu0 %v7302
    %7578 = vmatpush1.msra.mxu0 %v7301
    %7579 = vmatprep.subr.mxu0 %v7310
    %7580 = vmatpush1.msra.mxu0 %v7309
    %7581 = vmatprep.subr.mxu0 %v7318
    %7582 = vmatpush1.msra.mxu0 %v7317
    %7583 = vmatprep.subr.mxu0 %v7326
    %7584 = vmatpush1.msra.mxu0 %v7325
    %7585 = vmatprep.subr.mxu0 %v7334
    %7586 = vmatpush1.msra.mxu0 %v7333
    %7587 = vmatprep.subr.mxu0 %v7342
    %7588 = vmatpush1.msra.mxu0 %v7341
    %7589 = vmatprep.subr.mxu0 %v7350
    %7590 = vmatpush1.msra.mxu0 %v7349
    %7591 = vmatprep.subr.mxu0 %v7358
    %7592 = vmatpush1.msra.mxu0 %v7357
    %7593 = vmatprep.subr.mxu0 %v7366
    %7594 = vmatpush1.msra.mxu0 %v7365
    %7595 = vmatprep.subr.mxu0 %v7374
    %7596 = vmatpush1.msra.mxu0 %v7373
    %7597 = vmatprep.subr.mxu0 %v7382
    %7598 = vmatpush1.msra.mxu0 %v7381
    %7599 = vmatprep.subr.mxu0 %v7390
    %7600 = vmatpush1.msra.mxu0 %v7389
    %7601 = vmatprep.mubr.f32.mxu0 %v7393
    %7602 = vmatmul.mubr.f32.gmra.mrb[0].mxu0 %v7123
    %v7603 = vpop.f32.mrb[0].mxu0
    %v7604 = vadd.f32 0.0, %v7603
    %v7605 = vpop.f32.mrb[0].mxu0
    %v7606 = vadd.f32 0.0, %v7605
    %7607 = vdwg.mxu0
    %7608 = vmatprep.subr.mxu0 %v7144
    %7609 = vmatpush1.msra.mxu0 %v7143
    %7610 = vmatprep.subr.mxu0 %v7152
    %7611 = vmatpush1.msra.mxu0 %v7151
    %7612 = vmatprep.subr.mxu0 %v7160
    %7613 = vmatpush1.msra.mxu0 %v7159
    %7614 = vmatprep.subr.mxu0 %v7168
    %7615 = vmatpush1.msra.mxu0 %v7167
    %7616 = vmatprep.subr.mxu0 %v7176
    %7617 = vmatpush1.msra.mxu0 %v7175
    %7618 = vmatprep.subr.mxu0 %v7184
    %7619 = vmatpush1.msra.mxu0 %v7183
    %7620 = vmatprep.subr.mxu0 %v7192
    %7621 = vmatpush1.msra.mxu0 %v7191
    %7622 = vmatprep.subr.mxu0 %v7200
    %7623 = vmatpush1.msra.mxu0 %v7199
    %7624 = vmatprep.subr.mxu0 %v7208
    %7625 = vmatpush1.msra.mxu0 %v7207
    %7626 = vmatprep.subr.mxu0 %v7216
    %7627 = vmatpush1.msra.mxu0 %v7215
    %7628 = vmatprep.subr.mxu0 %v7224
    %7629 = vmatpush1.msra.mxu0 %v7223
    %7630 = vmatprep.subr.mxu0 %v7232
    %7631 = vmatpush1.msra.mxu0 %v7231
    %7632 = vmatprep.subr.mxu0 %v7240
    %7633 = vmatpush1.msra.mxu0 %v7239
    %7634 = vmatprep.subr.mxu0 %v7248
    %7635 = vmatpush1.msra.mxu0 %v7247
    %7636 = vmatprep.subr.mxu0 %v7256
    %7637 = vmatpush1.msra.mxu0 %v7255
    %7638 = vmatprep.subr.mxu0 %v7264
    %7639 = vmatpush1.msra.mxu0 %v7263
    %7640 = vmatprep.subr.mxu0 %v7272
    %7641 = vmatpush1.msra.mxu0 %v7271
    %7642 = vmatprep.subr.mxu0 %v7280
    %7643 = vmatpush1.msra.mxu0 %v7279
    %7644 = vmatprep.subr.mxu0 %v7288
    %7645 = vmatpush1.msra.mxu0 %v7287
    %7646 = vmatprep.subr.mxu0 %v7296
    %7647 = vmatpush1.msra.mxu0 %v7295
    %7648 = vmatprep.subr.mxu0 %v7304
    %7649 = vmatpush1.msra.mxu0 %v7303
    %7650 = vmatprep.subr.mxu0 %v7312
    %7651 = vmatpush1.msra.mxu0 %v7311
    %7652 = vmatprep.subr.mxu0 %v7320
    %7653 = vmatpush1.msra.mxu0 %v7319
    %7654 = vmatprep.subr.mxu0 %v7328
    %7655 = vmatpush1.msra.mxu0 %v7327
    %7656 = vmatprep.subr.mxu0 %v7336
    %7657 = vmatpush1.msra.mxu0 %v7335
    %7658 = vmatprep.subr.mxu0 %v7344
    %7659 = vmatpush1.msra.mxu0 %v7343
    %7660 = vmatprep.subr.mxu0 %v7352
    %7661 = vmatpush1.msra.mxu0 %v7351
    %7662 = vmatprep.subr.mxu0 %v7360
    %7663 = vmatpush1.msra.mxu0 %v7359
    %7664 = vmatprep.subr.mxu0 %v7368
    %7665 = vmatpush1.msra.mxu0 %v7367
    %7666 = vmatprep.subr.mxu0 %v7376
    %7667 = vmatpush1.msra.mxu0 %v7375
    %7668 = vmatprep.subr.mxu0 %v7384
    %7669 = vmatpush1.msra.mxu0 %v7383
    %7670 = vmatprep.subr.mxu0 %v7392
    %7671 = vmatpush1.msra.mxu0 %v7391
    %7672 = vmatprep.mubr.f32.mxu0 %v7393
    %7673 = vmatmul.mubr.f32.gmra.mrb[0].mxu0 %v7123
    %v7674 = vpop.f32.mrb[0].mxu0
    %v7675 = vadd.f32 0.0, %v7674
    %v7676 = vpop.f32.mrb[0].mxu0
    %v7677 = vadd.f32 0.0, %v7676
    %7678 = vdwg.mxu0
    %v7679 = vld [vmem:[#allocation7] sm:$0xff]
    %v7680 = vld [vmem:[#allocation7 + $0x8] sm:$0xff]
    %v7681 = vld [vmem:[#allocation7 + $0x10] sm:$0xff]
    %v7682 = vld [vmem:[#allocation7 + $0x18] sm:$0xff]
    %v7683 = vld [vmem:[#allocation7 + $0x20] sm:$0xff]
    %v7684 = vld [vmem:[#allocation7 + $0x28] sm:$0xff]
    %v7685 = vld [vmem:[#allocation7 + $0x30] sm:$0xff]
    %v7686 = vld [vmem:[#allocation7 + $0x38] sm:$0xff]
    %v7687 = vld [vmem:[#allocation7 + $0x40] sm:$0xff]
    %v7688 = vld [vmem:[#allocation7 + $0x48] sm:$0xff]
    %v7689 = vld [vmem:[#allocation7 + $0x50] sm:$0xff]
    %v7690 = vld [vmem:[#allocation7 + $0x58] sm:$0xff]
    %v7691 = vld [vmem:[#allocation7 + $0x60] sm:$0xff]
    %v7692 = vld [vmem:[#allocation7 + $0x68] sm:$0xff]
    %v7693 = vld [vmem:[#allocation7 + $0x70] sm:$0xff]
    %v7694 = vld [vmem:[#allocation7 + $0x78] sm:$0xff]
    %v7695 = vld [vmem:[#allocation7 + $0x80] sm:$0xff]
    %v7696 = vld [vmem:[#allocation7 + $0x88] sm:$0xff]
    %v7697 = vld [vmem:[#allocation7 + $0x90] sm:$0xff]
    %v7698 = vld [vmem:[#allocation7 + $0x98] sm:$0xff]
    %v7699 = vld [vmem:[#allocation7 + $0xa0] sm:$0xff]
    %v7700 = vld [vmem:[#allocation7 + $0xa8] sm:$0xff]
    %v7701 = vld [vmem:[#allocation7 + $0xb0] sm:$0xff]
    %v7702 = vld [vmem:[#allocation7 + $0xb8] sm:$0xff]
    %v7703 = vld [vmem:[#allocation7 + $0xc0] sm:$0xff]
    %v7704 = vld [vmem:[#allocation7 + $0xc8] sm:$0xff]
    %v7705 = vld [vmem:[#allocation7 + $0xd0] sm:$0xff]
    %v7706 = vld [vmem:[#allocation7 + $0xd8] sm:$0xff]
    %v7707 = vld [vmem:[#allocation7 + $0xe0] sm:$0xff]
    %v7708 = vld [vmem:[#allocation7 + $0xe8] sm:$0xff]
    %v7709 = vld [vmem:[#allocation7 + $0xf0] sm:$0xff]
    %v7710 = vld [vmem:[#allocation7 + $0xf8] sm:$0xff]
    %v7711 = vld [vmem:[#allocation7 + $0x100] sm:$0xff]
    %v7712 = vld [vmem:[#allocation7 + $0x108] sm:$0xff]
    %v7713 = vld [vmem:[#allocation7 + $0x110] sm:$0xff]
    %v7714 = vld [vmem:[#allocation7 + $0x118] sm:$0xff]
    %v7715 = vld [vmem:[#allocation7 + $0x120] sm:$0xff]
    %v7716 = vld [vmem:[#allocation7 + $0x128] sm:$0xff]
    %v7717 = vld [vmem:[#allocation7 + $0x130] sm:$0xff]
    %v7718 = vld [vmem:[#allocation7 + $0x138] sm:$0xff]
    %v7719 = vld [vmem:[#allocation7 + $0x140] sm:$0xff]
    %v7720 = vld [vmem:[#allocation7 + $0x148] sm:$0xff]
    %v7721 = vld [vmem:[#allocation7 + $0x150] sm:$0xff]
    %v7722 = vld [vmem:[#allocation7 + $0x158] sm:$0xff]
    %v7723 = vld [vmem:[#allocation7 + $0x160] sm:$0xff]
    %v7724 = vld [vmem:[#allocation7 + $0x168] sm:$0xff]
    %v7725 = vld [vmem:[#allocation7 + $0x170] sm:$0xff]
    %v7726 = vld [vmem:[#allocation7 + $0x178] sm:$0xff]
    %v7727 = vld [vmem:[#allocation7 + $0x180] sm:$0xff]
    %v7728 = vld [vmem:[#allocation7 + $0x188] sm:$0xff]
    %v7729 = vld [vmem:[#allocation7 + $0x190] sm:$0xff]
    %v7730 = vld [vmem:[#allocation7 + $0x198] sm:$0xff]
    %v7731 = vld [vmem:[#allocation7 + $0x1a0] sm:$0xff]
    %v7732 = vld [vmem:[#allocation7 + $0x1a8] sm:$0xff]
    %v7733 = vld [vmem:[#allocation7 + $0x1b0] sm:$0xff]
    %v7734 = vld [vmem:[#allocation7 + $0x1b8] sm:$0xff]
    %v7735 = vld [vmem:[#allocation7 + $0x1c0] sm:$0xff]
    %v7736 = vld [vmem:[#allocation7 + $0x1c8] sm:$0xff]
    %v7737 = vld [vmem:[#allocation7 + $0x1d0] sm:$0xff]
    %v7738 = vld [vmem:[#allocation7 + $0x1d8] sm:$0xff]
    %v7739 = vld [vmem:[#allocation7 + $0x1e0] sm:$0xff]
    %v7740 = vld [vmem:[#allocation7 + $0x1e8] sm:$0xff]
    %v7741 = vld [vmem:[#allocation7 + $0x1f0] sm:$0xff]
    %v7742 = vld [vmem:[#allocation7 + $0x1f8] sm:$0xff]
    %v7743 = vld [vmem:[#allocation7 + $0x200] sm:$0xff]
    %v7744 = vld [vmem:[#allocation7 + $0x208] sm:$0xff]
    %v7745 = vld [vmem:[#allocation7 + $0x210] sm:$0xff]
    %v7746 = vld [vmem:[#allocation7 + $0x218] sm:$0xff]
    %v7747 = vld [vmem:[#allocation7 + $0x220] sm:$0xff]
    %v7748 = vld [vmem:[#allocation7 + $0x228] sm:$0xff]
    %v7749 = vld [vmem:[#allocation7 + $0x230] sm:$0xff]
    %v7750 = vld [vmem:[#allocation7 + $0x238] sm:$0xff]
    %v7751 = vld [vmem:[#allocation7 + $0x240] sm:$0xff]
    %v7752 = vld [vmem:[#allocation7 + $0x248] sm:$0xff]
    %v7753 = vld [vmem:[#allocation7 + $0x250] sm:$0xff]
    %v7754 = vld [vmem:[#allocation7 + $0x258] sm:$0xff]
    %v7755 = vld [vmem:[#allocation7 + $0x260] sm:$0xff]
    %v7756 = vld [vmem:[#allocation7 + $0x268] sm:$0xff]
    %v7757 = vld [vmem:[#allocation7 + $0x270] sm:$0xff]
    %v7758 = vld [vmem:[#allocation7 + $0x278] sm:$0xff]
    %v7759 = vld [vmem:[#allocation7 + $0x280] sm:$0xff]
    %v7760 = vld [vmem:[#allocation7 + $0x288] sm:$0xff]
    %v7761 = vld [vmem:[#allocation7 + $0x290] sm:$0xff]
    %v7762 = vld [vmem:[#allocation7 + $0x298] sm:$0xff]
    %v7763 = vld [vmem:[#allocation7 + $0x2a0] sm:$0xff]
    %v7764 = vld [vmem:[#allocation7 + $0x2a8] sm:$0xff]
    %v7765 = vld [vmem:[#allocation7 + $0x2b0] sm:$0xff]
    %v7766 = vld [vmem:[#allocation7 + $0x2b8] sm:$0xff]
    %v7767 = vld [vmem:[#allocation7 + $0x2c0] sm:$0xff]
    %v7768 = vld [vmem:[#allocation7 + $0x2c8] sm:$0xff]
    %v7769 = vld [vmem:[#allocation7 + $0x2d0] sm:$0xff]
    %v7770 = vld [vmem:[#allocation7 + $0x2d8] sm:$0xff]
    %v7771 = vld [vmem:[#allocation7 + $0x2e0] sm:$0xff]
    %v7772 = vld [vmem:[#allocation7 + $0x2e8] sm:$0xff]
    %v7773 = vld [vmem:[#allocation7 + $0x2f0] sm:$0xff]
    %v7774 = vld [vmem:[#allocation7 + $0x2f8] sm:$0xff]
    %v7775 = vld [vmem:[#allocation7 + $0x300] sm:$0xff]
    %v7776 = vld [vmem:[#allocation7 + $0x308] sm:$0xff]
    %v7777 = vld [vmem:[#allocation7 + $0x310] sm:$0xff]
    %v7778 = vld [vmem:[#allocation7 + $0x318] sm:$0xff]
    %v7779 = vld [vmem:[#allocation7 + $0x320] sm:$0xff]
    %v7780 = vld [vmem:[#allocation7 + $0x328] sm:$0xff]
    %v7781 = vld [vmem:[#allocation7 + $0x330] sm:$0xff]
    %v7782 = vld [vmem:[#allocation7 + $0x338] sm:$0xff]
    %v7783 = vld [vmem:[#allocation7 + $0x340] sm:$0xff]
    %v7784 = vld [vmem:[#allocation7 + $0x348] sm:$0xff]
    %v7785 = vld [vmem:[#allocation7 + $0x350] sm:$0xff]
    %v7786 = vld [vmem:[#allocation7 + $0x358] sm:$0xff]
    %v7787 = vld [vmem:[#allocation7 + $0x360] sm:$0xff]
    %v7788 = vld [vmem:[#allocation7 + $0x368] sm:$0xff]
    %v7789 = vld [vmem:[#allocation7 + $0x370] sm:$0xff]
    %v7790 = vld [vmem:[#allocation7 + $0x378] sm:$0xff]
    %v7791 = vld [vmem:[#allocation7 + $0x380] sm:$0xff]
    %v7792 = vld [vmem:[#allocation7 + $0x388] sm:$0xff]
    %v7793 = vld [vmem:[#allocation7 + $0x390] sm:$0xff]
    %v7794 = vld [vmem:[#allocation7 + $0x398] sm:$0xff]
    %v7795 = vld [vmem:[#allocation7 + $0x3a0] sm:$0xff]
    %v7796 = vld [vmem:[#allocation7 + $0x3a8] sm:$0xff]
    %v7797 = vld [vmem:[#allocation7 + $0x3b0] sm:$0xff]
    %v7798 = vld [vmem:[#allocation7 + $0x3b8] sm:$0xff]
    %v7799 = vld [vmem:[#allocation7 + $0x3c0] sm:$0xff]
    %v7800 = vld [vmem:[#allocation7 + $0x3c8] sm:$0xff]
    %v7801 = vld [vmem:[#allocation7 + $0x3d0] sm:$0xff]
    %v7802 = vld [vmem:[#allocation7 + $0x3d8] sm:$0xff]
    %v7803 = vld [vmem:[#allocation7 + $0x3e0] sm:$0xff]
    %v7804 = vld [vmem:[#allocation7 + $0x3e8] sm:$0xff]
    %v7805 = vld [vmem:[#allocation7 + $0x3f0] sm:$0xff]
    %v7806 = vld [vmem:[#allocation7 + $0x3f8] sm:$0xff]
    %v7807 = vld [vmem:[#allocation7 + $0x400] sm:$0xff]
    %v7808 = vld [vmem:[#allocation7 + $0x408] sm:$0xff]
    %v7809 = vld [vmem:[#allocation7 + $0x410] sm:$0xff]
    %v7810 = vld [vmem:[#allocation7 + $0x418] sm:$0xff]
    %v7811 = vld [vmem:[#allocation7 + $0x420] sm:$0xff]
    %v7812 = vld [vmem:[#allocation7 + $0x428] sm:$0xff]
    %v7813 = vld [vmem:[#allocation7 + $0x430] sm:$0xff]
    %v7814 = vld [vmem:[#allocation7 + $0x438] sm:$0xff]
    %v7815 = vld [vmem:[#allocation7 + $0x440] sm:$0xff]
    %v7816 = vld [vmem:[#allocation7 + $0x448] sm:$0xff]
    %v7817 = vld [vmem:[#allocation7 + $0x450] sm:$0xff]
    %v7818 = vld [vmem:[#allocation7 + $0x458] sm:$0xff]
    %v7819 = vld [vmem:[#allocation7 + $0x460] sm:$0xff]
    %v7820 = vld [vmem:[#allocation7 + $0x468] sm:$0xff]
    %v7821 = vld [vmem:[#allocation7 + $0x470] sm:$0xff]
    %v7822 = vld [vmem:[#allocation7 + $0x478] sm:$0xff]
    %v7823 = vld [vmem:[#allocation7 + $0x480] sm:$0xff]
    %v7824 = vld [vmem:[#allocation7 + $0x488] sm:$0xff]
    %v7825 = vld [vmem:[#allocation7 + $0x490] sm:$0xff]
    %v7826 = vld [vmem:[#allocation7 + $0x498] sm:$0xff]
    %v7827 = vld [vmem:[#allocation7 + $0x4a0] sm:$0xff]
    %v7828 = vld [vmem:[#allocation7 + $0x4a8] sm:$0xff]
    %v7829 = vld [vmem:[#allocation7 + $0x4b0] sm:$0xff]
    %v7830 = vld [vmem:[#allocation7 + $0x4b8] sm:$0xff]
    %v7831 = vld [vmem:[#allocation7 + $0x4c0] sm:$0xff]
    %v7832 = vld [vmem:[#allocation7 + $0x4c8] sm:$0xff]
    %v7833 = vld [vmem:[#allocation7 + $0x4d0] sm:$0xff]
    %v7834 = vld [vmem:[#allocation7 + $0x4d8] sm:$0xff]
    %v7835 = vld [vmem:[#allocation7 + $0x4e0] sm:$0xff]
    %v7836 = vld [vmem:[#allocation7 + $0x4e8] sm:$0xff]
    %v7837 = vld [vmem:[#allocation7 + $0x4f0] sm:$0xff]
    %v7838 = vld [vmem:[#allocation7 + $0x4f8] sm:$0xff]
    %v7839 = vld [vmem:[#allocation7 + $0x500] sm:$0xff]
    %v7840 = vld [vmem:[#allocation7 + $0x508] sm:$0xff]
    %v7841 = vld [vmem:[#allocation7 + $0x510] sm:$0xff]
    %v7842 = vld [vmem:[#allocation7 + $0x518] sm:$0xff]
    %v7843 = vld [vmem:[#allocation7 + $0x520] sm:$0xff]
    %v7844 = vld [vmem:[#allocation7 + $0x528] sm:$0xff]
    %v7845 = vld [vmem:[#allocation7 + $0x530] sm:$0xff]
    %v7846 = vld [vmem:[#allocation7 + $0x538] sm:$0xff]
    %v7847 = vld [vmem:[#allocation7 + $0x540] sm:$0xff]
    %v7848 = vld [vmem:[#allocation7 + $0x548] sm:$0xff]
    %v7849 = vld [vmem:[#allocation7 + $0x550] sm:$0xff]
    %v7850 = vld [vmem:[#allocation7 + $0x558] sm:$0xff]
    %v7851 = vld [vmem:[#allocation7 + $0x560] sm:$0xff]
    %v7852 = vld [vmem:[#allocation7 + $0x568] sm:$0xff]
    %v7853 = vld [vmem:[#allocation7 + $0x570] sm:$0xff]
    %v7854 = vld [vmem:[#allocation7 + $0x578] sm:$0xff]
    %v7855 = vld [vmem:[#allocation7 + $0x580] sm:$0xff]
    %v7856 = vld [vmem:[#allocation7 + $0x588] sm:$0xff]
    %v7857 = vld [vmem:[#allocation7 + $0x590] sm:$0xff]
    %v7858 = vld [vmem:[#allocation7 + $0x598] sm:$0xff]
    %v7859 = vld [vmem:[#allocation7 + $0x5a0] sm:$0xff]
    %v7860 = vld [vmem:[#allocation7 + $0x5a8] sm:$0xff]
    %v7861 = vld [vmem:[#allocation7 + $0x5b0] sm:$0xff]
    %v7862 = vld [vmem:[#allocation7 + $0x5b8] sm:$0xff]
    %v7863 = vld [vmem:[#allocation7 + $0x5c0] sm:$0xff]
    %v7864 = vld [vmem:[#allocation7 + $0x5c8] sm:$0xff]
    %v7865 = vld [vmem:[#allocation7 + $0x5d0] sm:$0xff]
    %v7866 = vld [vmem:[#allocation7 + $0x5d8] sm:$0xff]
    %v7867 = vld [vmem:[#allocation7 + $0x5e0] sm:$0xff]
    %v7868 = vld [vmem:[#allocation7 + $0x5e8] sm:$0xff]
    %v7869 = vld [vmem:[#allocation7 + $0x5f0] sm:$0xff]
    %v7870 = vld [vmem:[#allocation7 + $0x5f8] sm:$0xff]
    %v7871 = vld [vmem:[#allocation7 + $0x600] sm:$0xff]
    %v7872 = vld [vmem:[#allocation7 + $0x608] sm:$0xff]
    %v7873 = vld [vmem:[#allocation7 + $0x610] sm:$0xff]
    %v7874 = vld [vmem:[#allocation7 + $0x618] sm:$0xff]
    %v7875 = vld [vmem:[#allocation7 + $0x620] sm:$0xff]
    %v7876 = vld [vmem:[#allocation7 + $0x628] sm:$0xff]
    %v7877 = vld [vmem:[#allocation7 + $0x630] sm:$0xff]
    %v7878 = vld [vmem:[#allocation7 + $0x638] sm:$0xff]
    %v7879 = vld [vmem:[#allocation7 + $0x640] sm:$0xff]
    %v7880 = vld [vmem:[#allocation7 + $0x648] sm:$0xff]
    %v7881 = vld [vmem:[#allocation7 + $0x650] sm:$0xff]
    %v7882 = vld [vmem:[#allocation7 + $0x658] sm:$0xff]
    %v7883 = vld [vmem:[#allocation7 + $0x660] sm:$0xff]
    %v7884 = vld [vmem:[#allocation7 + $0x668] sm:$0xff]
    %v7885 = vld [vmem:[#allocation7 + $0x670] sm:$0xff]
    %v7886 = vld [vmem:[#allocation7 + $0x678] sm:$0xff]
    %v7887 = vld [vmem:[#allocation7 + $0x680] sm:$0xff]
    %v7888 = vld [vmem:[#allocation7 + $0x688] sm:$0xff]
    %v7889 = vld [vmem:[#allocation7 + $0x690] sm:$0xff]
    %v7890 = vld [vmem:[#allocation7 + $0x698] sm:$0xff]
    %v7891 = vld [vmem:[#allocation7 + $0x6a0] sm:$0xff]
    %v7892 = vld [vmem:[#allocation7 + $0x6a8] sm:$0xff]
    %v7893 = vld [vmem:[#allocation7 + $0x6b0] sm:$0xff]
    %v7894 = vld [vmem:[#allocation7 + $0x6b8] sm:$0xff]
    %v7895 = vld [vmem:[#allocation7 + $0x6c0] sm:$0xff]
    %v7896 = vld [vmem:[#allocation7 + $0x6c8] sm:$0xff]
    %v7897 = vld [vmem:[#allocation7 + $0x6d0] sm:$0xff]
    %v7898 = vld [vmem:[#allocation7 + $0x6d8] sm:$0xff]
    %v7899 = vld [vmem:[#allocation7 + $0x6e0] sm:$0xff]
    %v7900 = vld [vmem:[#allocation7 + $0x6e8] sm:$0xff]
    %v7901 = vld [vmem:[#allocation7 + $0x6f0] sm:$0xff]
    %v7902 = vld [vmem:[#allocation7 + $0x6f8] sm:$0xff]
    %v7903 = vld [vmem:[#allocation7 + $0x700] sm:$0xff]
    %v7904 = vld [vmem:[#allocation7 + $0x708] sm:$0xff]
    %v7905 = vld [vmem:[#allocation7 + $0x710] sm:$0xff]
    %v7906 = vld [vmem:[#allocation7 + $0x718] sm:$0xff]
    %v7907 = vld [vmem:[#allocation7 + $0x720] sm:$0xff]
    %v7908 = vld [vmem:[#allocation7 + $0x728] sm:$0xff]
    %v7909 = vld [vmem:[#allocation7 + $0x730] sm:$0xff]
    %v7910 = vld [vmem:[#allocation7 + $0x738] sm:$0xff]
    %v7911 = vld [vmem:[#allocation7 + $0x740] sm:$0xff]
    %v7912 = vld [vmem:[#allocation7 + $0x748] sm:$0xff]
    %v7913 = vld [vmem:[#allocation7 + $0x750] sm:$0xff]
    %v7914 = vld [vmem:[#allocation7 + $0x758] sm:$0xff]
    %v7915 = vld [vmem:[#allocation7 + $0x760] sm:$0xff]
    %v7916 = vld [vmem:[#allocation7 + $0x768] sm:$0xff]
    %v7917 = vld [vmem:[#allocation7 + $0x770] sm:$0xff]
    %v7918 = vld [vmem:[#allocation7 + $0x778] sm:$0xff]
    %v7919 = vld [vmem:[#allocation7 + $0x780] sm:$0xff]
    %v7920 = vld [vmem:[#allocation7 + $0x788] sm:$0xff]
    %v7921 = vld [vmem:[#allocation7 + $0x790] sm:$0xff]
    %v7922 = vld [vmem:[#allocation7 + $0x798] sm:$0xff]
    %v7923 = vld [vmem:[#allocation7 + $0x7a0] sm:$0xff]
    %v7924 = vld [vmem:[#allocation7 + $0x7a8] sm:$0xff]
    %v7925 = vld [vmem:[#allocation7 + $0x7b0] sm:$0xff]
    %v7926 = vld [vmem:[#allocation7 + $0x7b8] sm:$0xff]
    %v7927 = vld [vmem:[#allocation7 + $0x7c0] sm:$0xff]
    %v7928 = vld [vmem:[#allocation7 + $0x7c8] sm:$0xff]
    %v7929 = vld [vmem:[#allocation7 + $0x7d0] sm:$0xff]
    %v7930 = vld [vmem:[#allocation7 + $0x7d8] sm:$0xff]
    %v7931 = vld [vmem:[#allocation7 + $0x7e0] sm:$0xff]
    %v7932 = vld [vmem:[#allocation7 + $0x7e8] sm:$0xff]
    %v7933 = vld [vmem:[#allocation7 + $0x7f0] sm:$0xff]
    %v7934 = vld [vmem:[#allocation7 + $0x7f8] sm:$0xff]
    %v7935 = vrot.slane %v7123, 2
    %v7936 = vrot.slane %v7393, 2
    %7939 = vmatprep.subr.mxu0 %v7680
    %7940 = vmatpush1.msra.mxu0 %v7679
    %7941 = vmatprep.subr.mxu0 %v7688
    %7942 = vmatpush1.msra.mxu0 %v7687
    %7943 = vmatprep.subr.mxu0 %v7696
    %7944 = vmatpush1.msra.mxu0 %v7695
    %7945 = vmatprep.subr.mxu0 %v7704
    %7946 = vmatpush1.msra.mxu0 %v7703
    %7947 = vmatprep.subr.mxu0 %v7712
    %7948 = vmatpush1.msra.mxu0 %v7711
    %7949 = vmatprep.subr.mxu0 %v7720
    %7950 = vmatpush1.msra.mxu0 %v7719
    %7951 = vmatprep.subr.mxu0 %v7728
    %7952 = vmatpush1.msra.mxu0 %v7727
    %7953 = vmatprep.subr.mxu0 %v7736
    %7954 = vmatpush1.msra.mxu0 %v7735
    %7955 = vmatprep.subr.mxu0 %v7744
    %7956 = vmatpush1.msra.mxu0 %v7743
    %7957 = vmatprep.subr.mxu0 %v7752
    %7958 = vmatpush1.msra.mxu0 %v7751
    %7959 = vmatprep.subr.mxu0 %v7760
    %7960 = vmatpush1.msra.mxu0 %v7759
    %7961 = vmatprep.subr.mxu0 %v7768
    %7962 = vmatpush1.msra.mxu0 %v7767
    %7963 = vmatprep.subr.mxu0 %v7776
    %7964 = vmatpush1.msra.mxu0 %v7775
    %7965 = vmatprep.subr.mxu0 %v7784
    %7966 = vmatpush1.msra.mxu0 %v7783
    %7967 = vmatprep.subr.mxu0 %v7792
    %7968 = vmatpush1.msra.mxu0 %v7791
    %7969 = vmatprep.subr.mxu0 %v7800
    %7970 = vmatpush1.msra.mxu0 %v7799
    %7971 = vmatprep.subr.mxu0 %v7808
    %7972 = vmatpush1.msra.mxu0 %v7807
    %7973 = vmatprep.subr.mxu0 %v7816
    %7974 = vmatpush1.msra.mxu0 %v7815
    %7975 = vmatprep.subr.mxu0 %v7824
    %7976 = vmatpush1.msra.mxu0 %v7823
    %7977 = vmatprep.subr.mxu0 %v7832
    %7978 = vmatpush1.msra.mxu0 %v7831
    %7979 = vmatprep.subr.mxu0 %v7840
    %7980 = vmatpush1.msra.mxu0 %v7839
    %7981 = vmatprep.subr.mxu0 %v7848
    %7982 = vmatpush1.msra.mxu0 %v7847
    %7983 = vmatprep.subr.mxu0 %v7856
    %7984 = vmatpush1.msra.mxu0 %v7855
    %7985 = vmatprep.subr.mxu0 %v7864
    %7986 = vmatpush1.msra.mxu0 %v7863
    %7987 = vmatprep.subr.mxu0 %v7872
    %7988 = vmatpush1.msra.mxu0 %v7871
    %7989 = vmatprep.subr.mxu0 %v7880
    %7990 = vmatpush1.msra.mxu0 %v7879
    %7991 = vmatprep.subr.mxu0 %v7888
    %7992 = vmatpush1.msra.mxu0 %v7887
    %7993 = vmatprep.subr.mxu0 %v7896
    %7994 = vmatpush1.msra.mxu0 %v7895
    %7995 = vmatprep.subr.mxu0 %v7904
    %7996 = vmatpush1.msra.mxu0 %v7903
    %7997 = vmatprep.subr.mxu0 %v7912
    %7998 = vmatpush1.msra.mxu0 %v7911
    %7999 = vmatprep.subr.mxu0 %v7920
    %8000 = vmatpush1.msra.mxu0 %v7919
    %8001 = vmatprep.subr.mxu0 %v7928
    %8002 = vmatpush1.msra.mxu0 %v7927
    %8003 = vmatprep.mubr.f32.mxu0 %v7936
    %8004 = vmatmul.mubr.f32.gmra.mrb[0].mxu0 %v7935
    %v8005 = vpop.f32.mrb[0].mxu0
    %v8006 = vadd.f32 0.0, %v8005
    %v8007 = vpop.f32.mrb[0].mxu0
    %v8008 = vadd.f32 0.0, %v8007
    %8009 = vdwg.mxu0
    %8010 = vmatprep.subr.mxu0 %v7682
    %8011 = vmatpush1.msra.mxu0 %v7681
    %8012 = vmatprep.subr.mxu0 %v7690
    %8013 = vmatpush1.msra.mxu0 %v7689
    %8014 = vmatprep.subr.mxu0 %v7698
    %8015 = vmatpush1.msra.mxu0 %v7697
    %8016 = vmatprep.subr.mxu0 %v7706
    %8017 = vmatpush1.msra.mxu0 %v7705
    %8018 = vmatprep.subr.mxu0 %v7714
    %8019 = vmatpush1.msra.mxu0 %v7713
    %8020 = vmatprep.subr.mxu0 %v7722
    %8021 = vmatpush1.msra.mxu0 %v7721
    %8022 = vmatprep.subr.mxu0 %v7730
    %8023 = vmatpush1.msra.mxu0 %v7729
    %8024 = vmatprep.subr.mxu0 %v7738
    %8025 = vmatpush1.msra.mxu0 %v7737
    %8026 = vmatprep.subr.mxu0 %v7746
    %8027 = vmatpush1.msra.mxu0 %v7745
    %8028 = vmatprep.subr.mxu0 %v7754
    %8029 = vmatpush1.msra.mxu0 %v7753
    %8030 = vmatprep.subr.mxu0 %v7762
    %8031 = vmatpush1.msra.mxu0 %v7761
    %8032 = vmatprep.subr.mxu0 %v7770
    %8033 = vmatpush1.msra.mxu0 %v7769
    %8034 = vmatprep.subr.mxu0 %v7778
    %8035 = vmatpush1.msra.mxu0 %v7777
    %8036 = vmatprep.subr.mxu0 %v7786
    %8037 = vmatpush1.msra.mxu0 %v7785
    %8038 = vmatprep.subr.mxu0 %v7794
    %8039 = vmatpush1.msra.mxu0 %v7793
    %8040 = vmatprep.subr.mxu0 %v7802
    %8041 = vmatpush1.msra.mxu0 %v7801
    %8042 = vmatprep.subr.mxu0 %v7810
    %8043 = vmatpush1.msra.mxu0 %v7809
    %8044 = vmatprep.subr.mxu0 %v7818
    %8045 = vmatpush1.msra.mxu0 %v7817
    %8046 = vmatprep.subr.mxu0 %v7826
    %8047 = vmatpush1.msra.mxu0 %v7825
    %8048 = vmatprep.subr.mxu0 %v7834
    %8049 = vmatpush1.msra.mxu0 %v7833
    %8050 = vmatprep.subr.mxu0 %v7842
    %8051 = vmatpush1.msra.mxu0 %v7841
    %8052 = vmatprep.subr.mxu0 %v7850
    %8053 = vmatpush1.msra.mxu0 %v7849
    %8054 = vmatprep.subr.mxu0 %v7858
    %8055 = vmatpush1.msra.mxu0 %v7857
    %8056 = vmatprep.subr.mxu0 %v7866
    %8057 = vmatpush1.msra.mxu0 %v7865
    %8058 = vmatprep.subr.mxu0 %v7874
    %8059 = vmatpush1.msra.mxu0 %v7873
    %8060 = vmatprep.subr.mxu0 %v7882
    %8061 = vmatpush1.msra.mxu0 %v7881
    %8062 = vmatprep.subr.mxu0 %v7890
    %8063 = vmatpush1.msra.mxu0 %v7889
    %8064 = vmatprep.subr.mxu0 %v7898
    %8065 = vmatpush1.msra.mxu0 %v7897
    %8066 = vmatprep.subr.mxu0 %v7906
    %8067 = vmatpush1.msra.mxu0 %v7905
    %8068 = vmatprep.subr.mxu0 %v7914
    %8069 = vmatpush1.msra.mxu0 %v7913
    %8070 = vmatprep.subr.mxu0 %v7922
    %8071 = vmatpush1.msra.mxu0 %v7921
    %8072 = vmatprep.subr.mxu0 %v7930
    %8073 = vmatpush1.msra.mxu0 %v7929
    %8074 = vmatprep.mubr.f32.mxu0 %v7936
    %8075 = vmatmul.mubr.f32.gmra.mrb[0].mxu0 %v7935
    %v8076 = vpop.f32.mrb[0].mxu0
    %v8077 = vadd.f32 0.0, %v8076
    %v8078 = vpop.f32.mrb[0].mxu0
    %v8079 = vadd.f32 0.0, %v8078
    %8080 = vdwg.mxu0
    %8081 = vmatprep.subr.mxu0 %v7684
    %8082 = vmatpush1.msra.mxu0 %v7683
    %8083 = vmatprep.subr.mxu0 %v7692
    %8084 = vmatpush1.msra.mxu0 %v7691
    %8085 = vmatprep.subr.mxu0 %v7700
    %8086 = vmatpush1.msra.mxu0 %v7699
    %8087 = vmatprep.subr.mxu0 %v7708
    %8088 = vmatpush1.msra.mxu0 %v7707
    %8089 = vmatprep.subr.mxu0 %v7716
    %8090 = vmatpush1.msra.mxu0 %v7715
    %8091 = vmatprep.subr.mxu0 %v7724
    %8092 = vmatpush1.msra.mxu0 %v7723
    %8093 = vmatprep.subr.mxu0 %v7732
    %8094 = vmatpush1.msra.mxu0 %v7731
    %8095 = vmatprep.subr.mxu0 %v7740
    %8096 = vmatpush1.msra.mxu0 %v7739
    %8097 = vmatprep.subr.mxu0 %v7748
    %8098 = vmatpush1.msra.mxu0 %v7747
    %8099 = vmatprep.subr.mxu0 %v7756
    %8100 = vmatpush1.msra.mxu0 %v7755
    %8101 = vmatprep.subr.mxu0 %v7764
    %8102 = vmatpush1.msra.mxu0 %v7763
    %8103 = vmatprep.subr.mxu0 %v7772
    %8104 = vmatpush1.msra.mxu0 %v7771
    %8105 = vmatprep.subr.mxu0 %v7780
    %8106 = vmatpush1.msra.mxu0 %v7779
    %8107 = vmatprep.subr.mxu0 %v7788
    %8108 = vmatpush1.msra.mxu0 %v7787
    %8109 = vmatprep.subr.mxu0 %v7796
    %8110 = vmatpush1.msra.mxu0 %v7795
    %8111 = vmatprep.subr.mxu0 %v7804
    %8112 = vmatpush1.msra.mxu0 %v7803
    %8113 = vmatprep.subr.mxu0 %v7812
    %8114 = vmatpush1.msra.mxu0 %v7811
    %8115 = vmatprep.subr.mxu0 %v7820
    %8116 = vmatpush1.msra.mxu0 %v7819
    %8117 = vmatprep.subr.mxu0 %v7828
    %8118 = vmatpush1.msra.mxu0 %v7827
    %8119 = vmatprep.subr.mxu0 %v7836
    %8120 = vmatpush1.msra.mxu0 %v7835
    %8121 = vmatprep.subr.mxu0 %v7844
    %8122 = vmatpush1.msra.mxu0 %v7843
    %8123 = vmatprep.subr.mxu0 %v7852
    %8124 = vmatpush1.msra.mxu0 %v7851
    %8125 = vmatprep.subr.mxu0 %v7860
    %8126 = vmatpush1.msra.mxu0 %v7859
    %8127 = vmatprep.subr.mxu0 %v7868
    %8128 = vmatpush1.msra.mxu0 %v7867
    %8129 = vmatprep.subr.mxu0 %v7876
    %8130 = vmatpush1.msra.mxu0 %v7875
    %8131 = vmatprep.subr.mxu0 %v7884
    %8132 = vmatpush1.msra.mxu0 %v7883
    %8133 = vmatprep.subr.mxu0 %v7892
    %8134 = vmatpush1.msra.mxu0 %v7891
    %8135 = vmatprep.subr.mxu0 %v7900
    %8136 = vmatpush1.msra.mxu0 %v7899
    %8137 = vmatprep.subr.mxu0 %v7908
    %8138 = vmatpush1.msra.mxu0 %v7907
    %8139 = vmatprep.subr.mxu0 %v7916
    %8140 = vmatpush1.msra.mxu0 %v7915
    %8141 = vmatprep.subr.mxu0 %v7924
    %8142 = vmatpush1.msra.mxu0 %v7923
    %8143 = vmatprep.subr.mxu0 %v7932
    %8144 = vmatpush1.msra.mxu0 %v7931
    %8145 = vmatprep.mubr.f32.mxu0 %v7936
    %8146 = vmatmul.mubr.f32.gmra.mrb[0].mxu0 %v7935
    %v8147 = vpop.f32.mrb[0].mxu0
    %v8148 = vadd.f32 0.0, %v8147
    %v8149 = vpop.f32.mrb[0].mxu0
    %v8150 = vadd.f32 0.0, %v8149
    %8151 = vdwg.mxu0
    %8152 = vmatprep.subr.mxu0 %v7686
    %8153 = vmatpush1.msra.mxu0 %v7685
    %8154 = vmatprep.subr.mxu0 %v7694
    %8155 = vmatpush1.msra.mxu0 %v7693
    %8156 = vmatprep.subr.mxu0 %v7702
    %8157 = vmatpush1.msra.mxu0 %v7701
    %8158 = vmatprep.subr.mxu0 %v7710
    %8159 = vmatpush1.msra.mxu0 %v7709
    %8160 = vmatprep.subr.mxu0 %v7718
    %8161 = vmatpush1.msra.mxu0 %v7717
    %8162 = vmatprep.subr.mxu0 %v7726
    %8163 = vmatpush1.msra.mxu0 %v7725
    %8164 = vmatprep.subr.mxu0 %v7734
    %8165 = vmatpush1.msra.mxu0 %v7733
    %8166 = vmatprep.subr.mxu0 %v7742
    %8167 = vmatpush1.msra.mxu0 %v7741
    %8168 = vmatprep.subr.mxu0 %v7750
    %8169 = vmatpush1.msra.mxu0 %v7749
    %8170 = vmatprep.subr.mxu0 %v7758
    %8171 = vmatpush1.msra.mxu0 %v7757
    %8172 = vmatprep.subr.mxu0 %v7766
    %8173 = vmatpush1.msra.mxu0 %v7765
    %8174 = vmatprep.subr.mxu0 %v7774
    %8175 = vmatpush1.msra.mxu0 %v7773
    %8176 = vmatprep.subr.mxu0 %v7782
    %8177 = vmatpush1.msra.mxu0 %v7781
    %8178 = vmatprep.subr.mxu0 %v7790
    %8179 = vmatpush1.msra.mxu0 %v7789
    %8180 = vmatprep.subr.mxu0 %v7798
    %8181 = vmatpush1.msra.mxu0 %v7797
    %8182 = vmatprep.subr.mxu0 %v7806
    %8183 = vmatpush1.msra.mxu0 %v7805
    %8184 = vmatprep.subr.mxu0 %v7814
    %8185 = vmatpush1.msra.mxu0 %v7813
    %8186 = vmatprep.subr.mxu0 %v7822
    %8187 = vmatpush1.msra.mxu0 %v7821
    %8188 = vmatprep.subr.mxu0 %v7830
    %8189 = vmatpush1.msra.mxu0 %v7829
    %8190 = vmatprep.subr.mxu0 %v7838
    %8191 = vmatpush1.msra.mxu0 %v7837
    %8192 = vmatprep.subr.mxu0 %v7846
    %8193 = vmatpush1.msra.mxu0 %v7845
    %8194 = vmatprep.subr.mxu0 %v7854
    %8195 = vmatpush1.msra.mxu0 %v7853
    %8196 = vmatprep.subr.mxu0 %v7862
    %8197 = vmatpush1.msra.mxu0 %v7861
    %8198 = vmatprep.subr.mxu0 %v7870
    %8199 = vmatpush1.msra.mxu0 %v7869
    %8200 = vmatprep.subr.mxu0 %v7878
    %8201 = vmatpush1.msra.mxu0 %v7877
    %8202 = vmatprep.subr.mxu0 %v7886
    %8203 = vmatpush1.msra.mxu0 %v7885
    %8204 = vmatprep.subr.mxu0 %v7894
    %8205 = vmatpush1.msra.mxu0 %v7893
    %8206 = vmatprep.subr.mxu0 %v7902
    %8207 = vmatpush1.msra.mxu0 %v7901
    %8208 = vmatprep.subr.mxu0 %v7910
    %8209 = vmatpush1.msra.mxu0 %v7909
    %8210 = vmatprep.subr.mxu0 %v7918
    %8211 = vmatpush1.msra.mxu0 %v7917
    %8212 = vmatprep.subr.mxu0 %v7926
    %8213 = vmatpush1.msra.mxu0 %v7925
    %8214 = vmatprep.subr.mxu0 %v7934
    %8215 = vmatpush1.msra.mxu0 %v7933
    %8216 = vmatprep.mubr.f32.mxu0 %v7936
    %8217 = vmatmul.mubr.f32.gmra.mrb[0].mxu0 %v7935
    %v8218 = vpop.f32.mrb[0].mxu0
    %v8219 = vadd.f32 0.0, %v8218
    %v8220 = vpop.f32.mrb[0].mxu0
    %v8221 = vadd.f32 0.0, %v8220
    %8222 = vdwg.mxu0
    %s8223 = scalar_lea.vmem [#allocation2], 192
    %v8224 = vld [vmem:[%s8223] sm:$0xff]
    %v8225 = vld [vmem:[%s8223 + $0x8] sm:$0xff]
    %v8226 = vld [vmem:[%s8223 + $0x10] sm:$0xff]
    %v8227 = vld [vmem:[%s8223 + $0x18] sm:$0xff]
    %v8236 = vrot.slane %v8006, 6
    %v8237 = vrot.slane %v8008, 6
    %v8238 = vrot.slane %v8077, 6
    %v8239 = vrot.slane %v8079, 6
    %v8240 = vrot.slane %v8148, 6
    %v8241 = vrot.slane %v8150, 6
    %v8242 = vrot.slane %v8219, 6
    %v8243 = vrot.slane %v8221, 6
    %v8252 = vsel %vm1164, %v7462, %v8236
    %v8253 = vsel %vm1164, %v7464, %v8237
    %v8254 = vsel %vm1164, %v7533, %v8238
    %v8255 = vsel %vm1164, %v7535, %v8239
    %v8256 = vsel %vm1164, %v7604, %v8240
    %v8257 = vsel %vm1164, %v7606, %v8241
    %v8258 = vsel %vm1164, %v7675, %v8242
    %v8259 = vsel %vm1164, %v7677, %v8243
    %v8268 = vcombine.low %v8252, %v8253
    %v8269 = vcombine.low %v8254, %v8255
    %v8270 = vcombine.low %v8256, %v8257
    %v8271 = vcombine.low %v8258, %v8259
    %v8276 = vadd.f32 %v8224, %v8268
    %v8277 = vadd.f32 %v8225, %v8269
    %v8278 = vadd.f32 %v8226, %v8270
    %v8279 = vadd.f32 %v8227, %v8271
    %v8280 = vxor.u32 %v8276, 2147483648
    %v8281 = vxor.u32 %v8277, 2147483648
    %v8282 = vxor.u32 %v8278, 2147483648
    %v8283 = vmul.f32 %v8280, 1.442695
    %v8284 = vpow.pop %v8283
    %v8285 = vmul.f32 %v8281, 1.442695
    %v8286 = vpow.pop %v8285
    %v8287 = vmul.f32 %v8282, 1.442695
    %v8288 = vpow.pop %v8287
    %v8289 = vadd.f32 %v8284, 1.0
    %v8290 = vadd.f32 %v8286, 1.0
    %v8291 = vadd.f32 %v8288, 1.0
    %v8292 = vrcp.pop %v8289
    %v8293 = vmul.f32 1.0, %v8292
    %v8294 = vrcp.pop %v8290
    %v8295 = vmul.f32 1.0, %v8294
    %v8296 = vrcp.pop %v8291
    %v8297 = vmul.f32 1.0, %v8296
    %v8298 = vtanh.pop %v8279
    %v8299 = vmul.f32 %v8295, %v7121
    %v8300 = vmul.f32 %v8293, %v8298
    %v8301 = vadd.f32 %v8299, %v8300
    %v8302 = vtanh.pop %v8301
    %v8303 = vmul.f32 %v8297, %v8302
    %v8306 = vunpack.c.l.s4 1983009808
    %v8307 = vunpack.c.0.s8 %v8306
    %v8308 = vlaneseq
    %v8309 = vshrl.u32 %v8308, 7
    %v8310 = vsub.s32 %v8307, %v8309
    %v8311 = vrot.slane %v8303, %v8310
    %8313 = vst [vmem:[%s2411] sm:$0xf] %v8311
    %v8314 = vcombine.high %v8311, %v8311
    %8316 = vst [vmem:[%s2407 + $0x4] sm:$0xf] %v8314
    %v8317 = vld [vmem:[#allocation5] sm:$0xff]
    %v8318 = vld [vmem:[#allocation5 + $0x8] sm:$0xff]
    %v8319 = vld [vmem:[#allocation5 + $0x10] sm:$0xff]
    %v8320 = vld [vmem:[#allocation5 + $0x18] sm:$0xff]
    %v8321 = vld [vmem:[#allocation5 + $0x20] sm:$0xff]
    %v8322 = vld [vmem:[#allocation5 + $0x28] sm:$0xff]
    %v8323 = vld [vmem:[#allocation5 + $0x30] sm:$0xff]
    %v8324 = vld [vmem:[#allocation5 + $0x38] sm:$0xff]
    %v8325 = vld [vmem:[#allocation5 + $0x40] sm:$0xff]
    %v8326 = vld [vmem:[#allocation5 + $0x48] sm:$0xff]
    %v8327 = vld [vmem:[#allocation5 + $0x50] sm:$0xff]
    %v8328 = vld [vmem:[#allocation5 + $0x58] sm:$0xff]
    %v8329 = vld [vmem:[#allocation5 + $0x60] sm:$0xff]
    %v8330 = vld [vmem:[#allocation5 + $0x68] sm:$0xff]
    %v8331 = vld [vmem:[#allocation5 + $0x70] sm:$0xff]
    %v8332 = vld [vmem:[#allocation5 + $0x78] sm:$0xff]
    %v8333 = vld [vmem:[#allocation5 + $0x80] sm:$0xff]
    %v8334 = vld [vmem:[#allocation5 + $0x88] sm:$0xff]
    %v8335 = vld [vmem:[#allocation5 + $0x90] sm:$0xff]
    %v8336 = vld [vmem:[#allocation5 + $0x98] sm:$0xff]
    %v8337 = vld [vmem:[#allocation5 + $0xa0] sm:$0xff]
    %v8338 = vld [vmem:[#allocation5 + $0xa8] sm:$0xff]
    %v8339 = vld [vmem:[#allocation5 + $0xb0] sm:$0xff]
    %v8340 = vld [vmem:[#allocation5 + $0xb8] sm:$0xff]
    %v8341 = vld [vmem:[#allocation5 + $0xc0] sm:$0xff]
    %v8342 = vld [vmem:[#allocation5 + $0xc8] sm:$0xff]
    %v8343 = vld [vmem:[#allocation5 + $0xd0] sm:$0xff]
    %v8344 = vld [vmem:[#allocation5 + $0xd8] sm:$0xff]
    %v8345 = vld [vmem:[#allocation5 + $0xe0] sm:$0xff]
    %v8346 = vld [vmem:[#allocation5 + $0xe8] sm:$0xff]
    %v8347 = vld [vmem:[#allocation5 + $0xf0] sm:$0xff]
    %v8348 = vld [vmem:[#allocation5 + $0xf8] sm:$0xff]
    %v8349 = vld [vmem:[#allocation5 + $0x100] sm:$0xff]
    %v8350 = vld [vmem:[#allocation5 + $0x108] sm:$0xff]
    %v8351 = vld [vmem:[#allocation5 + $0x110] sm:$0xff]
    %v8352 = vld [vmem:[#allocation5 + $0x118] sm:$0xff]
    %v8353 = vld [vmem:[#allocation5 + $0x120] sm:$0xff]
    %v8354 = vld [vmem:[#allocation5 + $0x128] sm:$0xff]
    %v8355 = vld [vmem:[#allocation5 + $0x130] sm:$0xff]
    %v8356 = vld [vmem:[#allocation5 + $0x138] sm:$0xff]
    %v8357 = vld [vmem:[#allocation5 + $0x140] sm:$0xff]
    %v8358 = vld [vmem:[#allocation5 + $0x148] sm:$0xff]
    %v8359 = vld [vmem:[#allocation5 + $0x150] sm:$0xff]
    %v8360 = vld [vmem:[#allocation5 + $0x158] sm:$0xff]
    %v8361 = vld [vmem:[#allocation5 + $0x160] sm:$0xff]
    %v8362 = vld [vmem:[#allocation5 + $0x168] sm:$0xff]
    %v8363 = vld [vmem:[#allocation5 + $0x170] sm:$0xff]
    %v8364 = vld [vmem:[#allocation5 + $0x178] sm:$0xff]
    %v8365 = vld [vmem:[#allocation5 + $0x180] sm:$0xff]
    %v8366 = vld [vmem:[#allocation5 + $0x188] sm:$0xff]
    %v8367 = vld [vmem:[#allocation5 + $0x190] sm:$0xff]
    %v8368 = vld [vmem:[#allocation5 + $0x198] sm:$0xff]
    %v8369 = vld [vmem:[#allocation5 + $0x1a0] sm:$0xff]
    %v8370 = vld [vmem:[#allocation5 + $0x1a8] sm:$0xff]
    %v8371 = vld [vmem:[#allocation5 + $0x1b0] sm:$0xff]
    %v8372 = vld [vmem:[#allocation5 + $0x1b8] sm:$0xff]
    %v8373 = vld [vmem:[#allocation5 + $0x1c0] sm:$0xff]
    %v8374 = vld [vmem:[#allocation5 + $0x1c8] sm:$0xff]
    %v8375 = vld [vmem:[#allocation5 + $0x1d0] sm:$0xff]
    %v8376 = vld [vmem:[#allocation5 + $0x1d8] sm:$0xff]
    %v8377 = vld [vmem:[#allocation5 + $0x1e0] sm:$0xff]
    %v8378 = vld [vmem:[#allocation5 + $0x1e8] sm:$0xff]
    %v8379 = vld [vmem:[#allocation5 + $0x1f0] sm:$0xff]
    %v8380 = vld [vmem:[#allocation5 + $0x1f8] sm:$0xff]
    %v8381 = vld [vmem:[#allocation5 + $0x200] sm:$0xff]
    %v8382 = vld [vmem:[#allocation5 + $0x208] sm:$0xff]
    %v8383 = vld [vmem:[#allocation5 + $0x210] sm:$0xff]
    %v8384 = vld [vmem:[#allocation5 + $0x218] sm:$0xff]
    %v8385 = vld [vmem:[#allocation5 + $0x220] sm:$0xff]
    %v8386 = vld [vmem:[#allocation5 + $0x228] sm:$0xff]
    %v8387 = vld [vmem:[#allocation5 + $0x230] sm:$0xff]
    %v8388 = vld [vmem:[#allocation5 + $0x238] sm:$0xff]
    %v8389 = vld [vmem:[#allocation5 + $0x240] sm:$0xff]
    %v8390 = vld [vmem:[#allocation5 + $0x248] sm:$0xff]
    %v8391 = vld [vmem:[#allocation5 + $0x250] sm:$0xff]
    %v8392 = vld [vmem:[#allocation5 + $0x258] sm:$0xff]
    %v8393 = vld [vmem:[#allocation5 + $0x260] sm:$0xff]
    %v8394 = vld [vmem:[#allocation5 + $0x268] sm:$0xff]
    %v8395 = vld [vmem:[#allocation5 + $0x270] sm:$0xff]
    %v8396 = vld [vmem:[#allocation5 + $0x278] sm:$0xff]
    %v8397 = vld [vmem:[#allocation5 + $0x280] sm:$0xff]
    %v8398 = vld [vmem:[#allocation5 + $0x288] sm:$0xff]
    %v8399 = vld [vmem:[#allocation5 + $0x290] sm:$0xff]
    %v8400 = vld [vmem:[#allocation5 + $0x298] sm:$0xff]
    %v8401 = vld [vmem:[#allocation5 + $0x2a0] sm:$0xff]
    %v8402 = vld [vmem:[#allocation5 + $0x2a8] sm:$0xff]
    %v8403 = vld [vmem:[#allocation5 + $0x2b0] sm:$0xff]
    %v8404 = vld [vmem:[#allocation5 + $0x2b8] sm:$0xff]
    %v8405 = vld [vmem:[#allocation5 + $0x2c0] sm:$0xff]
    %v8406 = vld [vmem:[#allocation5 + $0x2c8] sm:$0xff]
    %v8407 = vld [vmem:[#allocation5 + $0x2d0] sm:$0xff]
    %v8408 = vld [vmem:[#allocation5 + $0x2d8] sm:$0xff]
    %v8409 = vld [vmem:[#allocation5 + $0x2e0] sm:$0xff]
    %v8410 = vld [vmem:[#allocation5 + $0x2e8] sm:$0xff]
    %v8411 = vld [vmem:[#allocation5 + $0x2f0] sm:$0xff]
    %v8412 = vld [vmem:[#allocation5 + $0x2f8] sm:$0xff]
    %v8413 = vld [vmem:[#allocation5 + $0x300] sm:$0xff]
    %v8414 = vld [vmem:[#allocation5 + $0x308] sm:$0xff]
    %v8415 = vld [vmem:[#allocation5 + $0x310] sm:$0xff]
    %v8416 = vld [vmem:[#allocation5 + $0x318] sm:$0xff]
    %v8417 = vld [vmem:[#allocation5 + $0x320] sm:$0xff]
    %v8418 = vld [vmem:[#allocation5 + $0x328] sm:$0xff]
    %v8419 = vld [vmem:[#allocation5 + $0x330] sm:$0xff]
    %v8420 = vld [vmem:[#allocation5 + $0x338] sm:$0xff]
    %v8421 = vld [vmem:[#allocation5 + $0x340] sm:$0xff]
    %v8422 = vld [vmem:[#allocation5 + $0x348] sm:$0xff]
    %v8423 = vld [vmem:[#allocation5 + $0x350] sm:$0xff]
    %v8424 = vld [vmem:[#allocation5 + $0x358] sm:$0xff]
    %v8425 = vld [vmem:[#allocation5 + $0x360] sm:$0xff]
    %v8426 = vld [vmem:[#allocation5 + $0x368] sm:$0xff]
    %v8427 = vld [vmem:[#allocation5 + $0x370] sm:$0xff]
    %v8428 = vld [vmem:[#allocation5 + $0x378] sm:$0xff]
    %v8429 = vld [vmem:[#allocation5 + $0x380] sm:$0xff]
    %v8430 = vld [vmem:[#allocation5 + $0x388] sm:$0xff]
    %v8431 = vld [vmem:[#allocation5 + $0x390] sm:$0xff]
    %v8432 = vld [vmem:[#allocation5 + $0x398] sm:$0xff]
    %v8433 = vld [vmem:[#allocation5 + $0x3a0] sm:$0xff]
    %v8434 = vld [vmem:[#allocation5 + $0x3a8] sm:$0xff]
    %v8435 = vld [vmem:[#allocation5 + $0x3b0] sm:$0xff]
    %v8436 = vld [vmem:[#allocation5 + $0x3b8] sm:$0xff]
    %v8437 = vld [vmem:[#allocation5 + $0x3c0] sm:$0xff]
    %v8438 = vld [vmem:[#allocation5 + $0x3c8] sm:$0xff]
    %v8439 = vld [vmem:[#allocation5 + $0x3d0] sm:$0xff]
    %v8440 = vld [vmem:[#allocation5 + $0x3d8] sm:$0xff]
    %v8441 = vld [vmem:[#allocation5 + $0x3e0] sm:$0xff]
    %v8442 = vld [vmem:[#allocation5 + $0x3e8] sm:$0xff]
    %v8443 = vld [vmem:[#allocation5 + $0x3f0] sm:$0xff]
    %v8444 = vld [vmem:[#allocation5 + $0x3f8] sm:$0xff]
    %v8445 = vld [vmem:[#allocation5 + $0x400] sm:$0xff]
    %v8446 = vld [vmem:[#allocation5 + $0x408] sm:$0xff]
    %v8447 = vld [vmem:[#allocation5 + $0x410] sm:$0xff]
    %v8448 = vld [vmem:[#allocation5 + $0x418] sm:$0xff]
    %v8449 = vld [vmem:[#allocation5 + $0x420] sm:$0xff]
    %v8450 = vld [vmem:[#allocation5 + $0x428] sm:$0xff]
    %v8451 = vld [vmem:[#allocation5 + $0x430] sm:$0xff]
    %v8452 = vld [vmem:[#allocation5 + $0x438] sm:$0xff]
    %v8453 = vld [vmem:[#allocation5 + $0x440] sm:$0xff]
    %v8454 = vld [vmem:[#allocation5 + $0x448] sm:$0xff]
    %v8455 = vld [vmem:[#allocation5 + $0x450] sm:$0xff]
    %v8456 = vld [vmem:[#allocation5 + $0x458] sm:$0xff]
    %v8457 = vld [vmem:[#allocation5 + $0x460] sm:$0xff]
    %v8458 = vld [vmem:[#allocation5 + $0x468] sm:$0xff]
    %v8459 = vld [vmem:[#allocation5 + $0x470] sm:$0xff]
    %v8460 = vld [vmem:[#allocation5 + $0x478] sm:$0xff]
    %v8461 = vld [vmem:[#allocation5 + $0x480] sm:$0xff]
    %v8462 = vld [vmem:[#allocation5 + $0x488] sm:$0xff]
    %v8463 = vld [vmem:[#allocation5 + $0x490] sm:$0xff]
    %v8464 = vld [vmem:[#allocation5 + $0x498] sm:$0xff]
    %v8465 = vld [vmem:[#allocation5 + $0x4a0] sm:$0xff]
    %v8466 = vld [vmem:[#allocation5 + $0x4a8] sm:$0xff]
    %v8467 = vld [vmem:[#allocation5 + $0x4b0] sm:$0xff]
    %v8468 = vld [vmem:[#allocation5 + $0x4b8] sm:$0xff]
    %v8469 = vld [vmem:[#allocation5 + $0x4c0] sm:$0xff]
    %v8470 = vld [vmem:[#allocation5 + $0x4c8] sm:$0xff]
    %v8471 = vld [vmem:[#allocation5 + $0x4d0] sm:$0xff]
    %v8472 = vld [vmem:[#allocation5 + $0x4d8] sm:$0xff]
    %v8473 = vld [vmem:[#allocation5 + $0x4e0] sm:$0xff]
    %v8474 = vld [vmem:[#allocation5 + $0x4e8] sm:$0xff]
    %v8475 = vld [vmem:[#allocation5 + $0x4f0] sm:$0xff]
    %v8476 = vld [vmem:[#allocation5 + $0x4f8] sm:$0xff]
    %v8477 = vld [vmem:[#allocation5 + $0x500] sm:$0xff]
    %v8478 = vld [vmem:[#allocation5 + $0x508] sm:$0xff]
    %v8479 = vld [vmem:[#allocation5 + $0x510] sm:$0xff]
    %v8480 = vld [vmem:[#allocation5 + $0x518] sm:$0xff]
    %v8481 = vld [vmem:[#allocation5 + $0x520] sm:$0xff]
    %v8482 = vld [vmem:[#allocation5 + $0x528] sm:$0xff]
    %v8483 = vld [vmem:[#allocation5 + $0x530] sm:$0xff]
    %v8484 = vld [vmem:[#allocation5 + $0x538] sm:$0xff]
    %v8485 = vld [vmem:[#allocation5 + $0x540] sm:$0xff]
    %v8486 = vld [vmem:[#allocation5 + $0x548] sm:$0xff]
    %v8487 = vld [vmem:[#allocation5 + $0x550] sm:$0xff]
    %v8488 = vld [vmem:[#allocation5 + $0x558] sm:$0xff]
    %v8489 = vld [vmem:[#allocation5 + $0x560] sm:$0xff]
    %v8490 = vld [vmem:[#allocation5 + $0x568] sm:$0xff]
    %v8491 = vld [vmem:[#allocation5 + $0x570] sm:$0xff]
    %v8492 = vld [vmem:[#allocation5 + $0x578] sm:$0xff]
    %v8493 = vld [vmem:[#allocation5 + $0x580] sm:$0xff]
    %v8494 = vld [vmem:[#allocation5 + $0x588] sm:$0xff]
    %v8495 = vld [vmem:[#allocation5 + $0x590] sm:$0xff]
    %v8496 = vld [vmem:[#allocation5 + $0x598] sm:$0xff]
    %v8497 = vld [vmem:[#allocation5 + $0x5a0] sm:$0xff]
    %v8498 = vld [vmem:[#allocation5 + $0x5a8] sm:$0xff]
    %v8499 = vld [vmem:[#allocation5 + $0x5b0] sm:$0xff]
    %v8500 = vld [vmem:[#allocation5 + $0x5b8] sm:$0xff]
    %v8501 = vld [vmem:[#allocation5 + $0x5c0] sm:$0xff]
    %v8502 = vld [vmem:[#allocation5 + $0x5c8] sm:$0xff]
    %v8503 = vld [vmem:[#allocation5 + $0x5d0] sm:$0xff]
    %v8504 = vld [vmem:[#allocation5 + $0x5d8] sm:$0xff]
    %v8505 = vld [vmem:[#allocation5 + $0x5e0] sm:$0xff]
    %v8506 = vld [vmem:[#allocation5 + $0x5e8] sm:$0xff]
    %v8507 = vld [vmem:[#allocation5 + $0x5f0] sm:$0xff]
    %v8508 = vld [vmem:[#allocation5 + $0x5f8] sm:$0xff]
    %v8509 = vld [vmem:[#allocation5 + $0x600] sm:$0xff]
    %v8510 = vld [vmem:[#allocation5 + $0x608] sm:$0xff]
    %v8511 = vld [vmem:[#allocation5 + $0x610] sm:$0xff]
    %v8512 = vld [vmem:[#allocation5 + $0x618] sm:$0xff]
    %v8513 = vld [vmem:[#allocation5 + $0x620] sm:$0xff]
    %v8514 = vld [vmem:[#allocation5 + $0x628] sm:$0xff]
    %v8515 = vld [vmem:[#allocation5 + $0x630] sm:$0xff]
    %v8516 = vld [vmem:[#allocation5 + $0x638] sm:$0xff]
    %v8517 = vld [vmem:[#allocation5 + $0x640] sm:$0xff]
    %v8518 = vld [vmem:[#allocation5 + $0x648] sm:$0xff]
    %v8519 = vld [vmem:[#allocation5 + $0x650] sm:$0xff]
    %v8520 = vld [vmem:[#allocation5 + $0x658] sm:$0xff]
    %v8521 = vld [vmem:[#allocation5 + $0x660] sm:$0xff]
    %v8522 = vld [vmem:[#allocation5 + $0x668] sm:$0xff]
    %v8523 = vld [vmem:[#allocation5 + $0x670] sm:$0xff]
    %v8524 = vld [vmem:[#allocation5 + $0x678] sm:$0xff]
    %v8525 = vld [vmem:[#allocation5 + $0x680] sm:$0xff]
    %v8526 = vld [vmem:[#allocation5 + $0x688] sm:$0xff]
    %v8527 = vld [vmem:[#allocation5 + $0x690] sm:$0xff]
    %v8528 = vld [vmem:[#allocation5 + $0x698] sm:$0xff]
    %v8529 = vld [vmem:[#allocation5 + $0x6a0] sm:$0xff]
    %v8530 = vld [vmem:[#allocation5 + $0x6a8] sm:$0xff]
    %v8531 = vld [vmem:[#allocation5 + $0x6b0] sm:$0xff]
    %v8532 = vld [vmem:[#allocation5 + $0x6b8] sm:$0xff]
    %v8533 = vld [vmem:[#allocation5 + $0x6c0] sm:$0xff]
    %v8534 = vld [vmem:[#allocation5 + $0x6c8] sm:$0xff]
    %v8535 = vld [vmem:[#allocation5 + $0x6d0] sm:$0xff]
    %v8536 = vld [vmem:[#allocation5 + $0x6d8] sm:$0xff]
    %v8537 = vld [vmem:[#allocation5 + $0x6e0] sm:$0xff]
    %v8538 = vld [vmem:[#allocation5 + $0x6e8] sm:$0xff]
    %v8539 = vld [vmem:[#allocation5 + $0x6f0] sm:$0xff]
    %v8540 = vld [vmem:[#allocation5 + $0x6f8] sm:$0xff]
    %v8541 = vld [vmem:[#allocation5 + $0x700] sm:$0xff]
    %v8542 = vld [vmem:[#allocation5 + $0x708] sm:$0xff]
    %v8543 = vld [vmem:[#allocation5 + $0x710] sm:$0xff]
    %v8544 = vld [vmem:[#allocation5 + $0x718] sm:$0xff]
    %v8545 = vld [vmem:[#allocation5 + $0x720] sm:$0xff]
    %v8546 = vld [vmem:[#allocation5 + $0x728] sm:$0xff]
    %v8547 = vld [vmem:[#allocation5 + $0x730] sm:$0xff]
    %v8548 = vld [vmem:[#allocation5 + $0x738] sm:$0xff]
    %v8549 = vld [vmem:[#allocation5 + $0x740] sm:$0xff]
    %v8550 = vld [vmem:[#allocation5 + $0x748] sm:$0xff]
    %v8551 = vld [vmem:[#allocation5 + $0x750] sm:$0xff]
    %v8552 = vld [vmem:[#allocation5 + $0x758] sm:$0xff]
    %v8553 = vld [vmem:[#allocation5 + $0x760] sm:$0xff]
    %v8554 = vld [vmem:[#allocation5 + $0x768] sm:$0xff]
    %v8555 = vld [vmem:[#allocation5 + $0x770] sm:$0xff]
    %v8556 = vld [vmem:[#allocation5 + $0x778] sm:$0xff]
    %v8557 = vld [vmem:[#allocation5 + $0x780] sm:$0xff]
    %v8558 = vld [vmem:[#allocation5 + $0x788] sm:$0xff]
    %v8559 = vld [vmem:[#allocation5 + $0x790] sm:$0xff]
    %v8560 = vld [vmem:[#allocation5 + $0x798] sm:$0xff]
    %v8561 = vld [vmem:[#allocation5 + $0x7a0] sm:$0xff]
    %v8562 = vld [vmem:[#allocation5 + $0x7a8] sm:$0xff]
    %v8563 = vld [vmem:[#allocation5 + $0x7b0] sm:$0xff]
    %v8564 = vld [vmem:[#allocation5 + $0x7b8] sm:$0xff]
    %v8565 = vld [vmem:[#allocation5 + $0x7c0] sm:$0xff]
    %v8566 = vld [vmem:[#allocation5 + $0x7c8] sm:$0xff]
    %v8567 = vld [vmem:[#allocation5 + $0x7d0] sm:$0xff]
    %v8568 = vld [vmem:[#allocation5 + $0x7d8] sm:$0xff]
    %v8569 = vld [vmem:[#allocation5 + $0x7e0] sm:$0xff]
    %v8570 = vld [vmem:[#allocation5 + $0x7e8] sm:$0xff]
    %v8571 = vld [vmem:[#allocation5 + $0x7f0] sm:$0xff]
    %v8572 = vld [vmem:[#allocation5 + $0x7f8] sm:$0xff]
    %v8573 = vcombine.high %v8303, %v8303
    %8575 = vmatprep.subr.mxu0 %v8318
    %8576 = vmatpush1.msra.mxu0 %v8317
    %8577 = vmatprep.subr.mxu0 %v8326
    %8578 = vmatpush1.msra.mxu0 %v8325
    %8579 = vmatprep.subr.mxu0 %v8334
    %8580 = vmatpush1.msra.mxu0 %v8333
    %8581 = vmatprep.subr.mxu0 %v8342
    %8582 = vmatpush1.msra.mxu0 %v8341
    %8583 = vmatprep.subr.mxu0 %v8350
    %8584 = vmatpush1.msra.mxu0 %v8349
    %8585 = vmatprep.subr.mxu0 %v8358
    %8586 = vmatpush1.msra.mxu0 %v8357
    %8587 = vmatprep.subr.mxu0 %v8366
    %8588 = vmatpush1.msra.mxu0 %v8365
    %8589 = vmatprep.subr.mxu0 %v8374
    %8590 = vmatpush1.msra.mxu0 %v8373
    %8591 = vmatprep.subr.mxu0 %v8382
    %8592 = vmatpush1.msra.mxu0 %v8381
    %8593 = vmatprep.subr.mxu0 %v8390
    %8594 = vmatpush1.msra.mxu0 %v8389
    %8595 = vmatprep.subr.mxu0 %v8398
    %8596 = vmatpush1.msra.mxu0 %v8397
    %8597 = vmatprep.subr.mxu0 %v8406
    %8598 = vmatpush1.msra.mxu0 %v8405
    %8599 = vmatprep.subr.mxu0 %v8414
    %8600 = vmatpush1.msra.mxu0 %v8413
    %8601 = vmatprep.subr.mxu0 %v8422
    %8602 = vmatpush1.msra.mxu0 %v8421
    %8603 = vmatprep.subr.mxu0 %v8430
    %8604 = vmatpush1.msra.mxu0 %v8429
    %8605 = vmatprep.subr.mxu0 %v8438
    %8606 = vmatpush1.msra.mxu0 %v8437
    %8607 = vmatprep.subr.mxu0 %v8446
    %8608 = vmatpush1.msra.mxu0 %v8445
    %8609 = vmatprep.subr.mxu0 %v8454
    %8610 = vmatpush1.msra.mxu0 %v8453
    %8611 = vmatprep.subr.mxu0 %v8462
    %8612 = vmatpush1.msra.mxu0 %v8461
    %8613 = vmatprep.subr.mxu0 %v8470
    %8614 = vmatpush1.msra.mxu0 %v8469
    %8615 = vmatprep.subr.mxu0 %v8478
    %8616 = vmatpush1.msra.mxu0 %v8477
    %8617 = vmatprep.subr.mxu0 %v8486
    %8618 = vmatpush1.msra.mxu0 %v8485
    %8619 = vmatprep.subr.mxu0 %v8494
    %8620 = vmatpush1.msra.mxu0 %v8493
    %8621 = vmatprep.subr.mxu0 %v8502
    %8622 = vmatpush1.msra.mxu0 %v8501
    %8623 = vmatprep.subr.mxu0 %v8510
    %8624 = vmatpush1.msra.mxu0 %v8509
    %8625 = vmatprep.subr.mxu0 %v8518
    %8626 = vmatpush1.msra.mxu0 %v8517
    %8627 = vmatprep.subr.mxu0 %v8526
    %8628 = vmatpush1.msra.mxu0 %v8525
    %8629 = vmatprep.subr.mxu0 %v8534
    %8630 = vmatpush1.msra.mxu0 %v8533
    %8631 = vmatprep.subr.mxu0 %v8542
    %8632 = vmatpush1.msra.mxu0 %v8541
    %8633 = vmatprep.subr.mxu0 %v8550
    %8634 = vmatpush1.msra.mxu0 %v8549
    %8635 = vmatprep.subr.mxu0 %v8558
    %8636 = vmatpush1.msra.mxu0 %v8557
    %8637 = vmatprep.subr.mxu0 %v8566
    %8638 = vmatpush1.msra.mxu0 %v8565
    %8639 = vmatprep.mubr.f32.mxu0 %v8573
    %8640 = vmatmul.mubr.f32.gmra.mrb[0].mxu0 %v8303
    %v8641 = vpop.f32.mrb[0].mxu0
    %v8642 = vadd.f32 0.0, %v8641
    %v8643 = vpop.f32.mrb[0].mxu0
    %v8644 = vadd.f32 0.0, %v8643
    %8645 = vdwg.mxu0
    %8646 = vmatprep.subr.mxu0 %v8320
    %8647 = vmatpush1.msra.mxu0 %v8319
    %8648 = vmatprep.subr.mxu0 %v8328
    %8649 = vmatpush1.msra.mxu0 %v8327
    %8650 = vmatprep.subr.mxu0 %v8336
    %8651 = vmatpush1.msra.mxu0 %v8335
    %8652 = vmatprep.subr.mxu0 %v8344
    %8653 = vmatpush1.msra.mxu0 %v8343
    %8654 = vmatprep.subr.mxu0 %v8352
    %8655 = vmatpush1.msra.mxu0 %v8351
    %8656 = vmatprep.subr.mxu0 %v8360
    %8657 = vmatpush1.msra.mxu0 %v8359
    %8658 = vmatprep.subr.mxu0 %v8368
    %8659 = vmatpush1.msra.mxu0 %v8367
    %8660 = vmatprep.subr.mxu0 %v8376
    %8661 = vmatpush1.msra.mxu0 %v8375
    %8662 = vmatprep.subr.mxu0 %v8384
    %8663 = vmatpush1.msra.mxu0 %v8383
    %8664 = vmatprep.subr.mxu0 %v8392
    %8665 = vmatpush1.msra.mxu0 %v8391
    %8666 = vmatprep.subr.mxu0 %v8400
    %8667 = vmatpush1.msra.mxu0 %v8399
    %8668 = vmatprep.subr.mxu0 %v8408
    %8669 = vmatpush1.msra.mxu0 %v8407
    %8670 = vmatprep.subr.mxu0 %v8416
    %8671 = vmatpush1.msra.mxu0 %v8415
    %8672 = vmatprep.subr.mxu0 %v8424
    %8673 = vmatpush1.msra.mxu0 %v8423
    %8674 = vmatprep.subr.mxu0 %v8432
    %8675 = vmatpush1.msra.mxu0 %v8431
    %8676 = vmatprep.subr.mxu0 %v8440
    %8677 = vmatpush1.msra.mxu0 %v8439
    %8678 = vmatprep.subr.mxu0 %v8448
    %8679 = vmatpush1.msra.mxu0 %v8447
    %8680 = vmatprep.subr.mxu0 %v8456
    %8681 = vmatpush1.msra.mxu0 %v8455
    %8682 = vmatprep.subr.mxu0 %v8464
    %8683 = vmatpush1.msra.mxu0 %v8463
    %8684 = vmatprep.subr.mxu0 %v8472
    %8685 = vmatpush1.msra.mxu0 %v8471
    %8686 = vmatprep.subr.mxu0 %v8480
    %8687 = vmatpush1.msra.mxu0 %v8479
    %8688 = vmatprep.subr.mxu0 %v8488
    %8689 = vmatpush1.msra.mxu0 %v8487
    %8690 = vmatprep.subr.mxu0 %v8496
    %8691 = vmatpush1.msra.mxu0 %v8495
    %8692 = vmatprep.subr.mxu0 %v8504
    %8693 = vmatpush1.msra.mxu0 %v8503
    %8694 = vmatprep.subr.mxu0 %v8512
    %8695 = vmatpush1.msra.mxu0 %v8511
    %8696 = vmatprep.subr.mxu0 %v8520
    %8697 = vmatpush1.msra.mxu0 %v8519
    %8698 = vmatprep.subr.mxu0 %v8528
    %8699 = vmatpush1.msra.mxu0 %v8527
    %8700 = vmatprep.subr.mxu0 %v8536
    %8701 = vmatpush1.msra.mxu0 %v8535
    %8702 = vmatprep.subr.mxu0 %v8544
    %8703 = vmatpush1.msra.mxu0 %v8543
    %8704 = vmatprep.subr.mxu0 %v8552
    %8705 = vmatpush1.msra.mxu0 %v8551
    %8706 = vmatprep.subr.mxu0 %v8560
    %8707 = vmatpush1.msra.mxu0 %v8559
    %8708 = vmatprep.subr.mxu0 %v8568
    %8709 = vmatpush1.msra.mxu0 %v8567
    %8710 = vmatprep.mubr.f32.mxu0 %v8573
    %8711 = vmatmul.mubr.f32.gmra.mrb[0].mxu0 %v8303
    %v8712 = vpop.f32.mrb[0].mxu0
    %v8713 = vadd.f32 0.0, %v8712
    %v8714 = vpop.f32.mrb[0].mxu0
    %v8715 = vadd.f32 0.0, %v8714
    %8716 = vdwg.mxu0
    %8717 = vmatprep.subr.mxu0 %v8322
    %8718 = vmatpush1.msra.mxu0 %v8321
    %8719 = vmatprep.subr.mxu0 %v8330
    %8720 = vmatpush1.msra.mxu0 %v8329
    %8721 = vmatprep.subr.mxu0 %v8338
    %8722 = vmatpush1.msra.mxu0 %v8337
    %8723 = vmatprep.subr.mxu0 %v8346
    %8724 = vmatpush1.msra.mxu0 %v8345
    %8725 = vmatprep.subr.mxu0 %v8354
    %8726 = vmatpush1.msra.mxu0 %v8353
    %8727 = vmatprep.subr.mxu0 %v8362
    %8728 = vmatpush1.msra.mxu0 %v8361
    %8729 = vmatprep.subr.mxu0 %v8370
    %8730 = vmatpush1.msra.mxu0 %v8369
    %8731 = vmatprep.subr.mxu0 %v8378
    %8732 = vmatpush1.msra.mxu0 %v8377
    %8733 = vmatprep.subr.mxu0 %v8386
    %8734 = vmatpush1.msra.mxu0 %v8385
    %8735 = vmatprep.subr.mxu0 %v8394
    %8736 = vmatpush1.msra.mxu0 %v8393
    %8737 = vmatprep.subr.mxu0 %v8402
    %8738 = vmatpush1.msra.mxu0 %v8401
    %8739 = vmatprep.subr.mxu0 %v8410
    %8740 = vmatpush1.msra.mxu0 %v8409
    %8741 = vmatprep.subr.mxu0 %v8418
    %8742 = vmatpush1.msra.mxu0 %v8417
    %8743 = vmatprep.subr.mxu0 %v8426
    %8744 = vmatpush1.msra.mxu0 %v8425
    %8745 = vmatprep.subr.mxu0 %v8434
    %8746 = vmatpush1.msra.mxu0 %v8433
    %8747 = vmatprep.subr.mxu0 %v8442
    %8748 = vmatpush1.msra.mxu0 %v8441
    %8749 = vmatprep.subr.mxu0 %v8450
    %8750 = vmatpush1.msra.mxu0 %v8449
    %8751 = vmatprep.subr.mxu0 %v8458
    %8752 = vmatpush1.msra.mxu0 %v8457
    %8753 = vmatprep.subr.mxu0 %v8466
    %8754 = vmatpush1.msra.mxu0 %v8465
    %8755 = vmatprep.subr.mxu0 %v8474
    %8756 = vmatpush1.msra.mxu0 %v8473
    %8757 = vmatprep.subr.mxu0 %v8482
    %8758 = vmatpush1.msra.mxu0 %v8481
    %8759 = vmatprep.subr.mxu0 %v8490
    %8760 = vmatpush1.msra.mxu0 %v8489
    %8761 = vmatprep.subr.mxu0 %v8498
    %8762 = vmatpush1.msra.mxu0 %v8497
    %8763 = vmatprep.subr.mxu0 %v8506
    %8764 = vmatpush1.msra.mxu0 %v8505
    %8765 = vmatprep.subr.mxu0 %v8514
    %8766 = vmatpush1.msra.mxu0 %v8513
    %8767 = vmatprep.subr.mxu0 %v8522
    %8768 = vmatpush1.msra.mxu0 %v8521
    %8769 = vmatprep.subr.mxu0 %v8530
    %8770 = vmatpush1.msra.mxu0 %v8529
    %8771 = vmatprep.subr.mxu0 %v8538
    %8772 = vmatpush1.msra.mxu0 %v8537
    %8773 = vmatprep.subr.mxu0 %v8546
    %8774 = vmatpush1.msra.mxu0 %v8545
    %8775 = vmatprep.subr.mxu0 %v8554
    %8776 = vmatpush1.msra.mxu0 %v8553
    %8777 = vmatprep.subr.mxu0 %v8562
    %8778 = vmatpush1.msra.mxu0 %v8561
    %8779 = vmatprep.subr.mxu0 %v8570
    %8780 = vmatpush1.msra.mxu0 %v8569
    %8781 = vmatprep.mubr.f32.mxu0 %v8573
    %8782 = vmatmul.mubr.f32.gmra.mrb[0].mxu0 %v8303
    %v8783 = vpop.f32.mrb[0].mxu0
    %v8784 = vadd.f32 0.0, %v8783
    %v8785 = vpop.f32.mrb[0].mxu0
    %v8786 = vadd.f32 0.0, %v8785
    %8787 = vdwg.mxu0
    %8788 = vmatprep.subr.mxu0 %v8324
    %8789 = vmatpush1.msra.mxu0 %v8323
    %8790 = vmatprep.subr.mxu0 %v8332
    %8791 = vmatpush1.msra.mxu0 %v8331
    %8792 = vmatprep.subr.mxu0 %v8340
    %8793 = vmatpush1.msra.mxu0 %v8339
    %8794 = vmatprep.subr.mxu0 %v8348
    %8795 = vmatpush1.msra.mxu0 %v8347
    %8796 = vmatprep.subr.mxu0 %v8356
    %8797 = vmatpush1.msra.mxu0 %v8355
    %8798 = vmatprep.subr.mxu0 %v8364
    %8799 = vmatpush1.msra.mxu0 %v8363
    %8800 = vmatprep.subr.mxu0 %v8372
    %8801 = vmatpush1.msra.mxu0 %v8371
    %8802 = vmatprep.subr.mxu0 %v8380
    %8803 = vmatpush1.msra.mxu0 %v8379
    %8804 = vmatprep.subr.mxu0 %v8388
    %8805 = vmatpush1.msra.mxu0 %v8387
    %8806 = vmatprep.subr.mxu0 %v8396
    %8807 = vmatpush1.msra.mxu0 %v8395
    %8808 = vmatprep.subr.mxu0 %v8404
    %8809 = vmatpush1.msra.mxu0 %v8403
    %8810 = vmatprep.subr.mxu0 %v8412
    %8811 = vmatpush1.msra.mxu0 %v8411
    %8812 = vmatprep.subr.mxu0 %v8420
    %8813 = vmatpush1.msra.mxu0 %v8419
    %8814 = vmatprep.subr.mxu0 %v8428
    %8815 = vmatpush1.msra.mxu0 %v8427
    %8816 = vmatprep.subr.mxu0 %v8436
    %8817 = vmatpush1.msra.mxu0 %v8435
    %8818 = vmatprep.subr.mxu0 %v8444
    %8819 = vmatpush1.msra.mxu0 %v8443
    %8820 = vmatprep.subr.mxu0 %v8452
    %8821 = vmatpush1.msra.mxu0 %v8451
    %8822 = vmatprep.subr.mxu0 %v8460
    %8823 = vmatpush1.msra.mxu0 %v8459
    %8824 = vmatprep.subr.mxu0 %v8468
    %8825 = vmatpush1.msra.mxu0 %v8467
    %8826 = vmatprep.subr.mxu0 %v8476
    %8827 = vmatpush1.msra.mxu0 %v8475
    %8828 = vmatprep.subr.mxu0 %v8484
    %8829 = vmatpush1.msra.mxu0 %v8483
    %8830 = vmatprep.subr.mxu0 %v8492
    %8831 = vmatpush1.msra.mxu0 %v8491
    %8832 = vmatprep.subr.mxu0 %v8500
    %8833 = vmatpush1.msra.mxu0 %v8499
    %8834 = vmatprep.subr.mxu0 %v8508
    %8835 = vmatpush1.msra.mxu0 %v8507
    %8836 = vmatprep.subr.mxu0 %v8516
    %8837 = vmatpush1.msra.mxu0 %v8515
    %8838 = vmatprep.subr.mxu0 %v8524
    %8839 = vmatpush1.msra.mxu0 %v8523
    %8840 = vmatprep.subr.mxu0 %v8532
    %8841 = vmatpush1.msra.mxu0 %v8531
    %8842 = vmatprep.subr.mxu0 %v8540
    %8843 = vmatpush1.msra.mxu0 %v8539
    %8844 = vmatprep.subr.mxu0 %v8548
    %8845 = vmatpush1.msra.mxu0 %v8547
    %8846 = vmatprep.subr.mxu0 %v8556
    %8847 = vmatpush1.msra.mxu0 %v8555
    %8848 = vmatprep.subr.mxu0 %v8564
    %8849 = vmatpush1.msra.mxu0 %v8563
    %8850 = vmatprep.subr.mxu0 %v8572
    %8851 = vmatpush1.msra.mxu0 %v8571
    %8852 = vmatprep.mubr.f32.mxu0 %v8573
    %8853 = vmatmul.mubr.f32.gmra.mrb[0].mxu0 %v8303
    %v8854 = vpop.f32.mrb[0].mxu0
    %v8855 = vadd.f32 0.0, %v8854
    %v8856 = vpop.f32.mrb[0].mxu0
    %v8857 = vadd.f32 0.0, %v8856
    %8858 = vdwg.mxu0
    %v8859 = vld [vmem:[#allocation7] sm:$0xff]
    %v8860 = vld [vmem:[#allocation7 + $0x8] sm:$0xff]
    %v8861 = vld [vmem:[#allocation7 + $0x10] sm:$0xff]
    %v8862 = vld [vmem:[#allocation7 + $0x18] sm:$0xff]
    %v8863 = vld [vmem:[#allocation7 + $0x20] sm:$0xff]
    %v8864 = vld [vmem:[#allocation7 + $0x28] sm:$0xff]
    %v8865 = vld [vmem:[#allocation7 + $0x30] sm:$0xff]
    %v8866 = vld [vmem:[#allocation7 + $0x38] sm:$0xff]
    %v8867 = vld [vmem:[#allocation7 + $0x40] sm:$0xff]
    %v8868 = vld [vmem:[#allocation7 + $0x48] sm:$0xff]
    %v8869 = vld [vmem:[#allocation7 + $0x50] sm:$0xff]
    %v8870 = vld [vmem:[#allocation7 + $0x58] sm:$0xff]
    %v8871 = vld [vmem:[#allocation7 + $0x60] sm:$0xff]
    %v8872 = vld [vmem:[#allocation7 + $0x68] sm:$0xff]
    %v8873 = vld [vmem:[#allocation7 + $0x70] sm:$0xff]
    %v8874 = vld [vmem:[#allocation7 + $0x78] sm:$0xff]
    %v8875 = vld [vmem:[#allocation7 + $0x80] sm:$0xff]
    %v8876 = vld [vmem:[#allocation7 + $0x88] sm:$0xff]
    %v8877 = vld [vmem:[#allocation7 + $0x90] sm:$0xff]
    %v8878 = vld [vmem:[#allocation7 + $0x98] sm:$0xff]
    %v8879 = vld [vmem:[#allocation7 + $0xa0] sm:$0xff]
    %v8880 = vld [vmem:[#allocation7 + $0xa8] sm:$0xff]
    %v8881 = vld [vmem:[#allocation7 + $0xb0] sm:$0xff]
    %v8882 = vld [vmem:[#allocation7 + $0xb8] sm:$0xff]
    %v8883 = vld [vmem:[#allocation7 + $0xc0] sm:$0xff]
    %v8884 = vld [vmem:[#allocation7 + $0xc8] sm:$0xff]
    %v8885 = vld [vmem:[#allocation7 + $0xd0] sm:$0xff]
    %v8886 = vld [vmem:[#allocation7 + $0xd8] sm:$0xff]
    %v8887 = vld [vmem:[#allocation7 + $0xe0] sm:$0xff]
    %v8888 = vld [vmem:[#allocation7 + $0xe8] sm:$0xff]
    %v8889 = vld [vmem:[#allocation7 + $0xf0] sm:$0xff]
    %v8890 = vld [vmem:[#allocation7 + $0xf8] sm:$0xff]
    %v8891 = vld [vmem:[#allocation7 + $0x100] sm:$0xff]
    %v8892 = vld [vmem:[#allocation7 + $0x108] sm:$0xff]
    %v8893 = vld [vmem:[#allocation7 + $0x110] sm:$0xff]
    %v8894 = vld [vmem:[#allocation7 + $0x118] sm:$0xff]
    %v8895 = vld [vmem:[#allocation7 + $0x120] sm:$0xff]
    %v8896 = vld [vmem:[#allocation7 + $0x128] sm:$0xff]
    %v8897 = vld [vmem:[#allocation7 + $0x130] sm:$0xff]
    %v8898 = vld [vmem:[#allocation7 + $0x138] sm:$0xff]
    %v8899 = vld [vmem:[#allocation7 + $0x140] sm:$0xff]
    %v8900 = vld [vmem:[#allocation7 + $0x148] sm:$0xff]
    %v8901 = vld [vmem:[#allocation7 + $0x150] sm:$0xff]
    %v8902 = vld [vmem:[#allocation7 + $0x158] sm:$0xff]
    %v8903 = vld [vmem:[#allocation7 + $0x160] sm:$0xff]
    %v8904 = vld [vmem:[#allocation7 + $0x168] sm:$0xff]
    %v8905 = vld [vmem:[#allocation7 + $0x170] sm:$0xff]
    %v8906 = vld [vmem:[#allocation7 + $0x178] sm:$0xff]
    %v8907 = vld [vmem:[#allocation7 + $0x180] sm:$0xff]
    %v8908 = vld [vmem:[#allocation7 + $0x188] sm:$0xff]
    %v8909 = vld [vmem:[#allocation7 + $0x190] sm:$0xff]
    %v8910 = vld [vmem:[#allocation7 + $0x198] sm:$0xff]
    %v8911 = vld [vmem:[#allocation7 + $0x1a0] sm:$0xff]
    %v8912 = vld [vmem:[#allocation7 + $0x1a8] sm:$0xff]
    %v8913 = vld [vmem:[#allocation7 + $0x1b0] sm:$0xff]
    %v8914 = vld [vmem:[#allocation7 + $0x1b8] sm:$0xff]
    %v8915 = vld [vmem:[#allocation7 + $0x1c0] sm:$0xff]
    %v8916 = vld [vmem:[#allocation7 + $0x1c8] sm:$0xff]
    %v8917 = vld [vmem:[#allocation7 + $0x1d0] sm:$0xff]
    %v8918 = vld [vmem:[#allocation7 + $0x1d8] sm:$0xff]
    %v8919 = vld [vmem:[#allocation7 + $0x1e0] sm:$0xff]
    %v8920 = vld [vmem:[#allocation7 + $0x1e8] sm:$0xff]
    %v8921 = vld [vmem:[#allocation7 + $0x1f0] sm:$0xff]
    %v8922 = vld [vmem:[#allocation7 + $0x1f8] sm:$0xff]
    %v8923 = vld [vmem:[#allocation7 + $0x200] sm:$0xff]
    %v8924 = vld [vmem:[#allocation7 + $0x208] sm:$0xff]
    %v8925 = vld [vmem:[#allocation7 + $0x210] sm:$0xff]
    %v8926 = vld [vmem:[#allocation7 + $0x218] sm:$0xff]
    %v8927 = vld [vmem:[#allocation7 + $0x220] sm:$0xff]
    %v8928 = vld [vmem:[#allocation7 + $0x228] sm:$0xff]
    %v8929 = vld [vmem:[#allocation7 + $0x230] sm:$0xff]
    %v8930 = vld [vmem:[#allocation7 + $0x238] sm:$0xff]
    %v8931 = vld [vmem:[#allocation7 + $0x240] sm:$0xff]
    %v8932 = vld [vmem:[#allocation7 + $0x248] sm:$0xff]
    %v8933 = vld [vmem:[#allocation7 + $0x250] sm:$0xff]
    %v8934 = vld [vmem:[#allocation7 + $0x258] sm:$0xff]
    %v8935 = vld [vmem:[#allocation7 + $0x260] sm:$0xff]
    %v8936 = vld [vmem:[#allocation7 + $0x268] sm:$0xff]
    %v8937 = vld [vmem:[#allocation7 + $0x270] sm:$0xff]
    %v8938 = vld [vmem:[#allocation7 + $0x278] sm:$0xff]
    %v8939 = vld [vmem:[#allocation7 + $0x280] sm:$0xff]
    %v8940 = vld [vmem:[#allocation7 + $0x288] sm:$0xff]
    %v8941 = vld [vmem:[#allocation7 + $0x290] sm:$0xff]
    %v8942 = vld [vmem:[#allocation7 + $0x298] sm:$0xff]
    %v8943 = vld [vmem:[#allocation7 + $0x2a0] sm:$0xff]
    %v8944 = vld [vmem:[#allocation7 + $0x2a8] sm:$0xff]
    %v8945 = vld [vmem:[#allocation7 + $0x2b0] sm:$0xff]
    %v8946 = vld [vmem:[#allocation7 + $0x2b8] sm:$0xff]
    %v8947 = vld [vmem:[#allocation7 + $0x2c0] sm:$0xff]
    %v8948 = vld [vmem:[#allocation7 + $0x2c8] sm:$0xff]
    %v8949 = vld [vmem:[#allocation7 + $0x2d0] sm:$0xff]
    %v8950 = vld [vmem:[#allocation7 + $0x2d8] sm:$0xff]
    %v8951 = vld [vmem:[#allocation7 + $0x2e0] sm:$0xff]
    %v8952 = vld [vmem:[#allocation7 + $0x2e8] sm:$0xff]
    %v8953 = vld [vmem:[#allocation7 + $0x2f0] sm:$0xff]
    %v8954 = vld [vmem:[#allocation7 + $0x2f8] sm:$0xff]
    %v8955 = vld [vmem:[#allocation7 + $0x300] sm:$0xff]
    %v8956 = vld [vmem:[#allocation7 + $0x308] sm:$0xff]
    %v8957 = vld [vmem:[#allocation7 + $0x310] sm:$0xff]
    %v8958 = vld [vmem:[#allocation7 + $0x318] sm:$0xff]
    %v8959 = vld [vmem:[#allocation7 + $0x320] sm:$0xff]
    %v8960 = vld [vmem:[#allocation7 + $0x328] sm:$0xff]
    %v8961 = vld [vmem:[#allocation7 + $0x330] sm:$0xff]
    %v8962 = vld [vmem:[#allocation7 + $0x338] sm:$0xff]
    %v8963 = vld [vmem:[#allocation7 + $0x340] sm:$0xff]
    %v8964 = vld [vmem:[#allocation7 + $0x348] sm:$0xff]
    %v8965 = vld [vmem:[#allocation7 + $0x350] sm:$0xff]
    %v8966 = vld [vmem:[#allocation7 + $0x358] sm:$0xff]
    %v8967 = vld [vmem:[#allocation7 + $0x360] sm:$0xff]
    %v8968 = vld [vmem:[#allocation7 + $0x368] sm:$0xff]
    %v8969 = vld [vmem:[#allocation7 + $0x370] sm:$0xff]
    %v8970 = vld [vmem:[#allocation7 + $0x378] sm:$0xff]
    %v8971 = vld [vmem:[#allocation7 + $0x380] sm:$0xff]
    %v8972 = vld [vmem:[#allocation7 + $0x388] sm:$0xff]
    %v8973 = vld [vmem:[#allocation7 + $0x390] sm:$0xff]
    %v8974 = vld [vmem:[#allocation7 + $0x398] sm:$0xff]
    %v8975 = vld [vmem:[#allocation7 + $0x3a0] sm:$0xff]
    %v8976 = vld [vmem:[#allocation7 + $0x3a8] sm:$0xff]
    %v8977 = vld [vmem:[#allocation7 + $0x3b0] sm:$0xff]
    %v8978 = vld [vmem:[#allocation7 + $0x3b8] sm:$0xff]
    %v8979 = vld [vmem:[#allocation7 + $0x3c0] sm:$0xff]
    %v8980 = vld [vmem:[#allocation7 + $0x3c8] sm:$0xff]
    %v8981 = vld [vmem:[#allocation7 + $0x3d0] sm:$0xff]
    %v8982 = vld [vmem:[#allocation7 + $0x3d8] sm:$0xff]
    %v8983 = vld [vmem:[#allocation7 + $0x3e0] sm:$0xff]
    %v8984 = vld [vmem:[#allocation7 + $0x3e8] sm:$0xff]
    %v8985 = vld [vmem:[#allocation7 + $0x3f0] sm:$0xff]
    %v8986 = vld [vmem:[#allocation7 + $0x3f8] sm:$0xff]
    %v8987 = vld [vmem:[#allocation7 + $0x400] sm:$0xff]
    %v8988 = vld [vmem:[#allocation7 + $0x408] sm:$0xff]
    %v8989 = vld [vmem:[#allocation7 + $0x410] sm:$0xff]
    %v8990 = vld [vmem:[#allocation7 + $0x418] sm:$0xff]
    %v8991 = vld [vmem:[#allocation7 + $0x420] sm:$0xff]
    %v8992 = vld [vmem:[#allocation7 + $0x428] sm:$0xff]
    %v8993 = vld [vmem:[#allocation7 + $0x430] sm:$0xff]
    %v8994 = vld [vmem:[#allocation7 + $0x438] sm:$0xff]
    %v8995 = vld [vmem:[#allocation7 + $0x440] sm:$0xff]
    %v8996 = vld [vmem:[#allocation7 + $0x448] sm:$0xff]
    %v8997 = vld [vmem:[#allocation7 + $0x450] sm:$0xff]
    %v8998 = vld [vmem:[#allocation7 + $0x458] sm:$0xff]
    %v8999 = vld [vmem:[#allocation7 + $0x460] sm:$0xff]
    %v9000 = vld [vmem:[#allocation7 + $0x468] sm:$0xff]
    %v9001 = vld [vmem:[#allocation7 + $0x470] sm:$0xff]
    %v9002 = vld [vmem:[#allocation7 + $0x478] sm:$0xff]
    %v9003 = vld [vmem:[#allocation7 + $0x480] sm:$0xff]
    %v9004 = vld [vmem:[#allocation7 + $0x488] sm:$0xff]
    %v9005 = vld [vmem:[#allocation7 + $0x490] sm:$0xff]
    %v9006 = vld [vmem:[#allocation7 + $0x498] sm:$0xff]
    %v9007 = vld [vmem:[#allocation7 + $0x4a0] sm:$0xff]
    %v9008 = vld [vmem:[#allocation7 + $0x4a8] sm:$0xff]
    %v9009 = vld [vmem:[#allocation7 + $0x4b0] sm:$0xff]
    %v9010 = vld [vmem:[#allocation7 + $0x4b8] sm:$0xff]
    %v9011 = vld [vmem:[#allocation7 + $0x4c0] sm:$0xff]
    %v9012 = vld [vmem:[#allocation7 + $0x4c8] sm:$0xff]
    %v9013 = vld [vmem:[#allocation7 + $0x4d0] sm:$0xff]
    %v9014 = vld [vmem:[#allocation7 + $0x4d8] sm:$0xff]
    %v9015 = vld [vmem:[#allocation7 + $0x4e0] sm:$0xff]
    %v9016 = vld [vmem:[#allocation7 + $0x4e8] sm:$0xff]
    %v9017 = vld [vmem:[#allocation7 + $0x4f0] sm:$0xff]
    %v9018 = vld [vmem:[#allocation7 + $0x4f8] sm:$0xff]
    %v9019 = vld [vmem:[#allocation7 + $0x500] sm:$0xff]
    %v9020 = vld [vmem:[#allocation7 + $0x508] sm:$0xff]
    %v9021 = vld [vmem:[#allocation7 + $0x510] sm:$0xff]
    %v9022 = vld [vmem:[#allocation7 + $0x518] sm:$0xff]
    %v9023 = vld [vmem:[#allocation7 + $0x520] sm:$0xff]
    %v9024 = vld [vmem:[#allocation7 + $0x528] sm:$0xff]
    %v9025 = vld [vmem:[#allocation7 + $0x530] sm:$0xff]
    %v9026 = vld [vmem:[#allocation7 + $0x538] sm:$0xff]
    %v9027 = vld [vmem:[#allocation7 + $0x540] sm:$0xff]
    %v9028 = vld [vmem:[#allocation7 + $0x548] sm:$0xff]
    %v9029 = vld [vmem:[#allocation7 + $0x550] sm:$0xff]
    %v9030 = vld [vmem:[#allocation7 + $0x558] sm:$0xff]
    %v9031 = vld [vmem:[#allocation7 + $0x560] sm:$0xff]
    %v9032 = vld [vmem:[#allocation7 + $0x568] sm:$0xff]
    %v9033 = vld [vmem:[#allocation7 + $0x570] sm:$0xff]
    %v9034 = vld [vmem:[#allocation7 + $0x578] sm:$0xff]
    %v9035 = vld [vmem:[#allocation7 + $0x580] sm:$0xff]
    %v9036 = vld [vmem:[#allocation7 + $0x588] sm:$0xff]
    %v9037 = vld [vmem:[#allocation7 + $0x590] sm:$0xff]
    %v9038 = vld [vmem:[#allocation7 + $0x598] sm:$0xff]
    %v9039 = vld [vmem:[#allocation7 + $0x5a0] sm:$0xff]
    %v9040 = vld [vmem:[#allocation7 + $0x5a8] sm:$0xff]
    %v9041 = vld [vmem:[#allocation7 + $0x5b0] sm:$0xff]
    %v9042 = vld [vmem:[#allocation7 + $0x5b8] sm:$0xff]
    %v9043 = vld [vmem:[#allocation7 + $0x5c0] sm:$0xff]
    %v9044 = vld [vmem:[#allocation7 + $0x5c8] sm:$0xff]
    %v9045 = vld [vmem:[#allocation7 + $0x5d0] sm:$0xff]
    %v9046 = vld [vmem:[#allocation7 + $0x5d8] sm:$0xff]
    %v9047 = vld [vmem:[#allocation7 + $0x5e0] sm:$0xff]
    %v9048 = vld [vmem:[#allocation7 + $0x5e8] sm:$0xff]
    %v9049 = vld [vmem:[#allocation7 + $0x5f0] sm:$0xff]
    %v9050 = vld [vmem:[#allocation7 + $0x5f8] sm:$0xff]
    %v9051 = vld [vmem:[#allocation7 + $0x600] sm:$0xff]
    %v9052 = vld [vmem:[#allocation7 + $0x608] sm:$0xff]
    %v9053 = vld [vmem:[#allocation7 + $0x610] sm:$0xff]
    %v9054 = vld [vmem:[#allocation7 + $0x618] sm:$0xff]
    %v9055 = vld [vmem:[#allocation7 + $0x620] sm:$0xff]
    %v9056 = vld [vmem:[#allocation7 + $0x628] sm:$0xff]
    %v9057 = vld [vmem:[#allocation7 + $0x630] sm:$0xff]
    %v9058 = vld [vmem:[#allocation7 + $0x638] sm:$0xff]
    %v9059 = vld [vmem:[#allocation7 + $0x640] sm:$0xff]
    %v9060 = vld [vmem:[#allocation7 + $0x648] sm:$0xff]
    %v9061 = vld [vmem:[#allocation7 + $0x650] sm:$0xff]
    %v9062 = vld [vmem:[#allocation7 + $0x658] sm:$0xff]
    %v9063 = vld [vmem:[#allocation7 + $0x660] sm:$0xff]
    %v9064 = vld [vmem:[#allocation7 + $0x668] sm:$0xff]
    %v9065 = vld [vmem:[#allocation7 + $0x670] sm:$0xff]
    %v9066 = vld [vmem:[#allocation7 + $0x678] sm:$0xff]
    %v9067 = vld [vmem:[#allocation7 + $0x680] sm:$0xff]
    %v9068 = vld [vmem:[#allocation7 + $0x688] sm:$0xff]
    %v9069 = vld [vmem:[#allocation7 + $0x690] sm:$0xff]
    %v9070 = vld [vmem:[#allocation7 + $0x698] sm:$0xff]
    %v9071 = vld [vmem:[#allocation7 + $0x6a0] sm:$0xff]
    %v9072 = vld [vmem:[#allocation7 + $0x6a8] sm:$0xff]
    %v9073 = vld [vmem:[#allocation7 + $0x6b0] sm:$0xff]
    %v9074 = vld [vmem:[#allocation7 + $0x6b8] sm:$0xff]
    %v9075 = vld [vmem:[#allocation7 + $0x6c0] sm:$0xff]
    %v9076 = vld [vmem:[#allocation7 + $0x6c8] sm:$0xff]
    %v9077 = vld [vmem:[#allocation7 + $0x6d0] sm:$0xff]
    %v9078 = vld [vmem:[#allocation7 + $0x6d8] sm:$0xff]
    %v9079 = vld [vmem:[#allocation7 + $0x6e0] sm:$0xff]
    %v9080 = vld [vmem:[#allocation7 + $0x6e8] sm:$0xff]
    %v9081 = vld [vmem:[#allocation7 + $0x6f0] sm:$0xff]
    %v9082 = vld [vmem:[#allocation7 + $0x6f8] sm:$0xff]
    %v9083 = vld [vmem:[#allocation7 + $0x700] sm:$0xff]
    %v9084 = vld [vmem:[#allocation7 + $0x708] sm:$0xff]
    %v9085 = vld [vmem:[#allocation7 + $0x710] sm:$0xff]
    %v9086 = vld [vmem:[#allocation7 + $0x718] sm:$0xff]
    %v9087 = vld [vmem:[#allocation7 + $0x720] sm:$0xff]
    %v9088 = vld [vmem:[#allocation7 + $0x728] sm:$0xff]
    %v9089 = vld [vmem:[#allocation7 + $0x730] sm:$0xff]
    %v9090 = vld [vmem:[#allocation7 + $0x738] sm:$0xff]
    %v9091 = vld [vmem:[#allocation7 + $0x740] sm:$0xff]
    %v9092 = vld [vmem:[#allocation7 + $0x748] sm:$0xff]
    %v9093 = vld [vmem:[#allocation7 + $0x750] sm:$0xff]
    %v9094 = vld [vmem:[#allocation7 + $0x758] sm:$0xff]
    %v9095 = vld [vmem:[#allocation7 + $0x760] sm:$0xff]
    %v9096 = vld [vmem:[#allocation7 + $0x768] sm:$0xff]
    %v9097 = vld [vmem:[#allocation7 + $0x770] sm:$0xff]
    %v9098 = vld [vmem:[#allocation7 + $0x778] sm:$0xff]
    %v9099 = vld [vmem:[#allocation7 + $0x780] sm:$0xff]
    %v9100 = vld [vmem:[#allocation7 + $0x788] sm:$0xff]
    %v9101 = vld [vmem:[#allocation7 + $0x790] sm:$0xff]
    %v9102 = vld [vmem:[#allocation7 + $0x798] sm:$0xff]
    %v9103 = vld [vmem:[#allocation7 + $0x7a0] sm:$0xff]
    %v9104 = vld [vmem:[#allocation7 + $0x7a8] sm:$0xff]
    %v9105 = vld [vmem:[#allocation7 + $0x7b0] sm:$0xff]
    %v9106 = vld [vmem:[#allocation7 + $0x7b8] sm:$0xff]
    %v9107 = vld [vmem:[#allocation7 + $0x7c0] sm:$0xff]
    %v9108 = vld [vmem:[#allocation7 + $0x7c8] sm:$0xff]
    %v9109 = vld [vmem:[#allocation7 + $0x7d0] sm:$0xff]
    %v9110 = vld [vmem:[#allocation7 + $0x7d8] sm:$0xff]
    %v9111 = vld [vmem:[#allocation7 + $0x7e0] sm:$0xff]
    %v9112 = vld [vmem:[#allocation7 + $0x7e8] sm:$0xff]
    %v9113 = vld [vmem:[#allocation7 + $0x7f0] sm:$0xff]
    %v9114 = vld [vmem:[#allocation7 + $0x7f8] sm:$0xff]
    %v9115 = vrot.slane %v8303, 2
    %v9116 = vrot.slane %v8573, 2
    %9119 = vmatprep.subr.mxu0 %v8860
    %9120 = vmatpush1.msra.mxu0 %v8859
    %9121 = vmatprep.subr.mxu0 %v8868
    %9122 = vmatpush1.msra.mxu0 %v8867
    %9123 = vmatprep.subr.mxu0 %v8876
    %9124 = vmatpush1.msra.mxu0 %v8875
    %9125 = vmatprep.subr.mxu0 %v8884
    %9126 = vmatpush1.msra.mxu0 %v8883
    %9127 = vmatprep.subr.mxu0 %v8892
    %9128 = vmatpush1.msra.mxu0 %v8891
    %9129 = vmatprep.subr.mxu0 %v8900
    %9130 = vmatpush1.msra.mxu0 %v8899
    %9131 = vmatprep.subr.mxu0 %v8908
    %9132 = vmatpush1.msra.mxu0 %v8907
    %9133 = vmatprep.subr.mxu0 %v8916
    %9134 = vmatpush1.msra.mxu0 %v8915
    %9135 = vmatprep.subr.mxu0 %v8924
    %9136 = vmatpush1.msra.mxu0 %v8923
    %9137 = vmatprep.subr.mxu0 %v8932
    %9138 = vmatpush1.msra.mxu0 %v8931
    %9139 = vmatprep.subr.mxu0 %v8940
    %9140 = vmatpush1.msra.mxu0 %v8939
    %9141 = vmatprep.subr.mxu0 %v8948
    %9142 = vmatpush1.msra.mxu0 %v8947
    %9143 = vmatprep.subr.mxu0 %v8956
    %9144 = vmatpush1.msra.mxu0 %v8955
    %9145 = vmatprep.subr.mxu0 %v8964
    %9146 = vmatpush1.msra.mxu0 %v8963
    %9147 = vmatprep.subr.mxu0 %v8972
    %9148 = vmatpush1.msra.mxu0 %v8971
    %9149 = vmatprep.subr.mxu0 %v8980
    %9150 = vmatpush1.msra.mxu0 %v8979
    %9151 = vmatprep.subr.mxu0 %v8988
    %9152 = vmatpush1.msra.mxu0 %v8987
    %9153 = vmatprep.subr.mxu0 %v8996
    %9154 = vmatpush1.msra.mxu0 %v8995
    %9155 = vmatprep.subr.mxu0 %v9004
    %9156 = vmatpush1.msra.mxu0 %v9003
    %9157 = vmatprep.subr.mxu0 %v9012
    %9158 = vmatpush1.msra.mxu0 %v9011
    %9159 = vmatprep.subr.mxu0 %v9020
    %9160 = vmatpush1.msra.mxu0 %v9019
    %9161 = vmatprep.subr.mxu0 %v9028
    %9162 = vmatpush1.msra.mxu0 %v9027
    %9163 = vmatprep.subr.mxu0 %v9036
    %9164 = vmatpush1.msra.mxu0 %v9035
    %9165 = vmatprep.subr.mxu0 %v9044
    %9166 = vmatpush1.msra.mxu0 %v9043
    %9167 = vmatprep.subr.mxu0 %v9052
    %9168 = vmatpush1.msra.mxu0 %v9051
    %9169 = vmatprep.subr.mxu0 %v9060
    %9170 = vmatpush1.msra.mxu0 %v9059
    %9171 = vmatprep.subr.mxu0 %v9068
    %9172 = vmatpush1.msra.mxu0 %v9067
    %9173 = vmatprep.subr.mxu0 %v9076
    %9174 = vmatpush1.msra.mxu0 %v9075
    %9175 = vmatprep.subr.mxu0 %v9084
    %9176 = vmatpush1.msra.mxu0 %v9083
    %9177 = vmatprep.subr.mxu0 %v9092
    %9178 = vmatpush1.msra.mxu0 %v9091
    %9179 = vmatprep.subr.mxu0 %v9100
    %9180 = vmatpush1.msra.mxu0 %v9099
    %9181 = vmatprep.subr.mxu0 %v9108
    %9182 = vmatpush1.msra.mxu0 %v9107
    %9183 = vmatprep.mubr.f32.mxu0 %v9116
    %9184 = vmatmul.mubr.f32.gmra.mrb[0].mxu0 %v9115
    %v9185 = vpop.f32.mrb[0].mxu0
    %v9186 = vadd.f32 0.0, %v9185
    %v9187 = vpop.f32.mrb[0].mxu0
    %v9188 = vadd.f32 0.0, %v9187
    %9189 = vdwg.mxu0
    %9190 = vmatprep.subr.mxu0 %v8862
    %9191 = vmatpush1.msra.mxu0 %v8861
    %9192 = vmatprep.subr.mxu0 %v8870
    %9193 = vmatpush1.msra.mxu0 %v8869
    %9194 = vmatprep.subr.mxu0 %v8878
    %9195 = vmatpush1.msra.mxu0 %v8877
    %9196 = vmatprep.subr.mxu0 %v8886
    %9197 = vmatpush1.msra.mxu0 %v8885
    %9198 = vmatprep.subr.mxu0 %v8894
    %9199 = vmatpush1.msra.mxu0 %v8893
    %9200 = vmatprep.subr.mxu0 %v8902
    %9201 = vmatpush1.msra.mxu0 %v8901
    %9202 = vmatprep.subr.mxu0 %v8910
    %9203 = vmatpush1.msra.mxu0 %v8909
    %9204 = vmatprep.subr.mxu0 %v8918
    %9205 = vmatpush1.msra.mxu0 %v8917
    %9206 = vmatprep.subr.mxu0 %v8926
    %9207 = vmatpush1.msra.mxu0 %v8925
    %9208 = vmatprep.subr.mxu0 %v8934
    %9209 = vmatpush1.msra.mxu0 %v8933
    %9210 = vmatprep.subr.mxu0 %v8942
    %9211 = vmatpush1.msra.mxu0 %v8941
    %9212 = vmatprep.subr.mxu0 %v8950
    %9213 = vmatpush1.msra.mxu0 %v8949
    %9214 = vmatprep.subr.mxu0 %v8958
    %9215 = vmatpush1.msra.mxu0 %v8957
    %9216 = vmatprep.subr.mxu0 %v8966
    %9217 = vmatpush1.msra.mxu0 %v8965
    %9218 = vmatprep.subr.mxu0 %v8974
    %9219 = vmatpush1.msra.mxu0 %v8973
    %9220 = vmatprep.subr.mxu0 %v8982
    %9221 = vmatpush1.msra.mxu0 %v8981
    %9222 = vmatprep.subr.mxu0 %v8990
    %9223 = vmatpush1.msra.mxu0 %v8989
    %9224 = vmatprep.subr.mxu0 %v8998
    %9225 = vmatpush1.msra.mxu0 %v8997
    %9226 = vmatprep.subr.mxu0 %v9006
    %9227 = vmatpush1.msra.mxu0 %v9005
    %9228 = vmatprep.subr.mxu0 %v9014
    %9229 = vmatpush1.msra.mxu0 %v9013
    %9230 = vmatprep.subr.mxu0 %v9022
    %9231 = vmatpush1.msra.mxu0 %v9021
    %9232 = vmatprep.subr.mxu0 %v9030
    %9233 = vmatpush1.msra.mxu0 %v9029
    %9234 = vmatprep.subr.mxu0 %v9038
    %9235 = vmatpush1.msra.mxu0 %v9037
    %9236 = vmatprep.subr.mxu0 %v9046
    %9237 = vmatpush1.msra.mxu0 %v9045
    %9238 = vmatprep.subr.mxu0 %v9054
    %9239 = vmatpush1.msra.mxu0 %v9053
    %9240 = vmatprep.subr.mxu0 %v9062
    %9241 = vmatpush1.msra.mxu0 %v9061
    %9242 = vmatprep.subr.mxu0 %v9070
    %9243 = vmatpush1.msra.mxu0 %v9069
    %9244 = vmatprep.subr.mxu0 %v9078
    %9245 = vmatpush1.msra.mxu0 %v9077
    %9246 = vmatprep.subr.mxu0 %v9086
    %9247 = vmatpush1.msra.mxu0 %v9085
    %9248 = vmatprep.subr.mxu0 %v9094
    %9249 = vmatpush1.msra.mxu0 %v9093
    %9250 = vmatprep.subr.mxu0 %v9102
    %9251 = vmatpush1.msra.mxu0 %v9101
    %9252 = vmatprep.subr.mxu0 %v9110
    %9253 = vmatpush1.msra.mxu0 %v9109
    %9254 = vmatprep.mubr.f32.mxu0 %v9116
    %9255 = vmatmul.mubr.f32.gmra.mrb[0].mxu0 %v9115
    %v9256 = vpop.f32.mrb[0].mxu0
    %v9257 = vadd.f32 0.0, %v9256
    %v9258 = vpop.f32.mrb[0].mxu0
    %v9259 = vadd.f32 0.0, %v9258
    %9260 = vdwg.mxu0
    %9261 = vmatprep.subr.mxu0 %v8864
    %9262 = vmatpush1.msra.mxu0 %v8863
    %9263 = vmatprep.subr.mxu0 %v8872
    %9264 = vmatpush1.msra.mxu0 %v8871
    %9265 = vmatprep.subr.mxu0 %v8880
    %9266 = vmatpush1.msra.mxu0 %v8879
    %9267 = vmatprep.subr.mxu0 %v8888
    %9268 = vmatpush1.msra.mxu0 %v8887
    %9269 = vmatprep.subr.mxu0 %v8896
    %9270 = vmatpush1.msra.mxu0 %v8895
    %9271 = vmatprep.subr.mxu0 %v8904
    %9272 = vmatpush1.msra.mxu0 %v8903
    %9273 = vmatprep.subr.mxu0 %v8912
    %9274 = vmatpush1.msra.mxu0 %v8911
    %9275 = vmatprep.subr.mxu0 %v8920
    %9276 = vmatpush1.msra.mxu0 %v8919
    %9277 = vmatprep.subr.mxu0 %v8928
    %9278 = vmatpush1.msra.mxu0 %v8927
    %9279 = vmatprep.subr.mxu0 %v8936
    %9280 = vmatpush1.msra.mxu0 %v8935
    %9281 = vmatprep.subr.mxu0 %v8944
    %9282 = vmatpush1.msra.mxu0 %v8943
    %9283 = vmatprep.subr.mxu0 %v8952
    %9284 = vmatpush1.msra.mxu0 %v8951
    %9285 = vmatprep.subr.mxu0 %v8960
    %9286 = vmatpush1.msra.mxu0 %v8959
    %9287 = vmatprep.subr.mxu0 %v8968
    %9288 = vmatpush1.msra.mxu0 %v8967
    %9289 = vmatprep.subr.mxu0 %v8976
    %9290 = vmatpush1.msra.mxu0 %v8975
    %9291 = vmatprep.subr.mxu0 %v8984
    %9292 = vmatpush1.msra.mxu0 %v8983
    %9293 = vmatprep.subr.mxu0 %v8992
    %9294 = vmatpush1.msra.mxu0 %v8991
    %9295 = vmatprep.subr.mxu0 %v9000
    %9296 = vmatpush1.msra.mxu0 %v8999
    %9297 = vmatprep.subr.mxu0 %v9008
    %9298 = vmatpush1.msra.mxu0 %v9007
    %9299 = vmatprep.subr.mxu0 %v9016
    %9300 = vmatpush1.msra.mxu0 %v9015
    %9301 = vmatprep.subr.mxu0 %v9024
    %9302 = vmatpush1.msra.mxu0 %v9023
    %9303 = vmatprep.subr.mxu0 %v9032
    %9304 = vmatpush1.msra.mxu0 %v9031
    %9305 = vmatprep.subr.mxu0 %v9040
    %9306 = vmatpush1.msra.mxu0 %v9039
    %9307 = vmatprep.subr.mxu0 %v9048
    %9308 = vmatpush1.msra.mxu0 %v9047
    %9309 = vmatprep.subr.mxu0 %v9056
    %9310 = vmatpush1.msra.mxu0 %v9055
    %9311 = vmatprep.subr.mxu0 %v9064
    %9312 = vmatpush1.msra.mxu0 %v9063
    %9313 = vmatprep.subr.mxu0 %v9072
    %9314 = vmatpush1.msra.mxu0 %v9071
    %9315 = vmatprep.subr.mxu0 %v9080
    %9316 = vmatpush1.msra.mxu0 %v9079
    %9317 = vmatprep.subr.mxu0 %v9088
    %9318 = vmatpush1.msra.mxu0 %v9087
    %9319 = vmatprep.subr.mxu0 %v9096
    %9320 = vmatpush1.msra.mxu0 %v9095
    %9321 = vmatprep.subr.mxu0 %v9104
    %9322 = vmatpush1.msra.mxu0 %v9103
    %9323 = vmatprep.subr.mxu0 %v9112
    %9324 = vmatpush1.msra.mxu0 %v9111
    %9325 = vmatprep.mubr.f32.mxu0 %v9116
    %9326 = vmatmul.mubr.f32.gmra.mrb[0].mxu0 %v9115
    %v9327 = vpop.f32.mrb[0].mxu0
    %v9328 = vadd.f32 0.0, %v9327
    %v9329 = vpop.f32.mrb[0].mxu0
    %v9330 = vadd.f32 0.0, %v9329
    %9331 = vdwg.mxu0
    %9332 = vmatprep.subr.mxu0 %v8866
    %9333 = vmatpush1.msra.mxu0 %v8865
    %9334 = vmatprep.subr.mxu0 %v8874
    %9335 = vmatpush1.msra.mxu0 %v8873
    %9336 = vmatprep.subr.mxu0 %v8882
    %9337 = vmatpush1.msra.mxu0 %v8881
    %9338 = vmatprep.subr.mxu0 %v8890
    %9339 = vmatpush1.msra.mxu0 %v8889
    %9340 = vmatprep.subr.mxu0 %v8898
    %9341 = vmatpush1.msra.mxu0 %v8897
    %9342 = vmatprep.subr.mxu0 %v8906
    %9343 = vmatpush1.msra.mxu0 %v8905
    %9344 = vmatprep.subr.mxu0 %v8914
    %9345 = vmatpush1.msra.mxu0 %v8913
    %9346 = vmatprep.subr.mxu0 %v8922
    %9347 = vmatpush1.msra.mxu0 %v8921
    %9348 = vmatprep.subr.mxu0 %v8930
    %9349 = vmatpush1.msra.mxu0 %v8929
    %9350 = vmatprep.subr.mxu0 %v8938
    %9351 = vmatpush1.msra.mxu0 %v8937
    %9352 = vmatprep.subr.mxu0 %v8946
    %9353 = vmatpush1.msra.mxu0 %v8945
    %9354 = vmatprep.subr.mxu0 %v8954
    %9355 = vmatpush1.msra.mxu0 %v8953
    %9356 = vmatprep.subr.mxu0 %v8962
    %9357 = vmatpush1.msra.mxu0 %v8961
    %9358 = vmatprep.subr.mxu0 %v8970
    %9359 = vmatpush1.msra.mxu0 %v8969
    %9360 = vmatprep.subr.mxu0 %v8978
    %9361 = vmatpush1.msra.mxu0 %v8977
    %9362 = vmatprep.subr.mxu0 %v8986
    %9363 = vmatpush1.msra.mxu0 %v8985
    %9364 = vmatprep.subr.mxu0 %v8994
    %9365 = vmatpush1.msra.mxu0 %v8993
    %9366 = vmatprep.subr.mxu0 %v9002
    %9367 = vmatpush1.msra.mxu0 %v9001
    %9368 = vmatprep.subr.mxu0 %v9010
    %9369 = vmatpush1.msra.mxu0 %v9009
    %9370 = vmatprep.subr.mxu0 %v9018
    %9371 = vmatpush1.msra.mxu0 %v9017
    %9372 = vmatprep.subr.mxu0 %v9026
    %9373 = vmatpush1.msra.mxu0 %v9025
    %9374 = vmatprep.subr.mxu0 %v9034
    %9375 = vmatpush1.msra.mxu0 %v9033
    %9376 = vmatprep.subr.mxu0 %v9042
    %9377 = vmatpush1.msra.mxu0 %v9041
    %9378 = vmatprep.subr.mxu0 %v9050
    %9379 = vmatpush1.msra.mxu0 %v9049
    %9380 = vmatprep.subr.mxu0 %v9058
    %9381 = vmatpush1.msra.mxu0 %v9057
    %9382 = vmatprep.subr.mxu0 %v9066
    %9383 = vmatpush1.msra.mxu0 %v9065
    %9384 = vmatprep.subr.mxu0 %v9074
    %9385 = vmatpush1.msra.mxu0 %v9073
    %9386 = vmatprep.subr.mxu0 %v9082
    %9387 = vmatpush1.msra.mxu0 %v9081
    %9388 = vmatprep.subr.mxu0 %v9090
    %9389 = vmatpush1.msra.mxu0 %v9089
    %9390 = vmatprep.subr.mxu0 %v9098
    %9391 = vmatpush1.msra.mxu0 %v9097
    %9392 = vmatprep.subr.mxu0 %v9106
    %9393 = vmatpush1.msra.mxu0 %v9105
    %9394 = vmatprep.subr.mxu0 %v9114
    %9395 = vmatpush1.msra.mxu0 %v9113
    %9396 = vmatprep.mubr.f32.mxu0 %v9116
    %9397 = vmatmul.mubr.f32.gmra.mrb[0].mxu0 %v9115
    %v9398 = vpop.f32.mrb[0].mxu0
    %v9399 = vadd.f32 0.0, %v9398
    %v9400 = vpop.f32.mrb[0].mxu0
    %v9401 = vadd.f32 0.0, %v9400
    %9402 = vdwg.mxu0
    %s9403 = scalar_lea.vmem [#allocation2], 224
    %v9404 = vld [vmem:[%s9403] sm:$0xff]
    %v9405 = vld [vmem:[%s9403 + $0x8] sm:$0xff]
    %v9406 = vld [vmem:[%s9403 + $0x10] sm:$0xff]
    %v9407 = vld [vmem:[%s9403 + $0x18] sm:$0xff]
    %v9416 = vrot.slane %v9186, 6
    %v9417 = vrot.slane %v9188, 6
    %v9418 = vrot.slane %v9257, 6
    %v9419 = vrot.slane %v9259, 6
    %v9420 = vrot.slane %v9328, 6
    %v9421 = vrot.slane %v9330, 6
    %v9422 = vrot.slane %v9399, 6
    %v9423 = vrot.slane %v9401, 6
    %v9432 = vsel %vm1164, %v8642, %v9416
    %v9433 = vsel %vm1164, %v8644, %v9417
    %v9434 = vsel %vm1164, %v8713, %v9418
    %v9435 = vsel %vm1164, %v8715, %v9419
    %v9436 = vsel %vm1164, %v8784, %v9420
    %v9437 = vsel %vm1164, %v8786, %v9421
    %v9438 = vsel %vm1164, %v8855, %v9422
    %v9439 = vsel %vm1164, %v8857, %v9423
    %v9448 = vcombine.low %v9432, %v9433
    %v9449 = vcombine.low %v9434, %v9435
    %v9450 = vcombine.low %v9436, %v9437
    %v9451 = vcombine.low %v9438, %v9439
    %v9456 = vadd.f32 %v9404, %v9448
    %v9457 = vadd.f32 %v9405, %v9449
    %v9458 = vadd.f32 %v9406, %v9450
    %v9459 = vadd.f32 %v9407, %v9451
    %v9460 = vxor.u32 %v9456, 2147483648
    %v9461 = vxor.u32 %v9457, 2147483648
    %v9462 = vxor.u32 %v9458, 2147483648
    %v9463 = vmul.f32 %v9460, 1.442695
    %v9464 = vpow.pop %v9463
    %v9465 = vmul.f32 %v9461, 1.442695
    %v9466 = vpow.pop %v9465
    %v9467 = vmul.f32 %v9462, 1.442695
    %v9468 = vpow.pop %v9467
    %v9469 = vadd.f32 %v9464, 1.0
    %v9470 = vadd.f32 %v9466, 1.0
    %v9471 = vadd.f32 %v9468, 1.0
    %v9472 = vrcp.pop %v9469
    %v9473 = vmul.f32 1.0, %v9472
    %v9474 = vrcp.pop %v9470
    %v9475 = vmul.f32 1.0, %v9474
    %v9476 = vrcp.pop %v9471
    %v9477 = vmul.f32 1.0, %v9476
    %v9478 = vtanh.pop %v9459
    %v9479 = vmul.f32 %v9475, %v8301
    %v9480 = vmul.f32 %v9473, %v9478
    %v9481 = vadd.f32 %v9479, %v9480
    %v9482 = vtanh.pop %v9481
    %v9483 = vmul.f32 %v9477, %v9482
    %v9486 = vunpack.c.l.s4 1983009808
    %v9487 = vunpack.c.0.s8 %v9486
    %v9488 = vlaneseq
    %v9489 = vshrl.u32 %v9488, 7
    %v9490 = vsub.s32 %v9487, %v9489
    %v9491 = vrot.slane %v9483, %v9490
    %9493 = vst [vmem:[%s1229] sm:$0xf] %v9491
    %v9494 = vcombine.high %v9491, %v9491
    %9496 = vst [vmem:[#allocation8 + $0x4] sm:$0xf] %v9494
    // Predicated region
    $region26: #{tpu_custom_call.1} parent=1 // pred_check
      _
    $region27: #{tpu_custom_call.1} parent=1 // pred_check_branch
      %9498 = sbr.rel (0) target = $region29
    $region28: #{tpu_custom_call.1} parent=1 // pred_region
      %s9500 = ssub.s32 1024, 1024
      %9501 = vsyncadd [#allocation4], %s9500
      %s9502 = sshll.u32 [#allocation8], 4
      %s9503 = int_to_ptr.vmem [resolvable:$true] %s9502
      %9508 = dma.vmem_to_hbm [thread:$0]  %s9503, 1024, %s3, [#allocation4], 128, 128, 8
    $region29: #{tpu_custom_call.1} parent=1 // pred_fallthru
      _
    // Predicated region
    $region30: #{tpu_custom_call.1} parent=1 // pred_check
      _
    $region31: #{tpu_custom_call.1} parent=1 // pred_check_branch
      %9510 = sbr.rel (0) target = $region33
    $region32: #{tpu_custom_call.1} parent=1 // pred_region
      %9511 = dma.done [#allocation4], 1024
    $region33: #{tpu_custom_call.1} parent=1 // pred_fallthru
      _
    %9512 = vsyncpa [#allocation3], 1
    %9513 = vsyncpa [#allocation6], 1
    %9514 = vsyncpa [#allocation4], 1

</llo_original>
